<compile_context>
chip_gen: v7x
topology: tpu7x:2x2x1
jax: 0.10.0
libtpu: 0.0.40
codegen_flags: <defaults>
</compile_context>

<pallas_src>
import functools

import jax
import jax.numpy as jnp
import numpy as np
from jax import lax
from jax.experimental import pallas as pl
from jax.experimental.pallas import tpu as pltpu


# ------------------------------ fused kernel --------------------------------


def _conv3x3_folded(buf_ref, w_ref, b_ref, *, cin, cout, H, W, wl):
    """3x3 'same' conv over the first `cin` channels of the padded VMEM scratch.

    buf_ref: (H+2, Wp, Ctot) compute-dtype scratch with a zero halo ring; the
    interior starts at column `wl`.  w_ref: (3, cin, 3*cout) dy-folded weights
    (w_ref[dx][:, dy*cout:(dy+1)*cout] == HWIO w[dy, dx]).  b_ref: (1, cout) f32.
    Returns (H, W, cout) f32.
    """
    acc = jnp.zeros((H, W, cout), jnp.float32)
    for dx in range(3):
        c0 = wl - 1 + dx                                  # dx=1 is sublane-aligned
        col = buf_ref[:, c0:c0 + W, :cin]                 # (H+2, W, cin), compute dtype
        # One wide MXU dot per dx: N = 3*cout instead of cout.
        out = lax.dot_general(
            col, w_ref[dx],
            dimension_numbers=(((2,), (0,)), ((), ())),
            preferred_element_type=jnp.float32)           # (H+2, W, 3*cout) f32
        for dy in range(3):                               # major-axis slice + VPU add
            acc = acc + out[dy:dy + H, :, dy * cout:(dy + 1) * cout]
    return acc + b_ref[0][None, None, :].astype(jnp.float32)


def _rdb5_kernel(x_ref, w1, b1, w2, b2, w3, b3, w4, b4, w5, b5,
                 o_ref, buf_ref, *, nf, gc, H, W, wl, wp, compute_dtype):
    ctot = nf + 4 * gc
    cdt = compute_dtype

    # --- zero ONLY the halo ring (+ alignment pad), not the interior ---
    zrow = jnp.zeros((1, wp, ctot), cdt)
    buf_ref[0:1] = zrow                                   # top halo row
    buf_ref[H + 1:H + 2] = zrow                           # bottom halo row
    buf_ref[1:H + 1, 0:wl] = jnp.zeros((H, wl, ctot), cdt)            # left pad + halo col
    buf_ref[1:H + 1, wl + W:wp] = jnp.zeros((H, wp - wl - W, ctot), cdt)  # right halo (+pad)

    # interior: x goes into channels [0, nf) (sublane-aligned store at column wl)
    buf_ref[1:H + 1, wl:wl + W, 0:nf] = x_ref[0].astype(cdt)

    ws = (w1, w2, w3, w4)
    bs = (b1, b2, b3, b4)
    for i in range(4):                                    # dense stages, VMEM-resident
        cin = nf + i * gc
        y = _conv3x3_folded(buf_ref, ws[i], bs[i], cin=cin, cout=gc, H=H, W=W, wl=wl)
        y = jnp.where(y > 0, y, 0.2 * y)                  # LeakyReLU(0.2) in f32
        buf_ref[1:H + 1, wl:wl + W, cin:cin + gc] = y.astype(cdt)   # "concat" = slab write

    y5 = _conv3x3_folded(buf_ref, w5, b5, cin=ctot, cout=nf, H=H, W=W, wl=wl)
    res = buf_ref[1:H + 1, wl:wl + W, 0:nf].astype(jnp.float32)     # residual from scratch
    o_ref[0] = (y5 * 0.2 + res).astype(o_ref.dtype)                 # fused residual


# ------------------------------ host wrapper --------------------------------


def rdb5_forward(x_nchw, params, *, compute_dtype=jnp.bfloat16):
    """ResidualDenseBlock5 forward.  x_nchw: (N, nf, H, W) like the PyTorch module."""
    x = jnp.transpose(x_nchw, (0, 2, 3, 1))               # NCHW -> NHWC
    N, H, W, nf = x.shape
    gc = params["w1"].shape[-1]
    ctot = nf + 4 * gc
    cdt = jnp.dtype(compute_dtype)

    WL = 8                                                # interior starts sublane-aligned
    WP = ((WL + W + 1 + 7) // 8) * 8                      # padded scratch width

    kernel = functools.partial(_rdb5_kernel, nf=nf, gc=gc, H=H, W=W,
                               wl=WL, wp=WP, compute_dtype=cdt)

    args = [x]
    in_specs = [pl.BlockSpec((1, H, W, nf), lambda n: (n, 0, 0, 0))]
    w_bytes = 0
    for i in range(1, 6):
        w = params[f"w{i}"]                               # (3, 3, cin, cout) HWIO
        cin, cout = int(w.shape[2]), int(w.shape[3])
        # dy-fold: (dy, dx, cin, cout) -> (dx, cin, 3*cout); one wide dot per dx.
        wf = jnp.transpose(w, (1, 2, 0, 3)).reshape(3, cin, 3 * cout).astype(cdt)
        b = params[f"b{i}"].reshape(1, -1).astype(jnp.float32)
        args += [wf, b]
        in_specs += [pl.BlockSpec(wf.shape, lambda n: (0, 0, 0)),
                     pl.BlockSpec(b.shape, lambda n: (0, 0))]
        w_bytes += int(wf.size) * wf.dtype.itemsize + int(b.size) * b.dtype.itemsize

    # Advisory cost estimate so XLA schedules the boundary transposes around us.
    flops = 2 * N * H * W * 9 * sum(
        (nf + i * gc) * (gc if i < 4 else nf) for i in range(5))
    xi = x.dtype.itemsize
    bytes_accessed = 2 * N * H * W * nf * xi + w_bytes

    # VMEM budget (real itemsizes): scratch + double-buffered in/out blocks + weights
    # + per-dx f32 matmul output / accumulator temporaries.
    scratch_bytes = (H + 2) * WP * ctot * cdt.itemsize
    io_bytes = 2 * 2 * H * W * nf * xi
    tmp_bytes = (H + 2) * W * 3 * max(gc, nf) * 4 + 2 * H * W * max(gc, nf) * 4
    vmem_need = scratch_bytes + io_bytes + 2 * w_bytes + tmp_bytes

    try:
        cap = int(getattr(pltpu.get_tpu_info(), "vmem_capacity_bytes",
                          64 * 1024 * 1024))
    except Exception:                                      # pragma: no cover
        cap = 64 * 1024 * 1024
    soft_cap = int(cap * 0.85)                             # ~109 MiB v5e/v6e, ~54 MiB v7x
    vmem_limit = max(min(max(2 * vmem_need, 32 * 1024 * 1024), soft_cap), vmem_need)
    vmem_limit = int(min(vmem_limit, cap))

    out_nhwc = pl.pallas_call(
        kernel,
        out_shape=jax.ShapeDtypeStruct((N, H, W, nf), x.dtype),
        grid=(N,),
        in_specs=in_specs,
        out_specs=pl.BlockSpec((1, H, W, nf), lambda n: (n, 0, 0, 0)),
        scratch_shapes=[pltpu.VMEM((H + 2, WP, ctot), cdt)],
        compiler_params=pltpu.CompilerParams(
            dimension_semantics=("parallel",),
            vmem_limit_bytes=vmem_limit),
        cost_estimate=pl.CostEstimate(
            flops=flops, transcendentals=0, bytes_accessed=int(bytes_accessed)),
    )(*args)

    return jnp.transpose(out_nhwc, (0, 3, 1, 2))           # NHWC -> NCHW


# ------------------------- params / reference check -------------------------


def init_params(key, nf, gc, scale=0.1):
    """Kaiming-normal (fan_in, a=0) * scale, zero bias (matches initialize_weights)."""
    shapes = [  # HWIO
        (3, 3, nf, gc),
        (3, 3, nf + gc, gc),
        (3, 3, nf + 2 * gc, gc),
        (3, 3, nf + 3 * gc, gc),
        (3, 3, nf + 4 * gc, nf),
    ]
    params = {}
    keys = jax.random.split(key, len(shapes))
    for i, (k, s) in enumerate(zip(keys, shapes), start=1):
        fan_in = s[0] * s[1] * s[2]
        std = jnp.sqrt(2.0 / fan_in)
        params[f"w{i}"] = jax.random.normal(k, s, jnp.float32) * std * scale
        params[f"b{i}"] = jnp.zeros((s[3],), jnp.float32)
    return params


def _ref_conv(x, w, b):
    y = lax.conv_general_dilated(
        x, w, window_strides=(1, 1), padding="SAME",
        dimension_numbers=("NHWC", "HWIO", "NHWC"))
    return y + b[None, None, None, :]


def _ref_lrelu(y):
    return jnp.where(y > 0, y, 0.2 * y)


def rdb5_reference(x_nchw, params):
    x = jnp.transpose(x_nchw, (0, 2, 3, 1))
    x1 = _ref_lrelu(_ref_conv(x, params["w1"], params["b1"]))
    x2 = _ref_lrelu(_ref_conv(jnp.concatenate([x, x1], -1), params["w2"], params["b2"]))
    x3 = _ref_lrelu(_ref_conv(jnp.concatenate([x, x1, x2], -1), params["w3"], params["b3"]))
    x4 = _ref_lrelu(_ref_conv(jnp.concatenate([x, x1, x2, x3], -1), params["w4"], params["b4"]))
    x5 = _ref_conv(jnp.concatenate([x, x1, x2, x3, x4], -1), params["w5"], params["b5"])
    return jnp.transpose(x5 * 0.2 + x, (0, 3, 1, 2))


# ----------------------------------- main -----------------------------------

if __name__ == "__main__":
    key = jax.random.PRNGKey(0)
    k_x, k_p = jax.random.split(key)

    N, nf, gc, H, W = 2, 8, 4, 16, 16            # small shapes consistent with the module
    x = jax.random.normal(k_x, (N, nf, H, W), jnp.float32)   # NCHW, like PyTorch
    params = init_params(k_p, nf, gc, scale=0.1)

    out = jax.block_until_ready(rdb5_forward(x, params))
    ref = jax.block_until_ready(rdb5_reference(x, params))

    assert out.shape == (N, nf, H, W)
    # bf16 compute path -> relaxed tolerance vs. the f32 reference.
    np.testing.assert_allclose(np.asarray(out), np.asarray(ref), rtol=2e-2, atol=2e-2)

    print("KERNEL_OK")
</pallas_src>

<mosaic_0001>
module attributes {stable_mosaic.version = 11 : i64} {
  func.func @_rdb5_kernel(%arg0: i32, %arg1: memref<1x16x16x8xf32, #tpu.memory_space<vmem>>, %arg2: memref<3x8x12xbf16, #tpu.memory_space<vmem>>, %arg3: memref<1x4xf32, #tpu.memory_space<vmem>>, %arg4: memref<3x12x12xbf16, #tpu.memory_space<vmem>>, %arg5: memref<1x4xf32, #tpu.memory_space<vmem>>, %arg6: memref<3x16x12xbf16, #tpu.memory_space<vmem>>, %arg7: memref<1x4xf32, #tpu.memory_space<vmem>>, %arg8: memref<3x20x12xbf16, #tpu.memory_space<vmem>>, %arg9: memref<1x4xf32, #tpu.memory_space<vmem>>, %arg10: memref<3x24x24xbf16, #tpu.memory_space<vmem>>, %arg11: memref<1x8xf32, #tpu.memory_space<vmem>>, %arg12: memref<1x16x16x8xf32, #tpu.memory_space<vmem>>, %arg13: memref<18x32x24xbf16, #tpu.memory_space<vmem>>) attributes {dimension_semantics = [#tpu.dimension_semantics<parallel>], iteration_bounds = array<i64: 2>, scalar_prefetch = 0 : i64, scratch_operands = 1 : i64, tpu.core_type = #tpu.core_type<tc>, window_params = [{transform_indices = @transform_0, window_bounds = array<i64: 1, 16, 16, 8>}, {pipeline_mode = #tpu.pipeline_mode<synchronous>, transform_indices = @transform_1, window_bounds = array<i64: 3, 8, 12>}, {pipeline_mode = #tpu.pipeline_mode<synchronous>, transform_indices = @transform_2, window_bounds = array<i64: 1, 4>}, {pipeline_mode = #tpu.pipeline_mode<synchronous>, transform_indices = @transform_3, window_bounds = array<i64: 3, 12, 12>}, {pipeline_mode = #tpu.pipeline_mode<synchronous>, transform_indices = @transform_4, window_bounds = array<i64: 1, 4>}, {pipeline_mode = #tpu.pipeline_mode<synchronous>, transform_indices = @transform_5, window_bounds = array<i64: 3, 16, 12>}, {pipeline_mode = #tpu.pipeline_mode<synchronous>, transform_indices = @transform_6, window_bounds = array<i64: 1, 4>}, {pipeline_mode = #tpu.pipeline_mode<synchronous>, transform_indices = @transform_7, window_bounds = array<i64: 3, 20, 12>}, {pipeline_mode = #tpu.pipeline_mode<synchronous>, transform_indices = @transform_8, window_bounds = array<i64: 1, 4>}, {pipeline_mode = #tpu.pipeline_mode<synchronous>, transform_indices = @transform_9, window_bounds = array<i64: 3, 24, 24>}, {pipeline_mode = #tpu.pipeline_mode<synchronous>, transform_indices = @transform_10, window_bounds = array<i64: 1, 8>}, {transform_indices = @transform_11, window_bounds = array<i64: 1, 16, 16, 8>}]} {
    %cst = arith.constant 0.000000e+00 : bf16
    %0 = vector.broadcast %cst : bf16 to vector<1x32x24xbf16>
    %c0 = arith.constant 0 : index
    %c0_0 = arith.constant 0 : index
    %c0_1 = arith.constant 0 : index
    %1 = vector.load %arg13[%c0, %c0_0, %c0_1] : memref<18x32x24xbf16, #tpu.memory_space<vmem>>, vector<1x32x24xbf16>
    tpu.vector_store %arg13[%c0, %c0_0, %c0_1], %0 {strides = array<i32>} : memref<18x32x24xbf16, #tpu.memory_space<vmem>>, vector<1x32x24xbf16>,
    %c17 = arith.constant 17 : index
    %c0_2 = arith.constant 0 : index
    %c0_3 = arith.constant 0 : index
    %2 = vector.load %arg13[%c17, %c0_2, %c0_3] : memref<18x32x24xbf16, #tpu.memory_space<vmem>>, vector<1x32x24xbf16>
    tpu.vector_store %arg13[%c17, %c0_2, %c0_3], %0 {strides = array<i32>} : memref<18x32x24xbf16, #tpu.memory_space<vmem>>, vector<1x32x24xbf16>,
    %cst_4 = arith.constant 0.000000e+00 : bf16
    %3 = vector.broadcast %cst_4 : bf16 to vector<16x8x24xbf16>
    %c1 = arith.constant 1 : index
    %c0_5 = arith.constant 0 : index
    %c0_6 = arith.constant 0 : index
    %4 = vector.load %arg13[%c1, %c0_5, %c0_6] : memref<18x32x24xbf16, #tpu.memory_space<vmem>>, vector<16x8x24xbf16>
    tpu.vector_store %arg13[%c1, %c0_5, %c0_6], %3 {strides = array<i32>} : memref<18x32x24xbf16, #tpu.memory_space<vmem>>, vector<16x8x24xbf16>,
    %cst_7 = arith.constant 0.000000e+00 : bf16
    %5 = vector.broadcast %cst_7 : bf16 to vector<16x8x24xbf16>
    %c1_8 = arith.constant 1 : index
    %c24 = arith.constant 24 : index
    %c0_9 = arith.constant 0 : index
    %6 = vector.load %arg13[%c1_8, %c24, %c0_9] : memref<18x32x24xbf16, #tpu.memory_space<vmem>>, vector<16x8x24xbf16>
    tpu.vector_store %arg13[%c1_8, %c24, %c0_9], %5 {strides = array<i32>} : memref<18x32x24xbf16, #tpu.memory_space<vmem>>, vector<16x8x24xbf16>,
    %c0_10 = arith.constant 0 : index
    %c0_11 = arith.constant 0 : index
    %c0_12 = arith.constant 0 : index
    %c0_13 = arith.constant 0 : index
    %7 = vector.load %arg1[%c0_10, %c0_11, %c0_12, %c0_13] : memref<1x16x16x8xf32, #tpu.memory_space<vmem>>, vector<1x16x16x8xf32>
    %8 = vector.shape_cast %7 : vector<1x16x16x8xf32> to vector<16x16x8xf32>
    %9 = arith.truncf %8 : vector<16x16x8xf32> to vector<16x16x8xbf16>
    %c1_14 = arith.constant 1 : index
    %c8 = arith.constant 8 : index
    %c0_15 = arith.constant 0 : index
    %10 = vector.load %arg13[%c1_14, %c8, %c0_15] : memref<18x32x24xbf16, #tpu.memory_space<vmem>>, vector<16x16x8xbf16>
    tpu.vector_store %arg13[%c1_14, %c8, %c0_15], %9 {strides = array<i32>} : memref<18x32x24xbf16, #tpu.memory_space<vmem>>, vector<16x16x8xbf16>,
    %cst_16 = arith.constant 0.000000e+00 : f32
    %11 = vector.broadcast %cst_16 : f32 to vector<16x16x4xf32>
    %c0_17 = arith.constant 0 : index
    %c7 = arith.constant 7 : index
    %c0_18 = arith.constant 0 : index
    %12 = vector.load %arg13[%c0_17, %c7, %c0_18] : memref<18x32x24xbf16, #tpu.memory_space<vmem>>, vector<18x16x8xbf16>
    %c0_19 = arith.constant 0 : index
    %c0_20 = arith.constant 0 : index
    %c0_21 = arith.constant 0 : index
    %13 = vector.load %arg2[%c0_19, %c0_20, %c0_21] : memref<3x8x12xbf16, #tpu.memory_space<vmem>>, vector<1x8x12xbf16>
    %14 = vector.shape_cast %13 : vector<1x8x12xbf16> to vector<8x12xbf16>
    %cst_22 = arith.constant dense<0.000000e+00> : vector<18x16x12xf32>
    %15 = tpu.matmul %12, %14, %cst_22 {dimension_numbers = #tpu.dot_dimension_numbers<[2], [0], [0, 1], [1], [0, 0, 0, 1, 1, 1], [], []>} : vector<18x16x8xbf16>, vector<8x12xbf16>, vector<18x16x12xf32> -> vector<18x16x12xf32>
    %16 = vector.extract_strided_slice %15 {offsets = [0, 0, 0], sizes = [16, 16, 4], strides = [1, 1, 1]} : vector<18x16x12xf32> to vector<16x16x4xf32>
    %17 = arith.addf %11, %16 : vector<16x16x4xf32>
    %18 = vector.extract_strided_slice %15 {offsets = [1, 0, 4], sizes = [16, 16, 4], strides = [1, 1, 1]} : vector<18x16x12xf32> to vector<16x16x4xf32>
    %19 = arith.addf %17, %18 : vector<16x16x4xf32>
    %20 = vector.extract_strided_slice %15 {offsets = [2, 0, 8], sizes = [16, 16, 4], strides = [1, 1, 1]} : vector<18x16x12xf32> to vector<16x16x4xf32>
    %21 = arith.addf %19, %20 : vector<16x16x4xf32>
    %c0_23 = arith.constant 0 : index
    %c8_24 = arith.constant 8 : index
    %c0_25 = arith.constant 0 : index
    %22 = vector.load %arg13[%c0_23, %c8_24, %c0_25] : memref<18x32x24xbf16, #tpu.memory_space<vmem>>, vector<18x16x8xbf16>
    %c1_26 = arith.constant 1 : index
    %c0_27 = arith.constant 0 : index
    %c0_28 = arith.constant 0 : index
    %23 = vector.load %arg2[%c1_26, %c0_27, %c0_28] : memref<3x8x12xbf16, #tpu.memory_space<vmem>>, vector<1x8x12xbf16>
    %24 = vector.shape_cast %23 : vector<1x8x12xbf16> to vector<8x12xbf16>
    %cst_29 = arith.constant dense<0.000000e+00> : vector<18x16x12xf32>
    %25 = tpu.matmul %22, %24, %cst_29 {dimension_numbers = #tpu.dot_dimension_numbers<[2], [0], [0, 1], [1], [0, 0, 0, 1, 1, 1], [], []>} : vector<18x16x8xbf16>, vector<8x12xbf16>, vector<18x16x12xf32> -> vector<18x16x12xf32>
    %26 = vector.extract_strided_slice %25 {offsets = [0, 0, 0], sizes = [16, 16, 4], strides = [1, 1, 1]} : vector<18x16x12xf32> to vector<16x16x4xf32>
    %27 = arith.addf %21, %26 : vector<16x16x4xf32>
    %28 = vector.extract_strided_slice %25 {offsets = [1, 0, 4], sizes = [16, 16, 4], strides = [1, 1, 1]} : vector<18x16x12xf32> to vector<16x16x4xf32>
    %29 = arith.addf %27, %28 : vector<16x16x4xf32>
    %30 = vector.extract_strided_slice %25 {offsets = [2, 0, 8], sizes = [16, 16, 4], strides = [1, 1, 1]} : vector<18x16x12xf32> to vector<16x16x4xf32>
    %31 = arith.addf %29, %30 : vector<16x16x4xf32>
    %c0_30 = arith.constant 0 : index
    %c9 = arith.constant 9 : index
    %c0_31 = arith.constant 0 : index
    %32 = vector.load %arg13[%c0_30, %c9, %c0_31] : memref<18x32x24xbf16, #tpu.memory_space<vmem>>, vector<18x16x8xbf16>
    %c2 = arith.constant 2 : index
    %c0_32 = arith.constant 0 : index
    %c0_33 = arith.constant 0 : index
    %33 = vector.load %arg2[%c2, %c0_32, %c0_33] : memref<3x8x12xbf16, #tpu.memory_space<vmem>>, vector<1x8x12xbf16>
    %34 = vector.shape_cast %33 : vector<1x8x12xbf16> to vector<8x12xbf16>
    %cst_34 = arith.constant dense<0.000000e+00> : vector<18x16x12xf32>
    %35 = tpu.matmul %32, %34, %cst_34 {dimension_numbers = #tpu.dot_dimension_numbers<[2], [0], [0, 1], [1], [0, 0, 0, 1, 1, 1], [], []>} : vector<18x16x8xbf16>, vector<8x12xbf16>, vector<18x16x12xf32> -> vector<18x16x12xf32>
    %36 = vector.extract_strided_slice %35 {offsets = [0, 0, 0], sizes = [16, 16, 4], strides = [1, 1, 1]} : vector<18x16x12xf32> to vector<16x16x4xf32>
    %37 = arith.addf %31, %36 : vector<16x16x4xf32>
    %38 = vector.extract_strided_slice %35 {offsets = [1, 0, 4], sizes = [16, 16, 4], strides = [1, 1, 1]} : vector<18x16x12xf32> to vector<16x16x4xf32>
    %39 = arith.addf %37, %38 : vector<16x16x4xf32>
    %40 = vector.extract_strided_slice %35 {offsets = [2, 0, 8], sizes = [16, 16, 4], strides = [1, 1, 1]} : vector<18x16x12xf32> to vector<16x16x4xf32>
    %41 = arith.addf %39, %40 : vector<16x16x4xf32>
    %c0_35 = arith.constant 0 : index
    %c0_36 = arith.constant 0 : index
    %42 = vector.load %arg3[%c0_35, %c0_36] : memref<1x4xf32, #tpu.memory_space<vmem>>, vector<1x4xf32>
    %43 = vector.shape_cast %42 : vector<1x4xf32> to vector<4xf32>
    %44 = vector.shape_cast %43 : vector<4xf32> to vector<1x1x4xf32>
    %45 = vector.broadcast %44 : vector<1x1x4xf32> to vector<16x16x4xf32>
    %46 = arith.addf %41, %45 : vector<16x16x4xf32>
    %cst_37 = arith.constant 0.000000e+00 : f32
    %47 = vector.broadcast %cst_37 : f32 to vector<16x16x4xf32>
    %48 = arith.cmpf ogt, %46, %47 : vector<16x16x4xf32>
    %cst_38 = arith.constant 2.000000e-01 : f32
    %49 = vector.broadcast %cst_38 : f32 to vector<16x16x4xf32>
    %50 = arith.mulf %49, %46 : vector<16x16x4xf32>
    %51 = arith.select %48, %46, %50 : vector<16x16x4xi1>, vector<16x16x4xf32>
    %52 = arith.truncf %51 : vector<16x16x4xf32> to vector<16x16x4xbf16>
    %c1_39 = arith.constant 1 : index
    %c8_40 = arith.constant 8 : index
    %c8_41 = arith.constant 8 : index
    %53 = vector.load %arg13[%c1_39, %c8_40, %c8_41] : memref<18x32x24xbf16, #tpu.memory_space<vmem>>, vector<16x16x4xbf16>
    tpu.vector_store %arg13[%c1_39, %c8_40, %c8_41], %52 {strides = array<i32>} : memref<18x32x24xbf16, #tpu.memory_space<vmem>>, vector<16x16x4xbf16>,
    %cst_42 = arith.constant 0.000000e+00 : f32
    %54 = vector.broadcast %cst_42 : f32 to vector<16x16x4xf32>
    %c0_43 = arith.constant 0 : index
    %c7_44 = arith.constant 7 : index
    %c0_45 = arith.constant 0 : index
    %55 = vector.load %arg13[%c0_43, %c7_44, %c0_45] : memref<18x32x24xbf16, #tpu.memory_space<vmem>>, vector<18x16x12xbf16>
    %c0_46 = arith.constant 0 : index
    %c0_47 = arith.constant 0 : index
    %c0_48 = arith.constant 0 : index
    %56 = vector.load %arg4[%c0_46, %c0_47, %c0_48] : memref<3x12x12xbf16, #tpu.memory_space<vmem>>, vector<1x12x12xbf16>
    %57 = vector.shape_cast %56 : vector<1x12x12xbf16> to vector<12x12xbf16>
    %cst_49 = arith.constant dense<0.000000e+00> : vector<18x16x12xf32>
    %58 = tpu.matmul %55, %57, %cst_49 {dimension_numbers = #tpu.dot_dimension_numbers<[2], [0], [0, 1], [1], [0, 0, 0, 1, 1, 1], [], []>} : vector<18x16x12xbf16>, vector<12x12xbf16>, vector<18x16x12xf32> -> vector<18x16x12xf32>
    %59 = vector.extract_strided_slice %58 {offsets = [0, 0, 0], sizes = [16, 16, 4], strides = [1, 1, 1]} : vector<18x16x12xf32> to vector<16x16x4xf32>
    %60 = arith.addf %54, %59 : vector<16x16x4xf32>
    %61 = vector.extract_strided_slice %58 {offsets = [1, 0, 4], sizes = [16, 16, 4], strides = [1, 1, 1]} : vector<18x16x12xf32> to vector<16x16x4xf32>
    %62 = arith.addf %60, %61 : vector<16x16x4xf32>
    %63 = vector.extract_strided_slice %58 {offsets = [2, 0, 8], sizes = [16, 16, 4], strides = [1, 1, 1]} : vector<18x16x12xf32> to vector<16x16x4xf32>
    %64 = arith.addf %62, %63 : vector<16x16x4xf32>
    %c0_50 = arith.constant 0 : index
    %c8_51 = arith.constant 8 : index
    %c0_52 = arith.constant 0 : index
    %65 = vector.load %arg13[%c0_50, %c8_51, %c0_52] : memref<18x32x24xbf16, #tpu.memory_space<vmem>>, vector<18x16x12xbf16>
    %c1_53 = arith.constant 1 : index
    %c0_54 = arith.constant 0 : index
    %c0_55 = arith.constant 0 : index
    %66 = vector.load %arg4[%c1_53, %c0_54, %c0_55] : memref<3x12x12xbf16, #tpu.memory_space<vmem>>, vector<1x12x12xbf16>
    %67 = vector.shape_cast %66 : vector<1x12x12xbf16> to vector<12x12xbf16>
    %cst_56 = arith.constant dense<0.000000e+00> : vector<18x16x12xf32>
    %68 = tpu.matmul %65, %67, %cst_56 {dimension_numbers = #tpu.dot_dimension_numbers<[2], [0], [0, 1], [1], [0, 0, 0, 1, 1, 1], [], []>} : vector<18x16x12xbf16>, vector<12x12xbf16>, vector<18x16x12xf32> -> vector<18x16x12xf32>
    %69 = vector.extract_strided_slice %68 {offsets = [0, 0, 0], sizes = [16, 16, 4], strides = [1, 1, 1]} : vector<18x16x12xf32> to vector<16x16x4xf32>
    %70 = arith.addf %64, %69 : vector<16x16x4xf32>
    %71 = vector.extract_strided_slice %68 {offsets = [1, 0, 4], sizes = [16, 16, 4], strides = [1, 1, 1]} : vector<18x16x12xf32> to vector<16x16x4xf32>
    %72 = arith.addf %70, %71 : vector<16x16x4xf32>
    %73 = vector.extract_strided_slice %68 {offsets = [2, 0, 8], sizes = [16, 16, 4], strides = [1, 1, 1]} : vector<18x16x12xf32> to vector<16x16x4xf32>
    %74 = arith.addf %72, %73 : vector<16x16x4xf32>
    %c0_57 = arith.constant 0 : index
    %c9_58 = arith.constant 9 : index
    %c0_59 = arith.constant 0 : index
    %75 = vector.load %arg13[%c0_57, %c9_58, %c0_59] : memref<18x32x24xbf16, #tpu.memory_space<vmem>>, vector<18x16x12xbf16>
    %c2_60 = arith.constant 2 : index
    %c0_61 = arith.constant 0 : index
    %c0_62 = arith.constant 0 : index
    %76 = vector.load %arg4[%c2_60, %c0_61, %c0_62] : memref<3x12x12xbf16, #tpu.memory_space<vmem>>, vector<1x12x12xbf16>
    %77 = vector.shape_cast %76 : vector<1x12x12xbf16> to vector<12x12xbf16>
    %cst_63 = arith.constant dense<0.000000e+00> : vector<18x16x12xf32>
    %78 = tpu.matmul %75, %77, %cst_63 {dimension_numbers = #tpu.dot_dimension_numbers<[2], [0], [0, 1], [1], [0, 0, 0, 1, 1, 1], [], []>} : vector<18x16x12xbf16>, vector<12x12xbf16>, vector<18x16x12xf32> -> vector<18x16x12xf32>
    %79 = vector.extract_strided_slice %78 {offsets = [0, 0, 0], sizes = [16, 16, 4], strides = [1, 1, 1]} : vector<18x16x12xf32> to vector<16x16x4xf32>
    %80 = arith.addf %74, %79 : vector<16x16x4xf32>
    %81 = vector.extract_strided_slice %78 {offsets = [1, 0, 4], sizes = [16, 16, 4], strides = [1, 1, 1]} : vector<18x16x12xf32> to vector<16x16x4xf32>
    %82 = arith.addf %80, %81 : vector<16x16x4xf32>
    %83 = vector.extract_strided_slice %78 {offsets = [2, 0, 8], sizes = [16, 16, 4], strides = [1, 1, 1]} : vector<18x16x12xf32> to vector<16x16x4xf32>
    %84 = arith.addf %82, %83 : vector<16x16x4xf32>
    %c0_64 = arith.constant 0 : index
    %c0_65 = arith.constant 0 : index
    %85 = vector.load %arg5[%c0_64, %c0_65] : memref<1x4xf32, #tpu.memory_space<vmem>>, vector<1x4xf32>
    %86 = vector.shape_cast %85 : vector<1x4xf32> to vector<4xf32>
    %87 = vector.shape_cast %86 : vector<4xf32> to vector<1x1x4xf32>
    %88 = vector.broadcast %87 : vector<1x1x4xf32> to vector<16x16x4xf32>
    %89 = arith.addf %84, %88 : vector<16x16x4xf32>
    %cst_66 = arith.constant 0.000000e+00 : f32
    %90 = vector.broadcast %cst_66 : f32 to vector<16x16x4xf32>
    %91 = arith.cmpf ogt, %89, %90 : vector<16x16x4xf32>
    %cst_67 = arith.constant 2.000000e-01 : f32
    %92 = vector.broadcast %cst_67 : f32 to vector<16x16x4xf32>
    %93 = arith.mulf %92, %89 : vector<16x16x4xf32>
    %94 = arith.select %91, %89, %93 : vector<16x16x4xi1>, vector<16x16x4xf32>
    %95 = arith.truncf %94 : vector<16x16x4xf32> to vector<16x16x4xbf16>
    %c1_68 = arith.constant 1 : index
    %c8_69 = arith.constant 8 : index
    %c12 = arith.constant 12 : index
    %96 = vector.load %arg13[%c1_68, %c8_69, %c12] : memref<18x32x24xbf16, #tpu.memory_space<vmem>>, vector<16x16x4xbf16>
    tpu.vector_store %arg13[%c1_68, %c8_69, %c12], %95 {strides = array<i32>} : memref<18x32x24xbf16, #tpu.memory_space<vmem>>, vector<16x16x4xbf16>,
    %cst_70 = arith.constant 0.000000e+00 : f32
    %97 = vector.broadcast %cst_70 : f32 to vector<16x16x4xf32>
    %c0_71 = arith.constant 0 : index
    %c7_72 = arith.constant 7 : index
    %c0_73 = arith.constant 0 : index
    %98 = vector.load %arg13[%c0_71, %c7_72, %c0_73] : memref<18x32x24xbf16, #tpu.memory_space<vmem>>, vector<18x16x16xbf16>
    %c0_74 = arith.constant 0 : index
    %c0_75 = arith.constant 0 : index
    %c0_76 = arith.constant 0 : index
    %99 = vector.load %arg6[%c0_74, %c0_75, %c0_76] : memref<3x16x12xbf16, #tpu.memory_space<vmem>>, vector<1x16x12xbf16>
    %100 = vector.shape_cast %99 : vector<1x16x12xbf16> to vector<16x12xbf16>
    %cst_77 = arith.constant dense<0.000000e+00> : vector<18x16x12xf32>
    %101 = tpu.matmul %98, %100, %cst_77 {dimension_numbers = #tpu.dot_dimension_numbers<[2], [0], [0, 1], [1], [0, 0, 0, 1, 1, 1], [], []>} : vector<18x16x16xbf16>, vector<16x12xbf16>, vector<18x16x12xf32> -> vector<18x16x12xf32>
    %102 = vector.extract_strided_slice %101 {offsets = [0, 0, 0], sizes = [16, 16, 4], strides = [1, 1, 1]} : vector<18x16x12xf32> to vector<16x16x4xf32>
    %103 = arith.addf %97, %102 : vector<16x16x4xf32>
    %104 = vector.extract_strided_slice %101 {offsets = [1, 0, 4], sizes = [16, 16, 4], strides = [1, 1, 1]} : vector<18x16x12xf32> to vector<16x16x4xf32>
    %105 = arith.addf %103, %104 : vector<16x16x4xf32>
    %106 = vector.extract_strided_slice %101 {offsets = [2, 0, 8], sizes = [16, 16, 4], strides = [1, 1, 1]} : vector<18x16x12xf32> to vector<16x16x4xf32>
    %107 = arith.addf %105, %106 : vector<16x16x4xf32>
    %c0_78 = arith.constant 0 : index
    %c8_79 = arith.constant 8 : index
    %c0_80 = arith.constant 0 : index
    %108 = vector.load %arg13[%c0_78, %c8_79, %c0_80] : memref<18x32x24xbf16, #tpu.memory_space<vmem>>, vector<18x16x16xbf16>
    %c1_81 = arith.constant 1 : index
    %c0_82 = arith.constant 0 : index
    %c0_83 = arith.constant 0 : index
    %109 = vector.load %arg6[%c1_81, %c0_82, %c0_83] : memref<3x16x12xbf16, #tpu.memory_space<vmem>>, vector<1x16x12xbf16>
    %110 = vector.shape_cast %109 : vector<1x16x12xbf16> to vector<16x12xbf16>
    %cst_84 = arith.constant dense<0.000000e+00> : vector<18x16x12xf32>
    %111 = tpu.matmul %108, %110, %cst_84 {dimension_numbers = #tpu.dot_dimension_numbers<[2], [0], [0, 1], [1], [0, 0, 0, 1, 1, 1], [], []>} : vector<18x16x16xbf16>, vector<16x12xbf16>, vector<18x16x12xf32> -> vector<18x16x12xf32>
    %112 = vector.extract_strided_slice %111 {offsets = [0, 0, 0], sizes = [16, 16, 4], strides = [1, 1, 1]} : vector<18x16x12xf32> to vector<16x16x4xf32>
    %113 = arith.addf %107, %112 : vector<16x16x4xf32>
    %114 = vector.extract_strided_slice %111 {offsets = [1, 0, 4], sizes = [16, 16, 4], strides = [1, 1, 1]} : vector<18x16x12xf32> to vector<16x16x4xf32>
    %115 = arith.addf %113, %114 : vector<16x16x4xf32>
    %116 = vector.extract_strided_slice %111 {offsets = [2, 0, 8], sizes = [16, 16, 4], strides = [1, 1, 1]} : vector<18x16x12xf32> to vector<16x16x4xf32>
    %117 = arith.addf %115, %116 : vector<16x16x4xf32>
    %c0_85 = arith.constant 0 : index
    %c9_86 = arith.constant 9 : index
    %c0_87 = arith.constant 0 : index
    %118 = vector.load %arg13[%c0_85, %c9_86, %c0_87] : memref<18x32x24xbf16, #tpu.memory_space<vmem>>, vector<18x16x16xbf16>
    %c2_88 = arith.constant 2 : index
    %c0_89 = arith.constant 0 : index
    %c0_90 = arith.constant 0 : index
    %119 = vector.load %arg6[%c2_88, %c0_89, %c0_90] : memref<3x16x12xbf16, #tpu.memory_space<vmem>>, vector<1x16x12xbf16>
    %120 = vector.shape_cast %119 : vector<1x16x12xbf16> to vector<16x12xbf16>
    %cst_91 = arith.constant dense<0.000000e+00> : vector<18x16x12xf32>
    %121 = tpu.matmul %118, %120, %cst_91 {dimension_numbers = #tpu.dot_dimension_numbers<[2], [0], [0, 1], [1], [0, 0, 0, 1, 1, 1], [], []>} : vector<18x16x16xbf16>, vector<16x12xbf16>, vector<18x16x12xf32> -> vector<18x16x12xf32>
    %122 = vector.extract_strided_slice %121 {offsets = [0, 0, 0], sizes = [16, 16, 4], strides = [1, 1, 1]} : vector<18x16x12xf32> to vector<16x16x4xf32>
    %123 = arith.addf %117, %122 : vector<16x16x4xf32>
    %124 = vector.extract_strided_slice %121 {offsets = [1, 0, 4], sizes = [16, 16, 4], strides = [1, 1, 1]} : vector<18x16x12xf32> to vector<16x16x4xf32>
    %125 = arith.addf %123, %124 : vector<16x16x4xf32>
    %126 = vector.extract_strided_slice %121 {offsets = [2, 0, 8], sizes = [16, 16, 4], strides = [1, 1, 1]} : vector<18x16x12xf32> to vector<16x16x4xf32>
    %127 = arith.addf %125, %126 : vector<16x16x4xf32>
    %c0_92 = arith.constant 0 : index
    %c0_93 = arith.constant 0 : index
    %128 = vector.load %arg7[%c0_92, %c0_93] : memref<1x4xf32, #tpu.memory_space<vmem>>, vector<1x4xf32>
    %129 = vector.shape_cast %128 : vector<1x4xf32> to vector<4xf32>
    %130 = vector.shape_cast %129 : vector<4xf32> to vector<1x1x4xf32>
    %131 = vector.broadcast %130 : vector<1x1x4xf32> to vector<16x16x4xf32>
    %132 = arith.addf %127, %131 : vector<16x16x4xf32>
    %cst_94 = arith.constant 0.000000e+00 : f32
    %133 = vector.broadcast %cst_94 : f32 to vector<16x16x4xf32>
    %134 = arith.cmpf ogt, %132, %133 : vector<16x16x4xf32>
    %cst_95 = arith.constant 2.000000e-01 : f32
    %135 = vector.broadcast %cst_95 : f32 to vector<16x16x4xf32>
    %136 = arith.mulf %135, %132 : vector<16x16x4xf32>
    %137 = arith.select %134, %132, %136 : vector<16x16x4xi1>, vector<16x16x4xf32>
    %138 = arith.truncf %137 : vector<16x16x4xf32> to vector<16x16x4xbf16>
    %c1_96 = arith.constant 1 : index
    %c8_97 = arith.constant 8 : index
    %c16 = arith.constant 16 : index
    %139 = vector.load %arg13[%c1_96, %c8_97, %c16] : memref<18x32x24xbf16, #tpu.memory_space<vmem>>, vector<16x16x4xbf16>
    tpu.vector_store %arg13[%c1_96, %c8_97, %c16], %138 {strides = array<i32>} : memref<18x32x24xbf16, #tpu.memory_space<vmem>>, vector<16x16x4xbf16>,
    %cst_98 = arith.constant 0.000000e+00 : f32
    %140 = vector.broadcast %cst_98 : f32 to vector<16x16x4xf32>
    %c0_99 = arith.constant 0 : index
    %c7_100 = arith.constant 7 : index
    %c0_101 = arith.constant 0 : index
    %141 = vector.load %arg13[%c0_99, %c7_100, %c0_101] : memref<18x32x24xbf16, #tpu.memory_space<vmem>>, vector<18x16x20xbf16>
    %c0_102 = arith.constant 0 : index
    %c0_103 = arith.constant 0 : index
    %c0_104 = arith.constant 0 : index
    %142 = vector.load %arg8[%c0_102, %c0_103, %c0_104] : memref<3x20x12xbf16, #tpu.memory_space<vmem>>, vector<1x20x12xbf16>
    %143 = vector.shape_cast %142 : vector<1x20x12xbf16> to vector<20x12xbf16>
    %cst_105 = arith.constant dense<0.000000e+00> : vector<18x16x12xf32>
    %144 = tpu.matmul %141, %143, %cst_105 {dimension_numbers = #tpu.dot_dimension_numbers<[2], [0], [0, 1], [1], [0, 0, 0, 1, 1, 1], [], []>} : vector<18x16x20xbf16>, vector<20x12xbf16>, vector<18x16x12xf32> -> vector<18x16x12xf32>
    %145 = vector.extract_strided_slice %144 {offsets = [0, 0, 0], sizes = [16, 16, 4], strides = [1, 1, 1]} : vector<18x16x12xf32> to vector<16x16x4xf32>
    %146 = arith.addf %140, %145 : vector<16x16x4xf32>
    %147 = vector.extract_strided_slice %144 {offsets = [1, 0, 4], sizes = [16, 16, 4], strides = [1, 1, 1]} : vector<18x16x12xf32> to vector<16x16x4xf32>
    %148 = arith.addf %146, %147 : vector<16x16x4xf32>
    %149 = vector.extract_strided_slice %144 {offsets = [2, 0, 8], sizes = [16, 16, 4], strides = [1, 1, 1]} : vector<18x16x12xf32> to vector<16x16x4xf32>
    %150 = arith.addf %148, %149 : vector<16x16x4xf32>
    %c0_106 = arith.constant 0 : index
    %c8_107 = arith.constant 8 : index
    %c0_108 = arith.constant 0 : index
    %151 = vector.load %arg13[%c0_106, %c8_107, %c0_108] : memref<18x32x24xbf16, #tpu.memory_space<vmem>>, vector<18x16x20xbf16>
    %c1_109 = arith.constant 1 : index
    %c0_110 = arith.constant 0 : index
    %c0_111 = arith.constant 0 : index
    %152 = vector.load %arg8[%c1_109, %c0_110, %c0_111] : memref<3x20x12xbf16, #tpu.memory_space<vmem>>, vector<1x20x12xbf16>
    %153 = vector.shape_cast %152 : vector<1x20x12xbf16> to vector<20x12xbf16>
    %cst_112 = arith.constant dense<0.000000e+00> : vector<18x16x12xf32>
    %154 = tpu.matmul %151, %153, %cst_112 {dimension_numbers = #tpu.dot_dimension_numbers<[2], [0], [0, 1], [1], [0, 0, 0, 1, 1, 1], [], []>} : vector<18x16x20xbf16>, vector<20x12xbf16>, vector<18x16x12xf32> -> vector<18x16x12xf32>
    %155 = vector.extract_strided_slice %154 {offsets = [0, 0, 0], sizes = [16, 16, 4], strides = [1, 1, 1]} : vector<18x16x12xf32> to vector<16x16x4xf32>
    %156 = arith.addf %150, %155 : vector<16x16x4xf32>
    %157 = vector.extract_strided_slice %154 {offsets = [1, 0, 4], sizes = [16, 16, 4], strides = [1, 1, 1]} : vector<18x16x12xf32> to vector<16x16x4xf32>
    %158 = arith.addf %156, %157 : vector<16x16x4xf32>
    %159 = vector.extract_strided_slice %154 {offsets = [2, 0, 8], sizes = [16, 16, 4], strides = [1, 1, 1]} : vector<18x16x12xf32> to vector<16x16x4xf32>
    %160 = arith.addf %158, %159 : vector<16x16x4xf32>
    %c0_113 = arith.constant 0 : index
    %c9_114 = arith.constant 9 : index
    %c0_115 = arith.constant 0 : index
    %161 = vector.load %arg13[%c0_113, %c9_114, %c0_115] : memref<18x32x24xbf16, #tpu.memory_space<vmem>>, vector<18x16x20xbf16>
    %c2_116 = arith.constant 2 : index
    %c0_117 = arith.constant 0 : index
    %c0_118 = arith.constant 0 : index
    %162 = vector.load %arg8[%c2_116, %c0_117, %c0_118] : memref<3x20x12xbf16, #tpu.memory_space<vmem>>, vector<1x20x12xbf16>
    %163 = vector.shape_cast %162 : vector<1x20x12xbf16> to vector<20x12xbf16>
    %cst_119 = arith.constant dense<0.000000e+00> : vector<18x16x12xf32>
    %164 = tpu.matmul %161, %163, %cst_119 {dimension_numbers = #tpu.dot_dimension_numbers<[2], [0], [0, 1], [1], [0, 0, 0, 1, 1, 1], [], []>} : vector<18x16x20xbf16>, vector<20x12xbf16>, vector<18x16x12xf32> -> vector<18x16x12xf32>
    %165 = vector.extract_strided_slice %164 {offsets = [0, 0, 0], sizes = [16, 16, 4], strides = [1, 1, 1]} : vector<18x16x12xf32> to vector<16x16x4xf32>
    %166 = arith.addf %160, %165 : vector<16x16x4xf32>
    %167 = vector.extract_strided_slice %164 {offsets = [1, 0, 4], sizes = [16, 16, 4], strides = [1, 1, 1]} : vector<18x16x12xf32> to vector<16x16x4xf32>
    %168 = arith.addf %166, %167 : vector<16x16x4xf32>
    %169 = vector.extract_strided_slice %164 {offsets = [2, 0, 8], sizes = [16, 16, 4], strides = [1, 1, 1]} : vector<18x16x12xf32> to vector<16x16x4xf32>
    %170 = arith.addf %168, %169 : vector<16x16x4xf32>
    %c0_120 = arith.constant 0 : index
    %c0_121 = arith.constant 0 : index
    %171 = vector.load %arg9[%c0_120, %c0_121] : memref<1x4xf32, #tpu.memory_space<vmem>>, vector<1x4xf32>
    %172 = vector.shape_cast %171 : vector<1x4xf32> to vector<4xf32>
    %173 = vector.shape_cast %172 : vector<4xf32> to vector<1x1x4xf32>
    %174 = vector.broadcast %173 : vector<1x1x4xf32> to vector<16x16x4xf32>
    %175 = arith.addf %170, %174 : vector<16x16x4xf32>
    %cst_122 = arith.constant 0.000000e+00 : f32
    %176 = vector.broadcast %cst_122 : f32 to vector<16x16x4xf32>
    %177 = arith.cmpf ogt, %175, %176 : vector<16x16x4xf32>
    %cst_123 = arith.constant 2.000000e-01 : f32
    %178 = vector.broadcast %cst_123 : f32 to vector<16x16x4xf32>
    %179 = arith.mulf %178, %175 : vector<16x16x4xf32>
    %180 = arith.select %177, %175, %179 : vector<16x16x4xi1>, vector<16x16x4xf32>
    %181 = arith.truncf %180 : vector<16x16x4xf32> to vector<16x16x4xbf16>
    %c1_124 = arith.constant 1 : index
    %c8_125 = arith.constant 8 : index
    %c20 = arith.constant 20 : index
    %182 = vector.load %arg13[%c1_124, %c8_125, %c20] : memref<18x32x24xbf16, #tpu.memory_space<vmem>>, vector<16x16x4xbf16>
    tpu.vector_store %arg13[%c1_124, %c8_125, %c20], %181 {strides = array<i32>} : memref<18x32x24xbf16, #tpu.memory_space<vmem>>, vector<16x16x4xbf16>,
    %cst_126 = arith.constant 0.000000e+00 : f32
    %183 = vector.broadcast %cst_126 : f32 to vector<16x16x8xf32>
    %c0_127 = arith.constant 0 : index
    %c7_128 = arith.constant 7 : index
    %c0_129 = arith.constant 0 : index
    %184 = vector.load %arg13[%c0_127, %c7_128, %c0_129] : memref<18x32x24xbf16, #tpu.memory_space<vmem>>, vector<18x16x24xbf16>
    %c0_130 = arith.constant 0 : index
    %c0_131 = arith.constant 0 : index
    %c0_132 = arith.constant 0 : index
    %185 = vector.load %arg10[%c0_130, %c0_131, %c0_132] : memref<3x24x24xbf16, #tpu.memory_space<vmem>>, vector<1x24x24xbf16>
    %186 = vector.shape_cast %185 : vector<1x24x24xbf16> to vector<24x24xbf16>
    %cst_133 = arith.constant dense<0.000000e+00> : vector<18x16x24xf32>
    %187 = tpu.matmul %184, %186, %cst_133 {dimension_numbers = #tpu.dot_dimension_numbers<[2], [0], [0, 1], [1], [0, 0, 0, 1, 1, 1], [], []>} : vector<18x16x24xbf16>, vector<24x24xbf16>, vector<18x16x24xf32> -> vector<18x16x24xf32>
    %188 = vector.extract_strided_slice %187 {offsets = [0, 0, 0], sizes = [16, 16, 8], strides = [1, 1, 1]} : vector<18x16x24xf32> to vector<16x16x8xf32>
    %189 = arith.addf %183, %188 : vector<16x16x8xf32>
    %190 = vector.extract_strided_slice %187 {offsets = [1, 0, 8], sizes = [16, 16, 8], strides = [1, 1, 1]} : vector<18x16x24xf32> to vector<16x16x8xf32>
    %191 = arith.addf %189, %190 : vector<16x16x8xf32>
    %192 = vector.extract_strided_slice %187 {offsets = [2, 0, 16], sizes = [16, 16, 8], strides = [1, 1, 1]} : vector<18x16x24xf32> to vector<16x16x8xf32>
    %193 = arith.addf %191, %192 : vector<16x16x8xf32>
    %c0_134 = arith.constant 0 : index
    %c8_135 = arith.constant 8 : index
    %c0_136 = arith.constant 0 : index
    %194 = vector.load %arg13[%c0_134, %c8_135, %c0_136] : memref<18x32x24xbf16, #tpu.memory_space<vmem>>, vector<18x16x24xbf16>
    %c1_137 = arith.constant 1 : index
    %c0_138 = arith.constant 0 : index
    %c0_139 = arith.constant 0 : index
    %195 = vector.load %arg10[%c1_137, %c0_138, %c0_139] : memref<3x24x24xbf16, #tpu.memory_space<vmem>>, vector<1x24x24xbf16>
    %196 = vector.shape_cast %195 : vector<1x24x24xbf16> to vector<24x24xbf16>
    %cst_140 = arith.constant dense<0.000000e+00> : vector<18x16x24xf32>
    %197 = tpu.matmul %194, %196, %cst_140 {dimension_numbers = #tpu.dot_dimension_numbers<[2], [0], [0, 1], [1], [0, 0, 0, 1, 1, 1], [], []>} : vector<18x16x24xbf16>, vector<24x24xbf16>, vector<18x16x24xf32> -> vector<18x16x24xf32>
    %198 = vector.extract_strided_slice %197 {offsets = [0, 0, 0], sizes = [16, 16, 8], strides = [1, 1, 1]} : vector<18x16x24xf32> to vector<16x16x8xf32>
    %199 = arith.addf %193, %198 : vector<16x16x8xf32>
    %200 = vector.extract_strided_slice %197 {offsets = [1, 0, 8], sizes = [16, 16, 8], strides = [1, 1, 1]} : vector<18x16x24xf32> to vector<16x16x8xf32>
    %201 = arith.addf %199, %200 : vector<16x16x8xf32>
    %202 = vector.extract_strided_slice %197 {offsets = [2, 0, 16], sizes = [16, 16, 8], strides = [1, 1, 1]} : vector<18x16x24xf32> to vector<16x16x8xf32>
    %203 = arith.addf %201, %202 : vector<16x16x8xf32>
    %c0_141 = arith.constant 0 : index
    %c9_142 = arith.constant 9 : index
    %c0_143 = arith.constant 0 : index
    %204 = vector.load %arg13[%c0_141, %c9_142, %c0_143] : memref<18x32x24xbf16, #tpu.memory_space<vmem>>, vector<18x16x24xbf16>
    %c2_144 = arith.constant 2 : index
    %c0_145 = arith.constant 0 : index
    %c0_146 = arith.constant 0 : index
    %205 = vector.load %arg10[%c2_144, %c0_145, %c0_146] : memref<3x24x24xbf16, #tpu.memory_space<vmem>>, vector<1x24x24xbf16>
    %206 = vector.shape_cast %205 : vector<1x24x24xbf16> to vector<24x24xbf16>
    %cst_147 = arith.constant dense<0.000000e+00> : vector<18x16x24xf32>
    %207 = tpu.matmul %204, %206, %cst_147 {dimension_numbers = #tpu.dot_dimension_numbers<[2], [0], [0, 1], [1], [0, 0, 0, 1, 1, 1], [], []>} : vector<18x16x24xbf16>, vector<24x24xbf16>, vector<18x16x24xf32> -> vector<18x16x24xf32>
    %208 = vector.extract_strided_slice %207 {offsets = [0, 0, 0], sizes = [16, 16, 8], strides = [1, 1, 1]} : vector<18x16x24xf32> to vector<16x16x8xf32>
    %209 = arith.addf %203, %208 : vector<16x16x8xf32>
    %210 = vector.extract_strided_slice %207 {offsets = [1, 0, 8], sizes = [16, 16, 8], strides = [1, 1, 1]} : vector<18x16x24xf32> to vector<16x16x8xf32>
    %211 = arith.addf %209, %210 : vector<16x16x8xf32>
    %212 = vector.extract_strided_slice %207 {offsets = [2, 0, 16], sizes = [16, 16, 8], strides = [1, 1, 1]} : vector<18x16x24xf32> to vector<16x16x8xf32>
    %213 = arith.addf %211, %212 : vector<16x16x8xf32>
    %c0_148 = arith.constant 0 : index
    %c0_149 = arith.constant 0 : index
    %214 = vector.load %arg11[%c0_148, %c0_149] : memref<1x8xf32, #tpu.memory_space<vmem>>, vector<1x8xf32>
    %215 = vector.shape_cast %214 : vector<1x8xf32> to vector<8xf32>
    %216 = vector.shape_cast %215 : vector<8xf32> to vector<1x1x8xf32>
    %217 = vector.broadcast %216 : vector<1x1x8xf32> to vector<16x16x8xf32>
    %218 = arith.addf %213, %217 : vector<16x16x8xf32>
    %c1_150 = arith.constant 1 : index
    %c8_151 = arith.constant 8 : index
    %c0_152 = arith.constant 0 : index
    %219 = vector.load %arg13[%c1_150, %c8_151, %c0_152] : memref<18x32x24xbf16, #tpu.memory_space<vmem>>, vector<16x16x8xbf16>
    %220 = arith.extf %219 : vector<16x16x8xbf16> to vector<16x16x8xf32>
    %cst_153 = arith.constant 2.000000e-01 : f32
    %221 = vector.broadcast %cst_153 : f32 to vector<16x16x8xf32>
    %222 = arith.mulf %218, %221 : vector<16x16x8xf32>
    %223 = arith.addf %222, %220 : vector<16x16x8xf32>
    %c0_154 = arith.constant 0 : index
    %c0_155 = arith.constant 0 : index
    %c0_156 = arith.constant 0 : index
    %c0_157 = arith.constant 0 : index
    %224 = vector.load %arg12[%c0_154, %c0_155, %c0_156, %c0_157] : memref<1x16x16x8xf32, #tpu.memory_space<vmem>>, vector<1x16x16x8xf32>
    %225 = vector.shape_cast %224 : vector<1x16x16x8xf32> to vector<16x16x8xf32>
    %226 = vector.shape_cast %223 : vector<16x16x8xf32> to vector<1x16x16x8xf32>
    tpu.vector_store %arg12[%c0_154, %c0_155, %c0_156, %c0_157], %226 {strides = array<i32>} : memref<1x16x16x8xf32, #tpu.memory_space<vmem>>, vector<1x16x16x8xf32>,
    return
  }
  func.func @transform_0(%arg0: i32) -> (i32, i32, i32, i32) {
    %c0_i32 = arith.constant 0 : i32
    %c0_i32_0 = arith.constant 0 : i32
    %c0_i32_1 = arith.constant 0 : i32
    %c0_i32_2 = arith.constant 0 : i32
    return %arg0, %c0_i32, %c0_i32_0, %c0_i32_1 : i32, i32, i32, i32
  }
  func.func @transform_1(%arg0: i32) -> (i32, i32, i32) {
    %c0_i32 = arith.constant 0 : i32
    %c0_i32_0 = arith.constant 0 : i32
    %c0_i32_1 = arith.constant 0 : i32
    %c0_i32_2 = arith.constant 0 : i32
    return %c0_i32, %c0_i32_0, %c0_i32_1 : i32, i32, i32
  }
  func.func @transform_2(%arg0: i32) -> (i32, i32) {
    %c0_i32 = arith.constant 0 : i32
    %c0_i32_0 = arith.constant 0 : i32
    %c0_i32_1 = arith.constant 0 : i32
    return %c0_i32, %c0_i32_0 : i32, i32
  }
  func.func @transform_3(%arg0: i32) -> (i32, i32, i32) {
    %c0_i32 = arith.constant 0 : i32
    %c0_i32_0 = arith.constant 0 : i32
    %c0_i32_1 = arith.constant 0 : i32
    %c0_i32_2 = arith.constant 0 : i32
    return %c0_i32, %c0_i32_0, %c0_i32_1 : i32, i32, i32
  }
  func.func @transform_4(%arg0: i32) -> (i32, i32) {
    %c0_i32 = arith.constant 0 : i32
    %c0_i32_0 = arith.constant 0 : i32
    %c0_i32_1 = arith.constant 0 : i32
    return %c0_i32, %c0_i32_0 : i32, i32
  }
  func.func @transform_5(%arg0: i32) -> (i32, i32, i32) {
    %c0_i32 = arith.constant 0 : i32
    %c0_i32_0 = arith.constant 0 : i32
    %c0_i32_1 = arith.constant 0 : i32
    %c0_i32_2 = arith.constant 0 : i32
    return %c0_i32, %c0_i32_0, %c0_i32_1 : i32, i32, i32
  }
  func.func @transform_6(%arg0: i32) -> (i32, i32) {
    %c0_i32 = arith.constant 0 : i32
    %c0_i32_0 = arith.constant 0 : i32
    %c0_i32_1 = arith.constant 0 : i32
    return %c0_i32, %c0_i32_0 : i32, i32
  }
  func.func @transform_7(%arg0: i32) -> (i32, i32, i32) {
    %c0_i32 = arith.constant 0 : i32
    %c0_i32_0 = arith.constant 0 : i32
    %c0_i32_1 = arith.constant 0 : i32
    %c0_i32_2 = arith.constant 0 : i32
    return %c0_i32, %c0_i32_0, %c0_i32_1 : i32, i32, i32
  }
  func.func @transform_8(%arg0: i32) -> (i32, i32) {
    %c0_i32 = arith.constant 0 : i32
    %c0_i32_0 = arith.constant 0 : i32
    %c0_i32_1 = arith.constant 0 : i32
    return %c0_i32, %c0_i32_0 : i32, i32
  }
  func.func @transform_9(%arg0: i32) -> (i32, i32, i32) {
    %c0_i32 = arith.constant 0 : i32
    %c0_i32_0 = arith.constant 0 : i32
    %c0_i32_1 = arith.constant 0 : i32
    %c0_i32_2 = arith.constant 0 : i32
    return %c0_i32, %c0_i32_0, %c0_i32_1 : i32, i32, i32
  }
  func.func @transform_10(%arg0: i32) -> (i32, i32) {
    %c0_i32 = arith.constant 0 : i32
    %c0_i32_0 = arith.constant 0 : i32
    %c0_i32_1 = arith.constant 0 : i32
    return %c0_i32, %c0_i32_0 : i32, i32
  }
  func.func @transform_11(%arg0: i32) -> (i32, i32, i32, i32) {
    %c0_i32 = arith.constant 0 : i32
    %c0_i32_0 = arith.constant 0 : i32
    %c0_i32_1 = arith.constant 0 : i32
    %c0_i32_2 = arith.constant 0 : i32
    return %arg0, %c0_i32, %c0_i32_0, %c0_i32_1 : i32, i32, i32, i32
  }
}

</mosaic_0001>

<llo_original>
// kernel: tpu_custom_call.1
$region0: #{tpu_custom_call.1}
  #allocation0 [shape = 'u32[]', space=smem, size = 0x4, offset = 0x4, fixed_abs, tag = 'smem constant byte address 0x4 - core index']
  #allocation1 [shape = 'u32[144,128]{1,0:T(1,128)}', space=vmem, size = 0x12000, scoped, tag = 'internal scratch']
  #allocation2 [shape = 'bf16[18,32,24]{2,1,0:T(16,128)(2,1)}', space=vmem, size = 0x24000, scoped, tag = 'scratch operand']
  %s0 = inlined_call_operand.vmem [shape: f32[2,16,16,8], index: 0, kind: input, shape index: {}]
  %s1 = inlined_call_operand.vmem [shape: bf16[3,8,12], index: 1, kind: input, shape index: {}]
  %s2 = inlined_call_operand.vmem [shape: f32[1,4], index: 2, kind: input, shape index: {}]
  %s3 = inlined_call_operand.vmem [shape: bf16[3,12,12], index: 3, kind: input, shape index: {}]
  %s4 = inlined_call_operand.vmem [shape: f32[1,4], index: 4, kind: input, shape index: {}]
  %s5 = inlined_call_operand.vmem [shape: bf16[3,16,12], index: 5, kind: input, shape index: {}]
  %s6 = inlined_call_operand.vmem [shape: f32[1,4], index: 6, kind: input, shape index: {}]
  %s7 = inlined_call_operand.vmem [shape: bf16[3,20,12], index: 7, kind: input, shape index: {}]
  %s8 = inlined_call_operand.vmem [shape: f32[1,4], index: 8, kind: input, shape index: {}]
  %s9 = inlined_call_operand.vmem [shape: bf16[3,24,24], index: 9, kind: input, shape index: {}]
  %s10 = inlined_call_operand.vmem [shape: f32[1,8], index: 10, kind: input, shape index: {}]
  %s11 = inlined_call_operand.vmem [shape: f32[2,16,16,8], index: 11, kind: output, shape index: {}]
  %s12 = sld [smem:[#allocation0]]
  $region77: #{tpu_custom_call.1} parent=0
    _
  %s14 = ssub.s32 1, %s12
  %s15 = scalar_select 0, %s14, %s12
  loop: start=0, step=1, limit=4
  $region2: #{tpu_custom_call.1} parent=0 // loop_pre_header
    _
  $region3: #{tpu_custom_call.1} parent=0 // loop_header
    %s17 = sphi 0, %s21
    %p18 = scmp.ge.s32.totalorder %s17, 4
    %s27 = sphi 0, %s29
    %s30 = sphi 0, %s27
    %s31 = sphi 0, %s30
    %s47 = sphi 0, %s31
    %s51 = sphi 0, %s51
    %s53 = sphi 0, %s51
    %s54 = sphi 0, %s53
    %s68 = sphi 0, %s54
    %s72 = sphi 0, %s72
    %s74 = sphi 0, %s72
    %s75 = sphi 0, %s74
    %s89 = sphi 0, %s75
    %s93 = sphi 0, %s93
    %s95 = sphi 0, %s93
    %s96 = sphi 0, %s95
    %s110 = sphi 0, %s96
    %s114 = sphi 0, %s114
    %s116 = sphi 0, %s114
    %s117 = sphi 0, %s116
    %s131 = sphi 0, %s117
    %s135 = sphi 0, %s135
    %s137 = sphi 0, %s135
    %s138 = sphi 0, %s137
    %s152 = sphi 0, %s138
    %s156 = sphi 0, %s156
    %s158 = sphi 0, %s156
    %s159 = sphi 0, %s158
    %s173 = sphi 0, %s159
    %s177 = sphi 0, %s177
    %s179 = sphi 0, %s177
    %s180 = sphi 0, %s179
    %s194 = sphi 0, %s180
    %s198 = sphi 0, %s198
    %s200 = sphi 0, %s198
    %s201 = sphi 0, %s200
    %s215 = sphi 0, %s201
    %s219 = sphi 0, %s219
    %s221 = sphi 0, %s219
    %s222 = sphi 0, %s221
    %s236 = sphi 0, %s222
    %s240 = sphi 0, %s240
    %s242 = sphi 0, %s240
    %s243 = sphi 0, %s242
    %s257 = sphi 0, %s243
    %s263 = sphi 0, %s265
    %s266 = sphi 0, %s263
    %s267 = sphi 0, %s266
    %s283 = sphi 0, %s267
  $region4: #{tpu_custom_call.1} parent=0 // loop_header_branch
    %20 = sbr.rel (%p18) target = $region8
  $region5: #{tpu_custom_call.1} parent=0 // loop_body
    %s22 = ssub.s32 %s17, 1
    %s23 = ssub.s32 %s17, 2
    %s24 = sadd.s32 %s17, 1
    %s25 = ssub.s32 %s17, %s24
    %p26 = scmp.eq.s32.totalorder %s25, 0
    %s28 = sadd.s32 %s27, 1
    %s29 = scalar_select %p26, %s27, %s28
    %p32 = pneg %p26
    %p33 = scmp.eq.s32.totalorder %s17, 1
    %p34 = por %p32, %p33
    %p35 = scmp.ne.s32.totalorder %s27, %s30
    %p36 = scmp.eq.s32.totalorder %s17, 0
    %p37 = por %p35, %p36
    %p38 = scmp.ne.s32.totalorder %s27, %s30
    %p39 = scmp.eq.s32.totalorder %s22, 1
    %p40 = por %p38, %p39
    %p41 = scmp.ne.s32.totalorder %s30, %s31
    %p42 = scmp.eq.s32.totalorder %s22, 0
    %p43 = por %p41, %p42
    %p44 = scmp.ne.s32.totalorder %s30, %s31
    %p45 = scmp.eq.s32.totalorder %s23, 1
    %p46 = por %p44, %p45
    %p48 = scmp.ne.s32.totalorder %s31, %s47
    %p49 = scmp.eq.s32.totalorder %s23, 0
    %p50 = por %p48, %p49
    %s52 = sadd.s32 %s51, 1
    %p55 = scmp.eq.s32.totalorder %s17, 1
    %p56 = scmp.ne.s32.totalorder %s51, %s53
    %p57 = scmp.eq.s32.totalorder %s17, 0
    %p58 = por %p56, %p57
    %p59 = scmp.ne.s32.totalorder %s51, %s53
    %p60 = scmp.eq.s32.totalorder %s22, 1
    %p61 = por %p59, %p60
    %p62 = scmp.ne.s32.totalorder %s53, %s54
    %p63 = scmp.eq.s32.totalorder %s22, 0
    %p64 = por %p62, %p63
    %p65 = scmp.ne.s32.totalorder %s53, %s54
    %p66 = scmp.eq.s32.totalorder %s23, 1
    %p67 = por %p65, %p66
    %p69 = scmp.ne.s32.totalorder %s54, %s68
    %p70 = scmp.eq.s32.totalorder %s23, 0
    %p71 = por %p69, %p70
    %s73 = sadd.s32 %s72, 1
    %p76 = scmp.eq.s32.totalorder %s17, 1
    %p77 = scmp.ne.s32.totalorder %s72, %s74
    %p78 = scmp.eq.s32.totalorder %s17, 0
    %p79 = por %p77, %p78
    %p80 = scmp.ne.s32.totalorder %s72, %s74
    %p81 = scmp.eq.s32.totalorder %s22, 1
    %p82 = por %p80, %p81
    %p83 = scmp.ne.s32.totalorder %s74, %s75
    %p84 = scmp.eq.s32.totalorder %s22, 0
    %p85 = por %p83, %p84
    %p86 = scmp.ne.s32.totalorder %s74, %s75
    %p87 = scmp.eq.s32.totalorder %s23, 1
    %p88 = por %p86, %p87
    %p90 = scmp.ne.s32.totalorder %s75, %s89
    %p91 = scmp.eq.s32.totalorder %s23, 0
    %p92 = por %p90, %p91
    %s94 = sadd.s32 %s93, 1
    %p97 = scmp.eq.s32.totalorder %s17, 1
    %p98 = scmp.ne.s32.totalorder %s93, %s95
    %p99 = scmp.eq.s32.totalorder %s17, 0
    %p100 = por %p98, %p99
    %p101 = scmp.ne.s32.totalorder %s93, %s95
    %p102 = scmp.eq.s32.totalorder %s22, 1
    %p103 = por %p101, %p102
    %p104 = scmp.ne.s32.totalorder %s95, %s96
    %p105 = scmp.eq.s32.totalorder %s22, 0
    %p106 = por %p104, %p105
    %p107 = scmp.ne.s32.totalorder %s95, %s96
    %p108 = scmp.eq.s32.totalorder %s23, 1
    %p109 = por %p107, %p108
    %p111 = scmp.ne.s32.totalorder %s96, %s110
    %p112 = scmp.eq.s32.totalorder %s23, 0
    %p113 = por %p111, %p112
    %s115 = sadd.s32 %s114, 1
    %p118 = scmp.eq.s32.totalorder %s17, 1
    %p119 = scmp.ne.s32.totalorder %s114, %s116
    %p120 = scmp.eq.s32.totalorder %s17, 0
    %p121 = por %p119, %p120
    %p122 = scmp.ne.s32.totalorder %s114, %s116
    %p123 = scmp.eq.s32.totalorder %s22, 1
    %p124 = por %p122, %p123
    %p125 = scmp.ne.s32.totalorder %s116, %s117
    %p126 = scmp.eq.s32.totalorder %s22, 0
    %p127 = por %p125, %p126
    %p128 = scmp.ne.s32.totalorder %s116, %s117
    %p129 = scmp.eq.s32.totalorder %s23, 1
    %p130 = por %p128, %p129
    %p132 = scmp.ne.s32.totalorder %s117, %s131
    %p133 = scmp.eq.s32.totalorder %s23, 0
    %p134 = por %p132, %p133
    %s136 = sadd.s32 %s135, 1
    %p139 = scmp.eq.s32.totalorder %s17, 1
    %p140 = scmp.ne.s32.totalorder %s135, %s137
    %p141 = scmp.eq.s32.totalorder %s17, 0
    %p142 = por %p140, %p141
    %p143 = scmp.ne.s32.totalorder %s135, %s137
    %p144 = scmp.eq.s32.totalorder %s22, 1
    %p145 = por %p143, %p144
    %p146 = scmp.ne.s32.totalorder %s137, %s138
    %p147 = scmp.eq.s32.totalorder %s22, 0
    %p148 = por %p146, %p147
    %p149 = scmp.ne.s32.totalorder %s137, %s138
    %p150 = scmp.eq.s32.totalorder %s23, 1
    %p151 = por %p149, %p150
    %p153 = scmp.ne.s32.totalorder %s138, %s152
    %p154 = scmp.eq.s32.totalorder %s23, 0
    %p155 = por %p153, %p154
    %s157 = sadd.s32 %s156, 1
    %p160 = scmp.eq.s32.totalorder %s17, 1
    %p161 = scmp.ne.s32.totalorder %s156, %s158
    %p162 = scmp.eq.s32.totalorder %s17, 0
    %p163 = por %p161, %p162
    %p164 = scmp.ne.s32.totalorder %s156, %s158
    %p165 = scmp.eq.s32.totalorder %s22, 1
    %p166 = por %p164, %p165
    %p167 = scmp.ne.s32.totalorder %s158, %s159
    %p168 = scmp.eq.s32.totalorder %s22, 0
    %p169 = por %p167, %p168
    %p170 = scmp.ne.s32.totalorder %s158, %s159
    %p171 = scmp.eq.s32.totalorder %s23, 1
    %p172 = por %p170, %p171
    %p174 = scmp.ne.s32.totalorder %s159, %s173
    %p175 = scmp.eq.s32.totalorder %s23, 0
    %p176 = por %p174, %p175
    %s178 = sadd.s32 %s177, 1
    %p181 = scmp.eq.s32.totalorder %s17, 1
    %p182 = scmp.ne.s32.totalorder %s177, %s179
    %p183 = scmp.eq.s32.totalorder %s17, 0
    %p184 = por %p182, %p183
    %p185 = scmp.ne.s32.totalorder %s177, %s179
    %p186 = scmp.eq.s32.totalorder %s22, 1
    %p187 = por %p185, %p186
    %p188 = scmp.ne.s32.totalorder %s179, %s180
    %p189 = scmp.eq.s32.totalorder %s22, 0
    %p190 = por %p188, %p189
    %p191 = scmp.ne.s32.totalorder %s179, %s180
    %p192 = scmp.eq.s32.totalorder %s23, 1
    %p193 = por %p191, %p192
    %p195 = scmp.ne.s32.totalorder %s180, %s194
    %p196 = scmp.eq.s32.totalorder %s23, 0
    %p197 = por %p195, %p196
    %s199 = sadd.s32 %s198, 1
    %p202 = scmp.eq.s32.totalorder %s17, 1
    %p203 = scmp.ne.s32.totalorder %s198, %s200
    %p204 = scmp.eq.s32.totalorder %s17, 0
    %p205 = por %p203, %p204
    %p206 = scmp.ne.s32.totalorder %s198, %s200
    %p207 = scmp.eq.s32.totalorder %s22, 1
    %p208 = por %p206, %p207
    %p209 = scmp.ne.s32.totalorder %s200, %s201
    %p210 = scmp.eq.s32.totalorder %s22, 0
    %p211 = por %p209, %p210
    %p212 = scmp.ne.s32.totalorder %s200, %s201
    %p213 = scmp.eq.s32.totalorder %s23, 1
    %p214 = por %p212, %p213
    %p216 = scmp.ne.s32.totalorder %s201, %s215
    %p217 = scmp.eq.s32.totalorder %s23, 0
    %p218 = por %p216, %p217
    %s220 = sadd.s32 %s219, 1
    %p223 = scmp.eq.s32.totalorder %s17, 1
    %p224 = scmp.ne.s32.totalorder %s219, %s221
    %p225 = scmp.eq.s32.totalorder %s17, 0
    %p226 = por %p224, %p225
    %p227 = scmp.ne.s32.totalorder %s219, %s221
    %p228 = scmp.eq.s32.totalorder %s22, 1
    %p229 = por %p227, %p228
    %p230 = scmp.ne.s32.totalorder %s221, %s222
    %p231 = scmp.eq.s32.totalorder %s22, 0
    %p232 = por %p230, %p231
    %p233 = scmp.ne.s32.totalorder %s221, %s222
    %p234 = scmp.eq.s32.totalorder %s23, 1
    %p235 = por %p233, %p234
    %p237 = scmp.ne.s32.totalorder %s222, %s236
    %p238 = scmp.eq.s32.totalorder %s23, 0
    %p239 = por %p237, %p238
    %s241 = sadd.s32 %s240, 1
    %p244 = scmp.eq.s32.totalorder %s17, 1
    %p245 = scmp.ne.s32.totalorder %s240, %s242
    %p246 = scmp.eq.s32.totalorder %s17, 0
    %p247 = por %p245, %p246
    %p248 = scmp.ne.s32.totalorder %s240, %s242
    %p249 = scmp.eq.s32.totalorder %s22, 1
    %p250 = por %p248, %p249
    %p251 = scmp.ne.s32.totalorder %s242, %s243
    %p252 = scmp.eq.s32.totalorder %s22, 0
    %p253 = por %p251, %p252
    %p254 = scmp.ne.s32.totalorder %s242, %s243
    %p255 = scmp.eq.s32.totalorder %s23, 1
    %p256 = por %p254, %p255
    %p258 = scmp.ne.s32.totalorder %s243, %s257
    %p259 = scmp.eq.s32.totalorder %s23, 0
    %p260 = por %p258, %p259
    %s261 = ssub.s32 %s17, %s24
    %p262 = scmp.eq.s32.totalorder %s261, 0
    %s264 = sadd.s32 %s263, 1
    %s265 = scalar_select %p262, %s263, %s264
    %p268 = pneg %p262
    %p269 = scmp.eq.s32.totalorder %s17, 1
    %p270 = por %p268, %p269
    %p271 = scmp.ne.s32.totalorder %s263, %s266
    %p272 = scmp.eq.s32.totalorder %s17, 0
    %p273 = por %p271, %p272
    %p274 = scmp.ne.s32.totalorder %s263, %s266
    %p275 = scmp.eq.s32.totalorder %s22, 1
    %p276 = por %p274, %p275
    %p277 = scmp.ne.s32.totalorder %s266, %s267
    %p278 = scmp.eq.s32.totalorder %s22, 0
    %p279 = por %p277, %p278
    %p280 = scmp.ne.s32.totalorder %s266, %s267
    %p281 = scmp.eq.s32.totalorder %s23, 1
    %p282 = por %p280, %p281
    %p284 = scmp.ne.s32.totalorder %s267, %s283
    %p285 = scmp.eq.s32.totalorder %s23, 0
    %p286 = por %p284, %p285
    %p287 = scmp.le.s32.totalorder 1, %s17
    %p288 = scmp.lt.s32.totalorder %s17, 3
    %p289 = pnand %p287, %p288
    %p290 = pneg %p289
    // Predicated region
    $region9: #{tpu_custom_call.1} parent=5 // pred_check
      _
    $region10: #{tpu_custom_call.1} parent=5 // pred_check_branch
      %292 = sbr.rel (%p289) target = $region12
    $region11: #{tpu_custom_call.1} parent=5 // pred_region
      %s293 = ssub.s32 %s17, 1
      // Predicated region
      $region13: #{tpu_custom_call.1} parent=11 // pred_check
        %p294 = pneg %p64
      $region14: #{tpu_custom_call.1} parent=11 // pred_check_branch
        %296 = sbr.rel (%p294) target = $region16
      $region15: #{tpu_custom_call.1} parent=11 // pred_region
        _
      $region16: #{tpu_custom_call.1} parent=11 // pred_fallthru
        _
      // Predicated region
      $region17: #{tpu_custom_call.1} parent=11 // pred_check
        %p297 = pneg %p85
      $region18: #{tpu_custom_call.1} parent=11 // pred_check_branch
        %299 = sbr.rel (%p297) target = $region20
      $region19: #{tpu_custom_call.1} parent=11 // pred_region
        _
      $region20: #{tpu_custom_call.1} parent=11 // pred_fallthru
        _
      // Predicated region
      $region21: #{tpu_custom_call.1} parent=11 // pred_check
        %p300 = pneg %p106
      $region22: #{tpu_custom_call.1} parent=11 // pred_check_branch
        %302 = sbr.rel (%p300) target = $region24
      $region23: #{tpu_custom_call.1} parent=11 // pred_region
        _
      $region24: #{tpu_custom_call.1} parent=11 // pred_fallthru
        _
      // Predicated region
      $region25: #{tpu_custom_call.1} parent=11 // pred_check
        %p303 = pneg %p127
      $region26: #{tpu_custom_call.1} parent=11 // pred_check_branch
        %305 = sbr.rel (%p303) target = $region28
      $region27: #{tpu_custom_call.1} parent=11 // pred_region
        _
      $region28: #{tpu_custom_call.1} parent=11 // pred_fallthru
        _
      // Predicated region
      $region29: #{tpu_custom_call.1} parent=11 // pred_check
        %p306 = pneg %p148
      $region30: #{tpu_custom_call.1} parent=11 // pred_check_branch
        %308 = sbr.rel (%p306) target = $region32
      $region31: #{tpu_custom_call.1} parent=11 // pred_region
        _
      $region32: #{tpu_custom_call.1} parent=11 // pred_fallthru
        _
      // Predicated region
      $region33: #{tpu_custom_call.1} parent=11 // pred_check
        %p309 = pneg %p169
      $region34: #{tpu_custom_call.1} parent=11 // pred_check_branch
        %311 = sbr.rel (%p309) target = $region36
      $region35: #{tpu_custom_call.1} parent=11 // pred_region
        _
      $region36: #{tpu_custom_call.1} parent=11 // pred_fallthru
        _
      // Predicated region
      $region37: #{tpu_custom_call.1} parent=11 // pred_check
        %p312 = pneg %p190
      $region38: #{tpu_custom_call.1} parent=11 // pred_check_branch
        %314 = sbr.rel (%p312) target = $region40
      $region39: #{tpu_custom_call.1} parent=11 // pred_region
        _
      $region40: #{tpu_custom_call.1} parent=11 // pred_fallthru
        _
      // Predicated region
      $region41: #{tpu_custom_call.1} parent=11 // pred_check
        %p315 = pneg %p211
      $region42: #{tpu_custom_call.1} parent=11 // pred_check_branch
        %317 = sbr.rel (%p315) target = $region44
      $region43: #{tpu_custom_call.1} parent=11 // pred_region
        _
      $region44: #{tpu_custom_call.1} parent=11 // pred_fallthru
        _
      // Predicated region
      $region45: #{tpu_custom_call.1} parent=11 // pred_check
        %p318 = pneg %p232
      $region46: #{tpu_custom_call.1} parent=11 // pred_check_branch
        %320 = sbr.rel (%p318) target = $region48
      $region47: #{tpu_custom_call.1} parent=11 // pred_region
        _
      $region48: #{tpu_custom_call.1} parent=11 // pred_fallthru
        _
      // Predicated region
      $region49: #{tpu_custom_call.1} parent=11 // pred_check
        %p321 = pneg %p253
      $region50: #{tpu_custom_call.1} parent=11 // pred_check_branch
        %323 = sbr.rel (%p321) target = $region52
      $region51: #{tpu_custom_call.1} parent=11 // pred_region
        _
      $region52: #{tpu_custom_call.1} parent=11 // pred_fallthru
        _
    $region12: #{tpu_custom_call.1} parent=5 // pred_fallthru
      _
    %p324 = scmp.lt.s32.totalorder %s17, 2
    // Predicated region
    $region53: #{tpu_custom_call.1} parent=5 // pred_check
      %p325 = pneg %p324
    $region54: #{tpu_custom_call.1} parent=5 // pred_check_branch
      %327 = sbr.rel (%p325) target = $region56
    $region55: #{tpu_custom_call.1} parent=5 // pred_region
      // Predicated region
      $region57: #{tpu_custom_call.1} parent=55 // pred_check
        %p328 = pneg %p37
      $region58: #{tpu_custom_call.1} parent=55 // pred_check_branch
        %330 = sbr.rel (%p328) target = $region60
      $region59: #{tpu_custom_call.1} parent=55 // pred_region
        %p331 = scmp.lt.s32.totalorder %s17, 1
        %s332 = scalar_select %p331, %s17, 1
        %s333 = smul.addr %s332, 32
        %s334 = smul.addr %s333, 8
        %s335 = scalar_lea.vmem %s0, %s334
      $region60: #{tpu_custom_call.1} parent=55 // pred_fallthru
        _
    $region56: #{tpu_custom_call.1} parent=5 // pred_fallthru
      _
    %p336 = scmp.le.s32.totalorder 1, %s17
    %p337 = scmp.lt.s32.totalorder %s17, 3
    %p338 = pnand %p336, %p337
    %p339 = pneg %p338
    // Predicated region
    $region61: #{tpu_custom_call.1} parent=5 // pred_check
      _
    $region62: #{tpu_custom_call.1} parent=5 // pred_check_branch
      %341 = sbr.rel (%p338) target = $region64
    $region63: #{tpu_custom_call.1} parent=5 // pred_region
      %s342 = ssub.s32 %s17, 1
      %p343 = scmp.lt.s32.totalorder %s22, 1
      %s344 = scalar_select %p343, %s22, 1
      %s345 = smul.addr %s344, 32
      %s346 = smul.addr %s345, 8
      %s347 = scalar_lea.vmem %s0, %s346
      %p348 = pneg %p43
      %p349 = pneg %p40
      %p350 = pneg %p64
      %p351 = pneg %p61
      %p352 = pneg %p85
      %p353 = pneg %p82
      %p354 = pneg %p106
      %p355 = pneg %p103
      %p356 = pneg %p127
      %p357 = pneg %p124
      %p358 = pneg %p148
      %p359 = pneg %p145
      %p360 = pneg %p169
      %p361 = pneg %p166
      %p362 = pneg %p190
      %p363 = pneg %p187
      %p364 = pneg %p211
      %p365 = pneg %p208
      %p366 = pneg %p232
      %p367 = pneg %p229
      %p368 = pneg %p253
      %p369 = pneg %p250
      %p370 = pneg %p279
      %p371 = pneg %p276
      %p372 = scmp.lt.s32.totalorder %s22, 1
      %s373 = scalar_select %p372, %s22, 1
      %s374 = smul.addr %s373, 32
      %s375 = smul.addr %s374, 8
      %s376 = scalar_lea.vmem %s11, %s375
      %p377 = scmp.lt.s32.totalorder %s22, 1
      %s378 = scalar_select %p377, %s22, 1
      %s379 = smul.addr %s378, 32
      %s380 = smul.addr %s379, 8
      %s381 = scalar_lea.vmem %s0, %s380
      %p382 = scmp.lt.s32.totalorder %s22, 1
      %s383 = scalar_select %p382, %s22, 1
      %s384 = smul.addr %s383, 32
      %s385 = smul.addr %s384, 8
      %s386 = scalar_lea.vmem %s11, %s385
      %vm388 = vcmask 195584
      %389 = vst.msk [vmem:[#allocation2] sm:$0xff] %vm388, 0
      %390 = vst.msk [vmem:[#allocation2 + $0x8] sm:$0xff] %vm388, 0
      %s391 = scalar_lea.vmem [#allocation2], 272
      %392 = vst.msk [vmem:[%s391] sm:$0xff] %vm388, 0
      %393 = vst.msk [vmem:[%s391 + $0x8] sm:$0xff] %vm388, 0
      %s394 = scalar_lea.vmem [#allocation2], 16
      %vm395 = vcmask 191488
      %396 = vst.msk [vmem:[%s394] sm:$0xf] %vm395, 0
      %397 = vst.msk [vmem:[%s394 + $0x10] sm:$0xf] %vm395, 0
      %398 = vst.msk [vmem:[%s394 + $0x20] sm:$0xf] %vm395, 0
      %399 = vst.msk [vmem:[%s394 + $0x30] sm:$0xf] %vm395, 0
      %400 = vst.msk [vmem:[%s394 + $0x40] sm:$0xf] %vm395, 0
      %401 = vst.msk [vmem:[%s394 + $0x50] sm:$0xf] %vm395, 0
      %402 = vst.msk [vmem:[%s394 + $0x60] sm:$0xf] %vm395, 0
      %403 = vst.msk [vmem:[%s394 + $0x70] sm:$0xf] %vm395, 0
      %404 = vst.msk [vmem:[%s394 + $0x80] sm:$0xf] %vm395, 0
      %405 = vst.msk [vmem:[%s394 + $0x90] sm:$0xf] %vm395, 0
      %406 = vst.msk [vmem:[%s394 + $0xa0] sm:$0xf] %vm395, 0
      %407 = vst.msk [vmem:[%s394 + $0xb0] sm:$0xf] %vm395, 0
      %408 = vst.msk [vmem:[%s394 + $0xc0] sm:$0xf] %vm395, 0
      %409 = vst.msk [vmem:[%s394 + $0xd0] sm:$0xf] %vm395, 0
      %410 = vst.msk [vmem:[%s394 + $0xe0] sm:$0xf] %vm395, 0
      %411 = vst.msk [vmem:[%s394 + $0xf0] sm:$0xf] %vm395, 0
      %vm412 = vcmask 195588
      %413 = vst.msk [vmem:[%s394 + $0x8] sm:$0xf0] %vm412, 0
      %414 = vst.msk [vmem:[%s394 + $0x18] sm:$0xf0] %vm412, 0
      %415 = vst.msk [vmem:[%s394 + $0x28] sm:$0xf0] %vm412, 0
      %416 = vst.msk [vmem:[%s394 + $0x38] sm:$0xf0] %vm412, 0
      %417 = vst.msk [vmem:[%s394 + $0x48] sm:$0xf0] %vm412, 0
      %418 = vst.msk [vmem:[%s394 + $0x58] sm:$0xf0] %vm412, 0
      %419 = vst.msk [vmem:[%s394 + $0x68] sm:$0xf0] %vm412, 0
      %420 = vst.msk [vmem:[%s394 + $0x78] sm:$0xf0] %vm412, 0
      %421 = vst.msk [vmem:[%s394 + $0x88] sm:$0xf0] %vm412, 0
      %422 = vst.msk [vmem:[%s394 + $0x98] sm:$0xf0] %vm412, 0
      %423 = vst.msk [vmem:[%s394 + $0xa8] sm:$0xf0] %vm412, 0
      %424 = vst.msk [vmem:[%s394 + $0xb8] sm:$0xf0] %vm412, 0
      %425 = vst.msk [vmem:[%s394 + $0xc8] sm:$0xf0] %vm412, 0
      %426 = vst.msk [vmem:[%s394 + $0xd8] sm:$0xf0] %vm412, 0
      %427 = vst.msk [vmem:[%s394 + $0xe8] sm:$0xf0] %vm412, 0
      %428 = vst.msk [vmem:[%s394 + $0xf8] sm:$0xf0] %vm412, 0
      %v429 = vld [vmem:[%s381] sm:$0xff]
      %v430 = vld [vmem:[%s381 + $0x8] sm:$0xff]
      %v431 = vld [vmem:[%s381 + $0x10] sm:$0xff]
      %v432 = vld [vmem:[%s381 + $0x18] sm:$0xff]
      %v433 = vld [vmem:[%s381 + $0x20] sm:$0xff]
      %v434 = vld [vmem:[%s381 + $0x28] sm:$0xff]
      %v435 = vld [vmem:[%s381 + $0x30] sm:$0xff]
      %v436 = vld [vmem:[%s381 + $0x38] sm:$0xff]
      %v437 = vld [vmem:[%s381 + $0x40] sm:$0xff]
      %v438 = vld [vmem:[%s381 + $0x48] sm:$0xff]
      %v439 = vld [vmem:[%s381 + $0x50] sm:$0xff]
      %v440 = vld [vmem:[%s381 + $0x58] sm:$0xff]
      %v441 = vld [vmem:[%s381 + $0x60] sm:$0xff]
      %v442 = vld [vmem:[%s381 + $0x68] sm:$0xff]
      %v443 = vld [vmem:[%s381 + $0x70] sm:$0xff]
      %v444 = vld [vmem:[%s381 + $0x78] sm:$0xff]
      %v445 = vld [vmem:[%s381 + $0x80] sm:$0xff]
      %v446 = vld [vmem:[%s381 + $0x88] sm:$0xff]
      %v447 = vld [vmem:[%s381 + $0x90] sm:$0xff]
      %v448 = vld [vmem:[%s381 + $0x98] sm:$0xff]
      %v449 = vld [vmem:[%s381 + $0xa0] sm:$0xff]
      %v450 = vld [vmem:[%s381 + $0xa8] sm:$0xff]
      %v451 = vld [vmem:[%s381 + $0xb0] sm:$0xff]
      %v452 = vld [vmem:[%s381 + $0xb8] sm:$0xff]
      %v453 = vld [vmem:[%s381 + $0xc0] sm:$0xff]
      %v454 = vld [vmem:[%s381 + $0xc8] sm:$0xff]
      %v455 = vld [vmem:[%s381 + $0xd0] sm:$0xff]
      %v456 = vld [vmem:[%s381 + $0xd8] sm:$0xff]
      %v457 = vld [vmem:[%s381 + $0xe0] sm:$0xff]
      %v458 = vld [vmem:[%s381 + $0xe8] sm:$0xff]
      %v459 = vld [vmem:[%s381 + $0xf0] sm:$0xff]
      %v460 = vld [vmem:[%s381 + $0xf8] sm:$0xff]
      %v461 = vpack.c.bf16 %v430, %v429
      %v462 = vpack.c.bf16 %v432, %v431
      %v463 = vpack.c.bf16 %v434, %v433
      %v464 = vpack.c.bf16 %v436, %v435
      %v465 = vpack.c.bf16 %v438, %v437
      %v466 = vpack.c.bf16 %v440, %v439
      %v467 = vpack.c.bf16 %v442, %v441
      %v468 = vpack.c.bf16 %v444, %v443
      %v469 = vpack.c.bf16 %v446, %v445
      %v470 = vpack.c.bf16 %v448, %v447
      %v471 = vpack.c.bf16 %v450, %v449
      %v472 = vpack.c.bf16 %v452, %v451
      %v473 = vpack.c.bf16 %v454, %v453
      %v474 = vpack.c.bf16 %v456, %v455
      %v475 = vpack.c.bf16 %v458, %v457
      %v476 = vpack.c.bf16 %v460, %v459
      %v493 = vrot.slane %v461, 4
      %v494 = vrot.slane %v462, 4
      %v495 = vrot.slane %v463, 4
      %v496 = vrot.slane %v464, 4
      %v497 = vrot.slane %v465, 4
      %v498 = vrot.slane %v466, 4
      %v499 = vrot.slane %v467, 4
      %v500 = vrot.slane %v468, 4
      %v501 = vrot.slane %v469, 4
      %v502 = vrot.slane %v470, 4
      %v503 = vrot.slane %v471, 4
      %v504 = vrot.slane %v472, 4
      %v505 = vrot.slane %v473, 4
      %v506 = vrot.slane %v474, 4
      %v507 = vrot.slane %v475, 4
      %v508 = vrot.slane %v476, 4
      %vm525 = vcmask 64516
      %526 = vst.msk [vmem:[%s394] sm:$0xf0] %vm525, %v493
      %vm527 = vcmask 60416
      %528 = vst.msk [vmem:[%s394 + $0x8] sm:$0xf] %vm527, %v493
      %529 = vst.msk [vmem:[%s394 + $0x10] sm:$0xf0] %vm525, %v494
      %530 = vst.msk [vmem:[%s394 + $0x18] sm:$0xf] %vm527, %v494
      %531 = vst.msk [vmem:[%s394 + $0x20] sm:$0xf0] %vm525, %v495
      %532 = vst.msk [vmem:[%s394 + $0x28] sm:$0xf] %vm527, %v495
      %533 = vst.msk [vmem:[%s394 + $0x30] sm:$0xf0] %vm525, %v496
      %534 = vst.msk [vmem:[%s394 + $0x38] sm:$0xf] %vm527, %v496
      %535 = vst.msk [vmem:[%s394 + $0x40] sm:$0xf0] %vm525, %v497
      %536 = vst.msk [vmem:[%s394 + $0x48] sm:$0xf] %vm527, %v497
      %537 = vst.msk [vmem:[%s394 + $0x50] sm:$0xf0] %vm525, %v498
      %538 = vst.msk [vmem:[%s394 + $0x58] sm:$0xf] %vm527, %v498
      %539 = vst.msk [vmem:[%s394 + $0x60] sm:$0xf0] %vm525, %v499
      %540 = vst.msk [vmem:[%s394 + $0x68] sm:$0xf] %vm527, %v499
      %541 = vst.msk [vmem:[%s394 + $0x70] sm:$0xf0] %vm525, %v500
      %542 = vst.msk [vmem:[%s394 + $0x78] sm:$0xf] %vm527, %v500
      %543 = vst.msk [vmem:[%s394 + $0x80] sm:$0xf0] %vm525, %v501
      %544 = vst.msk [vmem:[%s394 + $0x88] sm:$0xf] %vm527, %v501
      %545 = vst.msk [vmem:[%s394 + $0x90] sm:$0xf0] %vm525, %v502
      %546 = vst.msk [vmem:[%s394 + $0x98] sm:$0xf] %vm527, %v502
      %547 = vst.msk [vmem:[%s394 + $0xa0] sm:$0xf0] %vm525, %v503
      %548 = vst.msk [vmem:[%s394 + $0xa8] sm:$0xf] %vm527, %v503
      %549 = vst.msk [vmem:[%s394 + $0xb0] sm:$0xf0] %vm525, %v504
      %550 = vst.msk [vmem:[%s394 + $0xb8] sm:$0xf] %vm527, %v504
      %551 = vst.msk [vmem:[%s394 + $0xc0] sm:$0xf0] %vm525, %v505
      %552 = vst.msk [vmem:[%s394 + $0xc8] sm:$0xf] %vm527, %v505
      %553 = vst.msk [vmem:[%s394 + $0xd0] sm:$0xf0] %vm525, %v506
      %554 = vst.msk [vmem:[%s394 + $0xd8] sm:$0xf] %vm527, %v506
      %555 = vst.msk [vmem:[%s394 + $0xe0] sm:$0xf0] %vm525, %v507
      %556 = vst.msk [vmem:[%s394 + $0xe8] sm:$0xf] %vm527, %v507
      %557 = vst.msk [vmem:[%s394 + $0xf0] sm:$0xf0] %vm525, %v508
      %558 = vst.msk [vmem:[%s394 + $0xf8] sm:$0xf] %vm527, %v508
      %v559 = vld [vmem:[#allocation2] sm:$0xf8]
      %v560 = vld [vmem:[#allocation2 + $0x8] sm:$0xf]
      %v561 = vld [vmem:[#allocation2 + $0x10] sm:$0xf8]
      %v562 = vld [vmem:[#allocation2 + $0x18] sm:$0xf]
      %v563 = vld [vmem:[#allocation2 + $0x20] sm:$0xf8]
      %v564 = vld [vmem:[#allocation2 + $0x28] sm:$0xf]
      %v565 = vld [vmem:[#allocation2 + $0x30] sm:$0xf8]
      %v566 = vld [vmem:[#allocation2 + $0x38] sm:$0xf]
      %v567 = vld [vmem:[#allocation2 + $0x40] sm:$0xf8]
      %v568 = vld [vmem:[#allocation2 + $0x48] sm:$0xf]
      %v569 = vld [vmem:[#allocation2 + $0x50] sm:$0xf8]
      %v570 = vld [vmem:[#allocation2 + $0x58] sm:$0xf]
      %v571 = vld [vmem:[#allocation2 + $0x60] sm:$0xf8]
      %v572 = vld [vmem:[#allocation2 + $0x68] sm:$0xf]
      %v573 = vld [vmem:[#allocation2 + $0x70] sm:$0xf8]
      %v574 = vld [vmem:[#allocation2 + $0x78] sm:$0xf]
      %v575 = vld [vmem:[#allocation2 + $0x80] sm:$0xf8]
      %v576 = vld [vmem:[#allocation2 + $0x88] sm:$0xf]
      %v577 = vld [vmem:[#allocation2 + $0x90] sm:$0xf8]
      %v578 = vld [vmem:[#allocation2 + $0x98] sm:$0xf]
      %v579 = vld [vmem:[#allocation2 + $0xa0] sm:$0xf8]
      %v580 = vld [vmem:[#allocation2 + $0xa8] sm:$0xf]
      %v581 = vld [vmem:[#allocation2 + $0xb0] sm:$0xf8]
      %v582 = vld [vmem:[#allocation2 + $0xb8] sm:$0xf]
      %v583 = vld [vmem:[#allocation2 + $0xc0] sm:$0xf8]
      %v584 = vld [vmem:[#allocation2 + $0xc8] sm:$0xf]
      %v585 = vld [vmem:[#allocation2 + $0xd0] sm:$0xf8]
      %v586 = vld [vmem:[#allocation2 + $0xd8] sm:$0xf]
      %v587 = vld [vmem:[#allocation2 + $0xe0] sm:$0xf8]
      %v588 = vld [vmem:[#allocation2 + $0xe8] sm:$0xf]
      %v589 = vld [vmem:[#allocation2 + $0xf0] sm:$0xf8]
      %v590 = vld [vmem:[#allocation2 + $0xf8] sm:$0xf]
      %v591 = vld [vmem:[#allocation2 + $0x100] sm:$0xf8]
      %v592 = vld [vmem:[#allocation2 + $0x108] sm:$0xf]
      %v593 = vld [vmem:[#allocation2 + $0x110] sm:$0xf8]
      %v594 = vld [vmem:[#allocation2 + $0x118] sm:$0xf]
      %v595 = vld [vmem:[%s1] sm:$0xf]
      %vm596 = vsmask.f32 4352
      %v598 = vshrl.u32 %v559, 16
      %v600 = vrot.slane %v598, 3
      %v601 = vshll.u32 %v559, 16
      %v603 = vrot.slane %v601, 4
      %v604 = vor.u32 %v600, %v603
      %v606 = vshrl.u32 %v560, 16
      %v608 = vrot.slane %v606, 3
      %v609 = vshll.u32 %v560, 16
      %v611 = vrot.slane %v609, 4
      %v612 = vor.u32 %v608, %v611
      %v613 = vsel %vm596, %v604, %v612
      %v615 = vshrl.u32 %v561, 16
      %v617 = vrot.slane %v615, 3
      %v618 = vshll.u32 %v561, 16
      %v620 = vrot.slane %v618, 4
      %v621 = vor.u32 %v617, %v620
      %v623 = vshrl.u32 %v562, 16
      %v625 = vrot.slane %v623, 3
      %v626 = vshll.u32 %v562, 16
      %v628 = vrot.slane %v626, 4
      %v629 = vor.u32 %v625, %v628
      %v630 = vsel %vm596, %v621, %v629
      %v632 = vshrl.u32 %v563, 16
      %v634 = vrot.slane %v632, 3
      %v635 = vshll.u32 %v563, 16
      %v637 = vrot.slane %v635, 4
      %v638 = vor.u32 %v634, %v637
      %v640 = vshrl.u32 %v564, 16
      %v642 = vrot.slane %v640, 3
      %v643 = vshll.u32 %v564, 16
      %v645 = vrot.slane %v643, 4
      %v646 = vor.u32 %v642, %v645
      %v647 = vsel %vm596, %v638, %v646
      %v649 = vshrl.u32 %v565, 16
      %v651 = vrot.slane %v649, 3
      %v652 = vshll.u32 %v565, 16
      %v654 = vrot.slane %v652, 4
      %v655 = vor.u32 %v651, %v654
      %v657 = vshrl.u32 %v566, 16
      %v659 = vrot.slane %v657, 3
      %v660 = vshll.u32 %v566, 16
      %v662 = vrot.slane %v660, 4
      %v663 = vor.u32 %v659, %v662
      %v664 = vsel %vm596, %v655, %v663
      %v666 = vshrl.u32 %v567, 16
      %v668 = vrot.slane %v666, 3
      %v669 = vshll.u32 %v567, 16
      %v671 = vrot.slane %v669, 4
      %v672 = vor.u32 %v668, %v671
      %v674 = vshrl.u32 %v568, 16
      %v676 = vrot.slane %v674, 3
      %v677 = vshll.u32 %v568, 16
      %v679 = vrot.slane %v677, 4
      %v680 = vor.u32 %v676, %v679
      %v681 = vsel %vm596, %v672, %v680
      %v683 = vshrl.u32 %v569, 16
      %v685 = vrot.slane %v683, 3
      %v686 = vshll.u32 %v569, 16
      %v688 = vrot.slane %v686, 4
      %v689 = vor.u32 %v685, %v688
      %v691 = vshrl.u32 %v570, 16
      %v693 = vrot.slane %v691, 3
      %v694 = vshll.u32 %v570, 16
      %v696 = vrot.slane %v694, 4
      %v697 = vor.u32 %v693, %v696
      %v698 = vsel %vm596, %v689, %v697
      %v700 = vshrl.u32 %v571, 16
      %v702 = vrot.slane %v700, 3
      %v703 = vshll.u32 %v571, 16
      %v705 = vrot.slane %v703, 4
      %v706 = vor.u32 %v702, %v705
      %v708 = vshrl.u32 %v572, 16
      %v710 = vrot.slane %v708, 3
      %v711 = vshll.u32 %v572, 16
      %v713 = vrot.slane %v711, 4
      %v714 = vor.u32 %v710, %v713
      %v715 = vsel %vm596, %v706, %v714
      %v717 = vshrl.u32 %v573, 16
      %v719 = vrot.slane %v717, 3
      %v720 = vshll.u32 %v573, 16
      %v722 = vrot.slane %v720, 4
      %v723 = vor.u32 %v719, %v722
      %v725 = vshrl.u32 %v574, 16
      %v727 = vrot.slane %v725, 3
      %v728 = vshll.u32 %v574, 16
      %v730 = vrot.slane %v728, 4
      %v731 = vor.u32 %v727, %v730
      %v732 = vsel %vm596, %v723, %v731
      %v734 = vshrl.u32 %v575, 16
      %v736 = vrot.slane %v734, 3
      %v737 = vshll.u32 %v575, 16
      %v739 = vrot.slane %v737, 4
      %v740 = vor.u32 %v736, %v739
      %v742 = vshrl.u32 %v576, 16
      %v744 = vrot.slane %v742, 3
      %v745 = vshll.u32 %v576, 16
      %v747 = vrot.slane %v745, 4
      %v748 = vor.u32 %v744, %v747
      %v749 = vsel %vm596, %v740, %v748
      %v751 = vshrl.u32 %v577, 16
      %v753 = vrot.slane %v751, 3
      %v754 = vshll.u32 %v577, 16
      %v756 = vrot.slane %v754, 4
      %v757 = vor.u32 %v753, %v756
      %v759 = vshrl.u32 %v578, 16
      %v761 = vrot.slane %v759, 3
      %v762 = vshll.u32 %v578, 16
      %v764 = vrot.slane %v762, 4
      %v765 = vor.u32 %v761, %v764
      %v766 = vsel %vm596, %v757, %v765
      %v768 = vshrl.u32 %v579, 16
      %v770 = vrot.slane %v768, 3
      %v771 = vshll.u32 %v579, 16
      %v773 = vrot.slane %v771, 4
      %v774 = vor.u32 %v770, %v773
      %v776 = vshrl.u32 %v580, 16
      %v778 = vrot.slane %v776, 3
      %v779 = vshll.u32 %v580, 16
      %v781 = vrot.slane %v779, 4
      %v782 = vor.u32 %v778, %v781
      %v783 = vsel %vm596, %v774, %v782
      %v785 = vshrl.u32 %v581, 16
      %v787 = vrot.slane %v785, 3
      %v788 = vshll.u32 %v581, 16
      %v790 = vrot.slane %v788, 4
      %v791 = vor.u32 %v787, %v790
      %v793 = vshrl.u32 %v582, 16
      %v795 = vrot.slane %v793, 3
      %v796 = vshll.u32 %v582, 16
      %v798 = vrot.slane %v796, 4
      %v799 = vor.u32 %v795, %v798
      %v800 = vsel %vm596, %v791, %v799
      %v802 = vshrl.u32 %v583, 16
      %v804 = vrot.slane %v802, 3
      %v805 = vshll.u32 %v583, 16
      %v807 = vrot.slane %v805, 4
      %v808 = vor.u32 %v804, %v807
      %v810 = vshrl.u32 %v584, 16
      %v812 = vrot.slane %v810, 3
      %v813 = vshll.u32 %v584, 16
      %v815 = vrot.slane %v813, 4
      %v816 = vor.u32 %v812, %v815
      %v817 = vsel %vm596, %v808, %v816
      %v819 = vshrl.u32 %v585, 16
      %v821 = vrot.slane %v819, 3
      %v822 = vshll.u32 %v585, 16
      %v824 = vrot.slane %v822, 4
      %v825 = vor.u32 %v821, %v824
      %v827 = vshrl.u32 %v586, 16
      %v829 = vrot.slane %v827, 3
      %v830 = vshll.u32 %v586, 16
      %v832 = vrot.slane %v830, 4
      %v833 = vor.u32 %v829, %v832
      %v834 = vsel %vm596, %v825, %v833
      %v836 = vshrl.u32 %v587, 16
      %v838 = vrot.slane %v836, 3
      %v839 = vshll.u32 %v587, 16
      %v841 = vrot.slane %v839, 4
      %v842 = vor.u32 %v838, %v841
      %v844 = vshrl.u32 %v588, 16
      %v846 = vrot.slane %v844, 3
      %v847 = vshll.u32 %v588, 16
      %v849 = vrot.slane %v847, 4
      %v850 = vor.u32 %v846, %v849
      %v851 = vsel %vm596, %v842, %v850
      %v853 = vshrl.u32 %v589, 16
      %v855 = vrot.slane %v853, 3
      %v856 = vshll.u32 %v589, 16
      %v858 = vrot.slane %v856, 4
      %v859 = vor.u32 %v855, %v858
      %v861 = vshrl.u32 %v590, 16
      %v863 = vrot.slane %v861, 3
      %v864 = vshll.u32 %v590, 16
      %v866 = vrot.slane %v864, 4
      %v867 = vor.u32 %v863, %v866
      %v868 = vsel %vm596, %v859, %v867
      %v870 = vshrl.u32 %v591, 16
      %v872 = vrot.slane %v870, 3
      %v873 = vshll.u32 %v591, 16
      %v875 = vrot.slane %v873, 4
      %v876 = vor.u32 %v872, %v875
      %v878 = vshrl.u32 %v592, 16
      %v880 = vrot.slane %v878, 3
      %v881 = vshll.u32 %v592, 16
      %v883 = vrot.slane %v881, 4
      %v884 = vor.u32 %v880, %v883
      %v885 = vsel %vm596, %v876, %v884
      %v887 = vshrl.u32 %v593, 16
      %v889 = vrot.slane %v887, 3
      %v890 = vshll.u32 %v593, 16
      %v892 = vrot.slane %v890, 4
      %v893 = vor.u32 %v889, %v892
      %v895 = vshrl.u32 %v594, 16
      %v897 = vrot.slane %v895, 3
      %v898 = vshll.u32 %v594, 16
      %v900 = vrot.slane %v898, 4
      %v901 = vor.u32 %v897, %v900
      %v902 = vsel %vm596, %v893, %v901
      %vm903 = vcmask 64512
      %v905 = vsel %vm903, %v613, 0
      %v908 = vsel %vm903, %v630, 0
      %v911 = vsel %vm903, %v647, 0
      %v914 = vsel %vm903, %v664, 0
      %v917 = vsel %vm903, %v681, 0
      %v920 = vsel %vm903, %v698, 0
      %v923 = vsel %vm903, %v715, 0
      %v926 = vsel %vm903, %v732, 0
      %v929 = vsel %vm903, %v749, 0
      %v932 = vsel %vm903, %v766, 0
      %v935 = vsel %vm903, %v783, 0
      %v938 = vsel %vm903, %v800, 0
      %v941 = vsel %vm903, %v817, 0
      %v944 = vsel %vm903, %v834, 0
      %v947 = vsel %vm903, %v851, 0
      %v950 = vsel %vm903, %v868, 0
      %v953 = vsel %vm903, %v885, 0
      %v956 = vsel %vm903, %v902, 0
      %vm958 = vcmask 1043456
      %v960 = vsel %vm958, %v595, 0
      %962 = vmatprep.subr.bf16.mxu0 0
      %963 = vmatpush1.bf16.msra.mxu0 %v960
      %964 = vmatprep.subr.bf16.mxu0 0
      %965 = vmatpush1.bf16.msra.mxu0 0
      %966 = vmatprep.subr.bf16.mxu0 0
      %967 = vmatpush1.bf16.msra.mxu0 0
      %968 = vmatprep.subr.bf16.mxu0 0
      %969 = vmatpush1.bf16.msra.mxu0 0
      %970 = vmatprep.subr.bf16.mxu0 0
      %971 = vmatpush1.bf16.msra.mxu0 0
      %972 = vmatprep.subr.bf16.mxu0 0
      %973 = vmatpush1.bf16.msra.mxu0 0
      %974 = vmatprep.subr.bf16.mxu0 0
      %975 = vmatpush1.bf16.msra.mxu0 0
      %976 = vmatprep.subr.bf16.mxu0 0
      %977 = vmatpush1.bf16.msra.mxu0 0
      %978 = vmatprep.subr.bf16.mxu0 0
      %979 = vmatpush1.bf16.msra.mxu0 0
      %980 = vmatprep.subr.bf16.mxu0 0
      %981 = vmatpush1.bf16.msra.mxu0 0
      %982 = vmatprep.subr.bf16.mxu0 0
      %983 = vmatpush1.bf16.msra.mxu0 0
      %984 = vmatprep.subr.bf16.mxu0 0
      %985 = vmatpush1.bf16.msra.mxu0 0
      %986 = vmatprep.subr.bf16.mxu0 0
      %987 = vmatpush1.bf16.msra.mxu0 0
      %988 = vmatprep.subr.bf16.mxu0 0
      %989 = vmatpush1.bf16.msra.mxu0 0
      %990 = vmatprep.subr.bf16.mxu0 0
      %991 = vmatpush1.bf16.msra.mxu0 0
      %992 = vmatprep.subr.bf16.mxu0 0
      %993 = vmatpush1.bf16.msra.mxu0 0
      %994 = vmatprep.mubr.bf16.mxu0 0
      %995 = vmatmul.mubr.bf16.gmra.mrb[0].mxu0 %v905
      %v996 = vpop.f32.mrb[0].mxu0
      %v997 = vadd.f32 0.0, %v996
      %v998 = vpop.f32.mrb[0].mxu0
      %v999 = vpop.f32.mrb[0].mxu0
      %v1000 = vadd.f32 0.0, %v999
      %v1001 = vpop.f32.mrb[0].mxu0
      %1002 = vmatprep.mubr.bf16.mxu0 0
      %1003 = vmatmul.mubr.bf16.gmra.mrb[0].mxu0 %v908
      %v1004 = vpop.f32.mrb[0].mxu0
      %v1005 = vadd.f32 0.0, %v1004
      %v1006 = vpop.f32.mrb[0].mxu0
      %v1007 = vpop.f32.mrb[0].mxu0
      %v1008 = vadd.f32 0.0, %v1007
      %v1009 = vpop.f32.mrb[0].mxu0
      %1010 = vmatprep.mubr.bf16.mxu0 0
      %1011 = vmatmul.mubr.bf16.gmra.mrb[0].mxu0 %v911
      %v1012 = vpop.f32.mrb[0].mxu0
      %v1013 = vadd.f32 0.0, %v1012
      %v1014 = vpop.f32.mrb[0].mxu0
      %v1015 = vpop.f32.mrb[0].mxu0
      %v1016 = vadd.f32 0.0, %v1015
      %v1017 = vpop.f32.mrb[0].mxu0
      %1018 = vmatprep.mubr.bf16.mxu0 0
      %1019 = vmatmul.mubr.bf16.gmra.mrb[0].mxu0 %v914
      %v1020 = vpop.f32.mrb[0].mxu0
      %v1021 = vadd.f32 0.0, %v1020
      %v1022 = vpop.f32.mrb[0].mxu0
      %v1023 = vpop.f32.mrb[0].mxu0
      %v1024 = vadd.f32 0.0, %v1023
      %v1025 = vpop.f32.mrb[0].mxu0
      %1026 = vmatprep.mubr.bf16.mxu0 0
      %1027 = vmatmul.mubr.bf16.gmra.mrb[0].mxu0 %v917
      %v1028 = vpop.f32.mrb[0].mxu0
      %v1029 = vadd.f32 0.0, %v1028
      %v1030 = vpop.f32.mrb[0].mxu0
      %v1031 = vpop.f32.mrb[0].mxu0
      %v1032 = vadd.f32 0.0, %v1031
      %v1033 = vpop.f32.mrb[0].mxu0
      %1034 = vmatprep.mubr.bf16.mxu0 0
      %1035 = vmatmul.mubr.bf16.gmra.mrb[0].mxu0 %v920
      %v1036 = vpop.f32.mrb[0].mxu0
      %v1037 = vadd.f32 0.0, %v1036
      %v1038 = vpop.f32.mrb[0].mxu0
      %v1039 = vpop.f32.mrb[0].mxu0
      %v1040 = vadd.f32 0.0, %v1039
      %v1041 = vpop.f32.mrb[0].mxu0
      %1042 = vmatprep.mubr.bf16.mxu0 0
      %1043 = vmatmul.mubr.bf16.gmra.mrb[0].mxu0 %v923
      %v1044 = vpop.f32.mrb[0].mxu0
      %v1045 = vadd.f32 0.0, %v1044
      %v1046 = vpop.f32.mrb[0].mxu0
      %v1047 = vpop.f32.mrb[0].mxu0
      %v1048 = vadd.f32 0.0, %v1047
      %v1049 = vpop.f32.mrb[0].mxu0
      %1050 = vmatprep.mubr.bf16.mxu0 0
      %1051 = vmatmul.mubr.bf16.gmra.mrb[0].mxu0 %v926
      %v1052 = vpop.f32.mrb[0].mxu0
      %v1053 = vadd.f32 0.0, %v1052
      %v1054 = vpop.f32.mrb[0].mxu0
      %v1055 = vpop.f32.mrb[0].mxu0
      %v1056 = vadd.f32 0.0, %v1055
      %v1057 = vpop.f32.mrb[0].mxu0
      %1058 = vmatprep.mubr.bf16.mxu0 0
      %1059 = vmatmul.mubr.bf16.gmra.mrb[0].mxu0 %v929
      %v1060 = vpop.f32.mrb[0].mxu0
      %v1061 = vadd.f32 0.0, %v1060
      %v1062 = vpop.f32.mrb[0].mxu0
      %v1063 = vpop.f32.mrb[0].mxu0
      %v1064 = vadd.f32 0.0, %v1063
      %v1065 = vpop.f32.mrb[0].mxu0
      %1066 = vmatprep.mubr.bf16.mxu0 0
      %1067 = vmatmul.mubr.bf16.gmra.mrb[0].mxu0 %v932
      %v1068 = vpop.f32.mrb[0].mxu0
      %v1069 = vadd.f32 0.0, %v1068
      %v1070 = vpop.f32.mrb[0].mxu0
      %v1071 = vpop.f32.mrb[0].mxu0
      %v1072 = vadd.f32 0.0, %v1071
      %v1073 = vpop.f32.mrb[0].mxu0
      %1074 = vmatprep.mubr.bf16.mxu0 0
      %1075 = vmatmul.mubr.bf16.gmra.mrb[0].mxu0 %v935
      %v1076 = vpop.f32.mrb[0].mxu0
      %v1077 = vadd.f32 0.0, %v1076
      %v1078 = vpop.f32.mrb[0].mxu0
      %v1079 = vpop.f32.mrb[0].mxu0
      %v1080 = vadd.f32 0.0, %v1079
      %v1081 = vpop.f32.mrb[0].mxu0
      %1082 = vmatprep.mubr.bf16.mxu0 0
      %1083 = vmatmul.mubr.bf16.gmra.mrb[0].mxu0 %v938
      %v1084 = vpop.f32.mrb[0].mxu0
      %v1085 = vadd.f32 0.0, %v1084
      %v1086 = vpop.f32.mrb[0].mxu0
      %v1087 = vpop.f32.mrb[0].mxu0
      %v1088 = vadd.f32 0.0, %v1087
      %v1089 = vpop.f32.mrb[0].mxu0
      %1090 = vmatprep.mubr.bf16.mxu0 0
      %1091 = vmatmul.mubr.bf16.gmra.mrb[0].mxu0 %v941
      %v1092 = vpop.f32.mrb[0].mxu0
      %v1093 = vadd.f32 0.0, %v1092
      %v1094 = vpop.f32.mrb[0].mxu0
      %v1095 = vpop.f32.mrb[0].mxu0
      %v1096 = vadd.f32 0.0, %v1095
      %v1097 = vpop.f32.mrb[0].mxu0
      %1098 = vmatprep.mubr.bf16.mxu0 0
      %1099 = vmatmul.mubr.bf16.gmra.mrb[0].mxu0 %v944
      %v1100 = vpop.f32.mrb[0].mxu0
      %v1101 = vadd.f32 0.0, %v1100
      %v1102 = vpop.f32.mrb[0].mxu0
      %v1103 = vpop.f32.mrb[0].mxu0
      %v1104 = vadd.f32 0.0, %v1103
      %v1105 = vpop.f32.mrb[0].mxu0
      %1106 = vmatprep.mubr.bf16.mxu0 0
      %1107 = vmatmul.mubr.bf16.gmra.mrb[0].mxu0 %v947
      %v1108 = vpop.f32.mrb[0].mxu0
      %v1109 = vadd.f32 0.0, %v1108
      %v1110 = vpop.f32.mrb[0].mxu0
      %v1111 = vpop.f32.mrb[0].mxu0
      %v1112 = vadd.f32 0.0, %v1111
      %v1113 = vpop.f32.mrb[0].mxu0
      %1114 = vmatprep.mubr.bf16.mxu0 0
      %1115 = vmatmul.mubr.bf16.gmra.mrb[0].mxu0 %v950
      %v1116 = vpop.f32.mrb[0].mxu0
      %v1117 = vadd.f32 0.0, %v1116
      %v1118 = vpop.f32.mrb[0].mxu0
      %v1119 = vpop.f32.mrb[0].mxu0
      %v1120 = vadd.f32 0.0, %v1119
      %v1121 = vpop.f32.mrb[0].mxu0
      %1122 = vmatprep.mubr.bf16.mxu0 0
      %1123 = vmatmul.mubr.bf16.gmra.mrb[0].mxu0 %v953
      %v1124 = vpop.f32.mrb[0].mxu0
      %v1125 = vadd.f32 0.0, %v1124
      %v1126 = vpop.f32.mrb[0].mxu0
      %v1127 = vpop.f32.mrb[0].mxu0
      %v1128 = vadd.f32 0.0, %v1127
      %v1129 = vpop.f32.mrb[0].mxu0
      %1130 = vmatprep.mubr.bf16.mxu0 0
      %1131 = vmatmul.mubr.bf16.gmra.mrb[0].mxu0 %v956
      %v1132 = vpop.f32.mrb[0].mxu0
      %v1133 = vadd.f32 0.0, %v1132
      %v1134 = vpop.f32.mrb[0].mxu0
      %v1135 = vpop.f32.mrb[0].mxu0
      %v1136 = vadd.f32 0.0, %v1135
      %v1137 = vpop.f32.mrb[0].mxu0
      %1138 = vdwg.mxu0
      %v1139 = vadd.f32 %v997, 0.0
      %v1140 = vadd.f32 %v1000, 0.0
      %v1141 = vadd.f32 %v1005, 0.0
      %v1142 = vadd.f32 %v1008, 0.0
      %v1143 = vadd.f32 %v1013, 0.0
      %v1144 = vadd.f32 %v1016, 0.0
      %v1145 = vadd.f32 %v1021, 0.0
      %v1146 = vadd.f32 %v1024, 0.0
      %v1147 = vadd.f32 %v1029, 0.0
      %v1148 = vadd.f32 %v1032, 0.0
      %v1149 = vadd.f32 %v1037, 0.0
      %v1150 = vadd.f32 %v1040, 0.0
      %v1151 = vadd.f32 %v1045, 0.0
      %v1152 = vadd.f32 %v1048, 0.0
      %v1153 = vadd.f32 %v1053, 0.0
      %v1154 = vadd.f32 %v1056, 0.0
      %v1155 = vadd.f32 %v1061, 0.0
      %v1156 = vadd.f32 %v1064, 0.0
      %v1157 = vadd.f32 %v1069, 0.0
      %v1158 = vadd.f32 %v1072, 0.0
      %v1159 = vadd.f32 %v1077, 0.0
      %v1160 = vadd.f32 %v1080, 0.0
      %v1161 = vadd.f32 %v1085, 0.0
      %v1162 = vadd.f32 %v1088, 0.0
      %v1163 = vadd.f32 %v1093, 0.0
      %v1164 = vadd.f32 %v1096, 0.0
      %v1165 = vadd.f32 %v1101, 0.0
      %v1166 = vadd.f32 %v1104, 0.0
      %v1167 = vadd.f32 %v1109, 0.0
      %v1168 = vadd.f32 %v1112, 0.0
      %v1169 = vadd.f32 %v1117, 0.0
      %v1170 = vadd.f32 %v1120, 0.0
      %1203 = vrot.lane.b32.xlu0 %v1005, 124
      %v1204 = vpop.permute.xlu0 %1203
      %1205 = vrot.lane.b32.xlu0 %v1008, 124
      %v1206 = vpop.permute.xlu0 %1205
      %1207 = vrot.lane.b32.xlu0 %v1013, 124
      %v1208 = vpop.permute.xlu0 %1207
      %1209 = vrot.lane.b32.xlu0 %v1016, 124
      %v1210 = vpop.permute.xlu0 %1209
      %1211 = vrot.lane.b32.xlu0 %v1021, 124
      %v1212 = vpop.permute.xlu0 %1211
      %1213 = vrot.lane.b32.xlu0 %v1024, 124
      %v1214 = vpop.permute.xlu0 %1213
      %1215 = vrot.lane.b32.xlu0 %v1029, 124
      %v1216 = vpop.permute.xlu0 %1215
      %1217 = vrot.lane.b32.xlu0 %v1032, 124
      %v1218 = vpop.permute.xlu0 %1217
      %1219 = vrot.lane.b32.xlu0 %v1037, 124
      %v1220 = vpop.permute.xlu0 %1219
      %1221 = vrot.lane.b32.xlu0 %v1040, 124
      %v1222 = vpop.permute.xlu0 %1221
      %1223 = vrot.lane.b32.xlu0 %v1045, 124
      %v1224 = vpop.permute.xlu0 %1223
      %1225 = vrot.lane.b32.xlu0 %v1048, 124
      %v1226 = vpop.permute.xlu0 %1225
      %1227 = vrot.lane.b32.xlu0 %v1053, 124
      %v1228 = vpop.permute.xlu0 %1227
      %1229 = vrot.lane.b32.xlu0 %v1056, 124
      %v1230 = vpop.permute.xlu0 %1229
      %1231 = vrot.lane.b32.xlu0 %v1061, 124
      %v1232 = vpop.permute.xlu0 %1231
      %1233 = vrot.lane.b32.xlu0 %v1064, 124
      %v1234 = vpop.permute.xlu0 %1233
      %1235 = vrot.lane.b32.xlu0 %v1069, 124
      %v1236 = vpop.permute.xlu0 %1235
      %1237 = vrot.lane.b32.xlu0 %v1072, 124
      %v1238 = vpop.permute.xlu0 %1237
      %1239 = vrot.lane.b32.xlu0 %v1077, 124
      %v1240 = vpop.permute.xlu0 %1239
      %1241 = vrot.lane.b32.xlu0 %v1080, 124
      %v1242 = vpop.permute.xlu0 %1241
      %1243 = vrot.lane.b32.xlu0 %v1085, 124
      %v1244 = vpop.permute.xlu0 %1243
      %1245 = vrot.lane.b32.xlu0 %v1088, 124
      %v1246 = vpop.permute.xlu0 %1245
      %1247 = vrot.lane.b32.xlu0 %v1093, 124
      %v1248 = vpop.permute.xlu0 %1247
      %1249 = vrot.lane.b32.xlu0 %v1096, 124
      %v1250 = vpop.permute.xlu0 %1249
      %1251 = vrot.lane.b32.xlu0 %v1101, 124
      %v1252 = vpop.permute.xlu0 %1251
      %1253 = vrot.lane.b32.xlu0 %v1104, 124
      %v1254 = vpop.permute.xlu0 %1253
      %1255 = vrot.lane.b32.xlu0 %v1109, 124
      %v1256 = vpop.permute.xlu0 %1255
      %1257 = vrot.lane.b32.xlu0 %v1112, 124
      %v1258 = vpop.permute.xlu0 %1257
      %1259 = vrot.lane.b32.xlu0 %v1117, 124
      %v1260 = vpop.permute.xlu0 %1259
      %1261 = vrot.lane.b32.xlu0 %v1120, 124
      %v1262 = vpop.permute.xlu0 %1261
      %1263 = vrot.lane.b32.xlu0 %v1125, 124
      %v1264 = vpop.permute.xlu0 %1263
      %1265 = vrot.lane.b32.xlu0 %v1128, 124
      %v1266 = vpop.permute.xlu0 %1265
      %v1299 = vadd.f32 %v1139, %v1204
      %v1300 = vadd.f32 %v1140, %v1206
      %v1301 = vadd.f32 %v1141, %v1208
      %v1302 = vadd.f32 %v1142, %v1210
      %v1303 = vadd.f32 %v1143, %v1212
      %v1304 = vadd.f32 %v1144, %v1214
      %v1305 = vadd.f32 %v1145, %v1216
      %v1306 = vadd.f32 %v1146, %v1218
      %v1307 = vadd.f32 %v1147, %v1220
      %v1308 = vadd.f32 %v1148, %v1222
      %v1309 = vadd.f32 %v1149, %v1224
      %v1310 = vadd.f32 %v1150, %v1226
      %v1311 = vadd.f32 %v1151, %v1228
      %v1312 = vadd.f32 %v1152, %v1230
      %v1313 = vadd.f32 %v1153, %v1232
      %v1314 = vadd.f32 %v1154, %v1234
      %v1315 = vadd.f32 %v1155, %v1236
      %v1316 = vadd.f32 %v1156, %v1238
      %v1317 = vadd.f32 %v1157, %v1240
      %v1318 = vadd.f32 %v1158, %v1242
      %v1319 = vadd.f32 %v1159, %v1244
      %v1320 = vadd.f32 %v1160, %v1246
      %v1321 = vadd.f32 %v1161, %v1248
      %v1322 = vadd.f32 %v1162, %v1250
      %v1323 = vadd.f32 %v1163, %v1252
      %v1324 = vadd.f32 %v1164, %v1254
      %v1325 = vadd.f32 %v1165, %v1256
      %v1326 = vadd.f32 %v1166, %v1258
      %v1327 = vadd.f32 %v1167, %v1260
      %v1328 = vadd.f32 %v1168, %v1262
      %v1329 = vadd.f32 %v1169, %v1264
      %v1330 = vadd.f32 %v1170, %v1266
      %1333 = vrot.lane.b32.xlu0 %v1013, 120
      %v1334 = vpop.permute.xlu0 %1333
      %1335 = vrot.lane.b32.xlu0 %v1016, 120
      %v1336 = vpop.permute.xlu0 %1335
      %1337 = vrot.lane.b32.xlu0 %v1021, 120
      %v1338 = vpop.permute.xlu0 %1337
      %1339 = vrot.lane.b32.xlu0 %v1024, 120
      %v1340 = vpop.permute.xlu0 %1339
      %1341 = vrot.lane.b32.xlu0 %v1029, 120
      %v1342 = vpop.permute.xlu0 %1341
      %1343 = vrot.lane.b32.xlu0 %v1032, 120
      %v1344 = vpop.permute.xlu0 %1343
      %1345 = vrot.lane.b32.xlu0 %v1037, 120
      %v1346 = vpop.permute.xlu0 %1345
      %1347 = vrot.lane.b32.xlu0 %v1040, 120
      %v1348 = vpop.permute.xlu0 %1347
      %1349 = vrot.lane.b32.xlu0 %v1045, 120
      %v1350 = vpop.permute.xlu0 %1349
      %1351 = vrot.lane.b32.xlu0 %v1048, 120
      %v1352 = vpop.permute.xlu0 %1351
      %1353 = vrot.lane.b32.xlu0 %v1053, 120
      %v1354 = vpop.permute.xlu0 %1353
      %1355 = vrot.lane.b32.xlu0 %v1056, 120
      %v1356 = vpop.permute.xlu0 %1355
      %1357 = vrot.lane.b32.xlu0 %v1061, 120
      %v1358 = vpop.permute.xlu0 %1357
      %1359 = vrot.lane.b32.xlu0 %v1064, 120
      %v1360 = vpop.permute.xlu0 %1359
      %1361 = vrot.lane.b32.xlu0 %v1069, 120
      %v1362 = vpop.permute.xlu0 %1361
      %1363 = vrot.lane.b32.xlu0 %v1072, 120
      %v1364 = vpop.permute.xlu0 %1363
      %1365 = vrot.lane.b32.xlu0 %v1077, 120
      %v1366 = vpop.permute.xlu0 %1365
      %1367 = vrot.lane.b32.xlu0 %v1080, 120
      %v1368 = vpop.permute.xlu0 %1367
      %1369 = vrot.lane.b32.xlu0 %v1085, 120
      %v1370 = vpop.permute.xlu0 %1369
      %1371 = vrot.lane.b32.xlu0 %v1088, 120
      %v1372 = vpop.permute.xlu0 %1371
      %1373 = vrot.lane.b32.xlu0 %v1093, 120
      %v1374 = vpop.permute.xlu0 %1373
      %1375 = vrot.lane.b32.xlu0 %v1096, 120
      %v1376 = vpop.permute.xlu0 %1375
      %1377 = vrot.lane.b32.xlu0 %v1101, 120
      %v1378 = vpop.permute.xlu0 %1377
      %1379 = vrot.lane.b32.xlu0 %v1104, 120
      %v1380 = vpop.permute.xlu0 %1379
      %1381 = vrot.lane.b32.xlu0 %v1109, 120
      %v1382 = vpop.permute.xlu0 %1381
      %1383 = vrot.lane.b32.xlu0 %v1112, 120
      %v1384 = vpop.permute.xlu0 %1383
      %1385 = vrot.lane.b32.xlu0 %v1117, 120
      %v1386 = vpop.permute.xlu0 %1385
      %1387 = vrot.lane.b32.xlu0 %v1120, 120
      %v1388 = vpop.permute.xlu0 %1387
      %1389 = vrot.lane.b32.xlu0 %v1125, 120
      %v1390 = vpop.permute.xlu0 %1389
      %1391 = vrot.lane.b32.xlu0 %v1128, 120
      %v1392 = vpop.permute.xlu0 %1391
      %1393 = vrot.lane.b32.xlu0 %v1133, 120
      %v1394 = vpop.permute.xlu0 %1393
      %1395 = vrot.lane.b32.xlu0 %v1136, 120
      %v1396 = vpop.permute.xlu0 %1395
      %v1429 = vadd.f32 %v1299, %v1334
      %v1430 = vadd.f32 %v1300, %v1336
      %v1431 = vadd.f32 %v1301, %v1338
      %v1432 = vadd.f32 %v1302, %v1340
      %v1433 = vadd.f32 %v1303, %v1342
      %v1434 = vadd.f32 %v1304, %v1344
      %v1435 = vadd.f32 %v1305, %v1346
      %v1436 = vadd.f32 %v1306, %v1348
      %v1437 = vadd.f32 %v1307, %v1350
      %v1438 = vadd.f32 %v1308, %v1352
      %v1439 = vadd.f32 %v1309, %v1354
      %v1440 = vadd.f32 %v1310, %v1356
      %v1441 = vadd.f32 %v1311, %v1358
      %v1442 = vadd.f32 %v1312, %v1360
      %v1443 = vadd.f32 %v1313, %v1362
      %v1444 = vadd.f32 %v1314, %v1364
      %v1445 = vadd.f32 %v1315, %v1366
      %v1446 = vadd.f32 %v1316, %v1368
      %v1447 = vadd.f32 %v1317, %v1370
      %v1448 = vadd.f32 %v1318, %v1372
      %v1449 = vadd.f32 %v1319, %v1374
      %v1450 = vadd.f32 %v1320, %v1376
      %v1451 = vadd.f32 %v1321, %v1378
      %v1452 = vadd.f32 %v1322, %v1380
      %v1453 = vadd.f32 %v1323, %v1382
      %v1454 = vadd.f32 %v1324, %v1384
      %v1455 = vadd.f32 %v1325, %v1386
      %v1456 = vadd.f32 %v1326, %v1388
      %v1457 = vadd.f32 %v1327, %v1390
      %v1458 = vadd.f32 %v1328, %v1392
      %v1459 = vadd.f32 %v1329, %v1394
      %v1460 = vadd.f32 %v1330, %v1396
      %v1461 = vld [vmem:[#allocation2] sm:$0xf0]
      %v1462 = vld [vmem:[#allocation2 + $0x10] sm:$0xf0]
      %v1463 = vld [vmem:[#allocation2 + $0x20] sm:$0xf0]
      %v1464 = vld [vmem:[#allocation2 + $0x30] sm:$0xf0]
      %v1465 = vld [vmem:[#allocation2 + $0x40] sm:$0xf0]
      %v1466 = vld [vmem:[#allocation2 + $0x50] sm:$0xf0]
      %v1467 = vld [vmem:[#allocation2 + $0x60] sm:$0xf0]
      %v1468 = vld [vmem:[#allocation2 + $0x70] sm:$0xf0]
      %v1469 = vld [vmem:[#allocation2 + $0x80] sm:$0xf0]
      %v1470 = vld [vmem:[#allocation2 + $0x90] sm:$0xf0]
      %v1471 = vld [vmem:[#allocation2 + $0xa0] sm:$0xf0]
      %v1472 = vld [vmem:[#allocation2 + $0xb0] sm:$0xf0]
      %v1473 = vld [vmem:[#allocation2 + $0xc0] sm:$0xf0]
      %v1474 = vld [vmem:[#allocation2 + $0xd0] sm:$0xf0]
      %v1475 = vld [vmem:[#allocation2 + $0xe0] sm:$0xf0]
      %v1476 = vld [vmem:[#allocation2 + $0xf0] sm:$0xf0]
      %v1477 = vld [vmem:[#allocation2 + $0x100] sm:$0xf0]
      %v1478 = vld [vmem:[#allocation2 + $0x110] sm:$0xf0]
      %s1479 = scalar_lea.vmem %s1, 4
      %v1480 = vld [vmem:[%s1479] sm:$0xf]
      %vm1517 = vcmask 1043456
      %v1518 = vrot.slane %v1461, 4
      %v1519 = vrot.slane %v560, 4
      %v1520 = vsel %vm1517, %v1518, %v1519
      %v1521 = vrot.slane %v1462, 4
      %v1522 = vrot.slane %v562, 4
      %v1523 = vsel %vm1517, %v1521, %v1522
      %v1524 = vrot.slane %v1463, 4
      %v1525 = vrot.slane %v564, 4
      %v1526 = vsel %vm1517, %v1524, %v1525
      %v1527 = vrot.slane %v1464, 4
      %v1528 = vrot.slane %v566, 4
      %v1529 = vsel %vm1517, %v1527, %v1528
      %v1530 = vrot.slane %v1465, 4
      %v1531 = vrot.slane %v568, 4
      %v1532 = vsel %vm1517, %v1530, %v1531
      %v1533 = vrot.slane %v1466, 4
      %v1534 = vrot.slane %v570, 4
      %v1535 = vsel %vm1517, %v1533, %v1534
      %v1536 = vrot.slane %v1467, 4
      %v1537 = vrot.slane %v572, 4
      %v1538 = vsel %vm1517, %v1536, %v1537
      %v1539 = vrot.slane %v1468, 4
      %v1540 = vrot.slane %v574, 4
      %v1541 = vsel %vm1517, %v1539, %v1540
      %v1542 = vrot.slane %v1469, 4
      %v1543 = vrot.slane %v576, 4
      %v1544 = vsel %vm1517, %v1542, %v1543
      %v1545 = vrot.slane %v1470, 4
      %v1546 = vrot.slane %v578, 4
      %v1547 = vsel %vm1517, %v1545, %v1546
      %v1548 = vrot.slane %v1471, 4
      %v1549 = vrot.slane %v580, 4
      %v1550 = vsel %vm1517, %v1548, %v1549
      %v1551 = vrot.slane %v1472, 4
      %v1552 = vrot.slane %v582, 4
      %v1553 = vsel %vm1517, %v1551, %v1552
      %v1554 = vrot.slane %v1473, 4
      %v1555 = vrot.slane %v584, 4
      %v1556 = vsel %vm1517, %v1554, %v1555
      %v1557 = vrot.slane %v1474, 4
      %v1558 = vrot.slane %v586, 4
      %v1559 = vsel %vm1517, %v1557, %v1558
      %v1560 = vrot.slane %v1475, 4
      %v1561 = vrot.slane %v588, 4
      %v1562 = vsel %vm1517, %v1560, %v1561
      %v1563 = vrot.slane %v1476, 4
      %v1564 = vrot.slane %v590, 4
      %v1565 = vsel %vm1517, %v1563, %v1564
      %v1566 = vrot.slane %v1477, 4
      %v1567 = vrot.slane %v592, 4
      %v1568 = vsel %vm1517, %v1566, %v1567
      %v1569 = vrot.slane %v1478, 4
      %v1570 = vrot.slane %v594, 4
      %v1571 = vsel %vm1517, %v1569, %v1570
      %v1573 = vsel %vm903, %v1520, 0
      %v1576 = vsel %vm903, %v1523, 0
      %v1579 = vsel %vm903, %v1526, 0
      %v1582 = vsel %vm903, %v1529, 0
      %v1585 = vsel %vm903, %v1532, 0
      %v1588 = vsel %vm903, %v1535, 0
      %v1591 = vsel %vm903, %v1538, 0
      %v1594 = vsel %vm903, %v1541, 0
      %v1597 = vsel %vm903, %v1544, 0
      %v1600 = vsel %vm903, %v1547, 0
      %v1603 = vsel %vm903, %v1550, 0
      %v1606 = vsel %vm903, %v1553, 0
      %v1609 = vsel %vm903, %v1556, 0
      %v1612 = vsel %vm903, %v1559, 0
      %v1615 = vsel %vm903, %v1562, 0
      %v1618 = vsel %vm903, %v1565, 0
      %v1621 = vsel %vm903, %v1568, 0
      %v1624 = vsel %vm903, %v1571, 0
      %v1627 = vsel %vm958, %v1480, 0
      %1629 = vmatprep.subr.bf16.mxu0 0
      %1630 = vmatpush1.bf16.msra.mxu0 %v1627
      %1631 = vmatprep.subr.bf16.mxu0 0
      %1632 = vmatpush1.bf16.msra.mxu0 0
      %1633 = vmatprep.subr.bf16.mxu0 0
      %1634 = vmatpush1.bf16.msra.mxu0 0
      %1635 = vmatprep.subr.bf16.mxu0 0
      %1636 = vmatpush1.bf16.msra.mxu0 0
      %1637 = vmatprep.subr.bf16.mxu0 0
      %1638 = vmatpush1.bf16.msra.mxu0 0
      %1639 = vmatprep.subr.bf16.mxu0 0
      %1640 = vmatpush1.bf16.msra.mxu0 0
      %1641 = vmatprep.subr.bf16.mxu0 0
      %1642 = vmatpush1.bf16.msra.mxu0 0
      %1643 = vmatprep.subr.bf16.mxu0 0
      %1644 = vmatpush1.bf16.msra.mxu0 0
      %1645 = vmatprep.subr.bf16.mxu0 0
      %1646 = vmatpush1.bf16.msra.mxu0 0
      %1647 = vmatprep.subr.bf16.mxu0 0
      %1648 = vmatpush1.bf16.msra.mxu0 0
      %1649 = vmatprep.subr.bf16.mxu0 0
      %1650 = vmatpush1.bf16.msra.mxu0 0
      %1651 = vmatprep.subr.bf16.mxu0 0
      %1652 = vmatpush1.bf16.msra.mxu0 0
      %1653 = vmatprep.subr.bf16.mxu0 0
      %1654 = vmatpush1.bf16.msra.mxu0 0
      %1655 = vmatprep.subr.bf16.mxu0 0
      %1656 = vmatpush1.bf16.msra.mxu0 0
      %1657 = vmatprep.subr.bf16.mxu0 0
      %1658 = vmatpush1.bf16.msra.mxu0 0
      %1659 = vmatprep.subr.bf16.mxu0 0
      %1660 = vmatpush1.bf16.msra.mxu0 0
      %1661 = vmatprep.mubr.bf16.mxu0 0
      %1662 = vmatmul.mubr.bf16.gmra.mrb[0].mxu0 %v1573
      %v1663 = vpop.f32.mrb[0].mxu0
      %v1664 = vadd.f32 0.0, %v1663
      %v1665 = vpop.f32.mrb[0].mxu0
      %v1666 = vpop.f32.mrb[0].mxu0
      %v1667 = vadd.f32 0.0, %v1666
      %v1668 = vpop.f32.mrb[0].mxu0
      %1669 = vmatprep.mubr.bf16.mxu0 0
      %1670 = vmatmul.mubr.bf16.gmra.mrb[0].mxu0 %v1576
      %v1671 = vpop.f32.mrb[0].mxu0
      %v1672 = vadd.f32 0.0, %v1671
      %v1673 = vpop.f32.mrb[0].mxu0
      %v1674 = vpop.f32.mrb[0].mxu0
      %v1675 = vadd.f32 0.0, %v1674
      %v1676 = vpop.f32.mrb[0].mxu0
      %1677 = vmatprep.mubr.bf16.mxu0 0
      %1678 = vmatmul.mubr.bf16.gmra.mrb[0].mxu0 %v1579
      %v1679 = vpop.f32.mrb[0].mxu0
      %v1680 = vadd.f32 0.0, %v1679
      %v1681 = vpop.f32.mrb[0].mxu0
      %v1682 = vpop.f32.mrb[0].mxu0
      %v1683 = vadd.f32 0.0, %v1682
      %v1684 = vpop.f32.mrb[0].mxu0
      %1685 = vmatprep.mubr.bf16.mxu0 0
      %1686 = vmatmul.mubr.bf16.gmra.mrb[0].mxu0 %v1582
      %v1687 = vpop.f32.mrb[0].mxu0
      %v1688 = vadd.f32 0.0, %v1687
      %v1689 = vpop.f32.mrb[0].mxu0
      %v1690 = vpop.f32.mrb[0].mxu0
      %v1691 = vadd.f32 0.0, %v1690
      %v1692 = vpop.f32.mrb[0].mxu0
      %1693 = vmatprep.mubr.bf16.mxu0 0
      %1694 = vmatmul.mubr.bf16.gmra.mrb[0].mxu0 %v1585
      %v1695 = vpop.f32.mrb[0].mxu0
      %v1696 = vadd.f32 0.0, %v1695
      %v1697 = vpop.f32.mrb[0].mxu0
      %v1698 = vpop.f32.mrb[0].mxu0
      %v1699 = vadd.f32 0.0, %v1698
      %v1700 = vpop.f32.mrb[0].mxu0
      %1701 = vmatprep.mubr.bf16.mxu0 0
      %1702 = vmatmul.mubr.bf16.gmra.mrb[0].mxu0 %v1588
      %v1703 = vpop.f32.mrb[0].mxu0
      %v1704 = vadd.f32 0.0, %v1703
      %v1705 = vpop.f32.mrb[0].mxu0
      %v1706 = vpop.f32.mrb[0].mxu0
      %v1707 = vadd.f32 0.0, %v1706
      %v1708 = vpop.f32.mrb[0].mxu0
      %1709 = vmatprep.mubr.bf16.mxu0 0
      %1710 = vmatmul.mubr.bf16.gmra.mrb[0].mxu0 %v1591
      %v1711 = vpop.f32.mrb[0].mxu0
      %v1712 = vadd.f32 0.0, %v1711
      %v1713 = vpop.f32.mrb[0].mxu0
      %v1714 = vpop.f32.mrb[0].mxu0
      %v1715 = vadd.f32 0.0, %v1714
      %v1716 = vpop.f32.mrb[0].mxu0
      %1717 = vmatprep.mubr.bf16.mxu0 0
      %1718 = vmatmul.mubr.bf16.gmra.mrb[0].mxu0 %v1594
      %v1719 = vpop.f32.mrb[0].mxu0
      %v1720 = vadd.f32 0.0, %v1719
      %v1721 = vpop.f32.mrb[0].mxu0
      %v1722 = vpop.f32.mrb[0].mxu0
      %v1723 = vadd.f32 0.0, %v1722
      %v1724 = vpop.f32.mrb[0].mxu0
      %1725 = vmatprep.mubr.bf16.mxu0 0
      %1726 = vmatmul.mubr.bf16.gmra.mrb[0].mxu0 %v1597
      %v1727 = vpop.f32.mrb[0].mxu0
      %v1728 = vadd.f32 0.0, %v1727
      %v1729 = vpop.f32.mrb[0].mxu0
      %v1730 = vpop.f32.mrb[0].mxu0
      %v1731 = vadd.f32 0.0, %v1730
      %v1732 = vpop.f32.mrb[0].mxu0
      %1733 = vmatprep.mubr.bf16.mxu0 0
      %1734 = vmatmul.mubr.bf16.gmra.mrb[0].mxu0 %v1600
      %v1735 = vpop.f32.mrb[0].mxu0
      %v1736 = vadd.f32 0.0, %v1735
      %v1737 = vpop.f32.mrb[0].mxu0
      %v1738 = vpop.f32.mrb[0].mxu0
      %v1739 = vadd.f32 0.0, %v1738
      %v1740 = vpop.f32.mrb[0].mxu0
      %1741 = vmatprep.mubr.bf16.mxu0 0
      %1742 = vmatmul.mubr.bf16.gmra.mrb[0].mxu0 %v1603
      %v1743 = vpop.f32.mrb[0].mxu0
      %v1744 = vadd.f32 0.0, %v1743
      %v1745 = vpop.f32.mrb[0].mxu0
      %v1746 = vpop.f32.mrb[0].mxu0
      %v1747 = vadd.f32 0.0, %v1746
      %v1748 = vpop.f32.mrb[0].mxu0
      %1749 = vmatprep.mubr.bf16.mxu0 0
      %1750 = vmatmul.mubr.bf16.gmra.mrb[0].mxu0 %v1606
      %v1751 = vpop.f32.mrb[0].mxu0
      %v1752 = vadd.f32 0.0, %v1751
      %v1753 = vpop.f32.mrb[0].mxu0
      %v1754 = vpop.f32.mrb[0].mxu0
      %v1755 = vadd.f32 0.0, %v1754
      %v1756 = vpop.f32.mrb[0].mxu0
      %1757 = vmatprep.mubr.bf16.mxu0 0
      %1758 = vmatmul.mubr.bf16.gmra.mrb[0].mxu0 %v1609
      %v1759 = vpop.f32.mrb[0].mxu0
      %v1760 = vadd.f32 0.0, %v1759
      %v1761 = vpop.f32.mrb[0].mxu0
      %v1762 = vpop.f32.mrb[0].mxu0
      %v1763 = vadd.f32 0.0, %v1762
      %v1764 = vpop.f32.mrb[0].mxu0
      %1765 = vmatprep.mubr.bf16.mxu0 0
      %1766 = vmatmul.mubr.bf16.gmra.mrb[0].mxu0 %v1612
      %v1767 = vpop.f32.mrb[0].mxu0
      %v1768 = vadd.f32 0.0, %v1767
      %v1769 = vpop.f32.mrb[0].mxu0
      %v1770 = vpop.f32.mrb[0].mxu0
      %v1771 = vadd.f32 0.0, %v1770
      %v1772 = vpop.f32.mrb[0].mxu0
      %1773 = vmatprep.mubr.bf16.mxu0 0
      %1774 = vmatmul.mubr.bf16.gmra.mrb[0].mxu0 %v1615
      %v1775 = vpop.f32.mrb[0].mxu0
      %v1776 = vadd.f32 0.0, %v1775
      %v1777 = vpop.f32.mrb[0].mxu0
      %v1778 = vpop.f32.mrb[0].mxu0
      %v1779 = vadd.f32 0.0, %v1778
      %v1780 = vpop.f32.mrb[0].mxu0
      %1781 = vmatprep.mubr.bf16.mxu0 0
      %1782 = vmatmul.mubr.bf16.gmra.mrb[0].mxu0 %v1618
      %v1783 = vpop.f32.mrb[0].mxu0
      %v1784 = vadd.f32 0.0, %v1783
      %v1785 = vpop.f32.mrb[0].mxu0
      %v1786 = vpop.f32.mrb[0].mxu0
      %v1787 = vadd.f32 0.0, %v1786
      %v1788 = vpop.f32.mrb[0].mxu0
      %1789 = vmatprep.mubr.bf16.mxu0 0
      %1790 = vmatmul.mubr.bf16.gmra.mrb[0].mxu0 %v1621
      %v1791 = vpop.f32.mrb[0].mxu0
      %v1792 = vadd.f32 0.0, %v1791
      %v1793 = vpop.f32.mrb[0].mxu0
      %v1794 = vpop.f32.mrb[0].mxu0
      %v1795 = vadd.f32 0.0, %v1794
      %v1796 = vpop.f32.mrb[0].mxu0
      %1797 = vmatprep.mubr.bf16.mxu0 0
      %1798 = vmatmul.mubr.bf16.gmra.mrb[0].mxu0 %v1624
      %v1799 = vpop.f32.mrb[0].mxu0
      %v1800 = vadd.f32 0.0, %v1799
      %v1801 = vpop.f32.mrb[0].mxu0
      %v1802 = vpop.f32.mrb[0].mxu0
      %v1803 = vadd.f32 0.0, %v1802
      %v1804 = vpop.f32.mrb[0].mxu0
      %1805 = vdwg.mxu0
      %v1806 = vadd.f32 %v1429, %v1664
      %v1807 = vadd.f32 %v1430, %v1667
      %v1808 = vadd.f32 %v1431, %v1672
      %v1809 = vadd.f32 %v1432, %v1675
      %v1810 = vadd.f32 %v1433, %v1680
      %v1811 = vadd.f32 %v1434, %v1683
      %v1812 = vadd.f32 %v1435, %v1688
      %v1813 = vadd.f32 %v1436, %v1691
      %v1814 = vadd.f32 %v1437, %v1696
      %v1815 = vadd.f32 %v1438, %v1699
      %v1816 = vadd.f32 %v1439, %v1704
      %v1817 = vadd.f32 %v1440, %v1707
      %v1818 = vadd.f32 %v1441, %v1712
      %v1819 = vadd.f32 %v1442, %v1715
      %v1820 = vadd.f32 %v1443, %v1720
      %v1821 = vadd.f32 %v1444, %v1723
      %v1822 = vadd.f32 %v1445, %v1728
      %v1823 = vadd.f32 %v1446, %v1731
      %v1824 = vadd.f32 %v1447, %v1736
      %v1825 = vadd.f32 %v1448, %v1739
      %v1826 = vadd.f32 %v1449, %v1744
      %v1827 = vadd.f32 %v1450, %v1747
      %v1828 = vadd.f32 %v1451, %v1752
      %v1829 = vadd.f32 %v1452, %v1755
      %v1830 = vadd.f32 %v1453, %v1760
      %v1831 = vadd.f32 %v1454, %v1763
      %v1832 = vadd.f32 %v1455, %v1768
      %v1833 = vadd.f32 %v1456, %v1771
      %v1834 = vadd.f32 %v1457, %v1776
      %v1835 = vadd.f32 %v1458, %v1779
      %v1836 = vadd.f32 %v1459, %v1784
      %v1837 = vadd.f32 %v1460, %v1787
      %1870 = vrot.lane.b32.xlu0 %v1672, 124
      %v1871 = vpop.permute.xlu0 %1870
      %1872 = vrot.lane.b32.xlu0 %v1675, 124
      %v1873 = vpop.permute.xlu0 %1872
      %1874 = vrot.lane.b32.xlu0 %v1680, 124
      %v1875 = vpop.permute.xlu0 %1874
      %1876 = vrot.lane.b32.xlu0 %v1683, 124
      %v1877 = vpop.permute.xlu0 %1876
      %1878 = vrot.lane.b32.xlu0 %v1688, 124
      %v1879 = vpop.permute.xlu0 %1878
      %1880 = vrot.lane.b32.xlu0 %v1691, 124
      %v1881 = vpop.permute.xlu0 %1880
      %1882 = vrot.lane.b32.xlu0 %v1696, 124
      %v1883 = vpop.permute.xlu0 %1882
      %1884 = vrot.lane.b32.xlu0 %v1699, 124
      %v1885 = vpop.permute.xlu0 %1884
      %1886 = vrot.lane.b32.xlu0 %v1704, 124
      %v1887 = vpop.permute.xlu0 %1886
      %1888 = vrot.lane.b32.xlu0 %v1707, 124
      %v1889 = vpop.permute.xlu0 %1888
      %1890 = vrot.lane.b32.xlu0 %v1712, 124
      %v1891 = vpop.permute.xlu0 %1890
      %1892 = vrot.lane.b32.xlu0 %v1715, 124
      %v1893 = vpop.permute.xlu0 %1892
      %1894 = vrot.lane.b32.xlu0 %v1720, 124
      %v1895 = vpop.permute.xlu0 %1894
      %1896 = vrot.lane.b32.xlu0 %v1723, 124
      %v1897 = vpop.permute.xlu0 %1896
      %1898 = vrot.lane.b32.xlu0 %v1728, 124
      %v1899 = vpop.permute.xlu0 %1898
      %1900 = vrot.lane.b32.xlu0 %v1731, 124
      %v1901 = vpop.permute.xlu0 %1900
      %1902 = vrot.lane.b32.xlu0 %v1736, 124
      %v1903 = vpop.permute.xlu0 %1902
      %1904 = vrot.lane.b32.xlu0 %v1739, 124
      %v1905 = vpop.permute.xlu0 %1904
      %1906 = vrot.lane.b32.xlu0 %v1744, 124
      %v1907 = vpop.permute.xlu0 %1906
      %1908 = vrot.lane.b32.xlu0 %v1747, 124
      %v1909 = vpop.permute.xlu0 %1908
      %1910 = vrot.lane.b32.xlu0 %v1752, 124
      %v1911 = vpop.permute.xlu0 %1910
      %1912 = vrot.lane.b32.xlu0 %v1755, 124
      %v1913 = vpop.permute.xlu0 %1912
      %1914 = vrot.lane.b32.xlu0 %v1760, 124
      %v1915 = vpop.permute.xlu0 %1914
      %1916 = vrot.lane.b32.xlu0 %v1763, 124
      %v1917 = vpop.permute.xlu0 %1916
      %1918 = vrot.lane.b32.xlu0 %v1768, 124
      %v1919 = vpop.permute.xlu0 %1918
      %1920 = vrot.lane.b32.xlu0 %v1771, 124
      %v1921 = vpop.permute.xlu0 %1920
      %1922 = vrot.lane.b32.xlu0 %v1776, 124
      %v1923 = vpop.permute.xlu0 %1922
      %1924 = vrot.lane.b32.xlu0 %v1779, 124
      %v1925 = vpop.permute.xlu0 %1924
      %1926 = vrot.lane.b32.xlu0 %v1784, 124
      %v1927 = vpop.permute.xlu0 %1926
      %1928 = vrot.lane.b32.xlu0 %v1787, 124
      %v1929 = vpop.permute.xlu0 %1928
      %1930 = vrot.lane.b32.xlu0 %v1792, 124
      %v1931 = vpop.permute.xlu0 %1930
      %1932 = vrot.lane.b32.xlu0 %v1795, 124
      %v1933 = vpop.permute.xlu0 %1932
      %v1966 = vadd.f32 %v1806, %v1871
      %v1967 = vadd.f32 %v1807, %v1873
      %v1968 = vadd.f32 %v1808, %v1875
      %v1969 = vadd.f32 %v1809, %v1877
      %v1970 = vadd.f32 %v1810, %v1879
      %v1971 = vadd.f32 %v1811, %v1881
      %v1972 = vadd.f32 %v1812, %v1883
      %v1973 = vadd.f32 %v1813, %v1885
      %v1974 = vadd.f32 %v1814, %v1887
      %v1975 = vadd.f32 %v1815, %v1889
      %v1976 = vadd.f32 %v1816, %v1891
      %v1977 = vadd.f32 %v1817, %v1893
      %v1978 = vadd.f32 %v1818, %v1895
      %v1979 = vadd.f32 %v1819, %v1897
      %v1980 = vadd.f32 %v1820, %v1899
      %v1981 = vadd.f32 %v1821, %v1901
      %v1982 = vadd.f32 %v1822, %v1903
      %v1983 = vadd.f32 %v1823, %v1905
      %v1984 = vadd.f32 %v1824, %v1907
      %v1985 = vadd.f32 %v1825, %v1909
      %v1986 = vadd.f32 %v1826, %v1911
      %v1987 = vadd.f32 %v1827, %v1913
      %v1988 = vadd.f32 %v1828, %v1915
      %v1989 = vadd.f32 %v1829, %v1917
      %v1990 = vadd.f32 %v1830, %v1919
      %v1991 = vadd.f32 %v1831, %v1921
      %v1992 = vadd.f32 %v1832, %v1923
      %v1993 = vadd.f32 %v1833, %v1925
      %v1994 = vadd.f32 %v1834, %v1927
      %v1995 = vadd.f32 %v1835, %v1929
      %v1996 = vadd.f32 %v1836, %v1931
      %v1997 = vadd.f32 %v1837, %v1933
      %2000 = vrot.lane.b32.xlu0 %v1680, 120
      %v2001 = vpop.permute.xlu0 %2000
      %2002 = vrot.lane.b32.xlu0 %v1683, 120
      %v2003 = vpop.permute.xlu0 %2002
      %2004 = vrot.lane.b32.xlu0 %v1688, 120
      %v2005 = vpop.permute.xlu0 %2004
      %2006 = vrot.lane.b32.xlu0 %v1691, 120
      %v2007 = vpop.permute.xlu0 %2006
      %2008 = vrot.lane.b32.xlu0 %v1696, 120
      %v2009 = vpop.permute.xlu0 %2008
      %2010 = vrot.lane.b32.xlu0 %v1699, 120
      %v2011 = vpop.permute.xlu0 %2010
      %2012 = vrot.lane.b32.xlu0 %v1704, 120
      %v2013 = vpop.permute.xlu0 %2012
      %2014 = vrot.lane.b32.xlu0 %v1707, 120
      %v2015 = vpop.permute.xlu0 %2014
      %2016 = vrot.lane.b32.xlu0 %v1712, 120
      %v2017 = vpop.permute.xlu0 %2016
      %2018 = vrot.lane.b32.xlu0 %v1715, 120
      %v2019 = vpop.permute.xlu0 %2018
      %2020 = vrot.lane.b32.xlu0 %v1720, 120
      %v2021 = vpop.permute.xlu0 %2020
      %2022 = vrot.lane.b32.xlu0 %v1723, 120
      %v2023 = vpop.permute.xlu0 %2022
      %2024 = vrot.lane.b32.xlu0 %v1728, 120
      %v2025 = vpop.permute.xlu0 %2024
      %2026 = vrot.lane.b32.xlu0 %v1731, 120
      %v2027 = vpop.permute.xlu0 %2026
      %2028 = vrot.lane.b32.xlu0 %v1736, 120
      %v2029 = vpop.permute.xlu0 %2028
      %2030 = vrot.lane.b32.xlu0 %v1739, 120
      %v2031 = vpop.permute.xlu0 %2030
      %2032 = vrot.lane.b32.xlu0 %v1744, 120
      %v2033 = vpop.permute.xlu0 %2032
      %2034 = vrot.lane.b32.xlu0 %v1747, 120
      %v2035 = vpop.permute.xlu0 %2034
      %2036 = vrot.lane.b32.xlu0 %v1752, 120
      %v2037 = vpop.permute.xlu0 %2036
      %2038 = vrot.lane.b32.xlu0 %v1755, 120
      %v2039 = vpop.permute.xlu0 %2038
      %2040 = vrot.lane.b32.xlu0 %v1760, 120
      %v2041 = vpop.permute.xlu0 %2040
      %2042 = vrot.lane.b32.xlu0 %v1763, 120
      %v2043 = vpop.permute.xlu0 %2042
      %2044 = vrot.lane.b32.xlu0 %v1768, 120
      %v2045 = vpop.permute.xlu0 %2044
      %2046 = vrot.lane.b32.xlu0 %v1771, 120
      %v2047 = vpop.permute.xlu0 %2046
      %2048 = vrot.lane.b32.xlu0 %v1776, 120
      %v2049 = vpop.permute.xlu0 %2048
      %2050 = vrot.lane.b32.xlu0 %v1779, 120
      %v2051 = vpop.permute.xlu0 %2050
      %2052 = vrot.lane.b32.xlu0 %v1784, 120
      %v2053 = vpop.permute.xlu0 %2052
      %2054 = vrot.lane.b32.xlu0 %v1787, 120
      %v2055 = vpop.permute.xlu0 %2054
      %2056 = vrot.lane.b32.xlu0 %v1792, 120
      %v2057 = vpop.permute.xlu0 %2056
      %2058 = vrot.lane.b32.xlu0 %v1795, 120
      %v2059 = vpop.permute.xlu0 %2058
      %2060 = vrot.lane.b32.xlu0 %v1800, 120
      %v2061 = vpop.permute.xlu0 %2060
      %2062 = vrot.lane.b32.xlu0 %v1803, 120
      %v2063 = vpop.permute.xlu0 %2062
      %v2096 = vadd.f32 %v1966, %v2001
      %v2097 = vadd.f32 %v1967, %v2003
      %v2098 = vadd.f32 %v1968, %v2005
      %v2099 = vadd.f32 %v1969, %v2007
      %v2100 = vadd.f32 %v1970, %v2009
      %v2101 = vadd.f32 %v1971, %v2011
      %v2102 = vadd.f32 %v1972, %v2013
      %v2103 = vadd.f32 %v1973, %v2015
      %v2104 = vadd.f32 %v1974, %v2017
      %v2105 = vadd.f32 %v1975, %v2019
      %v2106 = vadd.f32 %v1976, %v2021
      %v2107 = vadd.f32 %v1977, %v2023
      %v2108 = vadd.f32 %v1978, %v2025
      %v2109 = vadd.f32 %v1979, %v2027
      %v2110 = vadd.f32 %v1980, %v2029
      %v2111 = vadd.f32 %v1981, %v2031
      %v2112 = vadd.f32 %v1982, %v2033
      %v2113 = vadd.f32 %v1983, %v2035
      %v2114 = vadd.f32 %v1984, %v2037
      %v2115 = vadd.f32 %v1985, %v2039
      %v2116 = vadd.f32 %v1986, %v2041
      %v2117 = vadd.f32 %v1987, %v2043
      %v2118 = vadd.f32 %v1988, %v2045
      %v2119 = vadd.f32 %v1989, %v2047
      %v2120 = vadd.f32 %v1990, %v2049
      %v2121 = vadd.f32 %v1991, %v2051
      %v2122 = vadd.f32 %v1992, %v2053
      %v2123 = vadd.f32 %v1993, %v2055
      %v2124 = vadd.f32 %v1994, %v2057
      %v2125 = vadd.f32 %v1995, %v2059
      %v2126 = vadd.f32 %v1996, %v2061
      %v2127 = vadd.f32 %v1997, %v2063
      %v2128 = vld [vmem:[#allocation2 + $0x8] sm:$0x1f]
      %v2129 = vld [vmem:[#allocation2 + $0x18] sm:$0x1f]
      %v2130 = vld [vmem:[#allocation2 + $0x28] sm:$0x1f]
      %v2131 = vld [vmem:[#allocation2 + $0x38] sm:$0x1f]
      %v2132 = vld [vmem:[#allocation2 + $0x48] sm:$0x1f]
      %v2133 = vld [vmem:[#allocation2 + $0x58] sm:$0x1f]
      %v2134 = vld [vmem:[#allocation2 + $0x68] sm:$0x1f]
      %v2135 = vld [vmem:[#allocation2 + $0x78] sm:$0x1f]
      %v2136 = vld [vmem:[#allocation2 + $0x88] sm:$0x1f]
      %v2137 = vld [vmem:[#allocation2 + $0x98] sm:$0x1f]
      %v2138 = vld [vmem:[#allocation2 + $0xa8] sm:$0x1f]
      %v2139 = vld [vmem:[#allocation2 + $0xb8] sm:$0x1f]
      %v2140 = vld [vmem:[#allocation2 + $0xc8] sm:$0x1f]
      %v2141 = vld [vmem:[#allocation2 + $0xd8] sm:$0x1f]
      %v2142 = vld [vmem:[#allocation2 + $0xe8] sm:$0x1f]
      %v2143 = vld [vmem:[#allocation2 + $0xf8] sm:$0x1f]
      %v2144 = vld [vmem:[#allocation2 + $0x108] sm:$0x1f]
      %v2145 = vld [vmem:[#allocation2 + $0x118] sm:$0x1f]
      %s2146 = scalar_lea.vmem %s1, 8
      %v2147 = vld [vmem:[%s2146] sm:$0xf]
      %vm2148 = vsmask.f32 3328
      %v2150 = vshrl.u32 %v1461, 16
      %v2152 = vrot.slane %v2150, 4
      %v2153 = vshll.u32 %v1461, 16
      %v2155 = vrot.slane %v2153, 5
      %v2156 = vor.u32 %v2152, %v2155
      %v2158 = vshrl.u32 %v2128, 16
      %v2160 = vrot.slane %v2158, 4
      %v2161 = vshll.u32 %v2128, 16
      %v2163 = vrot.slane %v2161, 5
      %v2164 = vor.u32 %v2160, %v2163
      %v2165 = vsel %vm2148, %v2156, %v2164
      %v2167 = vshrl.u32 %v1462, 16
      %v2169 = vrot.slane %v2167, 4
      %v2170 = vshll.u32 %v1462, 16
      %v2172 = vrot.slane %v2170, 5
      %v2173 = vor.u32 %v2169, %v2172
      %v2175 = vshrl.u32 %v2129, 16
      %v2177 = vrot.slane %v2175, 4
      %v2178 = vshll.u32 %v2129, 16
      %v2180 = vrot.slane %v2178, 5
      %v2181 = vor.u32 %v2177, %v2180
      %v2182 = vsel %vm2148, %v2173, %v2181
      %v2184 = vshrl.u32 %v1463, 16
      %v2186 = vrot.slane %v2184, 4
      %v2187 = vshll.u32 %v1463, 16
      %v2189 = vrot.slane %v2187, 5
      %v2190 = vor.u32 %v2186, %v2189
      %v2192 = vshrl.u32 %v2130, 16
      %v2194 = vrot.slane %v2192, 4
      %v2195 = vshll.u32 %v2130, 16
      %v2197 = vrot.slane %v2195, 5
      %v2198 = vor.u32 %v2194, %v2197
      %v2199 = vsel %vm2148, %v2190, %v2198
      %v2201 = vshrl.u32 %v1464, 16
      %v2203 = vrot.slane %v2201, 4
      %v2204 = vshll.u32 %v1464, 16
      %v2206 = vrot.slane %v2204, 5
      %v2207 = vor.u32 %v2203, %v2206
      %v2209 = vshrl.u32 %v2131, 16
      %v2211 = vrot.slane %v2209, 4
      %v2212 = vshll.u32 %v2131, 16
      %v2214 = vrot.slane %v2212, 5
      %v2215 = vor.u32 %v2211, %v2214
      %v2216 = vsel %vm2148, %v2207, %v2215
      %v2218 = vshrl.u32 %v1465, 16
      %v2220 = vrot.slane %v2218, 4
      %v2221 = vshll.u32 %v1465, 16
      %v2223 = vrot.slane %v2221, 5
      %v2224 = vor.u32 %v2220, %v2223
      %v2226 = vshrl.u32 %v2132, 16
      %v2228 = vrot.slane %v2226, 4
      %v2229 = vshll.u32 %v2132, 16
      %v2231 = vrot.slane %v2229, 5
      %v2232 = vor.u32 %v2228, %v2231
      %v2233 = vsel %vm2148, %v2224, %v2232
      %v2235 = vshrl.u32 %v1466, 16
      %v2237 = vrot.slane %v2235, 4
      %v2238 = vshll.u32 %v1466, 16
      %v2240 = vrot.slane %v2238, 5
      %v2241 = vor.u32 %v2237, %v2240
      %v2243 = vshrl.u32 %v2133, 16
      %v2245 = vrot.slane %v2243, 4
      %v2246 = vshll.u32 %v2133, 16
      %v2248 = vrot.slane %v2246, 5
      %v2249 = vor.u32 %v2245, %v2248
      %v2250 = vsel %vm2148, %v2241, %v2249
      %v2252 = vshrl.u32 %v1467, 16
      %v2254 = vrot.slane %v2252, 4
      %v2255 = vshll.u32 %v1467, 16
      %v2257 = vrot.slane %v2255, 5
      %v2258 = vor.u32 %v2254, %v2257
      %v2260 = vshrl.u32 %v2134, 16
      %v2262 = vrot.slane %v2260, 4
      %v2263 = vshll.u32 %v2134, 16
      %v2265 = vrot.slane %v2263, 5
      %v2266 = vor.u32 %v2262, %v2265
      %v2267 = vsel %vm2148, %v2258, %v2266
      %v2269 = vshrl.u32 %v1468, 16
      %v2271 = vrot.slane %v2269, 4
      %v2272 = vshll.u32 %v1468, 16
      %v2274 = vrot.slane %v2272, 5
      %v2275 = vor.u32 %v2271, %v2274
      %v2277 = vshrl.u32 %v2135, 16
      %v2279 = vrot.slane %v2277, 4
      %v2280 = vshll.u32 %v2135, 16
      %v2282 = vrot.slane %v2280, 5
      %v2283 = vor.u32 %v2279, %v2282
      %v2284 = vsel %vm2148, %v2275, %v2283
      %v2286 = vshrl.u32 %v1469, 16
      %v2288 = vrot.slane %v2286, 4
      %v2289 = vshll.u32 %v1469, 16
      %v2291 = vrot.slane %v2289, 5
      %v2292 = vor.u32 %v2288, %v2291
      %v2294 = vshrl.u32 %v2136, 16
      %v2296 = vrot.slane %v2294, 4
      %v2297 = vshll.u32 %v2136, 16
      %v2299 = vrot.slane %v2297, 5
      %v2300 = vor.u32 %v2296, %v2299
      %v2301 = vsel %vm2148, %v2292, %v2300
      %v2303 = vshrl.u32 %v1470, 16
      %v2305 = vrot.slane %v2303, 4
      %v2306 = vshll.u32 %v1470, 16
      %v2308 = vrot.slane %v2306, 5
      %v2309 = vor.u32 %v2305, %v2308
      %v2311 = vshrl.u32 %v2137, 16
      %v2313 = vrot.slane %v2311, 4
      %v2314 = vshll.u32 %v2137, 16
      %v2316 = vrot.slane %v2314, 5
      %v2317 = vor.u32 %v2313, %v2316
      %v2318 = vsel %vm2148, %v2309, %v2317
      %v2320 = vshrl.u32 %v1471, 16
      %v2322 = vrot.slane %v2320, 4
      %v2323 = vshll.u32 %v1471, 16
      %v2325 = vrot.slane %v2323, 5
      %v2326 = vor.u32 %v2322, %v2325
      %v2328 = vshrl.u32 %v2138, 16
      %v2330 = vrot.slane %v2328, 4
      %v2331 = vshll.u32 %v2138, 16
      %v2333 = vrot.slane %v2331, 5
      %v2334 = vor.u32 %v2330, %v2333
      %v2335 = vsel %vm2148, %v2326, %v2334
      %v2337 = vshrl.u32 %v1472, 16
      %v2339 = vrot.slane %v2337, 4
      %v2340 = vshll.u32 %v1472, 16
      %v2342 = vrot.slane %v2340, 5
      %v2343 = vor.u32 %v2339, %v2342
      %v2345 = vshrl.u32 %v2139, 16
      %v2347 = vrot.slane %v2345, 4
      %v2348 = vshll.u32 %v2139, 16
      %v2350 = vrot.slane %v2348, 5
      %v2351 = vor.u32 %v2347, %v2350
      %v2352 = vsel %vm2148, %v2343, %v2351
      %v2354 = vshrl.u32 %v1473, 16
      %v2356 = vrot.slane %v2354, 4
      %v2357 = vshll.u32 %v1473, 16
      %v2359 = vrot.slane %v2357, 5
      %v2360 = vor.u32 %v2356, %v2359
      %v2362 = vshrl.u32 %v2140, 16
      %v2364 = vrot.slane %v2362, 4
      %v2365 = vshll.u32 %v2140, 16
      %v2367 = vrot.slane %v2365, 5
      %v2368 = vor.u32 %v2364, %v2367
      %v2369 = vsel %vm2148, %v2360, %v2368
      %v2371 = vshrl.u32 %v1474, 16
      %v2373 = vrot.slane %v2371, 4
      %v2374 = vshll.u32 %v1474, 16
      %v2376 = vrot.slane %v2374, 5
      %v2377 = vor.u32 %v2373, %v2376
      %v2379 = vshrl.u32 %v2141, 16
      %v2381 = vrot.slane %v2379, 4
      %v2382 = vshll.u32 %v2141, 16
      %v2384 = vrot.slane %v2382, 5
      %v2385 = vor.u32 %v2381, %v2384
      %v2386 = vsel %vm2148, %v2377, %v2385
      %v2388 = vshrl.u32 %v1475, 16
      %v2390 = vrot.slane %v2388, 4
      %v2391 = vshll.u32 %v1475, 16
      %v2393 = vrot.slane %v2391, 5
      %v2394 = vor.u32 %v2390, %v2393
      %v2396 = vshrl.u32 %v2142, 16
      %v2398 = vrot.slane %v2396, 4
      %v2399 = vshll.u32 %v2142, 16
      %v2401 = vrot.slane %v2399, 5
      %v2402 = vor.u32 %v2398, %v2401
      %v2403 = vsel %vm2148, %v2394, %v2402
      %v2405 = vshrl.u32 %v1476, 16
      %v2407 = vrot.slane %v2405, 4
      %v2408 = vshll.u32 %v1476, 16
      %v2410 = vrot.slane %v2408, 5
      %v2411 = vor.u32 %v2407, %v2410
      %v2413 = vshrl.u32 %v2143, 16
      %v2415 = vrot.slane %v2413, 4
      %v2416 = vshll.u32 %v2143, 16
      %v2418 = vrot.slane %v2416, 5
      %v2419 = vor.u32 %v2415, %v2418
      %v2420 = vsel %vm2148, %v2411, %v2419
      %v2422 = vshrl.u32 %v1477, 16
      %v2424 = vrot.slane %v2422, 4
      %v2425 = vshll.u32 %v1477, 16
      %v2427 = vrot.slane %v2425, 5
      %v2428 = vor.u32 %v2424, %v2427
      %v2430 = vshrl.u32 %v2144, 16
      %v2432 = vrot.slane %v2430, 4
      %v2433 = vshll.u32 %v2144, 16
      %v2435 = vrot.slane %v2433, 5
      %v2436 = vor.u32 %v2432, %v2435
      %v2437 = vsel %vm2148, %v2428, %v2436
      %v2439 = vshrl.u32 %v1478, 16
      %v2441 = vrot.slane %v2439, 4
      %v2442 = vshll.u32 %v1478, 16
      %v2444 = vrot.slane %v2442, 5
      %v2445 = vor.u32 %v2441, %v2444
      %v2447 = vshrl.u32 %v2145, 16
      %v2449 = vrot.slane %v2447, 4
      %v2450 = vshll.u32 %v2145, 16
      %v2452 = vrot.slane %v2450, 5
      %v2453 = vor.u32 %v2449, %v2452
      %v2454 = vsel %vm2148, %v2445, %v2453
      %v2456 = vsel %vm903, %v2165, 0
      %v2459 = vsel %vm903, %v2182, 0
      %v2462 = vsel %vm903, %v2199, 0
      %v2465 = vsel %vm903, %v2216, 0
      %v2468 = vsel %vm903, %v2233, 0
      %v2471 = vsel %vm903, %v2250, 0
      %v2474 = vsel %vm903, %v2267, 0
      %v2477 = vsel %vm903, %v2284, 0
      %v2480 = vsel %vm903, %v2301, 0
      %v2483 = vsel %vm903, %v2318, 0
      %v2486 = vsel %vm903, %v2335, 0
      %v2489 = vsel %vm903, %v2352, 0
      %v2492 = vsel %vm903, %v2369, 0
      %v2495 = vsel %vm903, %v2386, 0
      %v2498 = vsel %vm903, %v2403, 0
      %v2501 = vsel %vm903, %v2420, 0
      %v2504 = vsel %vm903, %v2437, 0
      %v2507 = vsel %vm903, %v2454, 0
      %v2510 = vsel %vm958, %v2147, 0
      %2512 = vmatprep.subr.bf16.mxu0 0
      %2513 = vmatpush1.bf16.msra.mxu0 %v2510
      %2514 = vmatprep.subr.bf16.mxu0 0
      %2515 = vmatpush1.bf16.msra.mxu0 0
      %2516 = vmatprep.subr.bf16.mxu0 0
      %2517 = vmatpush1.bf16.msra.mxu0 0
      %2518 = vmatprep.subr.bf16.mxu0 0
      %2519 = vmatpush1.bf16.msra.mxu0 0
      %2520 = vmatprep.subr.bf16.mxu0 0
      %2521 = vmatpush1.bf16.msra.mxu0 0
      %2522 = vmatprep.subr.bf16.mxu0 0
      %2523 = vmatpush1.bf16.msra.mxu0 0
      %2524 = vmatprep.subr.bf16.mxu0 0
      %2525 = vmatpush1.bf16.msra.mxu0 0
      %2526 = vmatprep.subr.bf16.mxu0 0
      %2527 = vmatpush1.bf16.msra.mxu0 0
      %2528 = vmatprep.subr.bf16.mxu0 0
      %2529 = vmatpush1.bf16.msra.mxu0 0
      %2530 = vmatprep.subr.bf16.mxu0 0
      %2531 = vmatpush1.bf16.msra.mxu0 0
      %2532 = vmatprep.subr.bf16.mxu0 0
      %2533 = vmatpush1.bf16.msra.mxu0 0
      %2534 = vmatprep.subr.bf16.mxu0 0
      %2535 = vmatpush1.bf16.msra.mxu0 0
      %2536 = vmatprep.subr.bf16.mxu0 0
      %2537 = vmatpush1.bf16.msra.mxu0 0
      %2538 = vmatprep.subr.bf16.mxu0 0
      %2539 = vmatpush1.bf16.msra.mxu0 0
      %2540 = vmatprep.subr.bf16.mxu0 0
      %2541 = vmatpush1.bf16.msra.mxu0 0
      %2542 = vmatprep.subr.bf16.mxu0 0
      %2543 = vmatpush1.bf16.msra.mxu0 0
      %2544 = vmatprep.mubr.bf16.mxu0 0
      %2545 = vmatmul.mubr.bf16.gmra.mrb[0].mxu0 %v2456
      %v2546 = vpop.f32.mrb[0].mxu0
      %v2547 = vadd.f32 0.0, %v2546
      %v2548 = vpop.f32.mrb[0].mxu0
      %v2549 = vpop.f32.mrb[0].mxu0
      %v2550 = vadd.f32 0.0, %v2549
      %v2551 = vpop.f32.mrb[0].mxu0
      %2552 = vmatprep.mubr.bf16.mxu0 0
      %2553 = vmatmul.mubr.bf16.gmra.mrb[0].mxu0 %v2459
      %v2554 = vpop.f32.mrb[0].mxu0
      %v2555 = vadd.f32 0.0, %v2554
      %v2556 = vpop.f32.mrb[0].mxu0
      %v2557 = vpop.f32.mrb[0].mxu0
      %v2558 = vadd.f32 0.0, %v2557
      %v2559 = vpop.f32.mrb[0].mxu0
      %2560 = vmatprep.mubr.bf16.mxu0 0
      %2561 = vmatmul.mubr.bf16.gmra.mrb[0].mxu0 %v2462
      %v2562 = vpop.f32.mrb[0].mxu0
      %v2563 = vadd.f32 0.0, %v2562
      %v2564 = vpop.f32.mrb[0].mxu0
      %v2565 = vpop.f32.mrb[0].mxu0
      %v2566 = vadd.f32 0.0, %v2565
      %v2567 = vpop.f32.mrb[0].mxu0
      %2568 = vmatprep.mubr.bf16.mxu0 0
      %2569 = vmatmul.mubr.bf16.gmra.mrb[0].mxu0 %v2465
      %v2570 = vpop.f32.mrb[0].mxu0
      %v2571 = vadd.f32 0.0, %v2570
      %v2572 = vpop.f32.mrb[0].mxu0
      %v2573 = vpop.f32.mrb[0].mxu0
      %v2574 = vadd.f32 0.0, %v2573
      %v2575 = vpop.f32.mrb[0].mxu0
      %2576 = vmatprep.mubr.bf16.mxu0 0
      %2577 = vmatmul.mubr.bf16.gmra.mrb[0].mxu0 %v2468
      %v2578 = vpop.f32.mrb[0].mxu0
      %v2579 = vadd.f32 0.0, %v2578
      %v2580 = vpop.f32.mrb[0].mxu0
      %v2581 = vpop.f32.mrb[0].mxu0
      %v2582 = vadd.f32 0.0, %v2581
      %v2583 = vpop.f32.mrb[0].mxu0
      %2584 = vmatprep.mubr.bf16.mxu0 0
      %2585 = vmatmul.mubr.bf16.gmra.mrb[0].mxu0 %v2471
      %v2586 = vpop.f32.mrb[0].mxu0
      %v2587 = vadd.f32 0.0, %v2586
      %v2588 = vpop.f32.mrb[0].mxu0
      %v2589 = vpop.f32.mrb[0].mxu0
      %v2590 = vadd.f32 0.0, %v2589
      %v2591 = vpop.f32.mrb[0].mxu0
      %2592 = vmatprep.mubr.bf16.mxu0 0
      %2593 = vmatmul.mubr.bf16.gmra.mrb[0].mxu0 %v2474
      %v2594 = vpop.f32.mrb[0].mxu0
      %v2595 = vadd.f32 0.0, %v2594
      %v2596 = vpop.f32.mrb[0].mxu0
      %v2597 = vpop.f32.mrb[0].mxu0
      %v2598 = vadd.f32 0.0, %v2597
      %v2599 = vpop.f32.mrb[0].mxu0
      %2600 = vmatprep.mubr.bf16.mxu0 0
      %2601 = vmatmul.mubr.bf16.gmra.mrb[0].mxu0 %v2477
      %v2602 = vpop.f32.mrb[0].mxu0
      %v2603 = vadd.f32 0.0, %v2602
      %v2604 = vpop.f32.mrb[0].mxu0
      %v2605 = vpop.f32.mrb[0].mxu0
      %v2606 = vadd.f32 0.0, %v2605
      %v2607 = vpop.f32.mrb[0].mxu0
      %2608 = vmatprep.mubr.bf16.mxu0 0
      %2609 = vmatmul.mubr.bf16.gmra.mrb[0].mxu0 %v2480
      %v2610 = vpop.f32.mrb[0].mxu0
      %v2611 = vadd.f32 0.0, %v2610
      %v2612 = vpop.f32.mrb[0].mxu0
      %v2613 = vpop.f32.mrb[0].mxu0
      %v2614 = vadd.f32 0.0, %v2613
      %v2615 = vpop.f32.mrb[0].mxu0
      %2616 = vmatprep.mubr.bf16.mxu0 0
      %2617 = vmatmul.mubr.bf16.gmra.mrb[0].mxu0 %v2483
      %v2618 = vpop.f32.mrb[0].mxu0
      %v2619 = vadd.f32 0.0, %v2618
      %v2620 = vpop.f32.mrb[0].mxu0
      %v2621 = vpop.f32.mrb[0].mxu0
      %v2622 = vadd.f32 0.0, %v2621
      %v2623 = vpop.f32.mrb[0].mxu0
      %2624 = vmatprep.mubr.bf16.mxu0 0
      %2625 = vmatmul.mubr.bf16.gmra.mrb[0].mxu0 %v2486
      %v2626 = vpop.f32.mrb[0].mxu0
      %v2627 = vadd.f32 0.0, %v2626
      %v2628 = vpop.f32.mrb[0].mxu0
      %v2629 = vpop.f32.mrb[0].mxu0
      %v2630 = vadd.f32 0.0, %v2629
      %v2631 = vpop.f32.mrb[0].mxu0
      %2632 = vmatprep.mubr.bf16.mxu0 0
      %2633 = vmatmul.mubr.bf16.gmra.mrb[0].mxu0 %v2489
      %v2634 = vpop.f32.mrb[0].mxu0
      %v2635 = vadd.f32 0.0, %v2634
      %v2636 = vpop.f32.mrb[0].mxu0
      %v2637 = vpop.f32.mrb[0].mxu0
      %v2638 = vadd.f32 0.0, %v2637
      %v2639 = vpop.f32.mrb[0].mxu0
      %2640 = vmatprep.mubr.bf16.mxu0 0
      %2641 = vmatmul.mubr.bf16.gmra.mrb[0].mxu0 %v2492
      %v2642 = vpop.f32.mrb[0].mxu0
      %v2643 = vadd.f32 0.0, %v2642
      %v2644 = vpop.f32.mrb[0].mxu0
      %v2645 = vpop.f32.mrb[0].mxu0
      %v2646 = vadd.f32 0.0, %v2645
      %v2647 = vpop.f32.mrb[0].mxu0
      %2648 = vmatprep.mubr.bf16.mxu0 0
      %2649 = vmatmul.mubr.bf16.gmra.mrb[0].mxu0 %v2495
      %v2650 = vpop.f32.mrb[0].mxu0
      %v2651 = vadd.f32 0.0, %v2650
      %v2652 = vpop.f32.mrb[0].mxu0
      %v2653 = vpop.f32.mrb[0].mxu0
      %v2654 = vadd.f32 0.0, %v2653
      %v2655 = vpop.f32.mrb[0].mxu0
      %2656 = vmatprep.mubr.bf16.mxu0 0
      %2657 = vmatmul.mubr.bf16.gmra.mrb[0].mxu0 %v2498
      %v2658 = vpop.f32.mrb[0].mxu0
      %v2659 = vadd.f32 0.0, %v2658
      %v2660 = vpop.f32.mrb[0].mxu0
      %v2661 = vpop.f32.mrb[0].mxu0
      %v2662 = vadd.f32 0.0, %v2661
      %v2663 = vpop.f32.mrb[0].mxu0
      %2664 = vmatprep.mubr.bf16.mxu0 0
      %2665 = vmatmul.mubr.bf16.gmra.mrb[0].mxu0 %v2501
      %v2666 = vpop.f32.mrb[0].mxu0
      %v2667 = vadd.f32 0.0, %v2666
      %v2668 = vpop.f32.mrb[0].mxu0
      %v2669 = vpop.f32.mrb[0].mxu0
      %v2670 = vadd.f32 0.0, %v2669
      %v2671 = vpop.f32.mrb[0].mxu0
      %2672 = vmatprep.mubr.bf16.mxu0 0
      %2673 = vmatmul.mubr.bf16.gmra.mrb[0].mxu0 %v2504
      %v2674 = vpop.f32.mrb[0].mxu0
      %v2675 = vadd.f32 0.0, %v2674
      %v2676 = vpop.f32.mrb[0].mxu0
      %v2677 = vpop.f32.mrb[0].mxu0
      %v2678 = vadd.f32 0.0, %v2677
      %v2679 = vpop.f32.mrb[0].mxu0
      %2680 = vmatprep.mubr.bf16.mxu0 0
      %2681 = vmatmul.mubr.bf16.gmra.mrb[0].mxu0 %v2507
      %v2682 = vpop.f32.mrb[0].mxu0
      %v2683 = vadd.f32 0.0, %v2682
      %v2684 = vpop.f32.mrb[0].mxu0
      %v2685 = vpop.f32.mrb[0].mxu0
      %v2686 = vadd.f32 0.0, %v2685
      %v2687 = vpop.f32.mrb[0].mxu0
      %2688 = vdwg.mxu0
      %v2689 = vadd.f32 %v2096, %v2547
      %v2690 = vadd.f32 %v2097, %v2550
      %v2691 = vadd.f32 %v2098, %v2555
      %v2692 = vadd.f32 %v2099, %v2558
      %v2693 = vadd.f32 %v2100, %v2563
      %v2694 = vadd.f32 %v2101, %v2566
      %v2695 = vadd.f32 %v2102, %v2571
      %v2696 = vadd.f32 %v2103, %v2574
      %v2697 = vadd.f32 %v2104, %v2579
      %v2698 = vadd.f32 %v2105, %v2582
      %v2699 = vadd.f32 %v2106, %v2587
      %v2700 = vadd.f32 %v2107, %v2590
      %v2701 = vadd.f32 %v2108, %v2595
      %v2702 = vadd.f32 %v2109, %v2598
      %v2703 = vadd.f32 %v2110, %v2603
      %v2704 = vadd.f32 %v2111, %v2606
      %v2705 = vadd.f32 %v2112, %v2611
      %v2706 = vadd.f32 %v2113, %v2614
      %v2707 = vadd.f32 %v2114, %v2619
      %v2708 = vadd.f32 %v2115, %v2622
      %v2709 = vadd.f32 %v2116, %v2627
      %v2710 = vadd.f32 %v2117, %v2630
      %v2711 = vadd.f32 %v2118, %v2635
      %v2712 = vadd.f32 %v2119, %v2638
      %v2713 = vadd.f32 %v2120, %v2643
      %v2714 = vadd.f32 %v2121, %v2646
      %v2715 = vadd.f32 %v2122, %v2651
      %v2716 = vadd.f32 %v2123, %v2654
      %v2717 = vadd.f32 %v2124, %v2659
      %v2718 = vadd.f32 %v2125, %v2662
      %v2719 = vadd.f32 %v2126, %v2667
      %v2720 = vadd.f32 %v2127, %v2670
      %2753 = vrot.lane.b32.xlu0 %v2555, 124
      %v2754 = vpop.permute.xlu0 %2753
      %2755 = vrot.lane.b32.xlu0 %v2558, 124
      %v2756 = vpop.permute.xlu0 %2755
      %2757 = vrot.lane.b32.xlu0 %v2563, 124
      %v2758 = vpop.permute.xlu0 %2757
      %2759 = vrot.lane.b32.xlu0 %v2566, 124
      %v2760 = vpop.permute.xlu0 %2759
      %2761 = vrot.lane.b32.xlu0 %v2571, 124
      %v2762 = vpop.permute.xlu0 %2761
      %2763 = vrot.lane.b32.xlu0 %v2574, 124
      %v2764 = vpop.permute.xlu0 %2763
      %2765 = vrot.lane.b32.xlu0 %v2579, 124
      %v2766 = vpop.permute.xlu0 %2765
      %2767 = vrot.lane.b32.xlu0 %v2582, 124
      %v2768 = vpop.permute.xlu0 %2767
      %2769 = vrot.lane.b32.xlu0 %v2587, 124
      %v2770 = vpop.permute.xlu0 %2769
      %2771 = vrot.lane.b32.xlu0 %v2590, 124
      %v2772 = vpop.permute.xlu0 %2771
      %2773 = vrot.lane.b32.xlu0 %v2595, 124
      %v2774 = vpop.permute.xlu0 %2773
      %2775 = vrot.lane.b32.xlu0 %v2598, 124
      %v2776 = vpop.permute.xlu0 %2775
      %2777 = vrot.lane.b32.xlu0 %v2603, 124
      %v2778 = vpop.permute.xlu0 %2777
      %2779 = vrot.lane.b32.xlu0 %v2606, 124
      %v2780 = vpop.permute.xlu0 %2779
      %2781 = vrot.lane.b32.xlu0 %v2611, 124
      %v2782 = vpop.permute.xlu0 %2781
      %2783 = vrot.lane.b32.xlu0 %v2614, 124
      %v2784 = vpop.permute.xlu0 %2783
      %2785 = vrot.lane.b32.xlu0 %v2619, 124
      %v2786 = vpop.permute.xlu0 %2785
      %2787 = vrot.lane.b32.xlu0 %v2622, 124
      %v2788 = vpop.permute.xlu0 %2787
      %2789 = vrot.lane.b32.xlu0 %v2627, 124
      %v2790 = vpop.permute.xlu0 %2789
      %2791 = vrot.lane.b32.xlu0 %v2630, 124
      %v2792 = vpop.permute.xlu0 %2791
      %2793 = vrot.lane.b32.xlu0 %v2635, 124
      %v2794 = vpop.permute.xlu0 %2793
      %2795 = vrot.lane.b32.xlu0 %v2638, 124
      %v2796 = vpop.permute.xlu0 %2795
      %2797 = vrot.lane.b32.xlu0 %v2643, 124
      %v2798 = vpop.permute.xlu0 %2797
      %2799 = vrot.lane.b32.xlu0 %v2646, 124
      %v2800 = vpop.permute.xlu0 %2799
      %2801 = vrot.lane.b32.xlu0 %v2651, 124
      %v2802 = vpop.permute.xlu0 %2801
      %2803 = vrot.lane.b32.xlu0 %v2654, 124
      %v2804 = vpop.permute.xlu0 %2803
      %2805 = vrot.lane.b32.xlu0 %v2659, 124
      %v2806 = vpop.permute.xlu0 %2805
      %2807 = vrot.lane.b32.xlu0 %v2662, 124
      %v2808 = vpop.permute.xlu0 %2807
      %2809 = vrot.lane.b32.xlu0 %v2667, 124
      %v2810 = vpop.permute.xlu0 %2809
      %2811 = vrot.lane.b32.xlu0 %v2670, 124
      %v2812 = vpop.permute.xlu0 %2811
      %2813 = vrot.lane.b32.xlu0 %v2675, 124
      %v2814 = vpop.permute.xlu0 %2813
      %2815 = vrot.lane.b32.xlu0 %v2678, 124
      %v2816 = vpop.permute.xlu0 %2815
      %v2849 = vadd.f32 %v2689, %v2754
      %v2850 = vadd.f32 %v2690, %v2756
      %v2851 = vadd.f32 %v2691, %v2758
      %v2852 = vadd.f32 %v2692, %v2760
      %v2853 = vadd.f32 %v2693, %v2762
      %v2854 = vadd.f32 %v2694, %v2764
      %v2855 = vadd.f32 %v2695, %v2766
      %v2856 = vadd.f32 %v2696, %v2768
      %v2857 = vadd.f32 %v2697, %v2770
      %v2858 = vadd.f32 %v2698, %v2772
      %v2859 = vadd.f32 %v2699, %v2774
      %v2860 = vadd.f32 %v2700, %v2776
      %v2861 = vadd.f32 %v2701, %v2778
      %v2862 = vadd.f32 %v2702, %v2780
      %v2863 = vadd.f32 %v2703, %v2782
      %v2864 = vadd.f32 %v2704, %v2784
      %v2865 = vadd.f32 %v2705, %v2786
      %v2866 = vadd.f32 %v2706, %v2788
      %v2867 = vadd.f32 %v2707, %v2790
      %v2868 = vadd.f32 %v2708, %v2792
      %v2869 = vadd.f32 %v2709, %v2794
      %v2870 = vadd.f32 %v2710, %v2796
      %v2871 = vadd.f32 %v2711, %v2798
      %v2872 = vadd.f32 %v2712, %v2800
      %v2873 = vadd.f32 %v2713, %v2802
      %v2874 = vadd.f32 %v2714, %v2804
      %v2875 = vadd.f32 %v2715, %v2806
      %v2876 = vadd.f32 %v2716, %v2808
      %v2877 = vadd.f32 %v2717, %v2810
      %v2878 = vadd.f32 %v2718, %v2812
      %v2879 = vadd.f32 %v2719, %v2814
      %v2880 = vadd.f32 %v2720, %v2816
      %2883 = vrot.lane.b32.xlu0 %v2563, 120
      %v2884 = vpop.permute.xlu0 %2883
      %2885 = vrot.lane.b32.xlu0 %v2566, 120
      %v2886 = vpop.permute.xlu0 %2885
      %2887 = vrot.lane.b32.xlu0 %v2571, 120
      %v2888 = vpop.permute.xlu0 %2887
      %2889 = vrot.lane.b32.xlu0 %v2574, 120
      %v2890 = vpop.permute.xlu0 %2889
      %2891 = vrot.lane.b32.xlu0 %v2579, 120
      %v2892 = vpop.permute.xlu0 %2891
      %2893 = vrot.lane.b32.xlu0 %v2582, 120
      %v2894 = vpop.permute.xlu0 %2893
      %2895 = vrot.lane.b32.xlu0 %v2587, 120
      %v2896 = vpop.permute.xlu0 %2895
      %2897 = vrot.lane.b32.xlu0 %v2590, 120
      %v2898 = vpop.permute.xlu0 %2897
      %2899 = vrot.lane.b32.xlu0 %v2595, 120
      %v2900 = vpop.permute.xlu0 %2899
      %2901 = vrot.lane.b32.xlu0 %v2598, 120
      %v2902 = vpop.permute.xlu0 %2901
      %2903 = vrot.lane.b32.xlu0 %v2603, 120
      %v2904 = vpop.permute.xlu0 %2903
      %2905 = vrot.lane.b32.xlu0 %v2606, 120
      %v2906 = vpop.permute.xlu0 %2905
      %2907 = vrot.lane.b32.xlu0 %v2611, 120
      %v2908 = vpop.permute.xlu0 %2907
      %2909 = vrot.lane.b32.xlu0 %v2614, 120
      %v2910 = vpop.permute.xlu0 %2909
      %2911 = vrot.lane.b32.xlu0 %v2619, 120
      %v2912 = vpop.permute.xlu0 %2911
      %2913 = vrot.lane.b32.xlu0 %v2622, 120
      %v2914 = vpop.permute.xlu0 %2913
      %2915 = vrot.lane.b32.xlu0 %v2627, 120
      %v2916 = vpop.permute.xlu0 %2915
      %2917 = vrot.lane.b32.xlu0 %v2630, 120
      %v2918 = vpop.permute.xlu0 %2917
      %2919 = vrot.lane.b32.xlu0 %v2635, 120
      %v2920 = vpop.permute.xlu0 %2919
      %2921 = vrot.lane.b32.xlu0 %v2638, 120
      %v2922 = vpop.permute.xlu0 %2921
      %2923 = vrot.lane.b32.xlu0 %v2643, 120
      %v2924 = vpop.permute.xlu0 %2923
      %2925 = vrot.lane.b32.xlu0 %v2646, 120
      %v2926 = vpop.permute.xlu0 %2925
      %2927 = vrot.lane.b32.xlu0 %v2651, 120
      %v2928 = vpop.permute.xlu0 %2927
      %2929 = vrot.lane.b32.xlu0 %v2654, 120
      %v2930 = vpop.permute.xlu0 %2929
      %2931 = vrot.lane.b32.xlu0 %v2659, 120
      %v2932 = vpop.permute.xlu0 %2931
      %2933 = vrot.lane.b32.xlu0 %v2662, 120
      %v2934 = vpop.permute.xlu0 %2933
      %2935 = vrot.lane.b32.xlu0 %v2667, 120
      %v2936 = vpop.permute.xlu0 %2935
      %2937 = vrot.lane.b32.xlu0 %v2670, 120
      %v2938 = vpop.permute.xlu0 %2937
      %2939 = vrot.lane.b32.xlu0 %v2675, 120
      %v2940 = vpop.permute.xlu0 %2939
      %2941 = vrot.lane.b32.xlu0 %v2678, 120
      %v2942 = vpop.permute.xlu0 %2941
      %2943 = vrot.lane.b32.xlu0 %v2683, 120
      %v2944 = vpop.permute.xlu0 %2943
      %2945 = vrot.lane.b32.xlu0 %v2686, 120
      %v2946 = vpop.permute.xlu0 %2945
      %v2979 = vadd.f32 %v2849, %v2884
      %v2980 = vadd.f32 %v2850, %v2886
      %v2981 = vadd.f32 %v2851, %v2888
      %v2982 = vadd.f32 %v2852, %v2890
      %v2983 = vadd.f32 %v2853, %v2892
      %v2984 = vadd.f32 %v2854, %v2894
      %v2985 = vadd.f32 %v2855, %v2896
      %v2986 = vadd.f32 %v2856, %v2898
      %v2987 = vadd.f32 %v2857, %v2900
      %v2988 = vadd.f32 %v2858, %v2902
      %v2989 = vadd.f32 %v2859, %v2904
      %v2990 = vadd.f32 %v2860, %v2906
      %v2991 = vadd.f32 %v2861, %v2908
      %v2992 = vadd.f32 %v2862, %v2910
      %v2993 = vadd.f32 %v2863, %v2912
      %v2994 = vadd.f32 %v2864, %v2914
      %v2995 = vadd.f32 %v2865, %v2916
      %v2996 = vadd.f32 %v2866, %v2918
      %v2997 = vadd.f32 %v2867, %v2920
      %v2998 = vadd.f32 %v2868, %v2922
      %v2999 = vadd.f32 %v2869, %v2924
      %v3000 = vadd.f32 %v2870, %v2926
      %v3001 = vadd.f32 %v2871, %v2928
      %v3002 = vadd.f32 %v2872, %v2930
      %v3003 = vadd.f32 %v2873, %v2932
      %v3004 = vadd.f32 %v2874, %v2934
      %v3005 = vadd.f32 %v2875, %v2936
      %v3006 = vadd.f32 %v2876, %v2938
      %v3007 = vadd.f32 %v2877, %v2940
      %v3008 = vadd.f32 %v2878, %v2942
      %v3009 = vadd.f32 %v2879, %v2944
      %v3010 = vadd.f32 %v2880, %v2946
      %v3011 = vld [vmem:[%s2] sm:$0x1]
      %v3013 = vlaneseq
      %v3014 = vshrl.u32 %v3013, 7
      %v3015 = vsub.s32 0, %v3014
      %v3016 = vrot.slane %v3011, %v3015
      %v3018 = vadd.f32 %v2979, %v3016
      %v3019 = vadd.f32 %v2980, %v3016
      %v3020 = vadd.f32 %v2981, %v3016
      %v3021 = vadd.f32 %v2982, %v3016
      %v3022 = vadd.f32 %v2983, %v3016
      %v3023 = vadd.f32 %v2984, %v3016
      %v3024 = vadd.f32 %v2985, %v3016
      %v3025 = vadd.f32 %v2986, %v3016
      %v3026 = vadd.f32 %v2987, %v3016
      %v3027 = vadd.f32 %v2988, %v3016
      %v3028 = vadd.f32 %v2989, %v3016
      %v3029 = vadd.f32 %v2990, %v3016
      %v3030 = vadd.f32 %v2991, %v3016
      %v3031 = vadd.f32 %v2992, %v3016
      %v3032 = vadd.f32 %v2993, %v3016
      %v3033 = vadd.f32 %v2994, %v3016
      %v3034 = vadd.f32 %v2995, %v3016
      %v3035 = vadd.f32 %v2996, %v3016
      %v3036 = vadd.f32 %v2997, %v3016
      %v3037 = vadd.f32 %v2998, %v3016
      %v3038 = vadd.f32 %v2999, %v3016
      %v3039 = vadd.f32 %v3000, %v3016
      %v3040 = vadd.f32 %v3001, %v3016
      %v3041 = vadd.f32 %v3002, %v3016
      %v3042 = vadd.f32 %v3003, %v3016
      %v3043 = vadd.f32 %v3004, %v3016
      %v3044 = vadd.f32 %v3005, %v3016
      %v3045 = vadd.f32 %v3006, %v3016
      %v3046 = vadd.f32 %v3007, %v3016
      %v3047 = vadd.f32 %v3008, %v3016
      %v3048 = vadd.f32 %v3009, %v3016
      %v3049 = vadd.f32 %v3010, %v3016
      %vm3050 = vcmp.gt.f32.partialorder %v3018, 0.0
      %vm3051 = vcmp.gt.f32.partialorder %v3019, 0.0
      %vm3052 = vcmp.gt.f32.partialorder %v3020, 0.0
      %vm3053 = vcmp.gt.f32.partialorder %v3021, 0.0
      %vm3054 = vcmp.gt.f32.partialorder %v3022, 0.0
      %vm3055 = vcmp.gt.f32.partialorder %v3023, 0.0
      %vm3056 = vcmp.gt.f32.partialorder %v3024, 0.0
      %vm3057 = vcmp.gt.f32.partialorder %v3025, 0.0
      %vm3058 = vcmp.gt.f32.partialorder %v3026, 0.0
      %vm3059 = vcmp.gt.f32.partialorder %v3027, 0.0
      %vm3060 = vcmp.gt.f32.partialorder %v3028, 0.0
      %vm3061 = vcmp.gt.f32.partialorder %v3029, 0.0
      %vm3062 = vcmp.gt.f32.partialorder %v3030, 0.0
      %vm3063 = vcmp.gt.f32.partialorder %v3031, 0.0
      %vm3064 = vcmp.gt.f32.partialorder %v3032, 0.0
      %vm3065 = vcmp.gt.f32.partialorder %v3033, 0.0
      %vm3066 = vcmp.gt.f32.partialorder %v3034, 0.0
      %vm3067 = vcmp.gt.f32.partialorder %v3035, 0.0
      %vm3068 = vcmp.gt.f32.partialorder %v3036, 0.0
      %vm3069 = vcmp.gt.f32.partialorder %v3037, 0.0
      %vm3070 = vcmp.gt.f32.partialorder %v3038, 0.0
      %vm3071 = vcmp.gt.f32.partialorder %v3039, 0.0
      %vm3072 = vcmp.gt.f32.partialorder %v3040, 0.0
      %vm3073 = vcmp.gt.f32.partialorder %v3041, 0.0
      %vm3074 = vcmp.gt.f32.partialorder %v3042, 0.0
      %vm3075 = vcmp.gt.f32.partialorder %v3043, 0.0
      %vm3076 = vcmp.gt.f32.partialorder %v3044, 0.0
      %vm3077 = vcmp.gt.f32.partialorder %v3045, 0.0
      %vm3078 = vcmp.gt.f32.partialorder %v3046, 0.0
      %vm3079 = vcmp.gt.f32.partialorder %v3047, 0.0
      %vm3080 = vcmp.gt.f32.partialorder %v3048, 0.0
      %vm3081 = vcmp.gt.f32.partialorder %v3049, 0.0
      %v3082 = vmul.f32 %v3018, 0.2
      %v3083 = vmul.f32 %v3019, 0.2
      %v3084 = vmul.f32 %v3020, 0.2
      %v3085 = vmul.f32 %v3021, 0.2
      %v3086 = vmul.f32 %v3022, 0.2
      %v3087 = vmul.f32 %v3023, 0.2
      %v3088 = vmul.f32 %v3024, 0.2
      %v3089 = vmul.f32 %v3025, 0.2
      %v3090 = vmul.f32 %v3026, 0.2
      %v3091 = vmul.f32 %v3027, 0.2
      %v3092 = vmul.f32 %v3028, 0.2
      %v3093 = vmul.f32 %v3029, 0.2
      %v3094 = vmul.f32 %v3030, 0.2
      %v3095 = vmul.f32 %v3031, 0.2
      %v3096 = vmul.f32 %v3032, 0.2
      %v3097 = vmul.f32 %v3033, 0.2
      %v3098 = vmul.f32 %v3034, 0.2
      %v3099 = vmul.f32 %v3035, 0.2
      %v3100 = vmul.f32 %v3036, 0.2
      %v3101 = vmul.f32 %v3037, 0.2
      %v3102 = vmul.f32 %v3038, 0.2
      %v3103 = vmul.f32 %v3039, 0.2
      %v3104 = vmul.f32 %v3040, 0.2
      %v3105 = vmul.f32 %v3041, 0.2
      %v3106 = vmul.f32 %v3042, 0.2
      %v3107 = vmul.f32 %v3043, 0.2
      %v3108 = vmul.f32 %v3044, 0.2
      %v3109 = vmul.f32 %v3045, 0.2
      %v3110 = vmul.f32 %v3046, 0.2
      %v3111 = vmul.f32 %v3047, 0.2
      %v3112 = vmul.f32 %v3048, 0.2
      %v3113 = vmul.f32 %v3049, 0.2
      %v3114 = vsel %vm3050, %v3018, %v3082
      %v3115 = vsel %vm3051, %v3019, %v3083
      %v3116 = vsel %vm3052, %v3020, %v3084
      %v3117 = vsel %vm3053, %v3021, %v3085
      %v3118 = vsel %vm3054, %v3022, %v3086
      %v3119 = vsel %vm3055, %v3023, %v3087
      %v3120 = vsel %vm3056, %v3024, %v3088
      %v3121 = vsel %vm3057, %v3025, %v3089
      %v3122 = vsel %vm3058, %v3026, %v3090
      %v3123 = vsel %vm3059, %v3027, %v3091
      %v3124 = vsel %vm3060, %v3028, %v3092
      %v3125 = vsel %vm3061, %v3029, %v3093
      %v3126 = vsel %vm3062, %v3030, %v3094
      %v3127 = vsel %vm3063, %v3031, %v3095
      %v3128 = vsel %vm3064, %v3032, %v3096
      %v3129 = vsel %vm3065, %v3033, %v3097
      %v3130 = vsel %vm3066, %v3034, %v3098
      %v3131 = vsel %vm3067, %v3035, %v3099
      %v3132 = vsel %vm3068, %v3036, %v3100
      %v3133 = vsel %vm3069, %v3037, %v3101
      %v3134 = vsel %vm3070, %v3038, %v3102
      %v3135 = vsel %vm3071, %v3039, %v3103
      %v3136 = vsel %vm3072, %v3040, %v3104
      %v3137 = vsel %vm3073, %v3041, %v3105
      %v3138 = vsel %vm3074, %v3042, %v3106
      %v3139 = vsel %vm3075, %v3043, %v3107
      %v3140 = vsel %vm3076, %v3044, %v3108
      %v3141 = vsel %vm3077, %v3045, %v3109
      %v3142 = vsel %vm3078, %v3046, %v3110
      %v3143 = vsel %vm3079, %v3047, %v3111
      %v3144 = vsel %vm3080, %v3048, %v3112
      %v3145 = vsel %vm3081, %v3049, %v3113
      %v3146 = vpack.c.bf16 %v3115, %v3114
      %v3147 = vpack.c.bf16 %v3117, %v3116
      %v3148 = vpack.c.bf16 %v3119, %v3118
      %v3149 = vpack.c.bf16 %v3121, %v3120
      %v3150 = vpack.c.bf16 %v3123, %v3122
      %v3151 = vpack.c.bf16 %v3125, %v3124
      %v3152 = vpack.c.bf16 %v3127, %v3126
      %v3153 = vpack.c.bf16 %v3129, %v3128
      %v3154 = vpack.c.bf16 %v3131, %v3130
      %v3155 = vpack.c.bf16 %v3133, %v3132
      %v3156 = vpack.c.bf16 %v3135, %v3134
      %v3157 = vpack.c.bf16 %v3137, %v3136
      %v3158 = vpack.c.bf16 %v3139, %v3138
      %v3159 = vpack.c.bf16 %v3141, %v3140
      %v3160 = vpack.c.bf16 %v3143, %v3142
      %v3161 = vpack.c.bf16 %v3145, %v3144
      %v3178 = vrot.slane %v3146, 4
      %v3179 = vrot.slane %v3147, 4
      %v3180 = vrot.slane %v3148, 4
      %v3181 = vrot.slane %v3149, 4
      %v3182 = vrot.slane %v3150, 4
      %v3183 = vrot.slane %v3151, 4
      %v3184 = vrot.slane %v3152, 4
      %v3185 = vrot.slane %v3153, 4
      %v3186 = vrot.slane %v3154, 4
      %v3187 = vrot.slane %v3155, 4
      %v3188 = vrot.slane %v3156, 4
      %v3189 = vrot.slane %v3157, 4
      %v3190 = vrot.slane %v3158, 4
      %v3191 = vrot.slane %v3159, 4
      %v3192 = vrot.slane %v3160, 4
      %v3193 = vrot.slane %v3161, 4
      %3194 = vrot.lane.b32.xlu0 %v3178, 8
      %v3195 = vpop.permute.xlu0 %3194
      %3196 = vrot.lane.b32.xlu0 %v3179, 8
      %v3197 = vpop.permute.xlu0 %3196
      %3198 = vrot.lane.b32.xlu0 %v3180, 8
      %v3199 = vpop.permute.xlu0 %3198
      %3200 = vrot.lane.b32.xlu0 %v3181, 8
      %v3201 = vpop.permute.xlu0 %3200
      %3202 = vrot.lane.b32.xlu0 %v3182, 8
      %v3203 = vpop.permute.xlu0 %3202
      %3204 = vrot.lane.b32.xlu0 %v3183, 8
      %v3205 = vpop.permute.xlu0 %3204
      %3206 = vrot.lane.b32.xlu0 %v3184, 8
      %v3207 = vpop.permute.xlu0 %3206
      %3208 = vrot.lane.b32.xlu0 %v3185, 8
      %v3209 = vpop.permute.xlu0 %3208
      %3210 = vrot.lane.b32.xlu0 %v3186, 8
      %v3211 = vpop.permute.xlu0 %3210
      %3212 = vrot.lane.b32.xlu0 %v3187, 8
      %v3213 = vpop.permute.xlu0 %3212
      %3214 = vrot.lane.b32.xlu0 %v3188, 8
      %v3215 = vpop.permute.xlu0 %3214
      %3216 = vrot.lane.b32.xlu0 %v3189, 8
      %v3217 = vpop.permute.xlu0 %3216
      %3218 = vrot.lane.b32.xlu0 %v3190, 8
      %v3219 = vpop.permute.xlu0 %3218
      %3220 = vrot.lane.b32.xlu0 %v3191, 8
      %v3221 = vpop.permute.xlu0 %3220
      %3222 = vrot.lane.b32.xlu0 %v3192, 8
      %v3223 = vpop.permute.xlu0 %3222
      %3224 = vrot.lane.b32.xlu0 %v3193, 8
      %v3225 = vpop.permute.xlu0 %3224
      %vm3242 = vcmask 97348
      %3243 = vst.msk [vmem:[%s394] sm:$0xf0] %vm3242, %v3195
      %vm3244 = vcmask 93248
      %3245 = vst.msk [vmem:[%s394 + $0x8] sm:$0xf] %vm3244, %v3195
      %3246 = vst.msk [vmem:[%s394 + $0x10] sm:$0xf0] %vm3242, %v3197
      %3247 = vst.msk [vmem:[%s394 + $0x18] sm:$0xf] %vm3244, %v3197
      %3248 = vst.msk [vmem:[%s394 + $0x20] sm:$0xf0] %vm3242, %v3199
      %3249 = vst.msk [vmem:[%s394 + $0x28] sm:$0xf] %vm3244, %v3199
      %3250 = vst.msk [vmem:[%s394 + $0x30] sm:$0xf0] %vm3242, %v3201
      %3251 = vst.msk [vmem:[%s394 + $0x38] sm:$0xf] %vm3244, %v3201
      %3252 = vst.msk [vmem:[%s394 + $0x40] sm:$0xf0] %vm3242, %v3203
      %3253 = vst.msk [vmem:[%s394 + $0x48] sm:$0xf] %vm3244, %v3203
      %3254 = vst.msk [vmem:[%s394 + $0x50] sm:$0xf0] %vm3242, %v3205
      %3255 = vst.msk [vmem:[%s394 + $0x58] sm:$0xf] %vm3244, %v3205
      %3256 = vst.msk [vmem:[%s394 + $0x60] sm:$0xf0] %vm3242, %v3207
      %3257 = vst.msk [vmem:[%s394 + $0x68] sm:$0xf] %vm3244, %v3207
      %3258 = vst.msk [vmem:[%s394 + $0x70] sm:$0xf0] %vm3242, %v3209
      %3259 = vst.msk [vmem:[%s394 + $0x78] sm:$0xf] %vm3244, %v3209
      %3260 = vst.msk [vmem:[%s394 + $0x80] sm:$0xf0] %vm3242, %v3211
      %3261 = vst.msk [vmem:[%s394 + $0x88] sm:$0xf] %vm3244, %v3211
      %3262 = vst.msk [vmem:[%s394 + $0x90] sm:$0xf0] %vm3242, %v3213
      %3263 = vst.msk [vmem:[%s394 + $0x98] sm:$0xf] %vm3244, %v3213
      %3264 = vst.msk [vmem:[%s394 + $0xa0] sm:$0xf0] %vm3242, %v3215
      %3265 = vst.msk [vmem:[%s394 + $0xa8] sm:$0xf] %vm3244, %v3215
      %3266 = vst.msk [vmem:[%s394 + $0xb0] sm:$0xf0] %vm3242, %v3217
      %3267 = vst.msk [vmem:[%s394 + $0xb8] sm:$0xf] %vm3244, %v3217
      %3268 = vst.msk [vmem:[%s394 + $0xc0] sm:$0xf0] %vm3242, %v3219
      %3269 = vst.msk [vmem:[%s394 + $0xc8] sm:$0xf] %vm3244, %v3219
      %3270 = vst.msk [vmem:[%s394 + $0xd0] sm:$0xf0] %vm3242, %v3221
      %3271 = vst.msk [vmem:[%s394 + $0xd8] sm:$0xf] %vm3244, %v3221
      %3272 = vst.msk [vmem:[%s394 + $0xe0] sm:$0xf0] %vm3242, %v3223
      %3273 = vst.msk [vmem:[%s394 + $0xe8] sm:$0xf] %vm3244, %v3223
      %3274 = vst.msk [vmem:[%s394 + $0xf0] sm:$0xf0] %vm3242, %v3225
      %3275 = vst.msk [vmem:[%s394 + $0xf8] sm:$0xf] %vm3244, %v3225
      %v3276 = vld [vmem:[#allocation2] sm:$0xf8]
      %v3277 = vld [vmem:[#allocation2 + $0x8] sm:$0xf]
      %v3278 = vld [vmem:[#allocation2 + $0x10] sm:$0xf8]
      %v3279 = vld [vmem:[#allocation2 + $0x18] sm:$0xf]
      %v3280 = vld [vmem:[#allocation2 + $0x20] sm:$0xf8]
      %v3281 = vld [vmem:[#allocation2 + $0x28] sm:$0xf]
      %v3282 = vld [vmem:[#allocation2 + $0x30] sm:$0xf8]
      %v3283 = vld [vmem:[#allocation2 + $0x38] sm:$0xf]
      %v3284 = vld [vmem:[#allocation2 + $0x40] sm:$0xf8]
      %v3285 = vld [vmem:[#allocation2 + $0x48] sm:$0xf]
      %v3286 = vld [vmem:[#allocation2 + $0x50] sm:$0xf8]
      %v3287 = vld [vmem:[#allocation2 + $0x58] sm:$0xf]
      %v3288 = vld [vmem:[#allocation2 + $0x60] sm:$0xf8]
      %v3289 = vld [vmem:[#allocation2 + $0x68] sm:$0xf]
      %v3290 = vld [vmem:[#allocation2 + $0x70] sm:$0xf8]
      %v3291 = vld [vmem:[#allocation2 + $0x78] sm:$0xf]
      %v3292 = vld [vmem:[#allocation2 + $0x80] sm:$0xf8]
      %v3293 = vld [vmem:[#allocation2 + $0x88] sm:$0xf]
      %v3294 = vld [vmem:[#allocation2 + $0x90] sm:$0xf8]
      %v3295 = vld [vmem:[#allocation2 + $0x98] sm:$0xf]
      %v3296 = vld [vmem:[#allocation2 + $0xa0] sm:$0xf8]
      %v3297 = vld [vmem:[#allocation2 + $0xa8] sm:$0xf]
      %v3298 = vld [vmem:[#allocation2 + $0xb0] sm:$0xf8]
      %v3299 = vld [vmem:[#allocation2 + $0xb8] sm:$0xf]
      %v3300 = vld [vmem:[#allocation2 + $0xc0] sm:$0xf8]
      %v3301 = vld [vmem:[#allocation2 + $0xc8] sm:$0xf]
      %v3302 = vld [vmem:[#allocation2 + $0xd0] sm:$0xf8]
      %v3303 = vld [vmem:[#allocation2 + $0xd8] sm:$0xf]
      %v3304 = vld [vmem:[#allocation2 + $0xe0] sm:$0xf8]
      %v3305 = vld [vmem:[#allocation2 + $0xe8] sm:$0xf]
      %v3306 = vld [vmem:[#allocation2 + $0xf0] sm:$0xf8]
      %v3307 = vld [vmem:[#allocation2 + $0xf8] sm:$0xf]
      %v3308 = vld [vmem:[#allocation2 + $0x100] sm:$0xf8]
      %v3309 = vld [vmem:[#allocation2 + $0x108] sm:$0xf]
      %v3310 = vld [vmem:[#allocation2 + $0x110] sm:$0xf8]
      %v3311 = vld [vmem:[#allocation2 + $0x118] sm:$0xf]
      %v3312 = vld [vmem:[%s3] sm:$0xf]
      %v3313 = vld [vmem:[%s3 + $0x4] sm:$0x3]
      %v3315 = vshrl.u32 %v3276, 16
      %v3317 = vrot.slane %v3315, 3
      %v3318 = vshll.u32 %v3276, 16
      %v3320 = vrot.slane %v3318, 4
      %v3321 = vor.u32 %v3317, %v3320
      %v3323 = vshrl.u32 %v3277, 16
      %v3325 = vrot.slane %v3323, 3
      %v3326 = vshll.u32 %v3277, 16
      %v3328 = vrot.slane %v3326, 4
      %v3329 = vor.u32 %v3325, %v3328
      %v3330 = vsel %vm596, %v3321, %v3329
      %v3332 = vshrl.u32 %v3278, 16
      %v3334 = vrot.slane %v3332, 3
      %v3335 = vshll.u32 %v3278, 16
      %v3337 = vrot.slane %v3335, 4
      %v3338 = vor.u32 %v3334, %v3337
      %v3340 = vshrl.u32 %v3279, 16
      %v3342 = vrot.slane %v3340, 3
      %v3343 = vshll.u32 %v3279, 16
      %v3345 = vrot.slane %v3343, 4
      %v3346 = vor.u32 %v3342, %v3345
      %v3347 = vsel %vm596, %v3338, %v3346
      %v3349 = vshrl.u32 %v3280, 16
      %v3351 = vrot.slane %v3349, 3
      %v3352 = vshll.u32 %v3280, 16
      %v3354 = vrot.slane %v3352, 4
      %v3355 = vor.u32 %v3351, %v3354
      %v3357 = vshrl.u32 %v3281, 16
      %v3359 = vrot.slane %v3357, 3
      %v3360 = vshll.u32 %v3281, 16
      %v3362 = vrot.slane %v3360, 4
      %v3363 = vor.u32 %v3359, %v3362
      %v3364 = vsel %vm596, %v3355, %v3363
      %v3366 = vshrl.u32 %v3282, 16
      %v3368 = vrot.slane %v3366, 3
      %v3369 = vshll.u32 %v3282, 16
      %v3371 = vrot.slane %v3369, 4
      %v3372 = vor.u32 %v3368, %v3371
      %v3374 = vshrl.u32 %v3283, 16
      %v3376 = vrot.slane %v3374, 3
      %v3377 = vshll.u32 %v3283, 16
      %v3379 = vrot.slane %v3377, 4
      %v3380 = vor.u32 %v3376, %v3379
      %v3381 = vsel %vm596, %v3372, %v3380
      %v3383 = vshrl.u32 %v3284, 16
      %v3385 = vrot.slane %v3383, 3
      %v3386 = vshll.u32 %v3284, 16
      %v3388 = vrot.slane %v3386, 4
      %v3389 = vor.u32 %v3385, %v3388
      %v3391 = vshrl.u32 %v3285, 16
      %v3393 = vrot.slane %v3391, 3
      %v3394 = vshll.u32 %v3285, 16
      %v3396 = vrot.slane %v3394, 4
      %v3397 = vor.u32 %v3393, %v3396
      %v3398 = vsel %vm596, %v3389, %v3397
      %v3400 = vshrl.u32 %v3286, 16
      %v3402 = vrot.slane %v3400, 3
      %v3403 = vshll.u32 %v3286, 16
      %v3405 = vrot.slane %v3403, 4
      %v3406 = vor.u32 %v3402, %v3405
      %v3408 = vshrl.u32 %v3287, 16
      %v3410 = vrot.slane %v3408, 3
      %v3411 = vshll.u32 %v3287, 16
      %v3413 = vrot.slane %v3411, 4
      %v3414 = vor.u32 %v3410, %v3413
      %v3415 = vsel %vm596, %v3406, %v3414
      %v3417 = vshrl.u32 %v3288, 16
      %v3419 = vrot.slane %v3417, 3
      %v3420 = vshll.u32 %v3288, 16
      %v3422 = vrot.slane %v3420, 4
      %v3423 = vor.u32 %v3419, %v3422
      %v3425 = vshrl.u32 %v3289, 16
      %v3427 = vrot.slane %v3425, 3
      %v3428 = vshll.u32 %v3289, 16
      %v3430 = vrot.slane %v3428, 4
      %v3431 = vor.u32 %v3427, %v3430
      %v3432 = vsel %vm596, %v3423, %v3431
      %v3434 = vshrl.u32 %v3290, 16
      %v3436 = vrot.slane %v3434, 3
      %v3437 = vshll.u32 %v3290, 16
      %v3439 = vrot.slane %v3437, 4
      %v3440 = vor.u32 %v3436, %v3439
      %v3442 = vshrl.u32 %v3291, 16
      %v3444 = vrot.slane %v3442, 3
      %v3445 = vshll.u32 %v3291, 16
      %v3447 = vrot.slane %v3445, 4
      %v3448 = vor.u32 %v3444, %v3447
      %v3449 = vsel %vm596, %v3440, %v3448
      %v3451 = vshrl.u32 %v3292, 16
      %v3453 = vrot.slane %v3451, 3
      %v3454 = vshll.u32 %v3292, 16
      %v3456 = vrot.slane %v3454, 4
      %v3457 = vor.u32 %v3453, %v3456
      %v3459 = vshrl.u32 %v3293, 16
      %v3461 = vrot.slane %v3459, 3
      %v3462 = vshll.u32 %v3293, 16
      %v3464 = vrot.slane %v3462, 4
      %v3465 = vor.u32 %v3461, %v3464
      %v3466 = vsel %vm596, %v3457, %v3465
      %v3468 = vshrl.u32 %v3294, 16
      %v3470 = vrot.slane %v3468, 3
      %v3471 = vshll.u32 %v3294, 16
      %v3473 = vrot.slane %v3471, 4
      %v3474 = vor.u32 %v3470, %v3473
      %v3476 = vshrl.u32 %v3295, 16
      %v3478 = vrot.slane %v3476, 3
      %v3479 = vshll.u32 %v3295, 16
      %v3481 = vrot.slane %v3479, 4
      %v3482 = vor.u32 %v3478, %v3481
      %v3483 = vsel %vm596, %v3474, %v3482
      %v3485 = vshrl.u32 %v3296, 16
      %v3487 = vrot.slane %v3485, 3
      %v3488 = vshll.u32 %v3296, 16
      %v3490 = vrot.slane %v3488, 4
      %v3491 = vor.u32 %v3487, %v3490
      %v3493 = vshrl.u32 %v3297, 16
      %v3495 = vrot.slane %v3493, 3
      %v3496 = vshll.u32 %v3297, 16
      %v3498 = vrot.slane %v3496, 4
      %v3499 = vor.u32 %v3495, %v3498
      %v3500 = vsel %vm596, %v3491, %v3499
      %v3502 = vshrl.u32 %v3298, 16
      %v3504 = vrot.slane %v3502, 3
      %v3505 = vshll.u32 %v3298, 16
      %v3507 = vrot.slane %v3505, 4
      %v3508 = vor.u32 %v3504, %v3507
      %v3510 = vshrl.u32 %v3299, 16
      %v3512 = vrot.slane %v3510, 3
      %v3513 = vshll.u32 %v3299, 16
      %v3515 = vrot.slane %v3513, 4
      %v3516 = vor.u32 %v3512, %v3515
      %v3517 = vsel %vm596, %v3508, %v3516
      %v3519 = vshrl.u32 %v3300, 16
      %v3521 = vrot.slane %v3519, 3
      %v3522 = vshll.u32 %v3300, 16
      %v3524 = vrot.slane %v3522, 4
      %v3525 = vor.u32 %v3521, %v3524
      %v3527 = vshrl.u32 %v3301, 16
      %v3529 = vrot.slane %v3527, 3
      %v3530 = vshll.u32 %v3301, 16
      %v3532 = vrot.slane %v3530, 4
      %v3533 = vor.u32 %v3529, %v3532
      %v3534 = vsel %vm596, %v3525, %v3533
      %v3536 = vshrl.u32 %v3302, 16
      %v3538 = vrot.slane %v3536, 3
      %v3539 = vshll.u32 %v3302, 16
      %v3541 = vrot.slane %v3539, 4
      %v3542 = vor.u32 %v3538, %v3541
      %v3544 = vshrl.u32 %v3303, 16
      %v3546 = vrot.slane %v3544, 3
      %v3547 = vshll.u32 %v3303, 16
      %v3549 = vrot.slane %v3547, 4
      %v3550 = vor.u32 %v3546, %v3549
      %v3551 = vsel %vm596, %v3542, %v3550
      %v3553 = vshrl.u32 %v3304, 16
      %v3555 = vrot.slane %v3553, 3
      %v3556 = vshll.u32 %v3304, 16
      %v3558 = vrot.slane %v3556, 4
      %v3559 = vor.u32 %v3555, %v3558
      %v3561 = vshrl.u32 %v3305, 16
      %v3563 = vrot.slane %v3561, 3
      %v3564 = vshll.u32 %v3305, 16
      %v3566 = vrot.slane %v3564, 4
      %v3567 = vor.u32 %v3563, %v3566
      %v3568 = vsel %vm596, %v3559, %v3567
      %v3570 = vshrl.u32 %v3306, 16
      %v3572 = vrot.slane %v3570, 3
      %v3573 = vshll.u32 %v3306, 16
      %v3575 = vrot.slane %v3573, 4
      %v3576 = vor.u32 %v3572, %v3575
      %v3578 = vshrl.u32 %v3307, 16
      %v3580 = vrot.slane %v3578, 3
      %v3581 = vshll.u32 %v3307, 16
      %v3583 = vrot.slane %v3581, 4
      %v3584 = vor.u32 %v3580, %v3583
      %v3585 = vsel %vm596, %v3576, %v3584
      %v3587 = vshrl.u32 %v3308, 16
      %v3589 = vrot.slane %v3587, 3
      %v3590 = vshll.u32 %v3308, 16
      %v3592 = vrot.slane %v3590, 4
      %v3593 = vor.u32 %v3589, %v3592
      %v3595 = vshrl.u32 %v3309, 16
      %v3597 = vrot.slane %v3595, 3
      %v3598 = vshll.u32 %v3309, 16
      %v3600 = vrot.slane %v3598, 4
      %v3601 = vor.u32 %v3597, %v3600
      %v3602 = vsel %vm596, %v3593, %v3601
      %v3604 = vshrl.u32 %v3310, 16
      %v3606 = vrot.slane %v3604, 3
      %v3607 = vshll.u32 %v3310, 16
      %v3609 = vrot.slane %v3607, 4
      %v3610 = vor.u32 %v3606, %v3609
      %v3612 = vshrl.u32 %v3311, 16
      %v3614 = vrot.slane %v3612, 3
      %v3615 = vshll.u32 %v3311, 16
      %v3617 = vrot.slane %v3615, 4
      %v3618 = vor.u32 %v3614, %v3617
      %v3619 = vsel %vm596, %v3610, %v3618
      %v3622 = vunpack.c.l.b16 %v3312
      %v3623 = vunpack.c.l.b16 %v3313
      %v3624 = vpack.c.b16 %v3623, %v3622
      %vm3625 = vcmask 97280
      %v3627 = vsel %vm3625, %v3330, 0
      %v3630 = vsel %vm3625, %v3347, 0
      %v3633 = vsel %vm3625, %v3364, 0
      %v3636 = vsel %vm3625, %v3381, 0
      %v3639 = vsel %vm3625, %v3398, 0
      %v3642 = vsel %vm3625, %v3415, 0
      %v3645 = vsel %vm3625, %v3432, 0
      %v3648 = vsel %vm3625, %v3449, 0
      %v3651 = vsel %vm3625, %v3466, 0
      %v3654 = vsel %vm3625, %v3483, 0
      %v3657 = vsel %vm3625, %v3500, 0
      %v3660 = vsel %vm3625, %v3517, 0
      %v3663 = vsel %vm3625, %v3534, 0
      %v3666 = vsel %vm3625, %v3551, 0
      %v3669 = vsel %vm3625, %v3568, 0
      %v3672 = vsel %vm3625, %v3585, 0
      %v3675 = vsel %vm3625, %v3602, 0
      %v3678 = vsel %vm3625, %v3619, 0
      %vm3680 = vcmask 1045504
      %v3682 = vsel %vm3680, %v3624, 0
      %3684 = vmatprep.subr.bf16.mxu0 0
      %3685 = vmatpush1.bf16.msra.mxu0 %v3682
      %3686 = vmatprep.subr.bf16.mxu0 0
      %3687 = vmatpush1.bf16.msra.mxu0 0
      %3688 = vmatprep.subr.bf16.mxu0 0
      %3689 = vmatpush1.bf16.msra.mxu0 0
      %3690 = vmatprep.subr.bf16.mxu0 0
      %3691 = vmatpush1.bf16.msra.mxu0 0
      %3692 = vmatprep.subr.bf16.mxu0 0
      %3693 = vmatpush1.bf16.msra.mxu0 0
      %3694 = vmatprep.subr.bf16.mxu0 0
      %3695 = vmatpush1.bf16.msra.mxu0 0
      %3696 = vmatprep.subr.bf16.mxu0 0
      %3697 = vmatpush1.bf16.msra.mxu0 0
      %3698 = vmatprep.subr.bf16.mxu0 0
      %3699 = vmatpush1.bf16.msra.mxu0 0
      %3700 = vmatprep.subr.bf16.mxu0 0
      %3701 = vmatpush1.bf16.msra.mxu0 0
      %3702 = vmatprep.subr.bf16.mxu0 0
      %3703 = vmatpush1.bf16.msra.mxu0 0
      %3704 = vmatprep.subr.bf16.mxu0 0
      %3705 = vmatpush1.bf16.msra.mxu0 0
      %3706 = vmatprep.subr.bf16.mxu0 0
      %3707 = vmatpush1.bf16.msra.mxu0 0
      %3708 = vmatprep.subr.bf16.mxu0 0
      %3709 = vmatpush1.bf16.msra.mxu0 0
      %3710 = vmatprep.subr.bf16.mxu0 0
      %3711 = vmatpush1.bf16.msra.mxu0 0
      %3712 = vmatprep.subr.bf16.mxu0 0
      %3713 = vmatpush1.bf16.msra.mxu0 0
      %3714 = vmatprep.subr.bf16.mxu0 0
      %3715 = vmatpush1.bf16.msra.mxu0 0
      %3716 = vmatprep.mubr.bf16.mxu0 0
      %3717 = vmatmul.mubr.bf16.gmra.mrb[0].mxu0 %v3627
      %v3718 = vpop.f32.mrb[0].mxu0
      %v3719 = vadd.f32 0.0, %v3718
      %v3720 = vpop.f32.mrb[0].mxu0
      %v3721 = vpop.f32.mrb[0].mxu0
      %v3722 = vadd.f32 0.0, %v3721
      %v3723 = vpop.f32.mrb[0].mxu0
      %3724 = vmatprep.mubr.bf16.mxu0 0
      %3725 = vmatmul.mubr.bf16.gmra.mrb[0].mxu0 %v3630
      %v3726 = vpop.f32.mrb[0].mxu0
      %v3727 = vadd.f32 0.0, %v3726
      %v3728 = vpop.f32.mrb[0].mxu0
      %v3729 = vpop.f32.mrb[0].mxu0
      %v3730 = vadd.f32 0.0, %v3729
      %v3731 = vpop.f32.mrb[0].mxu0
      %3732 = vmatprep.mubr.bf16.mxu0 0
      %3733 = vmatmul.mubr.bf16.gmra.mrb[0].mxu0 %v3633
      %v3734 = vpop.f32.mrb[0].mxu0
      %v3735 = vadd.f32 0.0, %v3734
      %v3736 = vpop.f32.mrb[0].mxu0
      %v3737 = vpop.f32.mrb[0].mxu0
      %v3738 = vadd.f32 0.0, %v3737
      %v3739 = vpop.f32.mrb[0].mxu0
      %3740 = vmatprep.mubr.bf16.mxu0 0
      %3741 = vmatmul.mubr.bf16.gmra.mrb[0].mxu0 %v3636
      %v3742 = vpop.f32.mrb[0].mxu0
      %v3743 = vadd.f32 0.0, %v3742
      %v3744 = vpop.f32.mrb[0].mxu0
      %v3745 = vpop.f32.mrb[0].mxu0
      %v3746 = vadd.f32 0.0, %v3745
      %v3747 = vpop.f32.mrb[0].mxu0
      %3748 = vmatprep.mubr.bf16.mxu0 0
      %3749 = vmatmul.mubr.bf16.gmra.mrb[0].mxu0 %v3639
      %v3750 = vpop.f32.mrb[0].mxu0
      %v3751 = vadd.f32 0.0, %v3750
      %v3752 = vpop.f32.mrb[0].mxu0
      %v3753 = vpop.f32.mrb[0].mxu0
      %v3754 = vadd.f32 0.0, %v3753
      %v3755 = vpop.f32.mrb[0].mxu0
      %3756 = vmatprep.mubr.bf16.mxu0 0
      %3757 = vmatmul.mubr.bf16.gmra.mrb[0].mxu0 %v3642
      %v3758 = vpop.f32.mrb[0].mxu0
      %v3759 = vadd.f32 0.0, %v3758
      %v3760 = vpop.f32.mrb[0].mxu0
      %v3761 = vpop.f32.mrb[0].mxu0
      %v3762 = vadd.f32 0.0, %v3761
      %v3763 = vpop.f32.mrb[0].mxu0
      %3764 = vmatprep.mubr.bf16.mxu0 0
      %3765 = vmatmul.mubr.bf16.gmra.mrb[0].mxu0 %v3645
      %v3766 = vpop.f32.mrb[0].mxu0
      %v3767 = vadd.f32 0.0, %v3766
      %v3768 = vpop.f32.mrb[0].mxu0
      %v3769 = vpop.f32.mrb[0].mxu0
      %v3770 = vadd.f32 0.0, %v3769
      %v3771 = vpop.f32.mrb[0].mxu0
      %3772 = vmatprep.mubr.bf16.mxu0 0
      %3773 = vmatmul.mubr.bf16.gmra.mrb[0].mxu0 %v3648
      %v3774 = vpop.f32.mrb[0].mxu0
      %v3775 = vadd.f32 0.0, %v3774
      %v3776 = vpop.f32.mrb[0].mxu0
      %v3777 = vpop.f32.mrb[0].mxu0
      %v3778 = vadd.f32 0.0, %v3777
      %v3779 = vpop.f32.mrb[0].mxu0
      %3780 = vmatprep.mubr.bf16.mxu0 0
      %3781 = vmatmul.mubr.bf16.gmra.mrb[0].mxu0 %v3651
      %v3782 = vpop.f32.mrb[0].mxu0
      %v3783 = vadd.f32 0.0, %v3782
      %v3784 = vpop.f32.mrb[0].mxu0
      %v3785 = vpop.f32.mrb[0].mxu0
      %v3786 = vadd.f32 0.0, %v3785
      %v3787 = vpop.f32.mrb[0].mxu0
      %3788 = vmatprep.mubr.bf16.mxu0 0
      %3789 = vmatmul.mubr.bf16.gmra.mrb[0].mxu0 %v3654
      %v3790 = vpop.f32.mrb[0].mxu0
      %v3791 = vadd.f32 0.0, %v3790
      %v3792 = vpop.f32.mrb[0].mxu0
      %v3793 = vpop.f32.mrb[0].mxu0
      %v3794 = vadd.f32 0.0, %v3793
      %v3795 = vpop.f32.mrb[0].mxu0
      %3796 = vmatprep.mubr.bf16.mxu0 0
      %3797 = vmatmul.mubr.bf16.gmra.mrb[0].mxu0 %v3657
      %v3798 = vpop.f32.mrb[0].mxu0
      %v3799 = vadd.f32 0.0, %v3798
      %v3800 = vpop.f32.mrb[0].mxu0
      %v3801 = vpop.f32.mrb[0].mxu0
      %v3802 = vadd.f32 0.0, %v3801
      %v3803 = vpop.f32.mrb[0].mxu0
      %3804 = vmatprep.mubr.bf16.mxu0 0
      %3805 = vmatmul.mubr.bf16.gmra.mrb[0].mxu0 %v3660
      %v3806 = vpop.f32.mrb[0].mxu0
      %v3807 = vadd.f32 0.0, %v3806
      %v3808 = vpop.f32.mrb[0].mxu0
      %v3809 = vpop.f32.mrb[0].mxu0
      %v3810 = vadd.f32 0.0, %v3809
      %v3811 = vpop.f32.mrb[0].mxu0
      %3812 = vmatprep.mubr.bf16.mxu0 0
      %3813 = vmatmul.mubr.bf16.gmra.mrb[0].mxu0 %v3663
      %v3814 = vpop.f32.mrb[0].mxu0
      %v3815 = vadd.f32 0.0, %v3814
      %v3816 = vpop.f32.mrb[0].mxu0
      %v3817 = vpop.f32.mrb[0].mxu0
      %v3818 = vadd.f32 0.0, %v3817
      %v3819 = vpop.f32.mrb[0].mxu0
      %3820 = vmatprep.mubr.bf16.mxu0 0
      %3821 = vmatmul.mubr.bf16.gmra.mrb[0].mxu0 %v3666
      %v3822 = vpop.f32.mrb[0].mxu0
      %v3823 = vadd.f32 0.0, %v3822
      %v3824 = vpop.f32.mrb[0].mxu0
      %v3825 = vpop.f32.mrb[0].mxu0
      %v3826 = vadd.f32 0.0, %v3825
      %v3827 = vpop.f32.mrb[0].mxu0
      %3828 = vmatprep.mubr.bf16.mxu0 0
      %3829 = vmatmul.mubr.bf16.gmra.mrb[0].mxu0 %v3669
      %v3830 = vpop.f32.mrb[0].mxu0
      %v3831 = vadd.f32 0.0, %v3830
      %v3832 = vpop.f32.mrb[0].mxu0
      %v3833 = vpop.f32.mrb[0].mxu0
      %v3834 = vadd.f32 0.0, %v3833
      %v3835 = vpop.f32.mrb[0].mxu0
      %3836 = vmatprep.mubr.bf16.mxu0 0
      %3837 = vmatmul.mubr.bf16.gmra.mrb[0].mxu0 %v3672
      %v3838 = vpop.f32.mrb[0].mxu0
      %v3839 = vadd.f32 0.0, %v3838
      %v3840 = vpop.f32.mrb[0].mxu0
      %v3841 = vpop.f32.mrb[0].mxu0
      %v3842 = vadd.f32 0.0, %v3841
      %v3843 = vpop.f32.mrb[0].mxu0
      %3844 = vmatprep.mubr.bf16.mxu0 0
      %3845 = vmatmul.mubr.bf16.gmra.mrb[0].mxu0 %v3675
      %v3846 = vpop.f32.mrb[0].mxu0
      %v3847 = vadd.f32 0.0, %v3846
      %v3848 = vpop.f32.mrb[0].mxu0
      %v3849 = vpop.f32.mrb[0].mxu0
      %v3850 = vadd.f32 0.0, %v3849
      %v3851 = vpop.f32.mrb[0].mxu0
      %3852 = vmatprep.mubr.bf16.mxu0 0
      %3853 = vmatmul.mubr.bf16.gmra.mrb[0].mxu0 %v3678
      %v3854 = vpop.f32.mrb[0].mxu0
      %v3855 = vadd.f32 0.0, %v3854
      %v3856 = vpop.f32.mrb[0].mxu0
      %v3857 = vpop.f32.mrb[0].mxu0
      %v3858 = vadd.f32 0.0, %v3857
      %v3859 = vpop.f32.mrb[0].mxu0
      %3860 = vdwg.mxu0
      %v3861 = vadd.f32 %v3719, 0.0
      %v3862 = vadd.f32 %v3722, 0.0
      %v3863 = vadd.f32 %v3727, 0.0
      %v3864 = vadd.f32 %v3730, 0.0
      %v3865 = vadd.f32 %v3735, 0.0
      %v3866 = vadd.f32 %v3738, 0.0
      %v3867 = vadd.f32 %v3743, 0.0
      %v3868 = vadd.f32 %v3746, 0.0
      %v3869 = vadd.f32 %v3751, 0.0
      %v3870 = vadd.f32 %v3754, 0.0
      %v3871 = vadd.f32 %v3759, 0.0
      %v3872 = vadd.f32 %v3762, 0.0
      %v3873 = vadd.f32 %v3767, 0.0
      %v3874 = vadd.f32 %v3770, 0.0
      %v3875 = vadd.f32 %v3775, 0.0
      %v3876 = vadd.f32 %v3778, 0.0
      %v3877 = vadd.f32 %v3783, 0.0
      %v3878 = vadd.f32 %v3786, 0.0
      %v3879 = vadd.f32 %v3791, 0.0
      %v3880 = vadd.f32 %v3794, 0.0
      %v3881 = vadd.f32 %v3799, 0.0
      %v3882 = vadd.f32 %v3802, 0.0
      %v3883 = vadd.f32 %v3807, 0.0
      %v3884 = vadd.f32 %v3810, 0.0
      %v3885 = vadd.f32 %v3815, 0.0
      %v3886 = vadd.f32 %v3818, 0.0
      %v3887 = vadd.f32 %v3823, 0.0
      %v3888 = vadd.f32 %v3826, 0.0
      %v3889 = vadd.f32 %v3831, 0.0
      %v3890 = vadd.f32 %v3834, 0.0
      %v3891 = vadd.f32 %v3839, 0.0
      %v3892 = vadd.f32 %v3842, 0.0
      %3925 = vrot.lane.b32.xlu0 %v3727, 124
      %v3926 = vpop.permute.xlu0 %3925
      %3927 = vrot.lane.b32.xlu0 %v3730, 124
      %v3928 = vpop.permute.xlu0 %3927
      %3929 = vrot.lane.b32.xlu0 %v3735, 124
      %v3930 = vpop.permute.xlu0 %3929
      %3931 = vrot.lane.b32.xlu0 %v3738, 124
      %v3932 = vpop.permute.xlu0 %3931
      %3933 = vrot.lane.b32.xlu0 %v3743, 124
      %v3934 = vpop.permute.xlu0 %3933
      %3935 = vrot.lane.b32.xlu0 %v3746, 124
      %v3936 = vpop.permute.xlu0 %3935
      %3937 = vrot.lane.b32.xlu0 %v3751, 124
      %v3938 = vpop.permute.xlu0 %3937
      %3939 = vrot.lane.b32.xlu0 %v3754, 124
      %v3940 = vpop.permute.xlu0 %3939
      %3941 = vrot.lane.b32.xlu0 %v3759, 124
      %v3942 = vpop.permute.xlu0 %3941
      %3943 = vrot.lane.b32.xlu0 %v3762, 124
      %v3944 = vpop.permute.xlu0 %3943
      %3945 = vrot.lane.b32.xlu0 %v3767, 124
      %v3946 = vpop.permute.xlu0 %3945
      %3947 = vrot.lane.b32.xlu0 %v3770, 124
      %v3948 = vpop.permute.xlu0 %3947
      %3949 = vrot.lane.b32.xlu0 %v3775, 124
      %v3950 = vpop.permute.xlu0 %3949
      %3951 = vrot.lane.b32.xlu0 %v3778, 124
      %v3952 = vpop.permute.xlu0 %3951
      %3953 = vrot.lane.b32.xlu0 %v3783, 124
      %v3954 = vpop.permute.xlu0 %3953
      %3955 = vrot.lane.b32.xlu0 %v3786, 124
      %v3956 = vpop.permute.xlu0 %3955
      %3957 = vrot.lane.b32.xlu0 %v3791, 124
      %v3958 = vpop.permute.xlu0 %3957
      %3959 = vrot.lane.b32.xlu0 %v3794, 124
      %v3960 = vpop.permute.xlu0 %3959
      %3961 = vrot.lane.b32.xlu0 %v3799, 124
      %v3962 = vpop.permute.xlu0 %3961
      %3963 = vrot.lane.b32.xlu0 %v3802, 124
      %v3964 = vpop.permute.xlu0 %3963
      %3965 = vrot.lane.b32.xlu0 %v3807, 124
      %v3966 = vpop.permute.xlu0 %3965
      %3967 = vrot.lane.b32.xlu0 %v3810, 124
      %v3968 = vpop.permute.xlu0 %3967
      %3969 = vrot.lane.b32.xlu0 %v3815, 124
      %v3970 = vpop.permute.xlu0 %3969
      %3971 = vrot.lane.b32.xlu0 %v3818, 124
      %v3972 = vpop.permute.xlu0 %3971
      %3973 = vrot.lane.b32.xlu0 %v3823, 124
      %v3974 = vpop.permute.xlu0 %3973
      %3975 = vrot.lane.b32.xlu0 %v3826, 124
      %v3976 = vpop.permute.xlu0 %3975
      %3977 = vrot.lane.b32.xlu0 %v3831, 124
      %v3978 = vpop.permute.xlu0 %3977
      %3979 = vrot.lane.b32.xlu0 %v3834, 124
      %v3980 = vpop.permute.xlu0 %3979
      %3981 = vrot.lane.b32.xlu0 %v3839, 124
      %v3982 = vpop.permute.xlu0 %3981
      %3983 = vrot.lane.b32.xlu0 %v3842, 124
      %v3984 = vpop.permute.xlu0 %3983
      %3985 = vrot.lane.b32.xlu0 %v3847, 124
      %v3986 = vpop.permute.xlu0 %3985
      %3987 = vrot.lane.b32.xlu0 %v3850, 124
      %v3988 = vpop.permute.xlu0 %3987
      %v4021 = vadd.f32 %v3861, %v3926
      %v4022 = vadd.f32 %v3862, %v3928
      %v4023 = vadd.f32 %v3863, %v3930
      %v4024 = vadd.f32 %v3864, %v3932
      %v4025 = vadd.f32 %v3865, %v3934
      %v4026 = vadd.f32 %v3866, %v3936
      %v4027 = vadd.f32 %v3867, %v3938
      %v4028 = vadd.f32 %v3868, %v3940
      %v4029 = vadd.f32 %v3869, %v3942
      %v4030 = vadd.f32 %v3870, %v3944
      %v4031 = vadd.f32 %v3871, %v3946
      %v4032 = vadd.f32 %v3872, %v3948
      %v4033 = vadd.f32 %v3873, %v3950
      %v4034 = vadd.f32 %v3874, %v3952
      %v4035 = vadd.f32 %v3875, %v3954
      %v4036 = vadd.f32 %v3876, %v3956
      %v4037 = vadd.f32 %v3877, %v3958
      %v4038 = vadd.f32 %v3878, %v3960
      %v4039 = vadd.f32 %v3879, %v3962
      %v4040 = vadd.f32 %v3880, %v3964
      %v4041 = vadd.f32 %v3881, %v3966
      %v4042 = vadd.f32 %v3882, %v3968
      %v4043 = vadd.f32 %v3883, %v3970
      %v4044 = vadd.f32 %v3884, %v3972
      %v4045 = vadd.f32 %v3885, %v3974
      %v4046 = vadd.f32 %v3886, %v3976
      %v4047 = vadd.f32 %v3887, %v3978
      %v4048 = vadd.f32 %v3888, %v3980
      %v4049 = vadd.f32 %v3889, %v3982
      %v4050 = vadd.f32 %v3890, %v3984
      %v4051 = vadd.f32 %v3891, %v3986
      %v4052 = vadd.f32 %v3892, %v3988
      %4055 = vrot.lane.b32.xlu0 %v3735, 120
      %v4056 = vpop.permute.xlu0 %4055
      %4057 = vrot.lane.b32.xlu0 %v3738, 120
      %v4058 = vpop.permute.xlu0 %4057
      %4059 = vrot.lane.b32.xlu0 %v3743, 120
      %v4060 = vpop.permute.xlu0 %4059
      %4061 = vrot.lane.b32.xlu0 %v3746, 120
      %v4062 = vpop.permute.xlu0 %4061
      %4063 = vrot.lane.b32.xlu0 %v3751, 120
      %v4064 = vpop.permute.xlu0 %4063
      %4065 = vrot.lane.b32.xlu0 %v3754, 120
      %v4066 = vpop.permute.xlu0 %4065
      %4067 = vrot.lane.b32.xlu0 %v3759, 120
      %v4068 = vpop.permute.xlu0 %4067
      %4069 = vrot.lane.b32.xlu0 %v3762, 120
      %v4070 = vpop.permute.xlu0 %4069
      %4071 = vrot.lane.b32.xlu0 %v3767, 120
      %v4072 = vpop.permute.xlu0 %4071
      %4073 = vrot.lane.b32.xlu0 %v3770, 120
      %v4074 = vpop.permute.xlu0 %4073
      %4075 = vrot.lane.b32.xlu0 %v3775, 120
      %v4076 = vpop.permute.xlu0 %4075
      %4077 = vrot.lane.b32.xlu0 %v3778, 120
      %v4078 = vpop.permute.xlu0 %4077
      %4079 = vrot.lane.b32.xlu0 %v3783, 120
      %v4080 = vpop.permute.xlu0 %4079
      %4081 = vrot.lane.b32.xlu0 %v3786, 120
      %v4082 = vpop.permute.xlu0 %4081
      %4083 = vrot.lane.b32.xlu0 %v3791, 120
      %v4084 = vpop.permute.xlu0 %4083
      %4085 = vrot.lane.b32.xlu0 %v3794, 120
      %v4086 = vpop.permute.xlu0 %4085
      %4087 = vrot.lane.b32.xlu0 %v3799, 120
      %v4088 = vpop.permute.xlu0 %4087
      %4089 = vrot.lane.b32.xlu0 %v3802, 120
      %v4090 = vpop.permute.xlu0 %4089
      %4091 = vrot.lane.b32.xlu0 %v3807, 120
      %v4092 = vpop.permute.xlu0 %4091
      %4093 = vrot.lane.b32.xlu0 %v3810, 120
      %v4094 = vpop.permute.xlu0 %4093
      %4095 = vrot.lane.b32.xlu0 %v3815, 120
      %v4096 = vpop.permute.xlu0 %4095
      %4097 = vrot.lane.b32.xlu0 %v3818, 120
      %v4098 = vpop.permute.xlu0 %4097
      %4099 = vrot.lane.b32.xlu0 %v3823, 120
      %v4100 = vpop.permute.xlu0 %4099
      %4101 = vrot.lane.b32.xlu0 %v3826, 120
      %v4102 = vpop.permute.xlu0 %4101
      %4103 = vrot.lane.b32.xlu0 %v3831, 120
      %v4104 = vpop.permute.xlu0 %4103
      %4105 = vrot.lane.b32.xlu0 %v3834, 120
      %v4106 = vpop.permute.xlu0 %4105
      %4107 = vrot.lane.b32.xlu0 %v3839, 120
      %v4108 = vpop.permute.xlu0 %4107
      %4109 = vrot.lane.b32.xlu0 %v3842, 120
      %v4110 = vpop.permute.xlu0 %4109
      %4111 = vrot.lane.b32.xlu0 %v3847, 120
      %v4112 = vpop.permute.xlu0 %4111
      %4113 = vrot.lane.b32.xlu0 %v3850, 120
      %v4114 = vpop.permute.xlu0 %4113
      %4115 = vrot.lane.b32.xlu0 %v3855, 120
      %v4116 = vpop.permute.xlu0 %4115
      %4117 = vrot.lane.b32.xlu0 %v3858, 120
      %v4118 = vpop.permute.xlu0 %4117
      %v4151 = vadd.f32 %v4021, %v4056
      %v4152 = vadd.f32 %v4022, %v4058
      %v4153 = vadd.f32 %v4023, %v4060
      %v4154 = vadd.f32 %v4024, %v4062
      %v4155 = vadd.f32 %v4025, %v4064
      %v4156 = vadd.f32 %v4026, %v4066
      %v4157 = vadd.f32 %v4027, %v4068
      %v4158 = vadd.f32 %v4028, %v4070
      %v4159 = vadd.f32 %v4029, %v4072
      %v4160 = vadd.f32 %v4030, %v4074
      %v4161 = vadd.f32 %v4031, %v4076
      %v4162 = vadd.f32 %v4032, %v4078
      %v4163 = vadd.f32 %v4033, %v4080
      %v4164 = vadd.f32 %v4034, %v4082
      %v4165 = vadd.f32 %v4035, %v4084
      %v4166 = vadd.f32 %v4036, %v4086
      %v4167 = vadd.f32 %v4037, %v4088
      %v4168 = vadd.f32 %v4038, %v4090
      %v4169 = vadd.f32 %v4039, %v4092
      %v4170 = vadd.f32 %v4040, %v4094
      %v4171 = vadd.f32 %v4041, %v4096
      %v4172 = vadd.f32 %v4042, %v4098
      %v4173 = vadd.f32 %v4043, %v4100
      %v4174 = vadd.f32 %v4044, %v4102
      %v4175 = vadd.f32 %v4045, %v4104
      %v4176 = vadd.f32 %v4046, %v4106
      %v4177 = vadd.f32 %v4047, %v4108
      %v4178 = vadd.f32 %v4048, %v4110
      %v4179 = vadd.f32 %v4049, %v4112
      %v4180 = vadd.f32 %v4050, %v4114
      %v4181 = vadd.f32 %v4051, %v4116
      %v4182 = vadd.f32 %v4052, %v4118
      %v4183 = vld [vmem:[#allocation2] sm:$0xf0]
      %v4184 = vld [vmem:[#allocation2 + $0x10] sm:$0xf0]
      %v4185 = vld [vmem:[#allocation2 + $0x20] sm:$0xf0]
      %v4186 = vld [vmem:[#allocation2 + $0x30] sm:$0xf0]
      %v4187 = vld [vmem:[#allocation2 + $0x40] sm:$0xf0]
      %v4188 = vld [vmem:[#allocation2 + $0x50] sm:$0xf0]
      %v4189 = vld [vmem:[#allocation2 + $0x60] sm:$0xf0]
      %v4190 = vld [vmem:[#allocation2 + $0x70] sm:$0xf0]
      %v4191 = vld [vmem:[#allocation2 + $0x80] sm:$0xf0]
      %v4192 = vld [vmem:[#allocation2 + $0x90] sm:$0xf0]
      %v4193 = vld [vmem:[#allocation2 + $0xa0] sm:$0xf0]
      %v4194 = vld [vmem:[#allocation2 + $0xb0] sm:$0xf0]
      %v4195 = vld [vmem:[#allocation2 + $0xc0] sm:$0xf0]
      %v4196 = vld [vmem:[#allocation2 + $0xd0] sm:$0xf0]
      %v4197 = vld [vmem:[#allocation2 + $0xe0] sm:$0xf0]
      %v4198 = vld [vmem:[#allocation2 + $0xf0] sm:$0xf0]
      %v4199 = vld [vmem:[#allocation2 + $0x100] sm:$0xf0]
      %v4200 = vld [vmem:[#allocation2 + $0x110] sm:$0xf0]
      %s4201 = scalar_lea.vmem %s3, 8
      %v4202 = vld [vmem:[%s4201] sm:$0xf]
      %v4203 = vld [vmem:[%s4201 + $0x4] sm:$0x3]
      %v4240 = vrot.slane %v4183, 4
      %v4241 = vrot.slane %v3277, 4
      %v4242 = vsel %vm1517, %v4240, %v4241
      %v4243 = vrot.slane %v4184, 4
      %v4244 = vrot.slane %v3279, 4
      %v4245 = vsel %vm1517, %v4243, %v4244
      %v4246 = vrot.slane %v4185, 4
      %v4247 = vrot.slane %v3281, 4
      %v4248 = vsel %vm1517, %v4246, %v4247
      %v4249 = vrot.slane %v4186, 4
      %v4250 = vrot.slane %v3283, 4
      %v4251 = vsel %vm1517, %v4249, %v4250
      %v4252 = vrot.slane %v4187, 4
      %v4253 = vrot.slane %v3285, 4
      %v4254 = vsel %vm1517, %v4252, %v4253
      %v4255 = vrot.slane %v4188, 4
      %v4256 = vrot.slane %v3287, 4
      %v4257 = vsel %vm1517, %v4255, %v4256
      %v4258 = vrot.slane %v4189, 4
      %v4259 = vrot.slane %v3289, 4
      %v4260 = vsel %vm1517, %v4258, %v4259
      %v4261 = vrot.slane %v4190, 4
      %v4262 = vrot.slane %v3291, 4
      %v4263 = vsel %vm1517, %v4261, %v4262
      %v4264 = vrot.slane %v4191, 4
      %v4265 = vrot.slane %v3293, 4
      %v4266 = vsel %vm1517, %v4264, %v4265
      %v4267 = vrot.slane %v4192, 4
      %v4268 = vrot.slane %v3295, 4
      %v4269 = vsel %vm1517, %v4267, %v4268
      %v4270 = vrot.slane %v4193, 4
      %v4271 = vrot.slane %v3297, 4
      %v4272 = vsel %vm1517, %v4270, %v4271
      %v4273 = vrot.slane %v4194, 4
      %v4274 = vrot.slane %v3299, 4
      %v4275 = vsel %vm1517, %v4273, %v4274
      %v4276 = vrot.slane %v4195, 4
      %v4277 = vrot.slane %v3301, 4
      %v4278 = vsel %vm1517, %v4276, %v4277
      %v4279 = vrot.slane %v4196, 4
      %v4280 = vrot.slane %v3303, 4
      %v4281 = vsel %vm1517, %v4279, %v4280
      %v4282 = vrot.slane %v4197, 4
      %v4283 = vrot.slane %v3305, 4
      %v4284 = vsel %vm1517, %v4282, %v4283
      %v4285 = vrot.slane %v4198, 4
      %v4286 = vrot.slane %v3307, 4
      %v4287 = vsel %vm1517, %v4285, %v4286
      %v4288 = vrot.slane %v4199, 4
      %v4289 = vrot.slane %v3309, 4
      %v4290 = vsel %vm1517, %v4288, %v4289
      %v4291 = vrot.slane %v4200, 4
      %v4292 = vrot.slane %v3311, 4
      %v4293 = vsel %vm1517, %v4291, %v4292
      %v4296 = vunpack.c.l.b16 %v4202
      %v4297 = vunpack.c.l.b16 %v4203
      %v4298 = vpack.c.b16 %v4297, %v4296
      %v4300 = vsel %vm3625, %v4242, 0
      %v4303 = vsel %vm3625, %v4245, 0
      %v4306 = vsel %vm3625, %v4248, 0
      %v4309 = vsel %vm3625, %v4251, 0
      %v4312 = vsel %vm3625, %v4254, 0
      %v4315 = vsel %vm3625, %v4257, 0
      %v4318 = vsel %vm3625, %v4260, 0
      %v4321 = vsel %vm3625, %v4263, 0
      %v4324 = vsel %vm3625, %v4266, 0
      %v4327 = vsel %vm3625, %v4269, 0
      %v4330 = vsel %vm3625, %v4272, 0
      %v4333 = vsel %vm3625, %v4275, 0
      %v4336 = vsel %vm3625, %v4278, 0
      %v4339 = vsel %vm3625, %v4281, 0
      %v4342 = vsel %vm3625, %v4284, 0
      %v4345 = vsel %vm3625, %v4287, 0
      %v4348 = vsel %vm3625, %v4290, 0
      %v4351 = vsel %vm3625, %v4293, 0
      %v4354 = vsel %vm3680, %v4298, 0
      %4356 = vmatprep.subr.bf16.mxu0 0
      %4357 = vmatpush1.bf16.msra.mxu0 %v4354
      %4358 = vmatprep.subr.bf16.mxu0 0
      %4359 = vmatpush1.bf16.msra.mxu0 0
      %4360 = vmatprep.subr.bf16.mxu0 0
      %4361 = vmatpush1.bf16.msra.mxu0 0
      %4362 = vmatprep.subr.bf16.mxu0 0
      %4363 = vmatpush1.bf16.msra.mxu0 0
      %4364 = vmatprep.subr.bf16.mxu0 0
      %4365 = vmatpush1.bf16.msra.mxu0 0
      %4366 = vmatprep.subr.bf16.mxu0 0
      %4367 = vmatpush1.bf16.msra.mxu0 0
      %4368 = vmatprep.subr.bf16.mxu0 0
      %4369 = vmatpush1.bf16.msra.mxu0 0
      %4370 = vmatprep.subr.bf16.mxu0 0
      %4371 = vmatpush1.bf16.msra.mxu0 0
      %4372 = vmatprep.subr.bf16.mxu0 0
      %4373 = vmatpush1.bf16.msra.mxu0 0
      %4374 = vmatprep.subr.bf16.mxu0 0
      %4375 = vmatpush1.bf16.msra.mxu0 0
      %4376 = vmatprep.subr.bf16.mxu0 0
      %4377 = vmatpush1.bf16.msra.mxu0 0
      %4378 = vmatprep.subr.bf16.mxu0 0
      %4379 = vmatpush1.bf16.msra.mxu0 0
      %4380 = vmatprep.subr.bf16.mxu0 0
      %4381 = vmatpush1.bf16.msra.mxu0 0
      %4382 = vmatprep.subr.bf16.mxu0 0
      %4383 = vmatpush1.bf16.msra.mxu0 0
      %4384 = vmatprep.subr.bf16.mxu0 0
      %4385 = vmatpush1.bf16.msra.mxu0 0
      %4386 = vmatprep.subr.bf16.mxu0 0
      %4387 = vmatpush1.bf16.msra.mxu0 0
      %4388 = vmatprep.mubr.bf16.mxu0 0
      %4389 = vmatmul.mubr.bf16.gmra.mrb[0].mxu0 %v4300
      %v4390 = vpop.f32.mrb[0].mxu0
      %v4391 = vadd.f32 0.0, %v4390
      %v4392 = vpop.f32.mrb[0].mxu0
      %v4393 = vpop.f32.mrb[0].mxu0
      %v4394 = vadd.f32 0.0, %v4393
      %v4395 = vpop.f32.mrb[0].mxu0
      %4396 = vmatprep.mubr.bf16.mxu0 0
      %4397 = vmatmul.mubr.bf16.gmra.mrb[0].mxu0 %v4303
      %v4398 = vpop.f32.mrb[0].mxu0
      %v4399 = vadd.f32 0.0, %v4398
      %v4400 = vpop.f32.mrb[0].mxu0
      %v4401 = vpop.f32.mrb[0].mxu0
      %v4402 = vadd.f32 0.0, %v4401
      %v4403 = vpop.f32.mrb[0].mxu0
      %4404 = vmatprep.mubr.bf16.mxu0 0
      %4405 = vmatmul.mubr.bf16.gmra.mrb[0].mxu0 %v4306
      %v4406 = vpop.f32.mrb[0].mxu0
      %v4407 = vadd.f32 0.0, %v4406
      %v4408 = vpop.f32.mrb[0].mxu0
      %v4409 = vpop.f32.mrb[0].mxu0
      %v4410 = vadd.f32 0.0, %v4409
      %v4411 = vpop.f32.mrb[0].mxu0
      %4412 = vmatprep.mubr.bf16.mxu0 0
      %4413 = vmatmul.mubr.bf16.gmra.mrb[0].mxu0 %v4309
      %v4414 = vpop.f32.mrb[0].mxu0
      %v4415 = vadd.f32 0.0, %v4414
      %v4416 = vpop.f32.mrb[0].mxu0
      %v4417 = vpop.f32.mrb[0].mxu0
      %v4418 = vadd.f32 0.0, %v4417
      %v4419 = vpop.f32.mrb[0].mxu0
      %4420 = vmatprep.mubr.bf16.mxu0 0
      %4421 = vmatmul.mubr.bf16.gmra.mrb[0].mxu0 %v4312
      %v4422 = vpop.f32.mrb[0].mxu0
      %v4423 = vadd.f32 0.0, %v4422
      %v4424 = vpop.f32.mrb[0].mxu0
      %v4425 = vpop.f32.mrb[0].mxu0
      %v4426 = vadd.f32 0.0, %v4425
      %v4427 = vpop.f32.mrb[0].mxu0
      %4428 = vmatprep.mubr.bf16.mxu0 0
      %4429 = vmatmul.mubr.bf16.gmra.mrb[0].mxu0 %v4315
      %v4430 = vpop.f32.mrb[0].mxu0
      %v4431 = vadd.f32 0.0, %v4430
      %v4432 = vpop.f32.mrb[0].mxu0
      %v4433 = vpop.f32.mrb[0].mxu0
      %v4434 = vadd.f32 0.0, %v4433
      %v4435 = vpop.f32.mrb[0].mxu0
      %4436 = vmatprep.mubr.bf16.mxu0 0
      %4437 = vmatmul.mubr.bf16.gmra.mrb[0].mxu0 %v4318
      %v4438 = vpop.f32.mrb[0].mxu0
      %v4439 = vadd.f32 0.0, %v4438
      %v4440 = vpop.f32.mrb[0].mxu0
      %v4441 = vpop.f32.mrb[0].mxu0
      %v4442 = vadd.f32 0.0, %v4441
      %v4443 = vpop.f32.mrb[0].mxu0
      %4444 = vmatprep.mubr.bf16.mxu0 0
      %4445 = vmatmul.mubr.bf16.gmra.mrb[0].mxu0 %v4321
      %v4446 = vpop.f32.mrb[0].mxu0
      %v4447 = vadd.f32 0.0, %v4446
      %v4448 = vpop.f32.mrb[0].mxu0
      %v4449 = vpop.f32.mrb[0].mxu0
      %v4450 = vadd.f32 0.0, %v4449
      %v4451 = vpop.f32.mrb[0].mxu0
      %4452 = vmatprep.mubr.bf16.mxu0 0
      %4453 = vmatmul.mubr.bf16.gmra.mrb[0].mxu0 %v4324
      %v4454 = vpop.f32.mrb[0].mxu0
      %v4455 = vadd.f32 0.0, %v4454
      %v4456 = vpop.f32.mrb[0].mxu0
      %v4457 = vpop.f32.mrb[0].mxu0
      %v4458 = vadd.f32 0.0, %v4457
      %v4459 = vpop.f32.mrb[0].mxu0
      %4460 = vmatprep.mubr.bf16.mxu0 0
      %4461 = vmatmul.mubr.bf16.gmra.mrb[0].mxu0 %v4327
      %v4462 = vpop.f32.mrb[0].mxu0
      %v4463 = vadd.f32 0.0, %v4462
      %v4464 = vpop.f32.mrb[0].mxu0
      %v4465 = vpop.f32.mrb[0].mxu0
      %v4466 = vadd.f32 0.0, %v4465
      %v4467 = vpop.f32.mrb[0].mxu0
      %4468 = vmatprep.mubr.bf16.mxu0 0
      %4469 = vmatmul.mubr.bf16.gmra.mrb[0].mxu0 %v4330
      %v4470 = vpop.f32.mrb[0].mxu0
      %v4471 = vadd.f32 0.0, %v4470
      %v4472 = vpop.f32.mrb[0].mxu0
      %v4473 = vpop.f32.mrb[0].mxu0
      %v4474 = vadd.f32 0.0, %v4473
      %v4475 = vpop.f32.mrb[0].mxu0
      %4476 = vmatprep.mubr.bf16.mxu0 0
      %4477 = vmatmul.mubr.bf16.gmra.mrb[0].mxu0 %v4333
      %v4478 = vpop.f32.mrb[0].mxu0
      %v4479 = vadd.f32 0.0, %v4478
      %v4480 = vpop.f32.mrb[0].mxu0
      %v4481 = vpop.f32.mrb[0].mxu0
      %v4482 = vadd.f32 0.0, %v4481
      %v4483 = vpop.f32.mrb[0].mxu0
      %4484 = vmatprep.mubr.bf16.mxu0 0
      %4485 = vmatmul.mubr.bf16.gmra.mrb[0].mxu0 %v4336
      %v4486 = vpop.f32.mrb[0].mxu0
      %v4487 = vadd.f32 0.0, %v4486
      %v4488 = vpop.f32.mrb[0].mxu0
      %v4489 = vpop.f32.mrb[0].mxu0
      %v4490 = vadd.f32 0.0, %v4489
      %v4491 = vpop.f32.mrb[0].mxu0
      %4492 = vmatprep.mubr.bf16.mxu0 0
      %4493 = vmatmul.mubr.bf16.gmra.mrb[0].mxu0 %v4339
      %v4494 = vpop.f32.mrb[0].mxu0
      %v4495 = vadd.f32 0.0, %v4494
      %v4496 = vpop.f32.mrb[0].mxu0
      %v4497 = vpop.f32.mrb[0].mxu0
      %v4498 = vadd.f32 0.0, %v4497
      %v4499 = vpop.f32.mrb[0].mxu0
      %4500 = vmatprep.mubr.bf16.mxu0 0
      %4501 = vmatmul.mubr.bf16.gmra.mrb[0].mxu0 %v4342
      %v4502 = vpop.f32.mrb[0].mxu0
      %v4503 = vadd.f32 0.0, %v4502
      %v4504 = vpop.f32.mrb[0].mxu0
      %v4505 = vpop.f32.mrb[0].mxu0
      %v4506 = vadd.f32 0.0, %v4505
      %v4507 = vpop.f32.mrb[0].mxu0
      %4508 = vmatprep.mubr.bf16.mxu0 0
      %4509 = vmatmul.mubr.bf16.gmra.mrb[0].mxu0 %v4345
      %v4510 = vpop.f32.mrb[0].mxu0
      %v4511 = vadd.f32 0.0, %v4510
      %v4512 = vpop.f32.mrb[0].mxu0
      %v4513 = vpop.f32.mrb[0].mxu0
      %v4514 = vadd.f32 0.0, %v4513
      %v4515 = vpop.f32.mrb[0].mxu0
      %4516 = vmatprep.mubr.bf16.mxu0 0
      %4517 = vmatmul.mubr.bf16.gmra.mrb[0].mxu0 %v4348
      %v4518 = vpop.f32.mrb[0].mxu0
      %v4519 = vadd.f32 0.0, %v4518
      %v4520 = vpop.f32.mrb[0].mxu0
      %v4521 = vpop.f32.mrb[0].mxu0
      %v4522 = vadd.f32 0.0, %v4521
      %v4523 = vpop.f32.mrb[0].mxu0
      %4524 = vmatprep.mubr.bf16.mxu0 0
      %4525 = vmatmul.mubr.bf16.gmra.mrb[0].mxu0 %v4351
      %v4526 = vpop.f32.mrb[0].mxu0
      %v4527 = vadd.f32 0.0, %v4526
      %v4528 = vpop.f32.mrb[0].mxu0
      %v4529 = vpop.f32.mrb[0].mxu0
      %v4530 = vadd.f32 0.0, %v4529
      %v4531 = vpop.f32.mrb[0].mxu0
      %4532 = vdwg.mxu0
      %v4533 = vadd.f32 %v4151, %v4391
      %v4534 = vadd.f32 %v4152, %v4394
      %v4535 = vadd.f32 %v4153, %v4399
      %v4536 = vadd.f32 %v4154, %v4402
      %v4537 = vadd.f32 %v4155, %v4407
      %v4538 = vadd.f32 %v4156, %v4410
      %v4539 = vadd.f32 %v4157, %v4415
      %v4540 = vadd.f32 %v4158, %v4418
      %v4541 = vadd.f32 %v4159, %v4423
      %v4542 = vadd.f32 %v4160, %v4426
      %v4543 = vadd.f32 %v4161, %v4431
      %v4544 = vadd.f32 %v4162, %v4434
      %v4545 = vadd.f32 %v4163, %v4439
      %v4546 = vadd.f32 %v4164, %v4442
      %v4547 = vadd.f32 %v4165, %v4447
      %v4548 = vadd.f32 %v4166, %v4450
      %v4549 = vadd.f32 %v4167, %v4455
      %v4550 = vadd.f32 %v4168, %v4458
      %v4551 = vadd.f32 %v4169, %v4463
      %v4552 = vadd.f32 %v4170, %v4466
      %v4553 = vadd.f32 %v4171, %v4471
      %v4554 = vadd.f32 %v4172, %v4474
      %v4555 = vadd.f32 %v4173, %v4479
      %v4556 = vadd.f32 %v4174, %v4482
      %v4557 = vadd.f32 %v4175, %v4487
      %v4558 = vadd.f32 %v4176, %v4490
      %v4559 = vadd.f32 %v4177, %v4495
      %v4560 = vadd.f32 %v4178, %v4498
      %v4561 = vadd.f32 %v4179, %v4503
      %v4562 = vadd.f32 %v4180, %v4506
      %v4563 = vadd.f32 %v4181, %v4511
      %v4564 = vadd.f32 %v4182, %v4514
      %4597 = vrot.lane.b32.xlu0 %v4399, 124
      %v4598 = vpop.permute.xlu0 %4597
      %4599 = vrot.lane.b32.xlu0 %v4402, 124
      %v4600 = vpop.permute.xlu0 %4599
      %4601 = vrot.lane.b32.xlu0 %v4407, 124
      %v4602 = vpop.permute.xlu0 %4601
      %4603 = vrot.lane.b32.xlu0 %v4410, 124
      %v4604 = vpop.permute.xlu0 %4603
      %4605 = vrot.lane.b32.xlu0 %v4415, 124
      %v4606 = vpop.permute.xlu0 %4605
      %4607 = vrot.lane.b32.xlu0 %v4418, 124
      %v4608 = vpop.permute.xlu0 %4607
      %4609 = vrot.lane.b32.xlu0 %v4423, 124
      %v4610 = vpop.permute.xlu0 %4609
      %4611 = vrot.lane.b32.xlu0 %v4426, 124
      %v4612 = vpop.permute.xlu0 %4611
      %4613 = vrot.lane.b32.xlu0 %v4431, 124
      %v4614 = vpop.permute.xlu0 %4613
      %4615 = vrot.lane.b32.xlu0 %v4434, 124
      %v4616 = vpop.permute.xlu0 %4615
      %4617 = vrot.lane.b32.xlu0 %v4439, 124
      %v4618 = vpop.permute.xlu0 %4617
      %4619 = vrot.lane.b32.xlu0 %v4442, 124
      %v4620 = vpop.permute.xlu0 %4619
      %4621 = vrot.lane.b32.xlu0 %v4447, 124
      %v4622 = vpop.permute.xlu0 %4621
      %4623 = vrot.lane.b32.xlu0 %v4450, 124
      %v4624 = vpop.permute.xlu0 %4623
      %4625 = vrot.lane.b32.xlu0 %v4455, 124
      %v4626 = vpop.permute.xlu0 %4625
      %4627 = vrot.lane.b32.xlu0 %v4458, 124
      %v4628 = vpop.permute.xlu0 %4627
      %4629 = vrot.lane.b32.xlu0 %v4463, 124
      %v4630 = vpop.permute.xlu0 %4629
      %4631 = vrot.lane.b32.xlu0 %v4466, 124
      %v4632 = vpop.permute.xlu0 %4631
      %4633 = vrot.lane.b32.xlu0 %v4471, 124
      %v4634 = vpop.permute.xlu0 %4633
      %4635 = vrot.lane.b32.xlu0 %v4474, 124
      %v4636 = vpop.permute.xlu0 %4635
      %4637 = vrot.lane.b32.xlu0 %v4479, 124
      %v4638 = vpop.permute.xlu0 %4637
      %4639 = vrot.lane.b32.xlu0 %v4482, 124
      %v4640 = vpop.permute.xlu0 %4639
      %4641 = vrot.lane.b32.xlu0 %v4487, 124
      %v4642 = vpop.permute.xlu0 %4641
      %4643 = vrot.lane.b32.xlu0 %v4490, 124
      %v4644 = vpop.permute.xlu0 %4643
      %4645 = vrot.lane.b32.xlu0 %v4495, 124
      %v4646 = vpop.permute.xlu0 %4645
      %4647 = vrot.lane.b32.xlu0 %v4498, 124
      %v4648 = vpop.permute.xlu0 %4647
      %4649 = vrot.lane.b32.xlu0 %v4503, 124
      %v4650 = vpop.permute.xlu0 %4649
      %4651 = vrot.lane.b32.xlu0 %v4506, 124
      %v4652 = vpop.permute.xlu0 %4651
      %4653 = vrot.lane.b32.xlu0 %v4511, 124
      %v4654 = vpop.permute.xlu0 %4653
      %4655 = vrot.lane.b32.xlu0 %v4514, 124
      %v4656 = vpop.permute.xlu0 %4655
      %4657 = vrot.lane.b32.xlu0 %v4519, 124
      %v4658 = vpop.permute.xlu0 %4657
      %4659 = vrot.lane.b32.xlu0 %v4522, 124
      %v4660 = vpop.permute.xlu0 %4659
      %v4693 = vadd.f32 %v4533, %v4598
      %v4694 = vadd.f32 %v4534, %v4600
      %v4695 = vadd.f32 %v4535, %v4602
      %v4696 = vadd.f32 %v4536, %v4604
      %v4697 = vadd.f32 %v4537, %v4606
      %v4698 = vadd.f32 %v4538, %v4608
      %v4699 = vadd.f32 %v4539, %v4610
      %v4700 = vadd.f32 %v4540, %v4612
      %v4701 = vadd.f32 %v4541, %v4614
      %v4702 = vadd.f32 %v4542, %v4616
      %v4703 = vadd.f32 %v4543, %v4618
      %v4704 = vadd.f32 %v4544, %v4620
      %v4705 = vadd.f32 %v4545, %v4622
      %v4706 = vadd.f32 %v4546, %v4624
      %v4707 = vadd.f32 %v4547, %v4626
      %v4708 = vadd.f32 %v4548, %v4628
      %v4709 = vadd.f32 %v4549, %v4630
      %v4710 = vadd.f32 %v4550, %v4632
      %v4711 = vadd.f32 %v4551, %v4634
      %v4712 = vadd.f32 %v4552, %v4636
      %v4713 = vadd.f32 %v4553, %v4638
      %v4714 = vadd.f32 %v4554, %v4640
      %v4715 = vadd.f32 %v4555, %v4642
      %v4716 = vadd.f32 %v4556, %v4644
      %v4717 = vadd.f32 %v4557, %v4646
      %v4718 = vadd.f32 %v4558, %v4648
      %v4719 = vadd.f32 %v4559, %v4650
      %v4720 = vadd.f32 %v4560, %v4652
      %v4721 = vadd.f32 %v4561, %v4654
      %v4722 = vadd.f32 %v4562, %v4656
      %v4723 = vadd.f32 %v4563, %v4658
      %v4724 = vadd.f32 %v4564, %v4660
      %4727 = vrot.lane.b32.xlu0 %v4407, 120
      %v4728 = vpop.permute.xlu0 %4727
      %4729 = vrot.lane.b32.xlu0 %v4410, 120
      %v4730 = vpop.permute.xlu0 %4729
      %4731 = vrot.lane.b32.xlu0 %v4415, 120
      %v4732 = vpop.permute.xlu0 %4731
      %4733 = vrot.lane.b32.xlu0 %v4418, 120
      %v4734 = vpop.permute.xlu0 %4733
      %4735 = vrot.lane.b32.xlu0 %v4423, 120
      %v4736 = vpop.permute.xlu0 %4735
      %4737 = vrot.lane.b32.xlu0 %v4426, 120
      %v4738 = vpop.permute.xlu0 %4737
      %4739 = vrot.lane.b32.xlu0 %v4431, 120
      %v4740 = vpop.permute.xlu0 %4739
      %4741 = vrot.lane.b32.xlu0 %v4434, 120
      %v4742 = vpop.permute.xlu0 %4741
      %4743 = vrot.lane.b32.xlu0 %v4439, 120
      %v4744 = vpop.permute.xlu0 %4743
      %4745 = vrot.lane.b32.xlu0 %v4442, 120
      %v4746 = vpop.permute.xlu0 %4745
      %4747 = vrot.lane.b32.xlu0 %v4447, 120
      %v4748 = vpop.permute.xlu0 %4747
      %4749 = vrot.lane.b32.xlu0 %v4450, 120
      %v4750 = vpop.permute.xlu0 %4749
      %4751 = vrot.lane.b32.xlu0 %v4455, 120
      %v4752 = vpop.permute.xlu0 %4751
      %4753 = vrot.lane.b32.xlu0 %v4458, 120
      %v4754 = vpop.permute.xlu0 %4753
      %4755 = vrot.lane.b32.xlu0 %v4463, 120
      %v4756 = vpop.permute.xlu0 %4755
      %4757 = vrot.lane.b32.xlu0 %v4466, 120
      %v4758 = vpop.permute.xlu0 %4757
      %4759 = vrot.lane.b32.xlu0 %v4471, 120
      %v4760 = vpop.permute.xlu0 %4759
      %4761 = vrot.lane.b32.xlu0 %v4474, 120
      %v4762 = vpop.permute.xlu0 %4761
      %4763 = vrot.lane.b32.xlu0 %v4479, 120
      %v4764 = vpop.permute.xlu0 %4763
      %4765 = vrot.lane.b32.xlu0 %v4482, 120
      %v4766 = vpop.permute.xlu0 %4765
      %4767 = vrot.lane.b32.xlu0 %v4487, 120
      %v4768 = vpop.permute.xlu0 %4767
      %4769 = vrot.lane.b32.xlu0 %v4490, 120
      %v4770 = vpop.permute.xlu0 %4769
      %4771 = vrot.lane.b32.xlu0 %v4495, 120
      %v4772 = vpop.permute.xlu0 %4771
      %4773 = vrot.lane.b32.xlu0 %v4498, 120
      %v4774 = vpop.permute.xlu0 %4773
      %4775 = vrot.lane.b32.xlu0 %v4503, 120
      %v4776 = vpop.permute.xlu0 %4775
      %4777 = vrot.lane.b32.xlu0 %v4506, 120
      %v4778 = vpop.permute.xlu0 %4777
      %4779 = vrot.lane.b32.xlu0 %v4511, 120
      %v4780 = vpop.permute.xlu0 %4779
      %4781 = vrot.lane.b32.xlu0 %v4514, 120
      %v4782 = vpop.permute.xlu0 %4781
      %4783 = vrot.lane.b32.xlu0 %v4519, 120
      %v4784 = vpop.permute.xlu0 %4783
      %4785 = vrot.lane.b32.xlu0 %v4522, 120
      %v4786 = vpop.permute.xlu0 %4785
      %4787 = vrot.lane.b32.xlu0 %v4527, 120
      %v4788 = vpop.permute.xlu0 %4787
      %4789 = vrot.lane.b32.xlu0 %v4530, 120
      %v4790 = vpop.permute.xlu0 %4789
      %v4823 = vadd.f32 %v4693, %v4728
      %v4824 = vadd.f32 %v4694, %v4730
      %v4825 = vadd.f32 %v4695, %v4732
      %v4826 = vadd.f32 %v4696, %v4734
      %v4827 = vadd.f32 %v4697, %v4736
      %v4828 = vadd.f32 %v4698, %v4738
      %v4829 = vadd.f32 %v4699, %v4740
      %v4830 = vadd.f32 %v4700, %v4742
      %v4831 = vadd.f32 %v4701, %v4744
      %v4832 = vadd.f32 %v4702, %v4746
      %v4833 = vadd.f32 %v4703, %v4748
      %v4834 = vadd.f32 %v4704, %v4750
      %v4835 = vadd.f32 %v4705, %v4752
      %v4836 = vadd.f32 %v4706, %v4754
      %v4837 = vadd.f32 %v4707, %v4756
      %v4838 = vadd.f32 %v4708, %v4758
      %v4839 = vadd.f32 %v4709, %v4760
      %v4840 = vadd.f32 %v4710, %v4762
      %v4841 = vadd.f32 %v4711, %v4764
      %v4842 = vadd.f32 %v4712, %v4766
      %v4843 = vadd.f32 %v4713, %v4768
      %v4844 = vadd.f32 %v4714, %v4770
      %v4845 = vadd.f32 %v4715, %v4772
      %v4846 = vadd.f32 %v4716, %v4774
      %v4847 = vadd.f32 %v4717, %v4776
      %v4848 = vadd.f32 %v4718, %v4778
      %v4849 = vadd.f32 %v4719, %v4780
      %v4850 = vadd.f32 %v4720, %v4782
      %v4851 = vadd.f32 %v4721, %v4784
      %v4852 = vadd.f32 %v4722, %v4786
      %v4853 = vadd.f32 %v4723, %v4788
      %v4854 = vadd.f32 %v4724, %v4790
      %v4855 = vld [vmem:[#allocation2 + $0x8] sm:$0x1f]
      %v4856 = vld [vmem:[#allocation2 + $0x18] sm:$0x1f]
      %v4857 = vld [vmem:[#allocation2 + $0x28] sm:$0x1f]
      %v4858 = vld [vmem:[#allocation2 + $0x38] sm:$0x1f]
      %v4859 = vld [vmem:[#allocation2 + $0x48] sm:$0x1f]
      %v4860 = vld [vmem:[#allocation2 + $0x58] sm:$0x1f]
      %v4861 = vld [vmem:[#allocation2 + $0x68] sm:$0x1f]
      %v4862 = vld [vmem:[#allocation2 + $0x78] sm:$0x1f]
      %v4863 = vld [vmem:[#allocation2 + $0x88] sm:$0x1f]
      %v4864 = vld [vmem:[#allocation2 + $0x98] sm:$0x1f]
      %v4865 = vld [vmem:[#allocation2 + $0xa8] sm:$0x1f]
      %v4866 = vld [vmem:[#allocation2 + $0xb8] sm:$0x1f]
      %v4867 = vld [vmem:[#allocation2 + $0xc8] sm:$0x1f]
      %v4868 = vld [vmem:[#allocation2 + $0xd8] sm:$0x1f]
      %v4869 = vld [vmem:[#allocation2 + $0xe8] sm:$0x1f]
      %v4870 = vld [vmem:[#allocation2 + $0xf8] sm:$0x1f]
      %v4871 = vld [vmem:[#allocation2 + $0x108] sm:$0x1f]
      %v4872 = vld [vmem:[#allocation2 + $0x118] sm:$0x1f]
      %s4873 = scalar_lea.vmem %s3, 16
      %v4874 = vld [vmem:[%s4873] sm:$0xf]
      %v4875 = vld [vmem:[%s4873 + $0x4] sm:$0x3]
      %v4877 = vshrl.u32 %v4183, 16
      %v4879 = vrot.slane %v4877, 4
      %v4880 = vshll.u32 %v4183, 16
      %v4882 = vrot.slane %v4880, 5
      %v4883 = vor.u32 %v4879, %v4882
      %v4885 = vshrl.u32 %v4855, 16
      %v4887 = vrot.slane %v4885, 4
      %v4888 = vshll.u32 %v4855, 16
      %v4890 = vrot.slane %v4888, 5
      %v4891 = vor.u32 %v4887, %v4890
      %v4892 = vsel %vm2148, %v4883, %v4891
      %v4894 = vshrl.u32 %v4184, 16
      %v4896 = vrot.slane %v4894, 4
      %v4897 = vshll.u32 %v4184, 16
      %v4899 = vrot.slane %v4897, 5
      %v4900 = vor.u32 %v4896, %v4899
      %v4902 = vshrl.u32 %v4856, 16
      %v4904 = vrot.slane %v4902, 4
      %v4905 = vshll.u32 %v4856, 16
      %v4907 = vrot.slane %v4905, 5
      %v4908 = vor.u32 %v4904, %v4907
      %v4909 = vsel %vm2148, %v4900, %v4908
      %v4911 = vshrl.u32 %v4185, 16
      %v4913 = vrot.slane %v4911, 4
      %v4914 = vshll.u32 %v4185, 16
      %v4916 = vrot.slane %v4914, 5
      %v4917 = vor.u32 %v4913, %v4916
      %v4919 = vshrl.u32 %v4857, 16
      %v4921 = vrot.slane %v4919, 4
      %v4922 = vshll.u32 %v4857, 16
      %v4924 = vrot.slane %v4922, 5
      %v4925 = vor.u32 %v4921, %v4924
      %v4926 = vsel %vm2148, %v4917, %v4925
      %v4928 = vshrl.u32 %v4186, 16
      %v4930 = vrot.slane %v4928, 4
      %v4931 = vshll.u32 %v4186, 16
      %v4933 = vrot.slane %v4931, 5
      %v4934 = vor.u32 %v4930, %v4933
      %v4936 = vshrl.u32 %v4858, 16
      %v4938 = vrot.slane %v4936, 4
      %v4939 = vshll.u32 %v4858, 16
      %v4941 = vrot.slane %v4939, 5
      %v4942 = vor.u32 %v4938, %v4941
      %v4943 = vsel %vm2148, %v4934, %v4942
      %v4945 = vshrl.u32 %v4187, 16
      %v4947 = vrot.slane %v4945, 4
      %v4948 = vshll.u32 %v4187, 16
      %v4950 = vrot.slane %v4948, 5
      %v4951 = vor.u32 %v4947, %v4950
      %v4953 = vshrl.u32 %v4859, 16
      %v4955 = vrot.slane %v4953, 4
      %v4956 = vshll.u32 %v4859, 16
      %v4958 = vrot.slane %v4956, 5
      %v4959 = vor.u32 %v4955, %v4958
      %v4960 = vsel %vm2148, %v4951, %v4959
      %v4962 = vshrl.u32 %v4188, 16
      %v4964 = vrot.slane %v4962, 4
      %v4965 = vshll.u32 %v4188, 16
      %v4967 = vrot.slane %v4965, 5
      %v4968 = vor.u32 %v4964, %v4967
      %v4970 = vshrl.u32 %v4860, 16
      %v4972 = vrot.slane %v4970, 4
      %v4973 = vshll.u32 %v4860, 16
      %v4975 = vrot.slane %v4973, 5
      %v4976 = vor.u32 %v4972, %v4975
      %v4977 = vsel %vm2148, %v4968, %v4976
      %v4979 = vshrl.u32 %v4189, 16
      %v4981 = vrot.slane %v4979, 4
      %v4982 = vshll.u32 %v4189, 16
      %v4984 = vrot.slane %v4982, 5
      %v4985 = vor.u32 %v4981, %v4984
      %v4987 = vshrl.u32 %v4861, 16
      %v4989 = vrot.slane %v4987, 4
      %v4990 = vshll.u32 %v4861, 16
      %v4992 = vrot.slane %v4990, 5
      %v4993 = vor.u32 %v4989, %v4992
      %v4994 = vsel %vm2148, %v4985, %v4993
      %v4996 = vshrl.u32 %v4190, 16
      %v4998 = vrot.slane %v4996, 4
      %v4999 = vshll.u32 %v4190, 16
      %v5001 = vrot.slane %v4999, 5
      %v5002 = vor.u32 %v4998, %v5001
      %v5004 = vshrl.u32 %v4862, 16
      %v5006 = vrot.slane %v5004, 4
      %v5007 = vshll.u32 %v4862, 16
      %v5009 = vrot.slane %v5007, 5
      %v5010 = vor.u32 %v5006, %v5009
      %v5011 = vsel %vm2148, %v5002, %v5010
      %v5013 = vshrl.u32 %v4191, 16
      %v5015 = vrot.slane %v5013, 4
      %v5016 = vshll.u32 %v4191, 16
      %v5018 = vrot.slane %v5016, 5
      %v5019 = vor.u32 %v5015, %v5018
      %v5021 = vshrl.u32 %v4863, 16
      %v5023 = vrot.slane %v5021, 4
      %v5024 = vshll.u32 %v4863, 16
      %v5026 = vrot.slane %v5024, 5
      %v5027 = vor.u32 %v5023, %v5026
      %v5028 = vsel %vm2148, %v5019, %v5027
      %v5030 = vshrl.u32 %v4192, 16
      %v5032 = vrot.slane %v5030, 4
      %v5033 = vshll.u32 %v4192, 16
      %v5035 = vrot.slane %v5033, 5
      %v5036 = vor.u32 %v5032, %v5035
      %v5038 = vshrl.u32 %v4864, 16
      %v5040 = vrot.slane %v5038, 4
      %v5041 = vshll.u32 %v4864, 16
      %v5043 = vrot.slane %v5041, 5
      %v5044 = vor.u32 %v5040, %v5043
      %v5045 = vsel %vm2148, %v5036, %v5044
      %v5047 = vshrl.u32 %v4193, 16
      %v5049 = vrot.slane %v5047, 4
      %v5050 = vshll.u32 %v4193, 16
      %v5052 = vrot.slane %v5050, 5
      %v5053 = vor.u32 %v5049, %v5052
      %v5055 = vshrl.u32 %v4865, 16
      %v5057 = vrot.slane %v5055, 4
      %v5058 = vshll.u32 %v4865, 16
      %v5060 = vrot.slane %v5058, 5
      %v5061 = vor.u32 %v5057, %v5060
      %v5062 = vsel %vm2148, %v5053, %v5061
      %v5064 = vshrl.u32 %v4194, 16
      %v5066 = vrot.slane %v5064, 4
      %v5067 = vshll.u32 %v4194, 16
      %v5069 = vrot.slane %v5067, 5
      %v5070 = vor.u32 %v5066, %v5069
      %v5072 = vshrl.u32 %v4866, 16
      %v5074 = vrot.slane %v5072, 4
      %v5075 = vshll.u32 %v4866, 16
      %v5077 = vrot.slane %v5075, 5
      %v5078 = vor.u32 %v5074, %v5077
      %v5079 = vsel %vm2148, %v5070, %v5078
      %v5081 = vshrl.u32 %v4195, 16
      %v5083 = vrot.slane %v5081, 4
      %v5084 = vshll.u32 %v4195, 16
      %v5086 = vrot.slane %v5084, 5
      %v5087 = vor.u32 %v5083, %v5086
      %v5089 = vshrl.u32 %v4867, 16
      %v5091 = vrot.slane %v5089, 4
      %v5092 = vshll.u32 %v4867, 16
      %v5094 = vrot.slane %v5092, 5
      %v5095 = vor.u32 %v5091, %v5094
      %v5096 = vsel %vm2148, %v5087, %v5095
      %v5098 = vshrl.u32 %v4196, 16
      %v5100 = vrot.slane %v5098, 4
      %v5101 = vshll.u32 %v4196, 16
      %v5103 = vrot.slane %v5101, 5
      %v5104 = vor.u32 %v5100, %v5103
      %v5106 = vshrl.u32 %v4868, 16
      %v5108 = vrot.slane %v5106, 4
      %v5109 = vshll.u32 %v4868, 16
      %v5111 = vrot.slane %v5109, 5
      %v5112 = vor.u32 %v5108, %v5111
      %v5113 = vsel %vm2148, %v5104, %v5112
      %v5115 = vshrl.u32 %v4197, 16
      %v5117 = vrot.slane %v5115, 4
      %v5118 = vshll.u32 %v4197, 16
      %v5120 = vrot.slane %v5118, 5
      %v5121 = vor.u32 %v5117, %v5120
      %v5123 = vshrl.u32 %v4869, 16
      %v5125 = vrot.slane %v5123, 4
      %v5126 = vshll.u32 %v4869, 16
      %v5128 = vrot.slane %v5126, 5
      %v5129 = vor.u32 %v5125, %v5128
      %v5130 = vsel %vm2148, %v5121, %v5129
      %v5132 = vshrl.u32 %v4198, 16
      %v5134 = vrot.slane %v5132, 4
      %v5135 = vshll.u32 %v4198, 16
      %v5137 = vrot.slane %v5135, 5
      %v5138 = vor.u32 %v5134, %v5137
      %v5140 = vshrl.u32 %v4870, 16
      %v5142 = vrot.slane %v5140, 4
      %v5143 = vshll.u32 %v4870, 16
      %v5145 = vrot.slane %v5143, 5
      %v5146 = vor.u32 %v5142, %v5145
      %v5147 = vsel %vm2148, %v5138, %v5146
      %v5149 = vshrl.u32 %v4199, 16
      %v5151 = vrot.slane %v5149, 4
      %v5152 = vshll.u32 %v4199, 16
      %v5154 = vrot.slane %v5152, 5
      %v5155 = vor.u32 %v5151, %v5154
      %v5157 = vshrl.u32 %v4871, 16
      %v5159 = vrot.slane %v5157, 4
      %v5160 = vshll.u32 %v4871, 16
      %v5162 = vrot.slane %v5160, 5
      %v5163 = vor.u32 %v5159, %v5162
      %v5164 = vsel %vm2148, %v5155, %v5163
      %v5166 = vshrl.u32 %v4200, 16
      %v5168 = vrot.slane %v5166, 4
      %v5169 = vshll.u32 %v4200, 16
      %v5171 = vrot.slane %v5169, 5
      %v5172 = vor.u32 %v5168, %v5171
      %v5174 = vshrl.u32 %v4872, 16
      %v5176 = vrot.slane %v5174, 4
      %v5177 = vshll.u32 %v4872, 16
      %v5179 = vrot.slane %v5177, 5
      %v5180 = vor.u32 %v5176, %v5179
      %v5181 = vsel %vm2148, %v5172, %v5180
      %v5184 = vunpack.c.l.b16 %v4874
      %v5185 = vunpack.c.l.b16 %v4875
      %v5186 = vpack.c.b16 %v5185, %v5184
      %v5188 = vsel %vm3625, %v4892, 0
      %v5191 = vsel %vm3625, %v4909, 0
      %v5194 = vsel %vm3625, %v4926, 0
      %v5197 = vsel %vm3625, %v4943, 0
      %v5200 = vsel %vm3625, %v4960, 0
      %v5203 = vsel %vm3625, %v4977, 0
      %v5206 = vsel %vm3625, %v4994, 0
      %v5209 = vsel %vm3625, %v5011, 0
      %v5212 = vsel %vm3625, %v5028, 0
      %v5215 = vsel %vm3625, %v5045, 0
      %v5218 = vsel %vm3625, %v5062, 0
      %v5221 = vsel %vm3625, %v5079, 0
      %v5224 = vsel %vm3625, %v5096, 0
      %v5227 = vsel %vm3625, %v5113, 0
      %v5230 = vsel %vm3625, %v5130, 0
      %v5233 = vsel %vm3625, %v5147, 0
      %v5236 = vsel %vm3625, %v5164, 0
      %v5239 = vsel %vm3625, %v5181, 0
      %v5242 = vsel %vm3680, %v5186, 0
      %5244 = vmatprep.subr.bf16.mxu0 0
      %5245 = vmatpush1.bf16.msra.mxu0 %v5242
      %5246 = vmatprep.subr.bf16.mxu0 0
      %5247 = vmatpush1.bf16.msra.mxu0 0
      %5248 = vmatprep.subr.bf16.mxu0 0
      %5249 = vmatpush1.bf16.msra.mxu0 0
      %5250 = vmatprep.subr.bf16.mxu0 0
      %5251 = vmatpush1.bf16.msra.mxu0 0
      %5252 = vmatprep.subr.bf16.mxu0 0
      %5253 = vmatpush1.bf16.msra.mxu0 0
      %5254 = vmatprep.subr.bf16.mxu0 0
      %5255 = vmatpush1.bf16.msra.mxu0 0
      %5256 = vmatprep.subr.bf16.mxu0 0
      %5257 = vmatpush1.bf16.msra.mxu0 0
      %5258 = vmatprep.subr.bf16.mxu0 0
      %5259 = vmatpush1.bf16.msra.mxu0 0
      %5260 = vmatprep.subr.bf16.mxu0 0
      %5261 = vmatpush1.bf16.msra.mxu0 0
      %5262 = vmatprep.subr.bf16.mxu0 0
      %5263 = vmatpush1.bf16.msra.mxu0 0
      %5264 = vmatprep.subr.bf16.mxu0 0
      %5265 = vmatpush1.bf16.msra.mxu0 0
      %5266 = vmatprep.subr.bf16.mxu0 0
      %5267 = vmatpush1.bf16.msra.mxu0 0
      %5268 = vmatprep.subr.bf16.mxu0 0
      %5269 = vmatpush1.bf16.msra.mxu0 0
      %5270 = vmatprep.subr.bf16.mxu0 0
      %5271 = vmatpush1.bf16.msra.mxu0 0
      %5272 = vmatprep.subr.bf16.mxu0 0
      %5273 = vmatpush1.bf16.msra.mxu0 0
      %5274 = vmatprep.subr.bf16.mxu0 0
      %5275 = vmatpush1.bf16.msra.mxu0 0
      %5276 = vmatprep.mubr.bf16.mxu0 0
      %5277 = vmatmul.mubr.bf16.gmra.mrb[0].mxu0 %v5188
      %v5278 = vpop.f32.mrb[0].mxu0
      %v5279 = vadd.f32 0.0, %v5278
      %v5280 = vpop.f32.mrb[0].mxu0
      %v5281 = vpop.f32.mrb[0].mxu0
      %v5282 = vadd.f32 0.0, %v5281
      %v5283 = vpop.f32.mrb[0].mxu0
      %5284 = vmatprep.mubr.bf16.mxu0 0
      %5285 = vmatmul.mubr.bf16.gmra.mrb[0].mxu0 %v5191
      %v5286 = vpop.f32.mrb[0].mxu0
      %v5287 = vadd.f32 0.0, %v5286
      %v5288 = vpop.f32.mrb[0].mxu0
      %v5289 = vpop.f32.mrb[0].mxu0
      %v5290 = vadd.f32 0.0, %v5289
      %v5291 = vpop.f32.mrb[0].mxu0
      %5292 = vmatprep.mubr.bf16.mxu0 0
      %5293 = vmatmul.mubr.bf16.gmra.mrb[0].mxu0 %v5194
      %v5294 = vpop.f32.mrb[0].mxu0
      %v5295 = vadd.f32 0.0, %v5294
      %v5296 = vpop.f32.mrb[0].mxu0
      %v5297 = vpop.f32.mrb[0].mxu0
      %v5298 = vadd.f32 0.0, %v5297
      %v5299 = vpop.f32.mrb[0].mxu0
      %5300 = vmatprep.mubr.bf16.mxu0 0
      %5301 = vmatmul.mubr.bf16.gmra.mrb[0].mxu0 %v5197
      %v5302 = vpop.f32.mrb[0].mxu0
      %v5303 = vadd.f32 0.0, %v5302
      %v5304 = vpop.f32.mrb[0].mxu0
      %v5305 = vpop.f32.mrb[0].mxu0
      %v5306 = vadd.f32 0.0, %v5305
      %v5307 = vpop.f32.mrb[0].mxu0
      %5308 = vmatprep.mubr.bf16.mxu0 0
      %5309 = vmatmul.mubr.bf16.gmra.mrb[0].mxu0 %v5200
      %v5310 = vpop.f32.mrb[0].mxu0
      %v5311 = vadd.f32 0.0, %v5310
      %v5312 = vpop.f32.mrb[0].mxu0
      %v5313 = vpop.f32.mrb[0].mxu0
      %v5314 = vadd.f32 0.0, %v5313
      %v5315 = vpop.f32.mrb[0].mxu0
      %5316 = vmatprep.mubr.bf16.mxu0 0
      %5317 = vmatmul.mubr.bf16.gmra.mrb[0].mxu0 %v5203
      %v5318 = vpop.f32.mrb[0].mxu0
      %v5319 = vadd.f32 0.0, %v5318
      %v5320 = vpop.f32.mrb[0].mxu0
      %v5321 = vpop.f32.mrb[0].mxu0
      %v5322 = vadd.f32 0.0, %v5321
      %v5323 = vpop.f32.mrb[0].mxu0
      %5324 = vmatprep.mubr.bf16.mxu0 0
      %5325 = vmatmul.mubr.bf16.gmra.mrb[0].mxu0 %v5206
      %v5326 = vpop.f32.mrb[0].mxu0
      %v5327 = vadd.f32 0.0, %v5326
      %v5328 = vpop.f32.mrb[0].mxu0
      %v5329 = vpop.f32.mrb[0].mxu0
      %v5330 = vadd.f32 0.0, %v5329
      %v5331 = vpop.f32.mrb[0].mxu0
      %5332 = vmatprep.mubr.bf16.mxu0 0
      %5333 = vmatmul.mubr.bf16.gmra.mrb[0].mxu0 %v5209
      %v5334 = vpop.f32.mrb[0].mxu0
      %v5335 = vadd.f32 0.0, %v5334
      %v5336 = vpop.f32.mrb[0].mxu0
      %v5337 = vpop.f32.mrb[0].mxu0
      %v5338 = vadd.f32 0.0, %v5337
      %v5339 = vpop.f32.mrb[0].mxu0
      %5340 = vmatprep.mubr.bf16.mxu0 0
      %5341 = vmatmul.mubr.bf16.gmra.mrb[0].mxu0 %v5212
      %v5342 = vpop.f32.mrb[0].mxu0
      %v5343 = vadd.f32 0.0, %v5342
      %v5344 = vpop.f32.mrb[0].mxu0
      %v5345 = vpop.f32.mrb[0].mxu0
      %v5346 = vadd.f32 0.0, %v5345
      %v5347 = vpop.f32.mrb[0].mxu0
      %5348 = vmatprep.mubr.bf16.mxu0 0
      %5349 = vmatmul.mubr.bf16.gmra.mrb[0].mxu0 %v5215
      %v5350 = vpop.f32.mrb[0].mxu0
      %v5351 = vadd.f32 0.0, %v5350
      %v5352 = vpop.f32.mrb[0].mxu0
      %v5353 = vpop.f32.mrb[0].mxu0
      %v5354 = vadd.f32 0.0, %v5353
      %v5355 = vpop.f32.mrb[0].mxu0
      %5356 = vmatprep.mubr.bf16.mxu0 0
      %5357 = vmatmul.mubr.bf16.gmra.mrb[0].mxu0 %v5218
      %v5358 = vpop.f32.mrb[0].mxu0
      %v5359 = vadd.f32 0.0, %v5358
      %v5360 = vpop.f32.mrb[0].mxu0
      %v5361 = vpop.f32.mrb[0].mxu0
      %v5362 = vadd.f32 0.0, %v5361
      %v5363 = vpop.f32.mrb[0].mxu0
      %5364 = vmatprep.mubr.bf16.mxu0 0
      %5365 = vmatmul.mubr.bf16.gmra.mrb[0].mxu0 %v5221
      %v5366 = vpop.f32.mrb[0].mxu0
      %v5367 = vadd.f32 0.0, %v5366
      %v5368 = vpop.f32.mrb[0].mxu0
      %v5369 = vpop.f32.mrb[0].mxu0
      %v5370 = vadd.f32 0.0, %v5369
      %v5371 = vpop.f32.mrb[0].mxu0
      %5372 = vmatprep.mubr.bf16.mxu0 0
      %5373 = vmatmul.mubr.bf16.gmra.mrb[0].mxu0 %v5224
      %v5374 = vpop.f32.mrb[0].mxu0
      %v5375 = vadd.f32 0.0, %v5374
      %v5376 = vpop.f32.mrb[0].mxu0
      %v5377 = vpop.f32.mrb[0].mxu0
      %v5378 = vadd.f32 0.0, %v5377
      %v5379 = vpop.f32.mrb[0].mxu0
      %5380 = vmatprep.mubr.bf16.mxu0 0
      %5381 = vmatmul.mubr.bf16.gmra.mrb[0].mxu0 %v5227
      %v5382 = vpop.f32.mrb[0].mxu0
      %v5383 = vadd.f32 0.0, %v5382
      %v5384 = vpop.f32.mrb[0].mxu0
      %v5385 = vpop.f32.mrb[0].mxu0
      %v5386 = vadd.f32 0.0, %v5385
      %v5387 = vpop.f32.mrb[0].mxu0
      %5388 = vmatprep.mubr.bf16.mxu0 0
      %5389 = vmatmul.mubr.bf16.gmra.mrb[0].mxu0 %v5230
      %v5390 = vpop.f32.mrb[0].mxu0
      %v5391 = vadd.f32 0.0, %v5390
      %v5392 = vpop.f32.mrb[0].mxu0
      %v5393 = vpop.f32.mrb[0].mxu0
      %v5394 = vadd.f32 0.0, %v5393
      %v5395 = vpop.f32.mrb[0].mxu0
      %5396 = vmatprep.mubr.bf16.mxu0 0
      %5397 = vmatmul.mubr.bf16.gmra.mrb[0].mxu0 %v5233
      %v5398 = vpop.f32.mrb[0].mxu0
      %v5399 = vadd.f32 0.0, %v5398
      %v5400 = vpop.f32.mrb[0].mxu0
      %v5401 = vpop.f32.mrb[0].mxu0
      %v5402 = vadd.f32 0.0, %v5401
      %v5403 = vpop.f32.mrb[0].mxu0
      %5404 = vmatprep.mubr.bf16.mxu0 0
      %5405 = vmatmul.mubr.bf16.gmra.mrb[0].mxu0 %v5236
      %v5406 = vpop.f32.mrb[0].mxu0
      %v5407 = vadd.f32 0.0, %v5406
      %v5408 = vpop.f32.mrb[0].mxu0
      %v5409 = vpop.f32.mrb[0].mxu0
      %v5410 = vadd.f32 0.0, %v5409
      %v5411 = vpop.f32.mrb[0].mxu0
      %5412 = vmatprep.mubr.bf16.mxu0 0
      %5413 = vmatmul.mubr.bf16.gmra.mrb[0].mxu0 %v5239
      %v5414 = vpop.f32.mrb[0].mxu0
      %v5415 = vadd.f32 0.0, %v5414
      %v5416 = vpop.f32.mrb[0].mxu0
      %v5417 = vpop.f32.mrb[0].mxu0
      %v5418 = vadd.f32 0.0, %v5417
      %v5419 = vpop.f32.mrb[0].mxu0
      %5420 = vdwg.mxu0
      %v5421 = vadd.f32 %v4823, %v5279
      %v5422 = vadd.f32 %v4824, %v5282
      %v5423 = vadd.f32 %v4825, %v5287
      %v5424 = vadd.f32 %v4826, %v5290
      %v5425 = vadd.f32 %v4827, %v5295
      %v5426 = vadd.f32 %v4828, %v5298
      %v5427 = vadd.f32 %v4829, %v5303
      %v5428 = vadd.f32 %v4830, %v5306
      %v5429 = vadd.f32 %v4831, %v5311
      %v5430 = vadd.f32 %v4832, %v5314
      %v5431 = vadd.f32 %v4833, %v5319
      %v5432 = vadd.f32 %v4834, %v5322
      %v5433 = vadd.f32 %v4835, %v5327
      %v5434 = vadd.f32 %v4836, %v5330
      %v5435 = vadd.f32 %v4837, %v5335
      %v5436 = vadd.f32 %v4838, %v5338
      %v5437 = vadd.f32 %v4839, %v5343
      %v5438 = vadd.f32 %v4840, %v5346
      %v5439 = vadd.f32 %v4841, %v5351
      %v5440 = vadd.f32 %v4842, %v5354
      %v5441 = vadd.f32 %v4843, %v5359
      %v5442 = vadd.f32 %v4844, %v5362
      %v5443 = vadd.f32 %v4845, %v5367
      %v5444 = vadd.f32 %v4846, %v5370
      %v5445 = vadd.f32 %v4847, %v5375
      %v5446 = vadd.f32 %v4848, %v5378
      %v5447 = vadd.f32 %v4849, %v5383
      %v5448 = vadd.f32 %v4850, %v5386
      %v5449 = vadd.f32 %v4851, %v5391
      %v5450 = vadd.f32 %v4852, %v5394
      %v5451 = vadd.f32 %v4853, %v5399
      %v5452 = vadd.f32 %v4854, %v5402
      %5485 = vrot.lane.b32.xlu0 %v5287, 124
      %v5486 = vpop.permute.xlu0 %5485
      %5487 = vrot.lane.b32.xlu0 %v5290, 124
      %v5488 = vpop.permute.xlu0 %5487
      %5489 = vrot.lane.b32.xlu0 %v5295, 124
      %v5490 = vpop.permute.xlu0 %5489
      %5491 = vrot.lane.b32.xlu0 %v5298, 124
      %v5492 = vpop.permute.xlu0 %5491
      %5493 = vrot.lane.b32.xlu0 %v5303, 124
      %v5494 = vpop.permute.xlu0 %5493
      %5495 = vrot.lane.b32.xlu0 %v5306, 124
      %v5496 = vpop.permute.xlu0 %5495
      %5497 = vrot.lane.b32.xlu0 %v5311, 124
      %v5498 = vpop.permute.xlu0 %5497
      %5499 = vrot.lane.b32.xlu0 %v5314, 124
      %v5500 = vpop.permute.xlu0 %5499
      %5501 = vrot.lane.b32.xlu0 %v5319, 124
      %v5502 = vpop.permute.xlu0 %5501
      %5503 = vrot.lane.b32.xlu0 %v5322, 124
      %v5504 = vpop.permute.xlu0 %5503
      %5505 = vrot.lane.b32.xlu0 %v5327, 124
      %v5506 = vpop.permute.xlu0 %5505
      %5507 = vrot.lane.b32.xlu0 %v5330, 124
      %v5508 = vpop.permute.xlu0 %5507
      %5509 = vrot.lane.b32.xlu0 %v5335, 124
      %v5510 = vpop.permute.xlu0 %5509
      %5511 = vrot.lane.b32.xlu0 %v5338, 124
      %v5512 = vpop.permute.xlu0 %5511
      %5513 = vrot.lane.b32.xlu0 %v5343, 124
      %v5514 = vpop.permute.xlu0 %5513
      %5515 = vrot.lane.b32.xlu0 %v5346, 124
      %v5516 = vpop.permute.xlu0 %5515
      %5517 = vrot.lane.b32.xlu0 %v5351, 124
      %v5518 = vpop.permute.xlu0 %5517
      %5519 = vrot.lane.b32.xlu0 %v5354, 124
      %v5520 = vpop.permute.xlu0 %5519
      %5521 = vrot.lane.b32.xlu0 %v5359, 124
      %v5522 = vpop.permute.xlu0 %5521
      %5523 = vrot.lane.b32.xlu0 %v5362, 124
      %v5524 = vpop.permute.xlu0 %5523
      %5525 = vrot.lane.b32.xlu0 %v5367, 124
      %v5526 = vpop.permute.xlu0 %5525
      %5527 = vrot.lane.b32.xlu0 %v5370, 124
      %v5528 = vpop.permute.xlu0 %5527
      %5529 = vrot.lane.b32.xlu0 %v5375, 124
      %v5530 = vpop.permute.xlu0 %5529
      %5531 = vrot.lane.b32.xlu0 %v5378, 124
      %v5532 = vpop.permute.xlu0 %5531
      %5533 = vrot.lane.b32.xlu0 %v5383, 124
      %v5534 = vpop.permute.xlu0 %5533
      %5535 = vrot.lane.b32.xlu0 %v5386, 124
      %v5536 = vpop.permute.xlu0 %5535
      %5537 = vrot.lane.b32.xlu0 %v5391, 124
      %v5538 = vpop.permute.xlu0 %5537
      %5539 = vrot.lane.b32.xlu0 %v5394, 124
      %v5540 = vpop.permute.xlu0 %5539
      %5541 = vrot.lane.b32.xlu0 %v5399, 124
      %v5542 = vpop.permute.xlu0 %5541
      %5543 = vrot.lane.b32.xlu0 %v5402, 124
      %v5544 = vpop.permute.xlu0 %5543
      %5545 = vrot.lane.b32.xlu0 %v5407, 124
      %v5546 = vpop.permute.xlu0 %5545
      %5547 = vrot.lane.b32.xlu0 %v5410, 124
      %v5548 = vpop.permute.xlu0 %5547
      %v5581 = vadd.f32 %v5421, %v5486
      %v5582 = vadd.f32 %v5422, %v5488
      %v5583 = vadd.f32 %v5423, %v5490
      %v5584 = vadd.f32 %v5424, %v5492
      %v5585 = vadd.f32 %v5425, %v5494
      %v5586 = vadd.f32 %v5426, %v5496
      %v5587 = vadd.f32 %v5427, %v5498
      %v5588 = vadd.f32 %v5428, %v5500
      %v5589 = vadd.f32 %v5429, %v5502
      %v5590 = vadd.f32 %v5430, %v5504
      %v5591 = vadd.f32 %v5431, %v5506
      %v5592 = vadd.f32 %v5432, %v5508
      %v5593 = vadd.f32 %v5433, %v5510
      %v5594 = vadd.f32 %v5434, %v5512
      %v5595 = vadd.f32 %v5435, %v5514
      %v5596 = vadd.f32 %v5436, %v5516
      %v5597 = vadd.f32 %v5437, %v5518
      %v5598 = vadd.f32 %v5438, %v5520
      %v5599 = vadd.f32 %v5439, %v5522
      %v5600 = vadd.f32 %v5440, %v5524
      %v5601 = vadd.f32 %v5441, %v5526
      %v5602 = vadd.f32 %v5442, %v5528
      %v5603 = vadd.f32 %v5443, %v5530
      %v5604 = vadd.f32 %v5444, %v5532
      %v5605 = vadd.f32 %v5445, %v5534
      %v5606 = vadd.f32 %v5446, %v5536
      %v5607 = vadd.f32 %v5447, %v5538
      %v5608 = vadd.f32 %v5448, %v5540
      %v5609 = vadd.f32 %v5449, %v5542
      %v5610 = vadd.f32 %v5450, %v5544
      %v5611 = vadd.f32 %v5451, %v5546
      %v5612 = vadd.f32 %v5452, %v5548
      %5615 = vrot.lane.b32.xlu0 %v5295, 120
      %v5616 = vpop.permute.xlu0 %5615
      %5617 = vrot.lane.b32.xlu0 %v5298, 120
      %v5618 = vpop.permute.xlu0 %5617
      %5619 = vrot.lane.b32.xlu0 %v5303, 120
      %v5620 = vpop.permute.xlu0 %5619
      %5621 = vrot.lane.b32.xlu0 %v5306, 120
      %v5622 = vpop.permute.xlu0 %5621
      %5623 = vrot.lane.b32.xlu0 %v5311, 120
      %v5624 = vpop.permute.xlu0 %5623
      %5625 = vrot.lane.b32.xlu0 %v5314, 120
      %v5626 = vpop.permute.xlu0 %5625
      %5627 = vrot.lane.b32.xlu0 %v5319, 120
      %v5628 = vpop.permute.xlu0 %5627
      %5629 = vrot.lane.b32.xlu0 %v5322, 120
      %v5630 = vpop.permute.xlu0 %5629
      %5631 = vrot.lane.b32.xlu0 %v5327, 120
      %v5632 = vpop.permute.xlu0 %5631
      %5633 = vrot.lane.b32.xlu0 %v5330, 120
      %v5634 = vpop.permute.xlu0 %5633
      %5635 = vrot.lane.b32.xlu0 %v5335, 120
      %v5636 = vpop.permute.xlu0 %5635
      %5637 = vrot.lane.b32.xlu0 %v5338, 120
      %v5638 = vpop.permute.xlu0 %5637
      %5639 = vrot.lane.b32.xlu0 %v5343, 120
      %v5640 = vpop.permute.xlu0 %5639
      %5641 = vrot.lane.b32.xlu0 %v5346, 120
      %v5642 = vpop.permute.xlu0 %5641
      %5643 = vrot.lane.b32.xlu0 %v5351, 120
      %v5644 = vpop.permute.xlu0 %5643
      %5645 = vrot.lane.b32.xlu0 %v5354, 120
      %v5646 = vpop.permute.xlu0 %5645
      %5647 = vrot.lane.b32.xlu0 %v5359, 120
      %v5648 = vpop.permute.xlu0 %5647
      %5649 = vrot.lane.b32.xlu0 %v5362, 120
      %v5650 = vpop.permute.xlu0 %5649
      %5651 = vrot.lane.b32.xlu0 %v5367, 120
      %v5652 = vpop.permute.xlu0 %5651
      %5653 = vrot.lane.b32.xlu0 %v5370, 120
      %v5654 = vpop.permute.xlu0 %5653
      %5655 = vrot.lane.b32.xlu0 %v5375, 120
      %v5656 = vpop.permute.xlu0 %5655
      %5657 = vrot.lane.b32.xlu0 %v5378, 120
      %v5658 = vpop.permute.xlu0 %5657
      %5659 = vrot.lane.b32.xlu0 %v5383, 120
      %v5660 = vpop.permute.xlu0 %5659
      %5661 = vrot.lane.b32.xlu0 %v5386, 120
      %v5662 = vpop.permute.xlu0 %5661
      %5663 = vrot.lane.b32.xlu0 %v5391, 120
      %v5664 = vpop.permute.xlu0 %5663
      %5665 = vrot.lane.b32.xlu0 %v5394, 120
      %v5666 = vpop.permute.xlu0 %5665
      %5667 = vrot.lane.b32.xlu0 %v5399, 120
      %v5668 = vpop.permute.xlu0 %5667
      %5669 = vrot.lane.b32.xlu0 %v5402, 120
      %v5670 = vpop.permute.xlu0 %5669
      %5671 = vrot.lane.b32.xlu0 %v5407, 120
      %v5672 = vpop.permute.xlu0 %5671
      %5673 = vrot.lane.b32.xlu0 %v5410, 120
      %v5674 = vpop.permute.xlu0 %5673
      %5675 = vrot.lane.b32.xlu0 %v5415, 120
      %v5676 = vpop.permute.xlu0 %5675
      %5677 = vrot.lane.b32.xlu0 %v5418, 120
      %v5678 = vpop.permute.xlu0 %5677
      %v5711 = vadd.f32 %v5581, %v5616
      %v5712 = vadd.f32 %v5582, %v5618
      %v5713 = vadd.f32 %v5583, %v5620
      %v5714 = vadd.f32 %v5584, %v5622
      %v5715 = vadd.f32 %v5585, %v5624
      %v5716 = vadd.f32 %v5586, %v5626
      %v5717 = vadd.f32 %v5587, %v5628
      %v5718 = vadd.f32 %v5588, %v5630
      %v5719 = vadd.f32 %v5589, %v5632
      %v5720 = vadd.f32 %v5590, %v5634
      %v5721 = vadd.f32 %v5591, %v5636
      %v5722 = vadd.f32 %v5592, %v5638
      %v5723 = vadd.f32 %v5593, %v5640
      %v5724 = vadd.f32 %v5594, %v5642
      %v5725 = vadd.f32 %v5595, %v5644
      %v5726 = vadd.f32 %v5596, %v5646
      %v5727 = vadd.f32 %v5597, %v5648
      %v5728 = vadd.f32 %v5598, %v5650
      %v5729 = vadd.f32 %v5599, %v5652
      %v5730 = vadd.f32 %v5600, %v5654
      %v5731 = vadd.f32 %v5601, %v5656
      %v5732 = vadd.f32 %v5602, %v5658
      %v5733 = vadd.f32 %v5603, %v5660
      %v5734 = vadd.f32 %v5604, %v5662
      %v5735 = vadd.f32 %v5605, %v5664
      %v5736 = vadd.f32 %v5606, %v5666
      %v5737 = vadd.f32 %v5607, %v5668
      %v5738 = vadd.f32 %v5608, %v5670
      %v5739 = vadd.f32 %v5609, %v5672
      %v5740 = vadd.f32 %v5610, %v5674
      %v5741 = vadd.f32 %v5611, %v5676
      %v5742 = vadd.f32 %v5612, %v5678
      %v5743 = vld [vmem:[%s4] sm:$0x1]
      %v5745 = vlaneseq
      %v5746 = vshrl.u32 %v5745, 7
      %v5747 = vsub.s32 0, %v5746
      %v5748 = vrot.slane %v5743, %v5747
      %v5750 = vadd.f32 %v5711, %v5748
      %v5751 = vadd.f32 %v5712, %v5748
      %v5752 = vadd.f32 %v5713, %v5748
      %v5753 = vadd.f32 %v5714, %v5748
      %v5754 = vadd.f32 %v5715, %v5748
      %v5755 = vadd.f32 %v5716, %v5748
      %v5756 = vadd.f32 %v5717, %v5748
      %v5757 = vadd.f32 %v5718, %v5748
      %v5758 = vadd.f32 %v5719, %v5748
      %v5759 = vadd.f32 %v5720, %v5748
      %v5760 = vadd.f32 %v5721, %v5748
      %v5761 = vadd.f32 %v5722, %v5748
      %v5762 = vadd.f32 %v5723, %v5748
      %v5763 = vadd.f32 %v5724, %v5748
      %v5764 = vadd.f32 %v5725, %v5748
      %v5765 = vadd.f32 %v5726, %v5748
      %v5766 = vadd.f32 %v5727, %v5748
      %v5767 = vadd.f32 %v5728, %v5748
      %v5768 = vadd.f32 %v5729, %v5748
      %v5769 = vadd.f32 %v5730, %v5748
      %v5770 = vadd.f32 %v5731, %v5748
      %v5771 = vadd.f32 %v5732, %v5748
      %v5772 = vadd.f32 %v5733, %v5748
      %v5773 = vadd.f32 %v5734, %v5748
      %v5774 = vadd.f32 %v5735, %v5748
      %v5775 = vadd.f32 %v5736, %v5748
      %v5776 = vadd.f32 %v5737, %v5748
      %v5777 = vadd.f32 %v5738, %v5748
      %v5778 = vadd.f32 %v5739, %v5748
      %v5779 = vadd.f32 %v5740, %v5748
      %v5780 = vadd.f32 %v5741, %v5748
      %v5781 = vadd.f32 %v5742, %v5748
      %vm5782 = vcmp.gt.f32.partialorder %v5750, 0.0
      %vm5783 = vcmp.gt.f32.partialorder %v5751, 0.0
      %vm5784 = vcmp.gt.f32.partialorder %v5752, 0.0
      %vm5785 = vcmp.gt.f32.partialorder %v5753, 0.0
      %vm5786 = vcmp.gt.f32.partialorder %v5754, 0.0
      %vm5787 = vcmp.gt.f32.partialorder %v5755, 0.0
      %vm5788 = vcmp.gt.f32.partialorder %v5756, 0.0
      %vm5789 = vcmp.gt.f32.partialorder %v5757, 0.0
      %vm5790 = vcmp.gt.f32.partialorder %v5758, 0.0
      %vm5791 = vcmp.gt.f32.partialorder %v5759, 0.0
      %vm5792 = vcmp.gt.f32.partialorder %v5760, 0.0
      %vm5793 = vcmp.gt.f32.partialorder %v5761, 0.0
      %vm5794 = vcmp.gt.f32.partialorder %v5762, 0.0
      %vm5795 = vcmp.gt.f32.partialorder %v5763, 0.0
      %vm5796 = vcmp.gt.f32.partialorder %v5764, 0.0
      %vm5797 = vcmp.gt.f32.partialorder %v5765, 0.0
      %vm5798 = vcmp.gt.f32.partialorder %v5766, 0.0
      %vm5799 = vcmp.gt.f32.partialorder %v5767, 0.0
      %vm5800 = vcmp.gt.f32.partialorder %v5768, 0.0
      %vm5801 = vcmp.gt.f32.partialorder %v5769, 0.0
      %vm5802 = vcmp.gt.f32.partialorder %v5770, 0.0
      %vm5803 = vcmp.gt.f32.partialorder %v5771, 0.0
      %vm5804 = vcmp.gt.f32.partialorder %v5772, 0.0
      %vm5805 = vcmp.gt.f32.partialorder %v5773, 0.0
      %vm5806 = vcmp.gt.f32.partialorder %v5774, 0.0
      %vm5807 = vcmp.gt.f32.partialorder %v5775, 0.0
      %vm5808 = vcmp.gt.f32.partialorder %v5776, 0.0
      %vm5809 = vcmp.gt.f32.partialorder %v5777, 0.0
      %vm5810 = vcmp.gt.f32.partialorder %v5778, 0.0
      %vm5811 = vcmp.gt.f32.partialorder %v5779, 0.0
      %vm5812 = vcmp.gt.f32.partialorder %v5780, 0.0
      %vm5813 = vcmp.gt.f32.partialorder %v5781, 0.0
      %v5814 = vmul.f32 %v5750, 0.2
      %v5815 = vmul.f32 %v5751, 0.2
      %v5816 = vmul.f32 %v5752, 0.2
      %v5817 = vmul.f32 %v5753, 0.2
      %v5818 = vmul.f32 %v5754, 0.2
      %v5819 = vmul.f32 %v5755, 0.2
      %v5820 = vmul.f32 %v5756, 0.2
      %v5821 = vmul.f32 %v5757, 0.2
      %v5822 = vmul.f32 %v5758, 0.2
      %v5823 = vmul.f32 %v5759, 0.2
      %v5824 = vmul.f32 %v5760, 0.2
      %v5825 = vmul.f32 %v5761, 0.2
      %v5826 = vmul.f32 %v5762, 0.2
      %v5827 = vmul.f32 %v5763, 0.2
      %v5828 = vmul.f32 %v5764, 0.2
      %v5829 = vmul.f32 %v5765, 0.2
      %v5830 = vmul.f32 %v5766, 0.2
      %v5831 = vmul.f32 %v5767, 0.2
      %v5832 = vmul.f32 %v5768, 0.2
      %v5833 = vmul.f32 %v5769, 0.2
      %v5834 = vmul.f32 %v5770, 0.2
      %v5835 = vmul.f32 %v5771, 0.2
      %v5836 = vmul.f32 %v5772, 0.2
      %v5837 = vmul.f32 %v5773, 0.2
      %v5838 = vmul.f32 %v5774, 0.2
      %v5839 = vmul.f32 %v5775, 0.2
      %v5840 = vmul.f32 %v5776, 0.2
      %v5841 = vmul.f32 %v5777, 0.2
      %v5842 = vmul.f32 %v5778, 0.2
      %v5843 = vmul.f32 %v5779, 0.2
      %v5844 = vmul.f32 %v5780, 0.2
      %v5845 = vmul.f32 %v5781, 0.2
      %v5846 = vsel %vm5782, %v5750, %v5814
      %v5847 = vsel %vm5783, %v5751, %v5815
      %v5848 = vsel %vm5784, %v5752, %v5816
      %v5849 = vsel %vm5785, %v5753, %v5817
      %v5850 = vsel %vm5786, %v5754, %v5818
      %v5851 = vsel %vm5787, %v5755, %v5819
      %v5852 = vsel %vm5788, %v5756, %v5820
      %v5853 = vsel %vm5789, %v5757, %v5821
      %v5854 = vsel %vm5790, %v5758, %v5822
      %v5855 = vsel %vm5791, %v5759, %v5823
      %v5856 = vsel %vm5792, %v5760, %v5824
      %v5857 = vsel %vm5793, %v5761, %v5825
      %v5858 = vsel %vm5794, %v5762, %v5826
      %v5859 = vsel %vm5795, %v5763, %v5827
      %v5860 = vsel %vm5796, %v5764, %v5828
      %v5861 = vsel %vm5797, %v5765, %v5829
      %v5862 = vsel %vm5798, %v5766, %v5830
      %v5863 = vsel %vm5799, %v5767, %v5831
      %v5864 = vsel %vm5800, %v5768, %v5832
      %v5865 = vsel %vm5801, %v5769, %v5833
      %v5866 = vsel %vm5802, %v5770, %v5834
      %v5867 = vsel %vm5803, %v5771, %v5835
      %v5868 = vsel %vm5804, %v5772, %v5836
      %v5869 = vsel %vm5805, %v5773, %v5837
      %v5870 = vsel %vm5806, %v5774, %v5838
      %v5871 = vsel %vm5807, %v5775, %v5839
      %v5872 = vsel %vm5808, %v5776, %v5840
      %v5873 = vsel %vm5809, %v5777, %v5841
      %v5874 = vsel %vm5810, %v5778, %v5842
      %v5875 = vsel %vm5811, %v5779, %v5843
      %v5876 = vsel %vm5812, %v5780, %v5844
      %v5877 = vsel %vm5813, %v5781, %v5845
      %v5878 = vpack.c.bf16 %v5847, %v5846
      %v5879 = vpack.c.bf16 %v5849, %v5848
      %v5880 = vpack.c.bf16 %v5851, %v5850
      %v5881 = vpack.c.bf16 %v5853, %v5852
      %v5882 = vpack.c.bf16 %v5855, %v5854
      %v5883 = vpack.c.bf16 %v5857, %v5856
      %v5884 = vpack.c.bf16 %v5859, %v5858
      %v5885 = vpack.c.bf16 %v5861, %v5860
      %v5886 = vpack.c.bf16 %v5863, %v5862
      %v5887 = vpack.c.bf16 %v5865, %v5864
      %v5888 = vpack.c.bf16 %v5867, %v5866
      %v5889 = vpack.c.bf16 %v5869, %v5868
      %v5890 = vpack.c.bf16 %v5871, %v5870
      %v5891 = vpack.c.bf16 %v5873, %v5872
      %v5892 = vpack.c.bf16 %v5875, %v5874
      %v5893 = vpack.c.bf16 %v5877, %v5876
      %v5910 = vrot.slane %v5878, 4
      %v5911 = vrot.slane %v5879, 4
      %v5912 = vrot.slane %v5880, 4
      %v5913 = vrot.slane %v5881, 4
      %v5914 = vrot.slane %v5882, 4
      %v5915 = vrot.slane %v5883, 4
      %v5916 = vrot.slane %v5884, 4
      %v5917 = vrot.slane %v5885, 4
      %v5918 = vrot.slane %v5886, 4
      %v5919 = vrot.slane %v5887, 4
      %v5920 = vrot.slane %v5888, 4
      %v5921 = vrot.slane %v5889, 4
      %v5922 = vrot.slane %v5890, 4
      %v5923 = vrot.slane %v5891, 4
      %v5924 = vrot.slane %v5892, 4
      %v5925 = vrot.slane %v5893, 4
      %5926 = vrot.lane.b32.xlu0 %v5910, 12
      %v5927 = vpop.permute.xlu0 %5926
      %5928 = vrot.lane.b32.xlu0 %v5911, 12
      %v5929 = vpop.permute.xlu0 %5928
      %5930 = vrot.lane.b32.xlu0 %v5912, 12
      %v5931 = vpop.permute.xlu0 %5930
      %5932 = vrot.lane.b32.xlu0 %v5913, 12
      %v5933 = vpop.permute.xlu0 %5932
      %5934 = vrot.lane.b32.xlu0 %v5914, 12
      %v5935 = vpop.permute.xlu0 %5934
      %5936 = vrot.lane.b32.xlu0 %v5915, 12
      %v5937 = vpop.permute.xlu0 %5936
      %5938 = vrot.lane.b32.xlu0 %v5916, 12
      %v5939 = vpop.permute.xlu0 %5938
      %5940 = vrot.lane.b32.xlu0 %v5917, 12
      %v5941 = vpop.permute.xlu0 %5940
      %5942 = vrot.lane.b32.xlu0 %v5918, 12
      %v5943 = vpop.permute.xlu0 %5942
      %5944 = vrot.lane.b32.xlu0 %v5919, 12
      %v5945 = vpop.permute.xlu0 %5944
      %5946 = vrot.lane.b32.xlu0 %v5920, 12
      %v5947 = vpop.permute.xlu0 %5946
      %5948 = vrot.lane.b32.xlu0 %v5921, 12
      %v5949 = vpop.permute.xlu0 %5948
      %5950 = vrot.lane.b32.xlu0 %v5922, 12
      %v5951 = vpop.permute.xlu0 %5950
      %5952 = vrot.lane.b32.xlu0 %v5923, 12
      %v5953 = vpop.permute.xlu0 %5952
      %5954 = vrot.lane.b32.xlu0 %v5924, 12
      %v5955 = vpop.permute.xlu0 %5954
      %5956 = vrot.lane.b32.xlu0 %v5925, 12
      %v5957 = vpop.permute.xlu0 %5956
      %vm5974 = vcmask 130148
      %5975 = vst.msk [vmem:[%s394] sm:$0xf0] %vm5974, %v5927
      %vm5976 = vcmask 126048
      %5977 = vst.msk [vmem:[%s394 + $0x8] sm:$0xf] %vm5976, %v5927
      %5978 = vst.msk [vmem:[%s394 + $0x10] sm:$0xf0] %vm5974, %v5929
      %5979 = vst.msk [vmem:[%s394 + $0x18] sm:$0xf] %vm5976, %v5929
      %5980 = vst.msk [vmem:[%s394 + $0x20] sm:$0xf0] %vm5974, %v5931
      %5981 = vst.msk [vmem:[%s394 + $0x28] sm:$0xf] %vm5976, %v5931
      %5982 = vst.msk [vmem:[%s394 + $0x30] sm:$0xf0] %vm5974, %v5933
      %5983 = vst.msk [vmem:[%s394 + $0x38] sm:$0xf] %vm5976, %v5933
      %5984 = vst.msk [vmem:[%s394 + $0x40] sm:$0xf0] %vm5974, %v5935
      %5985 = vst.msk [vmem:[%s394 + $0x48] sm:$0xf] %vm5976, %v5935
      %5986 = vst.msk [vmem:[%s394 + $0x50] sm:$0xf0] %vm5974, %v5937
      %5987 = vst.msk [vmem:[%s394 + $0x58] sm:$0xf] %vm5976, %v5937
      %5988 = vst.msk [vmem:[%s394 + $0x60] sm:$0xf0] %vm5974, %v5939
      %5989 = vst.msk [vmem:[%s394 + $0x68] sm:$0xf] %vm5976, %v5939
      %5990 = vst.msk [vmem:[%s394 + $0x70] sm:$0xf0] %vm5974, %v5941
      %5991 = vst.msk [vmem:[%s394 + $0x78] sm:$0xf] %vm5976, %v5941
      %5992 = vst.msk [vmem:[%s394 + $0x80] sm:$0xf0] %vm5974, %v5943
      %5993 = vst.msk [vmem:[%s394 + $0x88] sm:$0xf] %vm5976, %v5943
      %5994 = vst.msk [vmem:[%s394 + $0x90] sm:$0xf0] %vm5974, %v5945
      %5995 = vst.msk [vmem:[%s394 + $0x98] sm:$0xf] %vm5976, %v5945
      %5996 = vst.msk [vmem:[%s394 + $0xa0] sm:$0xf0] %vm5974, %v5947
      %5997 = vst.msk [vmem:[%s394 + $0xa8] sm:$0xf] %vm5976, %v5947
      %5998 = vst.msk [vmem:[%s394 + $0xb0] sm:$0xf0] %vm5974, %v5949
      %5999 = vst.msk [vmem:[%s394 + $0xb8] sm:$0xf] %vm5976, %v5949
      %6000 = vst.msk [vmem:[%s394 + $0xc0] sm:$0xf0] %vm5974, %v5951
      %6001 = vst.msk [vmem:[%s394 + $0xc8] sm:$0xf] %vm5976, %v5951
      %6002 = vst.msk [vmem:[%s394 + $0xd0] sm:$0xf0] %vm5974, %v5953
      %6003 = vst.msk [vmem:[%s394 + $0xd8] sm:$0xf] %vm5976, %v5953
      %6004 = vst.msk [vmem:[%s394 + $0xe0] sm:$0xf0] %vm5974, %v5955
      %6005 = vst.msk [vmem:[%s394 + $0xe8] sm:$0xf] %vm5976, %v5955
      %6006 = vst.msk [vmem:[%s394 + $0xf0] sm:$0xf0] %vm5974, %v5957
      %6007 = vst.msk [vmem:[%s394 + $0xf8] sm:$0xf] %vm5976, %v5957
      %v6008 = vld [vmem:[#allocation2] sm:$0xf8]
      %v6009 = vld [vmem:[#allocation2 + $0x8] sm:$0xf]
      %v6010 = vld [vmem:[#allocation2 + $0x10] sm:$0xf8]
      %v6011 = vld [vmem:[#allocation2 + $0x18] sm:$0xf]
      %v6012 = vld [vmem:[#allocation2 + $0x20] sm:$0xf8]
      %v6013 = vld [vmem:[#allocation2 + $0x28] sm:$0xf]
      %v6014 = vld [vmem:[#allocation2 + $0x30] sm:$0xf8]
      %v6015 = vld [vmem:[#allocation2 + $0x38] sm:$0xf]
      %v6016 = vld [vmem:[#allocation2 + $0x40] sm:$0xf8]
      %v6017 = vld [vmem:[#allocation2 + $0x48] sm:$0xf]
      %v6018 = vld [vmem:[#allocation2 + $0x50] sm:$0xf8]
      %v6019 = vld [vmem:[#allocation2 + $0x58] sm:$0xf]
      %v6020 = vld [vmem:[#allocation2 + $0x60] sm:$0xf8]
      %v6021 = vld [vmem:[#allocation2 + $0x68] sm:$0xf]
      %v6022 = vld [vmem:[#allocation2 + $0x70] sm:$0xf8]
      %v6023 = vld [vmem:[#allocation2 + $0x78] sm:$0xf]
      %v6024 = vld [vmem:[#allocation2 + $0x80] sm:$0xf8]
      %v6025 = vld [vmem:[#allocation2 + $0x88] sm:$0xf]
      %v6026 = vld [vmem:[#allocation2 + $0x90] sm:$0xf8]
      %v6027 = vld [vmem:[#allocation2 + $0x98] sm:$0xf]
      %v6028 = vld [vmem:[#allocation2 + $0xa0] sm:$0xf8]
      %v6029 = vld [vmem:[#allocation2 + $0xa8] sm:$0xf]
      %v6030 = vld [vmem:[#allocation2 + $0xb0] sm:$0xf8]
      %v6031 = vld [vmem:[#allocation2 + $0xb8] sm:$0xf]
      %v6032 = vld [vmem:[#allocation2 + $0xc0] sm:$0xf8]
      %v6033 = vld [vmem:[#allocation2 + $0xc8] sm:$0xf]
      %v6034 = vld [vmem:[#allocation2 + $0xd0] sm:$0xf8]
      %v6035 = vld [vmem:[#allocation2 + $0xd8] sm:$0xf]
      %v6036 = vld [vmem:[#allocation2 + $0xe0] sm:$0xf8]
      %v6037 = vld [vmem:[#allocation2 + $0xe8] sm:$0xf]
      %v6038 = vld [vmem:[#allocation2 + $0xf0] sm:$0xf8]
      %v6039 = vld [vmem:[#allocation2 + $0xf8] sm:$0xf]
      %v6040 = vld [vmem:[#allocation2 + $0x100] sm:$0xf8]
      %v6041 = vld [vmem:[#allocation2 + $0x108] sm:$0xf]
      %v6042 = vld [vmem:[#allocation2 + $0x110] sm:$0xf8]
      %v6043 = vld [vmem:[#allocation2 + $0x118] sm:$0xf]
      %v6044 = vld [vmem:[%s5] sm:$0xf]
      %v6045 = vld [vmem:[%s5 + $0x4] sm:$0xf]
      %v6047 = vshrl.u32 %v6008, 16
      %v6049 = vrot.slane %v6047, 3
      %v6050 = vshll.u32 %v6008, 16
      %v6052 = vrot.slane %v6050, 4
      %v6053 = vor.u32 %v6049, %v6052
      %v6055 = vshrl.u32 %v6009, 16
      %v6057 = vrot.slane %v6055, 3
      %v6058 = vshll.u32 %v6009, 16
      %v6060 = vrot.slane %v6058, 4
      %v6061 = vor.u32 %v6057, %v6060
      %v6062 = vsel %vm596, %v6053, %v6061
      %v6064 = vshrl.u32 %v6010, 16
      %v6066 = vrot.slane %v6064, 3
      %v6067 = vshll.u32 %v6010, 16
      %v6069 = vrot.slane %v6067, 4
      %v6070 = vor.u32 %v6066, %v6069
      %v6072 = vshrl.u32 %v6011, 16
      %v6074 = vrot.slane %v6072, 3
      %v6075 = vshll.u32 %v6011, 16
      %v6077 = vrot.slane %v6075, 4
      %v6078 = vor.u32 %v6074, %v6077
      %v6079 = vsel %vm596, %v6070, %v6078
      %v6081 = vshrl.u32 %v6012, 16
      %v6083 = vrot.slane %v6081, 3
      %v6084 = vshll.u32 %v6012, 16
      %v6086 = vrot.slane %v6084, 4
      %v6087 = vor.u32 %v6083, %v6086
      %v6089 = vshrl.u32 %v6013, 16
      %v6091 = vrot.slane %v6089, 3
      %v6092 = vshll.u32 %v6013, 16
      %v6094 = vrot.slane %v6092, 4
      %v6095 = vor.u32 %v6091, %v6094
      %v6096 = vsel %vm596, %v6087, %v6095
      %v6098 = vshrl.u32 %v6014, 16
      %v6100 = vrot.slane %v6098, 3
      %v6101 = vshll.u32 %v6014, 16
      %v6103 = vrot.slane %v6101, 4
      %v6104 = vor.u32 %v6100, %v6103
      %v6106 = vshrl.u32 %v6015, 16
      %v6108 = vrot.slane %v6106, 3
      %v6109 = vshll.u32 %v6015, 16
      %v6111 = vrot.slane %v6109, 4
      %v6112 = vor.u32 %v6108, %v6111
      %v6113 = vsel %vm596, %v6104, %v6112
      %v6115 = vshrl.u32 %v6016, 16
      %v6117 = vrot.slane %v6115, 3
      %v6118 = vshll.u32 %v6016, 16
      %v6120 = vrot.slane %v6118, 4
      %v6121 = vor.u32 %v6117, %v6120
      %v6123 = vshrl.u32 %v6017, 16
      %v6125 = vrot.slane %v6123, 3
      %v6126 = vshll.u32 %v6017, 16
      %v6128 = vrot.slane %v6126, 4
      %v6129 = vor.u32 %v6125, %v6128
      %v6130 = vsel %vm596, %v6121, %v6129
      %v6132 = vshrl.u32 %v6018, 16
      %v6134 = vrot.slane %v6132, 3
      %v6135 = vshll.u32 %v6018, 16
      %v6137 = vrot.slane %v6135, 4
      %v6138 = vor.u32 %v6134, %v6137
      %v6140 = vshrl.u32 %v6019, 16
      %v6142 = vrot.slane %v6140, 3
      %v6143 = vshll.u32 %v6019, 16
      %v6145 = vrot.slane %v6143, 4
      %v6146 = vor.u32 %v6142, %v6145
      %v6147 = vsel %vm596, %v6138, %v6146
      %v6149 = vshrl.u32 %v6020, 16
      %v6151 = vrot.slane %v6149, 3
      %v6152 = vshll.u32 %v6020, 16
      %v6154 = vrot.slane %v6152, 4
      %v6155 = vor.u32 %v6151, %v6154
      %v6157 = vshrl.u32 %v6021, 16
      %v6159 = vrot.slane %v6157, 3
      %v6160 = vshll.u32 %v6021, 16
      %v6162 = vrot.slane %v6160, 4
      %v6163 = vor.u32 %v6159, %v6162
      %v6164 = vsel %vm596, %v6155, %v6163
      %v6166 = vshrl.u32 %v6022, 16
      %v6168 = vrot.slane %v6166, 3
      %v6169 = vshll.u32 %v6022, 16
      %v6171 = vrot.slane %v6169, 4
      %v6172 = vor.u32 %v6168, %v6171
      %v6174 = vshrl.u32 %v6023, 16
      %v6176 = vrot.slane %v6174, 3
      %v6177 = vshll.u32 %v6023, 16
      %v6179 = vrot.slane %v6177, 4
      %v6180 = vor.u32 %v6176, %v6179
      %v6181 = vsel %vm596, %v6172, %v6180
      %v6183 = vshrl.u32 %v6024, 16
      %v6185 = vrot.slane %v6183, 3
      %v6186 = vshll.u32 %v6024, 16
      %v6188 = vrot.slane %v6186, 4
      %v6189 = vor.u32 %v6185, %v6188
      %v6191 = vshrl.u32 %v6025, 16
      %v6193 = vrot.slane %v6191, 3
      %v6194 = vshll.u32 %v6025, 16
      %v6196 = vrot.slane %v6194, 4
      %v6197 = vor.u32 %v6193, %v6196
      %v6198 = vsel %vm596, %v6189, %v6197
      %v6200 = vshrl.u32 %v6026, 16
      %v6202 = vrot.slane %v6200, 3
      %v6203 = vshll.u32 %v6026, 16
      %v6205 = vrot.slane %v6203, 4
      %v6206 = vor.u32 %v6202, %v6205
      %v6208 = vshrl.u32 %v6027, 16
      %v6210 = vrot.slane %v6208, 3
      %v6211 = vshll.u32 %v6027, 16
      %v6213 = vrot.slane %v6211, 4
      %v6214 = vor.u32 %v6210, %v6213
      %v6215 = vsel %vm596, %v6206, %v6214
      %v6217 = vshrl.u32 %v6028, 16
      %v6219 = vrot.slane %v6217, 3
      %v6220 = vshll.u32 %v6028, 16
      %v6222 = vrot.slane %v6220, 4
      %v6223 = vor.u32 %v6219, %v6222
      %v6225 = vshrl.u32 %v6029, 16
      %v6227 = vrot.slane %v6225, 3
      %v6228 = vshll.u32 %v6029, 16
      %v6230 = vrot.slane %v6228, 4
      %v6231 = vor.u32 %v6227, %v6230
      %v6232 = vsel %vm596, %v6223, %v6231
      %v6234 = vshrl.u32 %v6030, 16
      %v6236 = vrot.slane %v6234, 3
      %v6237 = vshll.u32 %v6030, 16
      %v6239 = vrot.slane %v6237, 4
      %v6240 = vor.u32 %v6236, %v6239
      %v6242 = vshrl.u32 %v6031, 16
      %v6244 = vrot.slane %v6242, 3
      %v6245 = vshll.u32 %v6031, 16
      %v6247 = vrot.slane %v6245, 4
      %v6248 = vor.u32 %v6244, %v6247
      %v6249 = vsel %vm596, %v6240, %v6248
      %v6251 = vshrl.u32 %v6032, 16
      %v6253 = vrot.slane %v6251, 3
      %v6254 = vshll.u32 %v6032, 16
      %v6256 = vrot.slane %v6254, 4
      %v6257 = vor.u32 %v6253, %v6256
      %v6259 = vshrl.u32 %v6033, 16
      %v6261 = vrot.slane %v6259, 3
      %v6262 = vshll.u32 %v6033, 16
      %v6264 = vrot.slane %v6262, 4
      %v6265 = vor.u32 %v6261, %v6264
      %v6266 = vsel %vm596, %v6257, %v6265
      %v6268 = vshrl.u32 %v6034, 16
      %v6270 = vrot.slane %v6268, 3
      %v6271 = vshll.u32 %v6034, 16
      %v6273 = vrot.slane %v6271, 4
      %v6274 = vor.u32 %v6270, %v6273
      %v6276 = vshrl.u32 %v6035, 16
      %v6278 = vrot.slane %v6276, 3
      %v6279 = vshll.u32 %v6035, 16
      %v6281 = vrot.slane %v6279, 4
      %v6282 = vor.u32 %v6278, %v6281
      %v6283 = vsel %vm596, %v6274, %v6282
      %v6285 = vshrl.u32 %v6036, 16
      %v6287 = vrot.slane %v6285, 3
      %v6288 = vshll.u32 %v6036, 16
      %v6290 = vrot.slane %v6288, 4
      %v6291 = vor.u32 %v6287, %v6290
      %v6293 = vshrl.u32 %v6037, 16
      %v6295 = vrot.slane %v6293, 3
      %v6296 = vshll.u32 %v6037, 16
      %v6298 = vrot.slane %v6296, 4
      %v6299 = vor.u32 %v6295, %v6298
      %v6300 = vsel %vm596, %v6291, %v6299
      %v6302 = vshrl.u32 %v6038, 16
      %v6304 = vrot.slane %v6302, 3
      %v6305 = vshll.u32 %v6038, 16
      %v6307 = vrot.slane %v6305, 4
      %v6308 = vor.u32 %v6304, %v6307
      %v6310 = vshrl.u32 %v6039, 16
      %v6312 = vrot.slane %v6310, 3
      %v6313 = vshll.u32 %v6039, 16
      %v6315 = vrot.slane %v6313, 4
      %v6316 = vor.u32 %v6312, %v6315
      %v6317 = vsel %vm596, %v6308, %v6316
      %v6319 = vshrl.u32 %v6040, 16
      %v6321 = vrot.slane %v6319, 3
      %v6322 = vshll.u32 %v6040, 16
      %v6324 = vrot.slane %v6322, 4
      %v6325 = vor.u32 %v6321, %v6324
      %v6327 = vshrl.u32 %v6041, 16
      %v6329 = vrot.slane %v6327, 3
      %v6330 = vshll.u32 %v6041, 16
      %v6332 = vrot.slane %v6330, 4
      %v6333 = vor.u32 %v6329, %v6332
      %v6334 = vsel %vm596, %v6325, %v6333
      %v6336 = vshrl.u32 %v6042, 16
      %v6338 = vrot.slane %v6336, 3
      %v6339 = vshll.u32 %v6042, 16
      %v6341 = vrot.slane %v6339, 4
      %v6342 = vor.u32 %v6338, %v6341
      %v6344 = vshrl.u32 %v6043, 16
      %v6346 = vrot.slane %v6344, 3
      %v6347 = vshll.u32 %v6043, 16
      %v6349 = vrot.slane %v6347, 4
      %v6350 = vor.u32 %v6346, %v6349
      %v6351 = vsel %vm596, %v6342, %v6350
      %v6354 = vunpack.c.l.b16 %v6044
      %v6355 = vunpack.c.l.b16 %v6045
      %v6356 = vpack.c.b16 %v6355, %v6354
      %vm6358 = vcmask 130048
      %v6360 = vsel %vm6358, %v6062, 0
      %v6363 = vsel %vm6358, %v6079, 0
      %v6366 = vsel %vm6358, %v6096, 0
      %v6369 = vsel %vm6358, %v6113, 0
      %v6372 = vsel %vm6358, %v6130, 0
      %v6375 = vsel %vm6358, %v6147, 0
      %v6378 = vsel %vm6358, %v6164, 0
      %v6381 = vsel %vm6358, %v6181, 0
      %v6384 = vsel %vm6358, %v6198, 0
      %v6387 = vsel %vm6358, %v6215, 0
      %v6390 = vsel %vm6358, %v6232, 0
      %v6393 = vsel %vm6358, %v6249, 0
      %v6396 = vsel %vm6358, %v6266, 0
      %v6399 = vsel %vm6358, %v6283, 0
      %v6402 = vsel %vm6358, %v6300, 0
      %v6405 = vsel %vm6358, %v6317, 0
      %v6408 = vsel %vm6358, %v6334, 0
      %v6411 = vsel %vm6358, %v6351, 0
      %6413 = vmatprep.subr.bf16.mxu0 0
      %6414 = vmatpush1.bf16.msra.mxu0 %v6356
      %6415 = vmatprep.subr.bf16.mxu0 0
      %6416 = vmatpush1.bf16.msra.mxu0 0
      %6417 = vmatprep.subr.bf16.mxu0 0
      %6418 = vmatpush1.bf16.msra.mxu0 0
      %6419 = vmatprep.subr.bf16.mxu0 0
      %6420 = vmatpush1.bf16.msra.mxu0 0
      %6421 = vmatprep.subr.bf16.mxu0 0
      %6422 = vmatpush1.bf16.msra.mxu0 0
      %6423 = vmatprep.subr.bf16.mxu0 0
      %6424 = vmatpush1.bf16.msra.mxu0 0
      %6425 = vmatprep.subr.bf16.mxu0 0
      %6426 = vmatpush1.bf16.msra.mxu0 0
      %6427 = vmatprep.subr.bf16.mxu0 0
      %6428 = vmatpush1.bf16.msra.mxu0 0
      %6429 = vmatprep.subr.bf16.mxu0 0
      %6430 = vmatpush1.bf16.msra.mxu0 0
      %6431 = vmatprep.subr.bf16.mxu0 0
      %6432 = vmatpush1.bf16.msra.mxu0 0
      %6433 = vmatprep.subr.bf16.mxu0 0
      %6434 = vmatpush1.bf16.msra.mxu0 0
      %6435 = vmatprep.subr.bf16.mxu0 0
      %6436 = vmatpush1.bf16.msra.mxu0 0
      %6437 = vmatprep.subr.bf16.mxu0 0
      %6438 = vmatpush1.bf16.msra.mxu0 0
      %6439 = vmatprep.subr.bf16.mxu0 0
      %6440 = vmatpush1.bf16.msra.mxu0 0
      %6441 = vmatprep.subr.bf16.mxu0 0
      %6442 = vmatpush1.bf16.msra.mxu0 0
      %6443 = vmatprep.subr.bf16.mxu0 0
      %6444 = vmatpush1.bf16.msra.mxu0 0
      %6445 = vmatprep.mubr.bf16.mxu0 0
      %6446 = vmatmul.mubr.bf16.gmra.mrb[0].mxu0 %v6360
      %v6447 = vpop.f32.mrb[0].mxu0
      %v6448 = vadd.f32 0.0, %v6447
      %v6449 = vpop.f32.mrb[0].mxu0
      %v6450 = vpop.f32.mrb[0].mxu0
      %v6451 = vadd.f32 0.0, %v6450
      %v6452 = vpop.f32.mrb[0].mxu0
      %6453 = vmatprep.mubr.bf16.mxu0 0
      %6454 = vmatmul.mubr.bf16.gmra.mrb[0].mxu0 %v6363
      %v6455 = vpop.f32.mrb[0].mxu0
      %v6456 = vadd.f32 0.0, %v6455
      %v6457 = vpop.f32.mrb[0].mxu0
      %v6458 = vpop.f32.mrb[0].mxu0
      %v6459 = vadd.f32 0.0, %v6458
      %v6460 = vpop.f32.mrb[0].mxu0
      %6461 = vmatprep.mubr.bf16.mxu0 0
      %6462 = vmatmul.mubr.bf16.gmra.mrb[0].mxu0 %v6366
      %v6463 = vpop.f32.mrb[0].mxu0
      %v6464 = vadd.f32 0.0, %v6463
      %v6465 = vpop.f32.mrb[0].mxu0
      %v6466 = vpop.f32.mrb[0].mxu0
      %v6467 = vadd.f32 0.0, %v6466
      %v6468 = vpop.f32.mrb[0].mxu0
      %6469 = vmatprep.mubr.bf16.mxu0 0
      %6470 = vmatmul.mubr.bf16.gmra.mrb[0].mxu0 %v6369
      %v6471 = vpop.f32.mrb[0].mxu0
      %v6472 = vadd.f32 0.0, %v6471
      %v6473 = vpop.f32.mrb[0].mxu0
      %v6474 = vpop.f32.mrb[0].mxu0
      %v6475 = vadd.f32 0.0, %v6474
      %v6476 = vpop.f32.mrb[0].mxu0
      %6477 = vmatprep.mubr.bf16.mxu0 0
      %6478 = vmatmul.mubr.bf16.gmra.mrb[0].mxu0 %v6372
      %v6479 = vpop.f32.mrb[0].mxu0
      %v6480 = vadd.f32 0.0, %v6479
      %v6481 = vpop.f32.mrb[0].mxu0
      %v6482 = vpop.f32.mrb[0].mxu0
      %v6483 = vadd.f32 0.0, %v6482
      %v6484 = vpop.f32.mrb[0].mxu0
      %6485 = vmatprep.mubr.bf16.mxu0 0
      %6486 = vmatmul.mubr.bf16.gmra.mrb[0].mxu0 %v6375
      %v6487 = vpop.f32.mrb[0].mxu0
      %v6488 = vadd.f32 0.0, %v6487
      %v6489 = vpop.f32.mrb[0].mxu0
      %v6490 = vpop.f32.mrb[0].mxu0
      %v6491 = vadd.f32 0.0, %v6490
      %v6492 = vpop.f32.mrb[0].mxu0
      %6493 = vmatprep.mubr.bf16.mxu0 0
      %6494 = vmatmul.mubr.bf16.gmra.mrb[0].mxu0 %v6378
      %v6495 = vpop.f32.mrb[0].mxu0
      %v6496 = vadd.f32 0.0, %v6495
      %v6497 = vpop.f32.mrb[0].mxu0
      %v6498 = vpop.f32.mrb[0].mxu0
      %v6499 = vadd.f32 0.0, %v6498
      %v6500 = vpop.f32.mrb[0].mxu0
      %6501 = vmatprep.mubr.bf16.mxu0 0
      %6502 = vmatmul.mubr.bf16.gmra.mrb[0].mxu0 %v6381
      %v6503 = vpop.f32.mrb[0].mxu0
      %v6504 = vadd.f32 0.0, %v6503
      %v6505 = vpop.f32.mrb[0].mxu0
      %v6506 = vpop.f32.mrb[0].mxu0
      %v6507 = vadd.f32 0.0, %v6506
      %v6508 = vpop.f32.mrb[0].mxu0
      %6509 = vmatprep.mubr.bf16.mxu0 0
      %6510 = vmatmul.mubr.bf16.gmra.mrb[0].mxu0 %v6384
      %v6511 = vpop.f32.mrb[0].mxu0
      %v6512 = vadd.f32 0.0, %v6511
      %v6513 = vpop.f32.mrb[0].mxu0
      %v6514 = vpop.f32.mrb[0].mxu0
      %v6515 = vadd.f32 0.0, %v6514
      %v6516 = vpop.f32.mrb[0].mxu0
      %6517 = vmatprep.mubr.bf16.mxu0 0
      %6518 = vmatmul.mubr.bf16.gmra.mrb[0].mxu0 %v6387
      %v6519 = vpop.f32.mrb[0].mxu0
      %v6520 = vadd.f32 0.0, %v6519
      %v6521 = vpop.f32.mrb[0].mxu0
      %v6522 = vpop.f32.mrb[0].mxu0
      %v6523 = vadd.f32 0.0, %v6522
      %v6524 = vpop.f32.mrb[0].mxu0
      %6525 = vmatprep.mubr.bf16.mxu0 0
      %6526 = vmatmul.mubr.bf16.gmra.mrb[0].mxu0 %v6390
      %v6527 = vpop.f32.mrb[0].mxu0
      %v6528 = vadd.f32 0.0, %v6527
      %v6529 = vpop.f32.mrb[0].mxu0
      %v6530 = vpop.f32.mrb[0].mxu0
      %v6531 = vadd.f32 0.0, %v6530
      %v6532 = vpop.f32.mrb[0].mxu0
      %6533 = vmatprep.mubr.bf16.mxu0 0
      %6534 = vmatmul.mubr.bf16.gmra.mrb[0].mxu0 %v6393
      %v6535 = vpop.f32.mrb[0].mxu0
      %v6536 = vadd.f32 0.0, %v6535
      %v6537 = vpop.f32.mrb[0].mxu0
      %v6538 = vpop.f32.mrb[0].mxu0
      %v6539 = vadd.f32 0.0, %v6538
      %v6540 = vpop.f32.mrb[0].mxu0
      %6541 = vmatprep.mubr.bf16.mxu0 0
      %6542 = vmatmul.mubr.bf16.gmra.mrb[0].mxu0 %v6396
      %v6543 = vpop.f32.mrb[0].mxu0
      %v6544 = vadd.f32 0.0, %v6543
      %v6545 = vpop.f32.mrb[0].mxu0
      %v6546 = vpop.f32.mrb[0].mxu0
      %v6547 = vadd.f32 0.0, %v6546
      %v6548 = vpop.f32.mrb[0].mxu0
      %6549 = vmatprep.mubr.bf16.mxu0 0
      %6550 = vmatmul.mubr.bf16.gmra.mrb[0].mxu0 %v6399
      %v6551 = vpop.f32.mrb[0].mxu0
      %v6552 = vadd.f32 0.0, %v6551
      %v6553 = vpop.f32.mrb[0].mxu0
      %v6554 = vpop.f32.mrb[0].mxu0
      %v6555 = vadd.f32 0.0, %v6554
      %v6556 = vpop.f32.mrb[0].mxu0
      %6557 = vmatprep.mubr.bf16.mxu0 0
      %6558 = vmatmul.mubr.bf16.gmra.mrb[0].mxu0 %v6402
      %v6559 = vpop.f32.mrb[0].mxu0
      %v6560 = vadd.f32 0.0, %v6559
      %v6561 = vpop.f32.mrb[0].mxu0
      %v6562 = vpop.f32.mrb[0].mxu0
      %v6563 = vadd.f32 0.0, %v6562
      %v6564 = vpop.f32.mrb[0].mxu0
      %6565 = vmatprep.mubr.bf16.mxu0 0
      %6566 = vmatmul.mubr.bf16.gmra.mrb[0].mxu0 %v6405
      %v6567 = vpop.f32.mrb[0].mxu0
      %v6568 = vadd.f32 0.0, %v6567
      %v6569 = vpop.f32.mrb[0].mxu0
      %v6570 = vpop.f32.mrb[0].mxu0
      %v6571 = vadd.f32 0.0, %v6570
      %v6572 = vpop.f32.mrb[0].mxu0
      %6573 = vmatprep.mubr.bf16.mxu0 0
      %6574 = vmatmul.mubr.bf16.gmra.mrb[0].mxu0 %v6408
      %v6575 = vpop.f32.mrb[0].mxu0
      %v6576 = vadd.f32 0.0, %v6575
      %v6577 = vpop.f32.mrb[0].mxu0
      %v6578 = vpop.f32.mrb[0].mxu0
      %v6579 = vadd.f32 0.0, %v6578
      %v6580 = vpop.f32.mrb[0].mxu0
      %6581 = vmatprep.mubr.bf16.mxu0 0
      %6582 = vmatmul.mubr.bf16.gmra.mrb[0].mxu0 %v6411
      %v6583 = vpop.f32.mrb[0].mxu0
      %v6584 = vadd.f32 0.0, %v6583
      %v6585 = vpop.f32.mrb[0].mxu0
      %v6586 = vpop.f32.mrb[0].mxu0
      %v6587 = vadd.f32 0.0, %v6586
      %v6588 = vpop.f32.mrb[0].mxu0
      %6589 = vdwg.mxu0
      %v6590 = vadd.f32 %v6448, 0.0
      %v6591 = vadd.f32 %v6451, 0.0
      %v6592 = vadd.f32 %v6456, 0.0
      %v6593 = vadd.f32 %v6459, 0.0
      %v6594 = vadd.f32 %v6464, 0.0
      %v6595 = vadd.f32 %v6467, 0.0
      %v6596 = vadd.f32 %v6472, 0.0
      %v6597 = vadd.f32 %v6475, 0.0
      %v6598 = vadd.f32 %v6480, 0.0
      %v6599 = vadd.f32 %v6483, 0.0
      %v6600 = vadd.f32 %v6488, 0.0
      %v6601 = vadd.f32 %v6491, 0.0
      %v6602 = vadd.f32 %v6496, 0.0
      %v6603 = vadd.f32 %v6499, 0.0
      %v6604 = vadd.f32 %v6504, 0.0
      %v6605 = vadd.f32 %v6507, 0.0
      %v6606 = vadd.f32 %v6512, 0.0
      %v6607 = vadd.f32 %v6515, 0.0
      %v6608 = vadd.f32 %v6520, 0.0
      %v6609 = vadd.f32 %v6523, 0.0
      %v6610 = vadd.f32 %v6528, 0.0
      %v6611 = vadd.f32 %v6531, 0.0
      %v6612 = vadd.f32 %v6536, 0.0
      %v6613 = vadd.f32 %v6539, 0.0
      %v6614 = vadd.f32 %v6544, 0.0
      %v6615 = vadd.f32 %v6547, 0.0
      %v6616 = vadd.f32 %v6552, 0.0
      %v6617 = vadd.f32 %v6555, 0.0
      %v6618 = vadd.f32 %v6560, 0.0
      %v6619 = vadd.f32 %v6563, 0.0
      %v6620 = vadd.f32 %v6568, 0.0
      %v6621 = vadd.f32 %v6571, 0.0
      %6654 = vrot.lane.b32.xlu0 %v6456, 124
      %v6655 = vpop.permute.xlu0 %6654
      %6656 = vrot.lane.b32.xlu0 %v6459, 124
      %v6657 = vpop.permute.xlu0 %6656
      %6658 = vrot.lane.b32.xlu0 %v6464, 124
      %v6659 = vpop.permute.xlu0 %6658
      %6660 = vrot.lane.b32.xlu0 %v6467, 124
      %v6661 = vpop.permute.xlu0 %6660
      %6662 = vrot.lane.b32.xlu0 %v6472, 124
      %v6663 = vpop.permute.xlu0 %6662
      %6664 = vrot.lane.b32.xlu0 %v6475, 124
      %v6665 = vpop.permute.xlu0 %6664
      %6666 = vrot.lane.b32.xlu0 %v6480, 124
      %v6667 = vpop.permute.xlu0 %6666
      %6668 = vrot.lane.b32.xlu0 %v6483, 124
      %v6669 = vpop.permute.xlu0 %6668
      %6670 = vrot.lane.b32.xlu0 %v6488, 124
      %v6671 = vpop.permute.xlu0 %6670
      %6672 = vrot.lane.b32.xlu0 %v6491, 124
      %v6673 = vpop.permute.xlu0 %6672
      %6674 = vrot.lane.b32.xlu0 %v6496, 124
      %v6675 = vpop.permute.xlu0 %6674
      %6676 = vrot.lane.b32.xlu0 %v6499, 124
      %v6677 = vpop.permute.xlu0 %6676
      %6678 = vrot.lane.b32.xlu0 %v6504, 124
      %v6679 = vpop.permute.xlu0 %6678
      %6680 = vrot.lane.b32.xlu0 %v6507, 124
      %v6681 = vpop.permute.xlu0 %6680
      %6682 = vrot.lane.b32.xlu0 %v6512, 124
      %v6683 = vpop.permute.xlu0 %6682
      %6684 = vrot.lane.b32.xlu0 %v6515, 124
      %v6685 = vpop.permute.xlu0 %6684
      %6686 = vrot.lane.b32.xlu0 %v6520, 124
      %v6687 = vpop.permute.xlu0 %6686
      %6688 = vrot.lane.b32.xlu0 %v6523, 124
      %v6689 = vpop.permute.xlu0 %6688
      %6690 = vrot.lane.b32.xlu0 %v6528, 124
      %v6691 = vpop.permute.xlu0 %6690
      %6692 = vrot.lane.b32.xlu0 %v6531, 124
      %v6693 = vpop.permute.xlu0 %6692
      %6694 = vrot.lane.b32.xlu0 %v6536, 124
      %v6695 = vpop.permute.xlu0 %6694
      %6696 = vrot.lane.b32.xlu0 %v6539, 124
      %v6697 = vpop.permute.xlu0 %6696
      %6698 = vrot.lane.b32.xlu0 %v6544, 124
      %v6699 = vpop.permute.xlu0 %6698
      %6700 = vrot.lane.b32.xlu0 %v6547, 124
      %v6701 = vpop.permute.xlu0 %6700
      %6702 = vrot.lane.b32.xlu0 %v6552, 124
      %v6703 = vpop.permute.xlu0 %6702
      %6704 = vrot.lane.b32.xlu0 %v6555, 124
      %v6705 = vpop.permute.xlu0 %6704
      %6706 = vrot.lane.b32.xlu0 %v6560, 124
      %v6707 = vpop.permute.xlu0 %6706
      %6708 = vrot.lane.b32.xlu0 %v6563, 124
      %v6709 = vpop.permute.xlu0 %6708
      %6710 = vrot.lane.b32.xlu0 %v6568, 124
      %v6711 = vpop.permute.xlu0 %6710
      %6712 = vrot.lane.b32.xlu0 %v6571, 124
      %v6713 = vpop.permute.xlu0 %6712
      %6714 = vrot.lane.b32.xlu0 %v6576, 124
      %v6715 = vpop.permute.xlu0 %6714
      %6716 = vrot.lane.b32.xlu0 %v6579, 124
      %v6717 = vpop.permute.xlu0 %6716
      %v6750 = vadd.f32 %v6590, %v6655
      %v6751 = vadd.f32 %v6591, %v6657
      %v6752 = vadd.f32 %v6592, %v6659
      %v6753 = vadd.f32 %v6593, %v6661
      %v6754 = vadd.f32 %v6594, %v6663
      %v6755 = vadd.f32 %v6595, %v6665
      %v6756 = vadd.f32 %v6596, %v6667
      %v6757 = vadd.f32 %v6597, %v6669
      %v6758 = vadd.f32 %v6598, %v6671
      %v6759 = vadd.f32 %v6599, %v6673
      %v6760 = vadd.f32 %v6600, %v6675
      %v6761 = vadd.f32 %v6601, %v6677
      %v6762 = vadd.f32 %v6602, %v6679
      %v6763 = vadd.f32 %v6603, %v6681
      %v6764 = vadd.f32 %v6604, %v6683
      %v6765 = vadd.f32 %v6605, %v6685
      %v6766 = vadd.f32 %v6606, %v6687
      %v6767 = vadd.f32 %v6607, %v6689
      %v6768 = vadd.f32 %v6608, %v6691
      %v6769 = vadd.f32 %v6609, %v6693
      %v6770 = vadd.f32 %v6610, %v6695
      %v6771 = vadd.f32 %v6611, %v6697
      %v6772 = vadd.f32 %v6612, %v6699
      %v6773 = vadd.f32 %v6613, %v6701
      %v6774 = vadd.f32 %v6614, %v6703
      %v6775 = vadd.f32 %v6615, %v6705
      %v6776 = vadd.f32 %v6616, %v6707
      %v6777 = vadd.f32 %v6617, %v6709
      %v6778 = vadd.f32 %v6618, %v6711
      %v6779 = vadd.f32 %v6619, %v6713
      %v6780 = vadd.f32 %v6620, %v6715
      %v6781 = vadd.f32 %v6621, %v6717
      %6784 = vrot.lane.b32.xlu0 %v6464, 120
      %v6785 = vpop.permute.xlu0 %6784
      %6786 = vrot.lane.b32.xlu0 %v6467, 120
      %v6787 = vpop.permute.xlu0 %6786
      %6788 = vrot.lane.b32.xlu0 %v6472, 120
      %v6789 = vpop.permute.xlu0 %6788
      %6790 = vrot.lane.b32.xlu0 %v6475, 120
      %v6791 = vpop.permute.xlu0 %6790
      %6792 = vrot.lane.b32.xlu0 %v6480, 120
      %v6793 = vpop.permute.xlu0 %6792
      %6794 = vrot.lane.b32.xlu0 %v6483, 120
      %v6795 = vpop.permute.xlu0 %6794
      %6796 = vrot.lane.b32.xlu0 %v6488, 120
      %v6797 = vpop.permute.xlu0 %6796
      %6798 = vrot.lane.b32.xlu0 %v6491, 120
      %v6799 = vpop.permute.xlu0 %6798
      %6800 = vrot.lane.b32.xlu0 %v6496, 120
      %v6801 = vpop.permute.xlu0 %6800
      %6802 = vrot.lane.b32.xlu0 %v6499, 120
      %v6803 = vpop.permute.xlu0 %6802
      %6804 = vrot.lane.b32.xlu0 %v6504, 120
      %v6805 = vpop.permute.xlu0 %6804
      %6806 = vrot.lane.b32.xlu0 %v6507, 120
      %v6807 = vpop.permute.xlu0 %6806
      %6808 = vrot.lane.b32.xlu0 %v6512, 120
      %v6809 = vpop.permute.xlu0 %6808
      %6810 = vrot.lane.b32.xlu0 %v6515, 120
      %v6811 = vpop.permute.xlu0 %6810
      %6812 = vrot.lane.b32.xlu0 %v6520, 120
      %v6813 = vpop.permute.xlu0 %6812
      %6814 = vrot.lane.b32.xlu0 %v6523, 120
      %v6815 = vpop.permute.xlu0 %6814
      %6816 = vrot.lane.b32.xlu0 %v6528, 120
      %v6817 = vpop.permute.xlu0 %6816
      %6818 = vrot.lane.b32.xlu0 %v6531, 120
      %v6819 = vpop.permute.xlu0 %6818
      %6820 = vrot.lane.b32.xlu0 %v6536, 120
      %v6821 = vpop.permute.xlu0 %6820
      %6822 = vrot.lane.b32.xlu0 %v6539, 120
      %v6823 = vpop.permute.xlu0 %6822
      %6824 = vrot.lane.b32.xlu0 %v6544, 120
      %v6825 = vpop.permute.xlu0 %6824
      %6826 = vrot.lane.b32.xlu0 %v6547, 120
      %v6827 = vpop.permute.xlu0 %6826
      %6828 = vrot.lane.b32.xlu0 %v6552, 120
      %v6829 = vpop.permute.xlu0 %6828
      %6830 = vrot.lane.b32.xlu0 %v6555, 120
      %v6831 = vpop.permute.xlu0 %6830
      %6832 = vrot.lane.b32.xlu0 %v6560, 120
      %v6833 = vpop.permute.xlu0 %6832
      %6834 = vrot.lane.b32.xlu0 %v6563, 120
      %v6835 = vpop.permute.xlu0 %6834
      %6836 = vrot.lane.b32.xlu0 %v6568, 120
      %v6837 = vpop.permute.xlu0 %6836
      %6838 = vrot.lane.b32.xlu0 %v6571, 120
      %v6839 = vpop.permute.xlu0 %6838
      %6840 = vrot.lane.b32.xlu0 %v6576, 120
      %v6841 = vpop.permute.xlu0 %6840
      %6842 = vrot.lane.b32.xlu0 %v6579, 120
      %v6843 = vpop.permute.xlu0 %6842
      %6844 = vrot.lane.b32.xlu0 %v6584, 120
      %v6845 = vpop.permute.xlu0 %6844
      %6846 = vrot.lane.b32.xlu0 %v6587, 120
      %v6847 = vpop.permute.xlu0 %6846
      %v6880 = vadd.f32 %v6750, %v6785
      %v6881 = vadd.f32 %v6751, %v6787
      %v6882 = vadd.f32 %v6752, %v6789
      %v6883 = vadd.f32 %v6753, %v6791
      %v6884 = vadd.f32 %v6754, %v6793
      %v6885 = vadd.f32 %v6755, %v6795
      %v6886 = vadd.f32 %v6756, %v6797
      %v6887 = vadd.f32 %v6757, %v6799
      %v6888 = vadd.f32 %v6758, %v6801
      %v6889 = vadd.f32 %v6759, %v6803
      %v6890 = vadd.f32 %v6760, %v6805
      %v6891 = vadd.f32 %v6761, %v6807
      %v6892 = vadd.f32 %v6762, %v6809
      %v6893 = vadd.f32 %v6763, %v6811
      %v6894 = vadd.f32 %v6764, %v6813
      %v6895 = vadd.f32 %v6765, %v6815
      %v6896 = vadd.f32 %v6766, %v6817
      %v6897 = vadd.f32 %v6767, %v6819
      %v6898 = vadd.f32 %v6768, %v6821
      %v6899 = vadd.f32 %v6769, %v6823
      %v6900 = vadd.f32 %v6770, %v6825
      %v6901 = vadd.f32 %v6771, %v6827
      %v6902 = vadd.f32 %v6772, %v6829
      %v6903 = vadd.f32 %v6773, %v6831
      %v6904 = vadd.f32 %v6774, %v6833
      %v6905 = vadd.f32 %v6775, %v6835
      %v6906 = vadd.f32 %v6776, %v6837
      %v6907 = vadd.f32 %v6777, %v6839
      %v6908 = vadd.f32 %v6778, %v6841
      %v6909 = vadd.f32 %v6779, %v6843
      %v6910 = vadd.f32 %v6780, %v6845
      %v6911 = vadd.f32 %v6781, %v6847
      %v6912 = vld [vmem:[#allocation2] sm:$0xf0]
      %v6913 = vld [vmem:[#allocation2 + $0x10] sm:$0xf0]
      %v6914 = vld [vmem:[#allocation2 + $0x20] sm:$0xf0]
      %v6915 = vld [vmem:[#allocation2 + $0x30] sm:$0xf0]
      %v6916 = vld [vmem:[#allocation2 + $0x40] sm:$0xf0]
      %v6917 = vld [vmem:[#allocation2 + $0x50] sm:$0xf0]
      %v6918 = vld [vmem:[#allocation2 + $0x60] sm:$0xf0]
      %v6919 = vld [vmem:[#allocation2 + $0x70] sm:$0xf0]
      %v6920 = vld [vmem:[#allocation2 + $0x80] sm:$0xf0]
      %v6921 = vld [vmem:[#allocation2 + $0x90] sm:$0xf0]
      %v6922 = vld [vmem:[#allocation2 + $0xa0] sm:$0xf0]
      %v6923 = vld [vmem:[#allocation2 + $0xb0] sm:$0xf0]
      %v6924 = vld [vmem:[#allocation2 + $0xc0] sm:$0xf0]
      %v6925 = vld [vmem:[#allocation2 + $0xd0] sm:$0xf0]
      %v6926 = vld [vmem:[#allocation2 + $0xe0] sm:$0xf0]
      %v6927 = vld [vmem:[#allocation2 + $0xf0] sm:$0xf0]
      %v6928 = vld [vmem:[#allocation2 + $0x100] sm:$0xf0]
      %v6929 = vld [vmem:[#allocation2 + $0x110] sm:$0xf0]
      %s6930 = scalar_lea.vmem %s5, 8
      %v6931 = vld [vmem:[%s6930] sm:$0xf]
      %v6932 = vld [vmem:[%s6930 + $0x4] sm:$0xf]
      %v6969 = vrot.slane %v6912, 4
      %v6970 = vrot.slane %v6009, 4
      %v6971 = vsel %vm1517, %v6969, %v6970
      %v6972 = vrot.slane %v6913, 4
      %v6973 = vrot.slane %v6011, 4
      %v6974 = vsel %vm1517, %v6972, %v6973
      %v6975 = vrot.slane %v6914, 4
      %v6976 = vrot.slane %v6013, 4
      %v6977 = vsel %vm1517, %v6975, %v6976
      %v6978 = vrot.slane %v6915, 4
      %v6979 = vrot.slane %v6015, 4
      %v6980 = vsel %vm1517, %v6978, %v6979
      %v6981 = vrot.slane %v6916, 4
      %v6982 = vrot.slane %v6017, 4
      %v6983 = vsel %vm1517, %v6981, %v6982
      %v6984 = vrot.slane %v6917, 4
      %v6985 = vrot.slane %v6019, 4
      %v6986 = vsel %vm1517, %v6984, %v6985
      %v6987 = vrot.slane %v6918, 4
      %v6988 = vrot.slane %v6021, 4
      %v6989 = vsel %vm1517, %v6987, %v6988
      %v6990 = vrot.slane %v6919, 4
      %v6991 = vrot.slane %v6023, 4
      %v6992 = vsel %vm1517, %v6990, %v6991
      %v6993 = vrot.slane %v6920, 4
      %v6994 = vrot.slane %v6025, 4
      %v6995 = vsel %vm1517, %v6993, %v6994
      %v6996 = vrot.slane %v6921, 4
      %v6997 = vrot.slane %v6027, 4
      %v6998 = vsel %vm1517, %v6996, %v6997
      %v6999 = vrot.slane %v6922, 4
      %v7000 = vrot.slane %v6029, 4
      %v7001 = vsel %vm1517, %v6999, %v7000
      %v7002 = vrot.slane %v6923, 4
      %v7003 = vrot.slane %v6031, 4
      %v7004 = vsel %vm1517, %v7002, %v7003
      %v7005 = vrot.slane %v6924, 4
      %v7006 = vrot.slane %v6033, 4
      %v7007 = vsel %vm1517, %v7005, %v7006
      %v7008 = vrot.slane %v6925, 4
      %v7009 = vrot.slane %v6035, 4
      %v7010 = vsel %vm1517, %v7008, %v7009
      %v7011 = vrot.slane %v6926, 4
      %v7012 = vrot.slane %v6037, 4
      %v7013 = vsel %vm1517, %v7011, %v7012
      %v7014 = vrot.slane %v6927, 4
      %v7015 = vrot.slane %v6039, 4
      %v7016 = vsel %vm1517, %v7014, %v7015
      %v7017 = vrot.slane %v6928, 4
      %v7018 = vrot.slane %v6041, 4
      %v7019 = vsel %vm1517, %v7017, %v7018
      %v7020 = vrot.slane %v6929, 4
      %v7021 = vrot.slane %v6043, 4
      %v7022 = vsel %vm1517, %v7020, %v7021
      %v7025 = vunpack.c.l.b16 %v6931
      %v7026 = vunpack.c.l.b16 %v6932
      %v7027 = vpack.c.b16 %v7026, %v7025
      %v7030 = vsel %vm6358, %v6971, 0
      %v7033 = vsel %vm6358, %v6974, 0
      %v7036 = vsel %vm6358, %v6977, 0
      %v7039 = vsel %vm6358, %v6980, 0
      %v7042 = vsel %vm6358, %v6983, 0
      %v7045 = vsel %vm6358, %v6986, 0
      %v7048 = vsel %vm6358, %v6989, 0
      %v7051 = vsel %vm6358, %v6992, 0
      %v7054 = vsel %vm6358, %v6995, 0
      %v7057 = vsel %vm6358, %v6998, 0
      %v7060 = vsel %vm6358, %v7001, 0
      %v7063 = vsel %vm6358, %v7004, 0
      %v7066 = vsel %vm6358, %v7007, 0
      %v7069 = vsel %vm6358, %v7010, 0
      %v7072 = vsel %vm6358, %v7013, 0
      %v7075 = vsel %vm6358, %v7016, 0
      %v7078 = vsel %vm6358, %v7019, 0
      %v7081 = vsel %vm6358, %v7022, 0
      %7083 = vmatprep.subr.bf16.mxu0 0
      %7084 = vmatpush1.bf16.msra.mxu0 %v7027
      %7085 = vmatprep.subr.bf16.mxu0 0
      %7086 = vmatpush1.bf16.msra.mxu0 0
      %7087 = vmatprep.subr.bf16.mxu0 0
      %7088 = vmatpush1.bf16.msra.mxu0 0
      %7089 = vmatprep.subr.bf16.mxu0 0
      %7090 = vmatpush1.bf16.msra.mxu0 0
      %7091 = vmatprep.subr.bf16.mxu0 0
      %7092 = vmatpush1.bf16.msra.mxu0 0
      %7093 = vmatprep.subr.bf16.mxu0 0
      %7094 = vmatpush1.bf16.msra.mxu0 0
      %7095 = vmatprep.subr.bf16.mxu0 0
      %7096 = vmatpush1.bf16.msra.mxu0 0
      %7097 = vmatprep.subr.bf16.mxu0 0
      %7098 = vmatpush1.bf16.msra.mxu0 0
      %7099 = vmatprep.subr.bf16.mxu0 0
      %7100 = vmatpush1.bf16.msra.mxu0 0
      %7101 = vmatprep.subr.bf16.mxu0 0
      %7102 = vmatpush1.bf16.msra.mxu0 0
      %7103 = vmatprep.subr.bf16.mxu0 0
      %7104 = vmatpush1.bf16.msra.mxu0 0
      %7105 = vmatprep.subr.bf16.mxu0 0
      %7106 = vmatpush1.bf16.msra.mxu0 0
      %7107 = vmatprep.subr.bf16.mxu0 0
      %7108 = vmatpush1.bf16.msra.mxu0 0
      %7109 = vmatprep.subr.bf16.mxu0 0
      %7110 = vmatpush1.bf16.msra.mxu0 0
      %7111 = vmatprep.subr.bf16.mxu0 0
      %7112 = vmatpush1.bf16.msra.mxu0 0
      %7113 = vmatprep.subr.bf16.mxu0 0
      %7114 = vmatpush1.bf16.msra.mxu0 0
      %7115 = vmatprep.mubr.bf16.mxu0 0
      %7116 = vmatmul.mubr.bf16.gmra.mrb[0].mxu0 %v7030
      %v7117 = vpop.f32.mrb[0].mxu0
      %v7118 = vadd.f32 0.0, %v7117
      %v7119 = vpop.f32.mrb[0].mxu0
      %v7120 = vpop.f32.mrb[0].mxu0
      %v7121 = vadd.f32 0.0, %v7120
      %v7122 = vpop.f32.mrb[0].mxu0
      %7123 = vmatprep.mubr.bf16.mxu0 0
      %7124 = vmatmul.mubr.bf16.gmra.mrb[0].mxu0 %v7033
      %v7125 = vpop.f32.mrb[0].mxu0
      %v7126 = vadd.f32 0.0, %v7125
      %v7127 = vpop.f32.mrb[0].mxu0
      %v7128 = vpop.f32.mrb[0].mxu0
      %v7129 = vadd.f32 0.0, %v7128
      %v7130 = vpop.f32.mrb[0].mxu0
      %7131 = vmatprep.mubr.bf16.mxu0 0
      %7132 = vmatmul.mubr.bf16.gmra.mrb[0].mxu0 %v7036
      %v7133 = vpop.f32.mrb[0].mxu0
      %v7134 = vadd.f32 0.0, %v7133
      %v7135 = vpop.f32.mrb[0].mxu0
      %v7136 = vpop.f32.mrb[0].mxu0
      %v7137 = vadd.f32 0.0, %v7136
      %v7138 = vpop.f32.mrb[0].mxu0
      %7139 = vmatprep.mubr.bf16.mxu0 0
      %7140 = vmatmul.mubr.bf16.gmra.mrb[0].mxu0 %v7039
      %v7141 = vpop.f32.mrb[0].mxu0
      %v7142 = vadd.f32 0.0, %v7141
      %v7143 = vpop.f32.mrb[0].mxu0
      %v7144 = vpop.f32.mrb[0].mxu0
      %v7145 = vadd.f32 0.0, %v7144
      %v7146 = vpop.f32.mrb[0].mxu0
      %7147 = vmatprep.mubr.bf16.mxu0 0
      %7148 = vmatmul.mubr.bf16.gmra.mrb[0].mxu0 %v7042
      %v7149 = vpop.f32.mrb[0].mxu0
      %v7150 = vadd.f32 0.0, %v7149
      %v7151 = vpop.f32.mrb[0].mxu0
      %v7152 = vpop.f32.mrb[0].mxu0
      %v7153 = vadd.f32 0.0, %v7152
      %v7154 = vpop.f32.mrb[0].mxu0
      %7155 = vmatprep.mubr.bf16.mxu0 0
      %7156 = vmatmul.mubr.bf16.gmra.mrb[0].mxu0 %v7045
      %v7157 = vpop.f32.mrb[0].mxu0
      %v7158 = vadd.f32 0.0, %v7157
      %v7159 = vpop.f32.mrb[0].mxu0
      %v7160 = vpop.f32.mrb[0].mxu0
      %v7161 = vadd.f32 0.0, %v7160
      %v7162 = vpop.f32.mrb[0].mxu0
      %7163 = vmatprep.mubr.bf16.mxu0 0
      %7164 = vmatmul.mubr.bf16.gmra.mrb[0].mxu0 %v7048
      %v7165 = vpop.f32.mrb[0].mxu0
      %v7166 = vadd.f32 0.0, %v7165
      %v7167 = vpop.f32.mrb[0].mxu0
      %v7168 = vpop.f32.mrb[0].mxu0
      %v7169 = vadd.f32 0.0, %v7168
      %v7170 = vpop.f32.mrb[0].mxu0
      %7171 = vmatprep.mubr.bf16.mxu0 0
      %7172 = vmatmul.mubr.bf16.gmra.mrb[0].mxu0 %v7051
      %v7173 = vpop.f32.mrb[0].mxu0
      %v7174 = vadd.f32 0.0, %v7173
      %v7175 = vpop.f32.mrb[0].mxu0
      %v7176 = vpop.f32.mrb[0].mxu0
      %v7177 = vadd.f32 0.0, %v7176
      %v7178 = vpop.f32.mrb[0].mxu0
      %7179 = vmatprep.mubr.bf16.mxu0 0
      %7180 = vmatmul.mubr.bf16.gmra.mrb[0].mxu0 %v7054
      %v7181 = vpop.f32.mrb[0].mxu0
      %v7182 = vadd.f32 0.0, %v7181
      %v7183 = vpop.f32.mrb[0].mxu0
      %v7184 = vpop.f32.mrb[0].mxu0
      %v7185 = vadd.f32 0.0, %v7184
      %v7186 = vpop.f32.mrb[0].mxu0
      %7187 = vmatprep.mubr.bf16.mxu0 0
      %7188 = vmatmul.mubr.bf16.gmra.mrb[0].mxu0 %v7057
      %v7189 = vpop.f32.mrb[0].mxu0
      %v7190 = vadd.f32 0.0, %v7189
      %v7191 = vpop.f32.mrb[0].mxu0
      %v7192 = vpop.f32.mrb[0].mxu0
      %v7193 = vadd.f32 0.0, %v7192
      %v7194 = vpop.f32.mrb[0].mxu0
      %7195 = vmatprep.mubr.bf16.mxu0 0
      %7196 = vmatmul.mubr.bf16.gmra.mrb[0].mxu0 %v7060
      %v7197 = vpop.f32.mrb[0].mxu0
      %v7198 = vadd.f32 0.0, %v7197
      %v7199 = vpop.f32.mrb[0].mxu0
      %v7200 = vpop.f32.mrb[0].mxu0
      %v7201 = vadd.f32 0.0, %v7200
      %v7202 = vpop.f32.mrb[0].mxu0
      %7203 = vmatprep.mubr.bf16.mxu0 0
      %7204 = vmatmul.mubr.bf16.gmra.mrb[0].mxu0 %v7063
      %v7205 = vpop.f32.mrb[0].mxu0
      %v7206 = vadd.f32 0.0, %v7205
      %v7207 = vpop.f32.mrb[0].mxu0
      %v7208 = vpop.f32.mrb[0].mxu0
      %v7209 = vadd.f32 0.0, %v7208
      %v7210 = vpop.f32.mrb[0].mxu0
      %7211 = vmatprep.mubr.bf16.mxu0 0
      %7212 = vmatmul.mubr.bf16.gmra.mrb[0].mxu0 %v7066
      %v7213 = vpop.f32.mrb[0].mxu0
      %v7214 = vadd.f32 0.0, %v7213
      %v7215 = vpop.f32.mrb[0].mxu0
      %v7216 = vpop.f32.mrb[0].mxu0
      %v7217 = vadd.f32 0.0, %v7216
      %v7218 = vpop.f32.mrb[0].mxu0
      %7219 = vmatprep.mubr.bf16.mxu0 0
      %7220 = vmatmul.mubr.bf16.gmra.mrb[0].mxu0 %v7069
      %v7221 = vpop.f32.mrb[0].mxu0
      %v7222 = vadd.f32 0.0, %v7221
      %v7223 = vpop.f32.mrb[0].mxu0
      %v7224 = vpop.f32.mrb[0].mxu0
      %v7225 = vadd.f32 0.0, %v7224
      %v7226 = vpop.f32.mrb[0].mxu0
      %7227 = vmatprep.mubr.bf16.mxu0 0
      %7228 = vmatmul.mubr.bf16.gmra.mrb[0].mxu0 %v7072
      %v7229 = vpop.f32.mrb[0].mxu0
      %v7230 = vadd.f32 0.0, %v7229
      %v7231 = vpop.f32.mrb[0].mxu0
      %v7232 = vpop.f32.mrb[0].mxu0
      %v7233 = vadd.f32 0.0, %v7232
      %v7234 = vpop.f32.mrb[0].mxu0
      %7235 = vmatprep.mubr.bf16.mxu0 0
      %7236 = vmatmul.mubr.bf16.gmra.mrb[0].mxu0 %v7075
      %v7237 = vpop.f32.mrb[0].mxu0
      %v7238 = vadd.f32 0.0, %v7237
      %v7239 = vpop.f32.mrb[0].mxu0
      %v7240 = vpop.f32.mrb[0].mxu0
      %v7241 = vadd.f32 0.0, %v7240
      %v7242 = vpop.f32.mrb[0].mxu0
      %7243 = vmatprep.mubr.bf16.mxu0 0
      %7244 = vmatmul.mubr.bf16.gmra.mrb[0].mxu0 %v7078
      %v7245 = vpop.f32.mrb[0].mxu0
      %v7246 = vadd.f32 0.0, %v7245
      %v7247 = vpop.f32.mrb[0].mxu0
      %v7248 = vpop.f32.mrb[0].mxu0
      %v7249 = vadd.f32 0.0, %v7248
      %v7250 = vpop.f32.mrb[0].mxu0
      %7251 = vmatprep.mubr.bf16.mxu0 0
      %7252 = vmatmul.mubr.bf16.gmra.mrb[0].mxu0 %v7081
      %v7253 = vpop.f32.mrb[0].mxu0
      %v7254 = vadd.f32 0.0, %v7253
      %v7255 = vpop.f32.mrb[0].mxu0
      %v7256 = vpop.f32.mrb[0].mxu0
      %v7257 = vadd.f32 0.0, %v7256
      %v7258 = vpop.f32.mrb[0].mxu0
      %7259 = vdwg.mxu0
      %v7260 = vadd.f32 %v6880, %v7118
      %v7261 = vadd.f32 %v6881, %v7121
      %v7262 = vadd.f32 %v6882, %v7126
      %v7263 = vadd.f32 %v6883, %v7129
      %v7264 = vadd.f32 %v6884, %v7134
      %v7265 = vadd.f32 %v6885, %v7137
      %v7266 = vadd.f32 %v6886, %v7142
      %v7267 = vadd.f32 %v6887, %v7145
      %v7268 = vadd.f32 %v6888, %v7150
      %v7269 = vadd.f32 %v6889, %v7153
      %v7270 = vadd.f32 %v6890, %v7158
      %v7271 = vadd.f32 %v6891, %v7161
      %v7272 = vadd.f32 %v6892, %v7166
      %v7273 = vadd.f32 %v6893, %v7169
      %v7274 = vadd.f32 %v6894, %v7174
      %v7275 = vadd.f32 %v6895, %v7177
      %v7276 = vadd.f32 %v6896, %v7182
      %v7277 = vadd.f32 %v6897, %v7185
      %v7278 = vadd.f32 %v6898, %v7190
      %v7279 = vadd.f32 %v6899, %v7193
      %v7280 = vadd.f32 %v6900, %v7198
      %v7281 = vadd.f32 %v6901, %v7201
      %v7282 = vadd.f32 %v6902, %v7206
      %v7283 = vadd.f32 %v6903, %v7209
      %v7284 = vadd.f32 %v6904, %v7214
      %v7285 = vadd.f32 %v6905, %v7217
      %v7286 = vadd.f32 %v6906, %v7222
      %v7287 = vadd.f32 %v6907, %v7225
      %v7288 = vadd.f32 %v6908, %v7230
      %v7289 = vadd.f32 %v6909, %v7233
      %v7290 = vadd.f32 %v6910, %v7238
      %v7291 = vadd.f32 %v6911, %v7241
      %7324 = vrot.lane.b32.xlu0 %v7126, 124
      %v7325 = vpop.permute.xlu0 %7324
      %7326 = vrot.lane.b32.xlu0 %v7129, 124
      %v7327 = vpop.permute.xlu0 %7326
      %7328 = vrot.lane.b32.xlu0 %v7134, 124
      %v7329 = vpop.permute.xlu0 %7328
      %7330 = vrot.lane.b32.xlu0 %v7137, 124
      %v7331 = vpop.permute.xlu0 %7330
      %7332 = vrot.lane.b32.xlu0 %v7142, 124
      %v7333 = vpop.permute.xlu0 %7332
      %7334 = vrot.lane.b32.xlu0 %v7145, 124
      %v7335 = vpop.permute.xlu0 %7334
      %7336 = vrot.lane.b32.xlu0 %v7150, 124
      %v7337 = vpop.permute.xlu0 %7336
      %7338 = vrot.lane.b32.xlu0 %v7153, 124
      %v7339 = vpop.permute.xlu0 %7338
      %7340 = vrot.lane.b32.xlu0 %v7158, 124
      %v7341 = vpop.permute.xlu0 %7340
      %7342 = vrot.lane.b32.xlu0 %v7161, 124
      %v7343 = vpop.permute.xlu0 %7342
      %7344 = vrot.lane.b32.xlu0 %v7166, 124
      %v7345 = vpop.permute.xlu0 %7344
      %7346 = vrot.lane.b32.xlu0 %v7169, 124
      %v7347 = vpop.permute.xlu0 %7346
      %7348 = vrot.lane.b32.xlu0 %v7174, 124
      %v7349 = vpop.permute.xlu0 %7348
      %7350 = vrot.lane.b32.xlu0 %v7177, 124
      %v7351 = vpop.permute.xlu0 %7350
      %7352 = vrot.lane.b32.xlu0 %v7182, 124
      %v7353 = vpop.permute.xlu0 %7352
      %7354 = vrot.lane.b32.xlu0 %v7185, 124
      %v7355 = vpop.permute.xlu0 %7354
      %7356 = vrot.lane.b32.xlu0 %v7190, 124
      %v7357 = vpop.permute.xlu0 %7356
      %7358 = vrot.lane.b32.xlu0 %v7193, 124
      %v7359 = vpop.permute.xlu0 %7358
      %7360 = vrot.lane.b32.xlu0 %v7198, 124
      %v7361 = vpop.permute.xlu0 %7360
      %7362 = vrot.lane.b32.xlu0 %v7201, 124
      %v7363 = vpop.permute.xlu0 %7362
      %7364 = vrot.lane.b32.xlu0 %v7206, 124
      %v7365 = vpop.permute.xlu0 %7364
      %7366 = vrot.lane.b32.xlu0 %v7209, 124
      %v7367 = vpop.permute.xlu0 %7366
      %7368 = vrot.lane.b32.xlu0 %v7214, 124
      %v7369 = vpop.permute.xlu0 %7368
      %7370 = vrot.lane.b32.xlu0 %v7217, 124
      %v7371 = vpop.permute.xlu0 %7370
      %7372 = vrot.lane.b32.xlu0 %v7222, 124
      %v7373 = vpop.permute.xlu0 %7372
      %7374 = vrot.lane.b32.xlu0 %v7225, 124
      %v7375 = vpop.permute.xlu0 %7374
      %7376 = vrot.lane.b32.xlu0 %v7230, 124
      %v7377 = vpop.permute.xlu0 %7376
      %7378 = vrot.lane.b32.xlu0 %v7233, 124
      %v7379 = vpop.permute.xlu0 %7378
      %7380 = vrot.lane.b32.xlu0 %v7238, 124
      %v7381 = vpop.permute.xlu0 %7380
      %7382 = vrot.lane.b32.xlu0 %v7241, 124
      %v7383 = vpop.permute.xlu0 %7382
      %7384 = vrot.lane.b32.xlu0 %v7246, 124
      %v7385 = vpop.permute.xlu0 %7384
      %7386 = vrot.lane.b32.xlu0 %v7249, 124
      %v7387 = vpop.permute.xlu0 %7386
      %v7420 = vadd.f32 %v7260, %v7325
      %v7421 = vadd.f32 %v7261, %v7327
      %v7422 = vadd.f32 %v7262, %v7329
      %v7423 = vadd.f32 %v7263, %v7331
      %v7424 = vadd.f32 %v7264, %v7333
      %v7425 = vadd.f32 %v7265, %v7335
      %v7426 = vadd.f32 %v7266, %v7337
      %v7427 = vadd.f32 %v7267, %v7339
      %v7428 = vadd.f32 %v7268, %v7341
      %v7429 = vadd.f32 %v7269, %v7343
      %v7430 = vadd.f32 %v7270, %v7345
      %v7431 = vadd.f32 %v7271, %v7347
      %v7432 = vadd.f32 %v7272, %v7349
      %v7433 = vadd.f32 %v7273, %v7351
      %v7434 = vadd.f32 %v7274, %v7353
      %v7435 = vadd.f32 %v7275, %v7355
      %v7436 = vadd.f32 %v7276, %v7357
      %v7437 = vadd.f32 %v7277, %v7359
      %v7438 = vadd.f32 %v7278, %v7361
      %v7439 = vadd.f32 %v7279, %v7363
      %v7440 = vadd.f32 %v7280, %v7365
      %v7441 = vadd.f32 %v7281, %v7367
      %v7442 = vadd.f32 %v7282, %v7369
      %v7443 = vadd.f32 %v7283, %v7371
      %v7444 = vadd.f32 %v7284, %v7373
      %v7445 = vadd.f32 %v7285, %v7375
      %v7446 = vadd.f32 %v7286, %v7377
      %v7447 = vadd.f32 %v7287, %v7379
      %v7448 = vadd.f32 %v7288, %v7381
      %v7449 = vadd.f32 %v7289, %v7383
      %v7450 = vadd.f32 %v7290, %v7385
      %v7451 = vadd.f32 %v7291, %v7387
      %7454 = vrot.lane.b32.xlu0 %v7134, 120
      %v7455 = vpop.permute.xlu0 %7454
      %7456 = vrot.lane.b32.xlu0 %v7137, 120
      %v7457 = vpop.permute.xlu0 %7456
      %7458 = vrot.lane.b32.xlu0 %v7142, 120
      %v7459 = vpop.permute.xlu0 %7458
      %7460 = vrot.lane.b32.xlu0 %v7145, 120
      %v7461 = vpop.permute.xlu0 %7460
      %7462 = vrot.lane.b32.xlu0 %v7150, 120
      %v7463 = vpop.permute.xlu0 %7462
      %7464 = vrot.lane.b32.xlu0 %v7153, 120
      %v7465 = vpop.permute.xlu0 %7464
      %7466 = vrot.lane.b32.xlu0 %v7158, 120
      %v7467 = vpop.permute.xlu0 %7466
      %7468 = vrot.lane.b32.xlu0 %v7161, 120
      %v7469 = vpop.permute.xlu0 %7468
      %7470 = vrot.lane.b32.xlu0 %v7166, 120
      %v7471 = vpop.permute.xlu0 %7470
      %7472 = vrot.lane.b32.xlu0 %v7169, 120
      %v7473 = vpop.permute.xlu0 %7472
      %7474 = vrot.lane.b32.xlu0 %v7174, 120
      %v7475 = vpop.permute.xlu0 %7474
      %7476 = vrot.lane.b32.xlu0 %v7177, 120
      %v7477 = vpop.permute.xlu0 %7476
      %7478 = vrot.lane.b32.xlu0 %v7182, 120
      %v7479 = vpop.permute.xlu0 %7478
      %7480 = vrot.lane.b32.xlu0 %v7185, 120
      %v7481 = vpop.permute.xlu0 %7480
      %7482 = vrot.lane.b32.xlu0 %v7190, 120
      %v7483 = vpop.permute.xlu0 %7482
      %7484 = vrot.lane.b32.xlu0 %v7193, 120
      %v7485 = vpop.permute.xlu0 %7484
      %7486 = vrot.lane.b32.xlu0 %v7198, 120
      %v7487 = vpop.permute.xlu0 %7486
      %7488 = vrot.lane.b32.xlu0 %v7201, 120
      %v7489 = vpop.permute.xlu0 %7488
      %7490 = vrot.lane.b32.xlu0 %v7206, 120
      %v7491 = vpop.permute.xlu0 %7490
      %7492 = vrot.lane.b32.xlu0 %v7209, 120
      %v7493 = vpop.permute.xlu0 %7492
      %7494 = vrot.lane.b32.xlu0 %v7214, 120
      %v7495 = vpop.permute.xlu0 %7494
      %7496 = vrot.lane.b32.xlu0 %v7217, 120
      %v7497 = vpop.permute.xlu0 %7496
      %7498 = vrot.lane.b32.xlu0 %v7222, 120
      %v7499 = vpop.permute.xlu0 %7498
      %7500 = vrot.lane.b32.xlu0 %v7225, 120
      %v7501 = vpop.permute.xlu0 %7500
      %7502 = vrot.lane.b32.xlu0 %v7230, 120
      %v7503 = vpop.permute.xlu0 %7502
      %7504 = vrot.lane.b32.xlu0 %v7233, 120
      %v7505 = vpop.permute.xlu0 %7504
      %7506 = vrot.lane.b32.xlu0 %v7238, 120
      %v7507 = vpop.permute.xlu0 %7506
      %7508 = vrot.lane.b32.xlu0 %v7241, 120
      %v7509 = vpop.permute.xlu0 %7508
      %7510 = vrot.lane.b32.xlu0 %v7246, 120
      %v7511 = vpop.permute.xlu0 %7510
      %7512 = vrot.lane.b32.xlu0 %v7249, 120
      %v7513 = vpop.permute.xlu0 %7512
      %7514 = vrot.lane.b32.xlu0 %v7254, 120
      %v7515 = vpop.permute.xlu0 %7514
      %7516 = vrot.lane.b32.xlu0 %v7257, 120
      %v7517 = vpop.permute.xlu0 %7516
      %v7550 = vadd.f32 %v7420, %v7455
      %v7551 = vadd.f32 %v7421, %v7457
      %v7552 = vadd.f32 %v7422, %v7459
      %v7553 = vadd.f32 %v7423, %v7461
      %v7554 = vadd.f32 %v7424, %v7463
      %v7555 = vadd.f32 %v7425, %v7465
      %v7556 = vadd.f32 %v7426, %v7467
      %v7557 = vadd.f32 %v7427, %v7469
      %v7558 = vadd.f32 %v7428, %v7471
      %v7559 = vadd.f32 %v7429, %v7473
      %v7560 = vadd.f32 %v7430, %v7475
      %v7561 = vadd.f32 %v7431, %v7477
      %v7562 = vadd.f32 %v7432, %v7479
      %v7563 = vadd.f32 %v7433, %v7481
      %v7564 = vadd.f32 %v7434, %v7483
      %v7565 = vadd.f32 %v7435, %v7485
      %v7566 = vadd.f32 %v7436, %v7487
      %v7567 = vadd.f32 %v7437, %v7489
      %v7568 = vadd.f32 %v7438, %v7491
      %v7569 = vadd.f32 %v7439, %v7493
      %v7570 = vadd.f32 %v7440, %v7495
      %v7571 = vadd.f32 %v7441, %v7497
      %v7572 = vadd.f32 %v7442, %v7499
      %v7573 = vadd.f32 %v7443, %v7501
      %v7574 = vadd.f32 %v7444, %v7503
      %v7575 = vadd.f32 %v7445, %v7505
      %v7576 = vadd.f32 %v7446, %v7507
      %v7577 = vadd.f32 %v7447, %v7509
      %v7578 = vadd.f32 %v7448, %v7511
      %v7579 = vadd.f32 %v7449, %v7513
      %v7580 = vadd.f32 %v7450, %v7515
      %v7581 = vadd.f32 %v7451, %v7517
      %v7582 = vld [vmem:[#allocation2 + $0x8] sm:$0x1f]
      %v7583 = vld [vmem:[#allocation2 + $0x18] sm:$0x1f]
      %v7584 = vld [vmem:[#allocation2 + $0x28] sm:$0x1f]
      %v7585 = vld [vmem:[#allocation2 + $0x38] sm:$0x1f]
      %v7586 = vld [vmem:[#allocation2 + $0x48] sm:$0x1f]
      %v7587 = vld [vmem:[#allocation2 + $0x58] sm:$0x1f]
      %v7588 = vld [vmem:[#allocation2 + $0x68] sm:$0x1f]
      %v7589 = vld [vmem:[#allocation2 + $0x78] sm:$0x1f]
      %v7590 = vld [vmem:[#allocation2 + $0x88] sm:$0x1f]
      %v7591 = vld [vmem:[#allocation2 + $0x98] sm:$0x1f]
      %v7592 = vld [vmem:[#allocation2 + $0xa8] sm:$0x1f]
      %v7593 = vld [vmem:[#allocation2 + $0xb8] sm:$0x1f]
      %v7594 = vld [vmem:[#allocation2 + $0xc8] sm:$0x1f]
      %v7595 = vld [vmem:[#allocation2 + $0xd8] sm:$0x1f]
      %v7596 = vld [vmem:[#allocation2 + $0xe8] sm:$0x1f]
      %v7597 = vld [vmem:[#allocation2 + $0xf8] sm:$0x1f]
      %v7598 = vld [vmem:[#allocation2 + $0x108] sm:$0x1f]
      %v7599 = vld [vmem:[#allocation2 + $0x118] sm:$0x1f]
      %s7600 = scalar_lea.vmem %s5, 16
      %v7601 = vld [vmem:[%s7600] sm:$0xf]
      %v7602 = vld [vmem:[%s7600 + $0x4] sm:$0xf]
      %v7604 = vshrl.u32 %v6912, 16
      %v7606 = vrot.slane %v7604, 4
      %v7607 = vshll.u32 %v6912, 16
      %v7609 = vrot.slane %v7607, 5
      %v7610 = vor.u32 %v7606, %v7609
      %v7612 = vshrl.u32 %v7582, 16
      %v7614 = vrot.slane %v7612, 4
      %v7615 = vshll.u32 %v7582, 16
      %v7617 = vrot.slane %v7615, 5
      %v7618 = vor.u32 %v7614, %v7617
      %v7619 = vsel %vm2148, %v7610, %v7618
      %v7621 = vshrl.u32 %v6913, 16
      %v7623 = vrot.slane %v7621, 4
      %v7624 = vshll.u32 %v6913, 16
      %v7626 = vrot.slane %v7624, 5
      %v7627 = vor.u32 %v7623, %v7626
      %v7629 = vshrl.u32 %v7583, 16
      %v7631 = vrot.slane %v7629, 4
      %v7632 = vshll.u32 %v7583, 16
      %v7634 = vrot.slane %v7632, 5
      %v7635 = vor.u32 %v7631, %v7634
      %v7636 = vsel %vm2148, %v7627, %v7635
      %v7638 = vshrl.u32 %v6914, 16
      %v7640 = vrot.slane %v7638, 4
      %v7641 = vshll.u32 %v6914, 16
      %v7643 = vrot.slane %v7641, 5
      %v7644 = vor.u32 %v7640, %v7643
      %v7646 = vshrl.u32 %v7584, 16
      %v7648 = vrot.slane %v7646, 4
      %v7649 = vshll.u32 %v7584, 16
      %v7651 = vrot.slane %v7649, 5
      %v7652 = vor.u32 %v7648, %v7651
      %v7653 = vsel %vm2148, %v7644, %v7652
      %v7655 = vshrl.u32 %v6915, 16
      %v7657 = vrot.slane %v7655, 4
      %v7658 = vshll.u32 %v6915, 16
      %v7660 = vrot.slane %v7658, 5
      %v7661 = vor.u32 %v7657, %v7660
      %v7663 = vshrl.u32 %v7585, 16
      %v7665 = vrot.slane %v7663, 4
      %v7666 = vshll.u32 %v7585, 16
      %v7668 = vrot.slane %v7666, 5
      %v7669 = vor.u32 %v7665, %v7668
      %v7670 = vsel %vm2148, %v7661, %v7669
      %v7672 = vshrl.u32 %v6916, 16
      %v7674 = vrot.slane %v7672, 4
      %v7675 = vshll.u32 %v6916, 16
      %v7677 = vrot.slane %v7675, 5
      %v7678 = vor.u32 %v7674, %v7677
      %v7680 = vshrl.u32 %v7586, 16
      %v7682 = vrot.slane %v7680, 4
      %v7683 = vshll.u32 %v7586, 16
      %v7685 = vrot.slane %v7683, 5
      %v7686 = vor.u32 %v7682, %v7685
      %v7687 = vsel %vm2148, %v7678, %v7686
      %v7689 = vshrl.u32 %v6917, 16
      %v7691 = vrot.slane %v7689, 4
      %v7692 = vshll.u32 %v6917, 16
      %v7694 = vrot.slane %v7692, 5
      %v7695 = vor.u32 %v7691, %v7694
      %v7697 = vshrl.u32 %v7587, 16
      %v7699 = vrot.slane %v7697, 4
      %v7700 = vshll.u32 %v7587, 16
      %v7702 = vrot.slane %v7700, 5
      %v7703 = vor.u32 %v7699, %v7702
      %v7704 = vsel %vm2148, %v7695, %v7703
      %v7706 = vshrl.u32 %v6918, 16
      %v7708 = vrot.slane %v7706, 4
      %v7709 = vshll.u32 %v6918, 16
      %v7711 = vrot.slane %v7709, 5
      %v7712 = vor.u32 %v7708, %v7711
      %v7714 = vshrl.u32 %v7588, 16
      %v7716 = vrot.slane %v7714, 4
      %v7717 = vshll.u32 %v7588, 16
      %v7719 = vrot.slane %v7717, 5
      %v7720 = vor.u32 %v7716, %v7719
      %v7721 = vsel %vm2148, %v7712, %v7720
      %v7723 = vshrl.u32 %v6919, 16
      %v7725 = vrot.slane %v7723, 4
      %v7726 = vshll.u32 %v6919, 16
      %v7728 = vrot.slane %v7726, 5
      %v7729 = vor.u32 %v7725, %v7728
      %v7731 = vshrl.u32 %v7589, 16
      %v7733 = vrot.slane %v7731, 4
      %v7734 = vshll.u32 %v7589, 16
      %v7736 = vrot.slane %v7734, 5
      %v7737 = vor.u32 %v7733, %v7736
      %v7738 = vsel %vm2148, %v7729, %v7737
      %v7740 = vshrl.u32 %v6920, 16
      %v7742 = vrot.slane %v7740, 4
      %v7743 = vshll.u32 %v6920, 16
      %v7745 = vrot.slane %v7743, 5
      %v7746 = vor.u32 %v7742, %v7745
      %v7748 = vshrl.u32 %v7590, 16
      %v7750 = vrot.slane %v7748, 4
      %v7751 = vshll.u32 %v7590, 16
      %v7753 = vrot.slane %v7751, 5
      %v7754 = vor.u32 %v7750, %v7753
      %v7755 = vsel %vm2148, %v7746, %v7754
      %v7757 = vshrl.u32 %v6921, 16
      %v7759 = vrot.slane %v7757, 4
      %v7760 = vshll.u32 %v6921, 16
      %v7762 = vrot.slane %v7760, 5
      %v7763 = vor.u32 %v7759, %v7762
      %v7765 = vshrl.u32 %v7591, 16
      %v7767 = vrot.slane %v7765, 4
      %v7768 = vshll.u32 %v7591, 16
      %v7770 = vrot.slane %v7768, 5
      %v7771 = vor.u32 %v7767, %v7770
      %v7772 = vsel %vm2148, %v7763, %v7771
      %v7774 = vshrl.u32 %v6922, 16
      %v7776 = vrot.slane %v7774, 4
      %v7777 = vshll.u32 %v6922, 16
      %v7779 = vrot.slane %v7777, 5
      %v7780 = vor.u32 %v7776, %v7779
      %v7782 = vshrl.u32 %v7592, 16
      %v7784 = vrot.slane %v7782, 4
      %v7785 = vshll.u32 %v7592, 16
      %v7787 = vrot.slane %v7785, 5
      %v7788 = vor.u32 %v7784, %v7787
      %v7789 = vsel %vm2148, %v7780, %v7788
      %v7791 = vshrl.u32 %v6923, 16
      %v7793 = vrot.slane %v7791, 4
      %v7794 = vshll.u32 %v6923, 16
      %v7796 = vrot.slane %v7794, 5
      %v7797 = vor.u32 %v7793, %v7796
      %v7799 = vshrl.u32 %v7593, 16
      %v7801 = vrot.slane %v7799, 4
      %v7802 = vshll.u32 %v7593, 16
      %v7804 = vrot.slane %v7802, 5
      %v7805 = vor.u32 %v7801, %v7804
      %v7806 = vsel %vm2148, %v7797, %v7805
      %v7808 = vshrl.u32 %v6924, 16
      %v7810 = vrot.slane %v7808, 4
      %v7811 = vshll.u32 %v6924, 16
      %v7813 = vrot.slane %v7811, 5
      %v7814 = vor.u32 %v7810, %v7813
      %v7816 = vshrl.u32 %v7594, 16
      %v7818 = vrot.slane %v7816, 4
      %v7819 = vshll.u32 %v7594, 16
      %v7821 = vrot.slane %v7819, 5
      %v7822 = vor.u32 %v7818, %v7821
      %v7823 = vsel %vm2148, %v7814, %v7822
      %v7825 = vshrl.u32 %v6925, 16
      %v7827 = vrot.slane %v7825, 4
      %v7828 = vshll.u32 %v6925, 16
      %v7830 = vrot.slane %v7828, 5
      %v7831 = vor.u32 %v7827, %v7830
      %v7833 = vshrl.u32 %v7595, 16
      %v7835 = vrot.slane %v7833, 4
      %v7836 = vshll.u32 %v7595, 16
      %v7838 = vrot.slane %v7836, 5
      %v7839 = vor.u32 %v7835, %v7838
      %v7840 = vsel %vm2148, %v7831, %v7839
      %v7842 = vshrl.u32 %v6926, 16
      %v7844 = vrot.slane %v7842, 4
      %v7845 = vshll.u32 %v6926, 16
      %v7847 = vrot.slane %v7845, 5
      %v7848 = vor.u32 %v7844, %v7847
      %v7850 = vshrl.u32 %v7596, 16
      %v7852 = vrot.slane %v7850, 4
      %v7853 = vshll.u32 %v7596, 16
      %v7855 = vrot.slane %v7853, 5
      %v7856 = vor.u32 %v7852, %v7855
      %v7857 = vsel %vm2148, %v7848, %v7856
      %v7859 = vshrl.u32 %v6927, 16
      %v7861 = vrot.slane %v7859, 4
      %v7862 = vshll.u32 %v6927, 16
      %v7864 = vrot.slane %v7862, 5
      %v7865 = vor.u32 %v7861, %v7864
      %v7867 = vshrl.u32 %v7597, 16
      %v7869 = vrot.slane %v7867, 4
      %v7870 = vshll.u32 %v7597, 16
      %v7872 = vrot.slane %v7870, 5
      %v7873 = vor.u32 %v7869, %v7872
      %v7874 = vsel %vm2148, %v7865, %v7873
      %v7876 = vshrl.u32 %v6928, 16
      %v7878 = vrot.slane %v7876, 4
      %v7879 = vshll.u32 %v6928, 16
      %v7881 = vrot.slane %v7879, 5
      %v7882 = vor.u32 %v7878, %v7881
      %v7884 = vshrl.u32 %v7598, 16
      %v7886 = vrot.slane %v7884, 4
      %v7887 = vshll.u32 %v7598, 16
      %v7889 = vrot.slane %v7887, 5
      %v7890 = vor.u32 %v7886, %v7889
      %v7891 = vsel %vm2148, %v7882, %v7890
      %v7893 = vshrl.u32 %v6929, 16
      %v7895 = vrot.slane %v7893, 4
      %v7896 = vshll.u32 %v6929, 16
      %v7898 = vrot.slane %v7896, 5
      %v7899 = vor.u32 %v7895, %v7898
      %v7901 = vshrl.u32 %v7599, 16
      %v7903 = vrot.slane %v7901, 4
      %v7904 = vshll.u32 %v7599, 16
      %v7906 = vrot.slane %v7904, 5
      %v7907 = vor.u32 %v7903, %v7906
      %v7908 = vsel %vm2148, %v7899, %v7907
      %v7911 = vunpack.c.l.b16 %v7601
      %v7912 = vunpack.c.l.b16 %v7602
      %v7913 = vpack.c.b16 %v7912, %v7911
      %v7916 = vsel %vm6358, %v7619, 0
      %v7919 = vsel %vm6358, %v7636, 0
      %v7922 = vsel %vm6358, %v7653, 0
      %v7925 = vsel %vm6358, %v7670, 0
      %v7928 = vsel %vm6358, %v7687, 0
      %v7931 = vsel %vm6358, %v7704, 0
      %v7934 = vsel %vm6358, %v7721, 0
      %v7937 = vsel %vm6358, %v7738, 0
      %v7940 = vsel %vm6358, %v7755, 0
      %v7943 = vsel %vm6358, %v7772, 0
      %v7946 = vsel %vm6358, %v7789, 0
      %v7949 = vsel %vm6358, %v7806, 0
      %v7952 = vsel %vm6358, %v7823, 0
      %v7955 = vsel %vm6358, %v7840, 0
      %v7958 = vsel %vm6358, %v7857, 0
      %v7961 = vsel %vm6358, %v7874, 0
      %v7964 = vsel %vm6358, %v7891, 0
      %v7967 = vsel %vm6358, %v7908, 0
      %7969 = vmatprep.subr.bf16.mxu0 0
      %7970 = vmatpush1.bf16.msra.mxu0 %v7913
      %7971 = vmatprep.subr.bf16.mxu0 0
      %7972 = vmatpush1.bf16.msra.mxu0 0
      %7973 = vmatprep.subr.bf16.mxu0 0
      %7974 = vmatpush1.bf16.msra.mxu0 0
      %7975 = vmatprep.subr.bf16.mxu0 0
      %7976 = vmatpush1.bf16.msra.mxu0 0
      %7977 = vmatprep.subr.bf16.mxu0 0
      %7978 = vmatpush1.bf16.msra.mxu0 0
      %7979 = vmatprep.subr.bf16.mxu0 0
      %7980 = vmatpush1.bf16.msra.mxu0 0
      %7981 = vmatprep.subr.bf16.mxu0 0
      %7982 = vmatpush1.bf16.msra.mxu0 0
      %7983 = vmatprep.subr.bf16.mxu0 0
      %7984 = vmatpush1.bf16.msra.mxu0 0
      %7985 = vmatprep.subr.bf16.mxu0 0
      %7986 = vmatpush1.bf16.msra.mxu0 0
      %7987 = vmatprep.subr.bf16.mxu0 0
      %7988 = vmatpush1.bf16.msra.mxu0 0
      %7989 = vmatprep.subr.bf16.mxu0 0
      %7990 = vmatpush1.bf16.msra.mxu0 0
      %7991 = vmatprep.subr.bf16.mxu0 0
      %7992 = vmatpush1.bf16.msra.mxu0 0
      %7993 = vmatprep.subr.bf16.mxu0 0
      %7994 = vmatpush1.bf16.msra.mxu0 0
      %7995 = vmatprep.subr.bf16.mxu0 0
      %7996 = vmatpush1.bf16.msra.mxu0 0
      %7997 = vmatprep.subr.bf16.mxu0 0
      %7998 = vmatpush1.bf16.msra.mxu0 0
      %7999 = vmatprep.subr.bf16.mxu0 0
      %8000 = vmatpush1.bf16.msra.mxu0 0
      %8001 = vmatprep.mubr.bf16.mxu0 0
      %8002 = vmatmul.mubr.bf16.gmra.mrb[0].mxu0 %v7916
      %v8003 = vpop.f32.mrb[0].mxu0
      %v8004 = vadd.f32 0.0, %v8003
      %v8005 = vpop.f32.mrb[0].mxu0
      %v8006 = vpop.f32.mrb[0].mxu0
      %v8007 = vadd.f32 0.0, %v8006
      %v8008 = vpop.f32.mrb[0].mxu0
      %8009 = vmatprep.mubr.bf16.mxu0 0
      %8010 = vmatmul.mubr.bf16.gmra.mrb[0].mxu0 %v7919
      %v8011 = vpop.f32.mrb[0].mxu0
      %v8012 = vadd.f32 0.0, %v8011
      %v8013 = vpop.f32.mrb[0].mxu0
      %v8014 = vpop.f32.mrb[0].mxu0
      %v8015 = vadd.f32 0.0, %v8014
      %v8016 = vpop.f32.mrb[0].mxu0
      %8017 = vmatprep.mubr.bf16.mxu0 0
      %8018 = vmatmul.mubr.bf16.gmra.mrb[0].mxu0 %v7922
      %v8019 = vpop.f32.mrb[0].mxu0
      %v8020 = vadd.f32 0.0, %v8019
      %v8021 = vpop.f32.mrb[0].mxu0
      %v8022 = vpop.f32.mrb[0].mxu0
      %v8023 = vadd.f32 0.0, %v8022
      %v8024 = vpop.f32.mrb[0].mxu0
      %8025 = vmatprep.mubr.bf16.mxu0 0
      %8026 = vmatmul.mubr.bf16.gmra.mrb[0].mxu0 %v7925
      %v8027 = vpop.f32.mrb[0].mxu0
      %v8028 = vadd.f32 0.0, %v8027
      %v8029 = vpop.f32.mrb[0].mxu0
      %v8030 = vpop.f32.mrb[0].mxu0
      %v8031 = vadd.f32 0.0, %v8030
      %v8032 = vpop.f32.mrb[0].mxu0
      %8033 = vmatprep.mubr.bf16.mxu0 0
      %8034 = vmatmul.mubr.bf16.gmra.mrb[0].mxu0 %v7928
      %v8035 = vpop.f32.mrb[0].mxu0
      %v8036 = vadd.f32 0.0, %v8035
      %v8037 = vpop.f32.mrb[0].mxu0
      %v8038 = vpop.f32.mrb[0].mxu0
      %v8039 = vadd.f32 0.0, %v8038
      %v8040 = vpop.f32.mrb[0].mxu0
      %8041 = vmatprep.mubr.bf16.mxu0 0
      %8042 = vmatmul.mubr.bf16.gmra.mrb[0].mxu0 %v7931
      %v8043 = vpop.f32.mrb[0].mxu0
      %v8044 = vadd.f32 0.0, %v8043
      %v8045 = vpop.f32.mrb[0].mxu0
      %v8046 = vpop.f32.mrb[0].mxu0
      %v8047 = vadd.f32 0.0, %v8046
      %v8048 = vpop.f32.mrb[0].mxu0
      %8049 = vmatprep.mubr.bf16.mxu0 0
      %8050 = vmatmul.mubr.bf16.gmra.mrb[0].mxu0 %v7934
      %v8051 = vpop.f32.mrb[0].mxu0
      %v8052 = vadd.f32 0.0, %v8051
      %v8053 = vpop.f32.mrb[0].mxu0
      %v8054 = vpop.f32.mrb[0].mxu0
      %v8055 = vadd.f32 0.0, %v8054
      %v8056 = vpop.f32.mrb[0].mxu0
      %8057 = vmatprep.mubr.bf16.mxu0 0
      %8058 = vmatmul.mubr.bf16.gmra.mrb[0].mxu0 %v7937
      %v8059 = vpop.f32.mrb[0].mxu0
      %v8060 = vadd.f32 0.0, %v8059
      %v8061 = vpop.f32.mrb[0].mxu0
      %v8062 = vpop.f32.mrb[0].mxu0
      %v8063 = vadd.f32 0.0, %v8062
      %v8064 = vpop.f32.mrb[0].mxu0
      %8065 = vmatprep.mubr.bf16.mxu0 0
      %8066 = vmatmul.mubr.bf16.gmra.mrb[0].mxu0 %v7940
      %v8067 = vpop.f32.mrb[0].mxu0
      %v8068 = vadd.f32 0.0, %v8067
      %v8069 = vpop.f32.mrb[0].mxu0
      %v8070 = vpop.f32.mrb[0].mxu0
      %v8071 = vadd.f32 0.0, %v8070
      %v8072 = vpop.f32.mrb[0].mxu0
      %8073 = vmatprep.mubr.bf16.mxu0 0
      %8074 = vmatmul.mubr.bf16.gmra.mrb[0].mxu0 %v7943
      %v8075 = vpop.f32.mrb[0].mxu0
      %v8076 = vadd.f32 0.0, %v8075
      %v8077 = vpop.f32.mrb[0].mxu0
      %v8078 = vpop.f32.mrb[0].mxu0
      %v8079 = vadd.f32 0.0, %v8078
      %v8080 = vpop.f32.mrb[0].mxu0
      %8081 = vmatprep.mubr.bf16.mxu0 0
      %8082 = vmatmul.mubr.bf16.gmra.mrb[0].mxu0 %v7946
      %v8083 = vpop.f32.mrb[0].mxu0
      %v8084 = vadd.f32 0.0, %v8083
      %v8085 = vpop.f32.mrb[0].mxu0
      %v8086 = vpop.f32.mrb[0].mxu0
      %v8087 = vadd.f32 0.0, %v8086
      %v8088 = vpop.f32.mrb[0].mxu0
      %8089 = vmatprep.mubr.bf16.mxu0 0
      %8090 = vmatmul.mubr.bf16.gmra.mrb[0].mxu0 %v7949
      %v8091 = vpop.f32.mrb[0].mxu0
      %v8092 = vadd.f32 0.0, %v8091
      %v8093 = vpop.f32.mrb[0].mxu0
      %v8094 = vpop.f32.mrb[0].mxu0
      %v8095 = vadd.f32 0.0, %v8094
      %v8096 = vpop.f32.mrb[0].mxu0
      %8097 = vmatprep.mubr.bf16.mxu0 0
      %8098 = vmatmul.mubr.bf16.gmra.mrb[0].mxu0 %v7952
      %v8099 = vpop.f32.mrb[0].mxu0
      %v8100 = vadd.f32 0.0, %v8099
      %v8101 = vpop.f32.mrb[0].mxu0
      %v8102 = vpop.f32.mrb[0].mxu0
      %v8103 = vadd.f32 0.0, %v8102
      %v8104 = vpop.f32.mrb[0].mxu0
      %8105 = vmatprep.mubr.bf16.mxu0 0
      %8106 = vmatmul.mubr.bf16.gmra.mrb[0].mxu0 %v7955
      %v8107 = vpop.f32.mrb[0].mxu0
      %v8108 = vadd.f32 0.0, %v8107
      %v8109 = vpop.f32.mrb[0].mxu0
      %v8110 = vpop.f32.mrb[0].mxu0
      %v8111 = vadd.f32 0.0, %v8110
      %v8112 = vpop.f32.mrb[0].mxu0
      %8113 = vmatprep.mubr.bf16.mxu0 0
      %8114 = vmatmul.mubr.bf16.gmra.mrb[0].mxu0 %v7958
      %v8115 = vpop.f32.mrb[0].mxu0
      %v8116 = vadd.f32 0.0, %v8115
      %v8117 = vpop.f32.mrb[0].mxu0
      %v8118 = vpop.f32.mrb[0].mxu0
      %v8119 = vadd.f32 0.0, %v8118
      %v8120 = vpop.f32.mrb[0].mxu0
      %8121 = vmatprep.mubr.bf16.mxu0 0
      %8122 = vmatmul.mubr.bf16.gmra.mrb[0].mxu0 %v7961
      %v8123 = vpop.f32.mrb[0].mxu0
      %v8124 = vadd.f32 0.0, %v8123
      %v8125 = vpop.f32.mrb[0].mxu0
      %v8126 = vpop.f32.mrb[0].mxu0
      %v8127 = vadd.f32 0.0, %v8126
      %v8128 = vpop.f32.mrb[0].mxu0
      %8129 = vmatprep.mubr.bf16.mxu0 0
      %8130 = vmatmul.mubr.bf16.gmra.mrb[0].mxu0 %v7964
      %v8131 = vpop.f32.mrb[0].mxu0
      %v8132 = vadd.f32 0.0, %v8131
      %v8133 = vpop.f32.mrb[0].mxu0
      %v8134 = vpop.f32.mrb[0].mxu0
      %v8135 = vadd.f32 0.0, %v8134
      %v8136 = vpop.f32.mrb[0].mxu0
      %8137 = vmatprep.mubr.bf16.mxu0 0
      %8138 = vmatmul.mubr.bf16.gmra.mrb[0].mxu0 %v7967
      %v8139 = vpop.f32.mrb[0].mxu0
      %v8140 = vadd.f32 0.0, %v8139
      %v8141 = vpop.f32.mrb[0].mxu0
      %v8142 = vpop.f32.mrb[0].mxu0
      %v8143 = vadd.f32 0.0, %v8142
      %v8144 = vpop.f32.mrb[0].mxu0
      %8145 = vdwg.mxu0
      %v8146 = vadd.f32 %v7550, %v8004
      %v8147 = vadd.f32 %v7551, %v8007
      %v8148 = vadd.f32 %v7552, %v8012
      %v8149 = vadd.f32 %v7553, %v8015
      %v8150 = vadd.f32 %v7554, %v8020
      %v8151 = vadd.f32 %v7555, %v8023
      %v8152 = vadd.f32 %v7556, %v8028
      %v8153 = vadd.f32 %v7557, %v8031
      %v8154 = vadd.f32 %v7558, %v8036
      %v8155 = vadd.f32 %v7559, %v8039
      %v8156 = vadd.f32 %v7560, %v8044
      %v8157 = vadd.f32 %v7561, %v8047
      %v8158 = vadd.f32 %v7562, %v8052
      %v8159 = vadd.f32 %v7563, %v8055
      %v8160 = vadd.f32 %v7564, %v8060
      %v8161 = vadd.f32 %v7565, %v8063
      %v8162 = vadd.f32 %v7566, %v8068
      %v8163 = vadd.f32 %v7567, %v8071
      %v8164 = vadd.f32 %v7568, %v8076
      %v8165 = vadd.f32 %v7569, %v8079
      %v8166 = vadd.f32 %v7570, %v8084
      %v8167 = vadd.f32 %v7571, %v8087
      %v8168 = vadd.f32 %v7572, %v8092
      %v8169 = vadd.f32 %v7573, %v8095
      %v8170 = vadd.f32 %v7574, %v8100
      %v8171 = vadd.f32 %v7575, %v8103
      %v8172 = vadd.f32 %v7576, %v8108
      %v8173 = vadd.f32 %v7577, %v8111
      %v8174 = vadd.f32 %v7578, %v8116
      %v8175 = vadd.f32 %v7579, %v8119
      %v8176 = vadd.f32 %v7580, %v8124
      %v8177 = vadd.f32 %v7581, %v8127
      %8210 = vrot.lane.b32.xlu0 %v8012, 124
      %v8211 = vpop.permute.xlu0 %8210
      %8212 = vrot.lane.b32.xlu0 %v8015, 124
      %v8213 = vpop.permute.xlu0 %8212
      %8214 = vrot.lane.b32.xlu0 %v8020, 124
      %v8215 = vpop.permute.xlu0 %8214
      %8216 = vrot.lane.b32.xlu0 %v8023, 124
      %v8217 = vpop.permute.xlu0 %8216
      %8218 = vrot.lane.b32.xlu0 %v8028, 124
      %v8219 = vpop.permute.xlu0 %8218
      %8220 = vrot.lane.b32.xlu0 %v8031, 124
      %v8221 = vpop.permute.xlu0 %8220
      %8222 = vrot.lane.b32.xlu0 %v8036, 124
      %v8223 = vpop.permute.xlu0 %8222
      %8224 = vrot.lane.b32.xlu0 %v8039, 124
      %v8225 = vpop.permute.xlu0 %8224
      %8226 = vrot.lane.b32.xlu0 %v8044, 124
      %v8227 = vpop.permute.xlu0 %8226
      %8228 = vrot.lane.b32.xlu0 %v8047, 124
      %v8229 = vpop.permute.xlu0 %8228
      %8230 = vrot.lane.b32.xlu0 %v8052, 124
      %v8231 = vpop.permute.xlu0 %8230
      %8232 = vrot.lane.b32.xlu0 %v8055, 124
      %v8233 = vpop.permute.xlu0 %8232
      %8234 = vrot.lane.b32.xlu0 %v8060, 124
      %v8235 = vpop.permute.xlu0 %8234
      %8236 = vrot.lane.b32.xlu0 %v8063, 124
      %v8237 = vpop.permute.xlu0 %8236
      %8238 = vrot.lane.b32.xlu0 %v8068, 124
      %v8239 = vpop.permute.xlu0 %8238
      %8240 = vrot.lane.b32.xlu0 %v8071, 124
      %v8241 = vpop.permute.xlu0 %8240
      %8242 = vrot.lane.b32.xlu0 %v8076, 124
      %v8243 = vpop.permute.xlu0 %8242
      %8244 = vrot.lane.b32.xlu0 %v8079, 124
      %v8245 = vpop.permute.xlu0 %8244
      %8246 = vrot.lane.b32.xlu0 %v8084, 124
      %v8247 = vpop.permute.xlu0 %8246
      %8248 = vrot.lane.b32.xlu0 %v8087, 124
      %v8249 = vpop.permute.xlu0 %8248
      %8250 = vrot.lane.b32.xlu0 %v8092, 124
      %v8251 = vpop.permute.xlu0 %8250
      %8252 = vrot.lane.b32.xlu0 %v8095, 124
      %v8253 = vpop.permute.xlu0 %8252
      %8254 = vrot.lane.b32.xlu0 %v8100, 124
      %v8255 = vpop.permute.xlu0 %8254
      %8256 = vrot.lane.b32.xlu0 %v8103, 124
      %v8257 = vpop.permute.xlu0 %8256
      %8258 = vrot.lane.b32.xlu0 %v8108, 124
      %v8259 = vpop.permute.xlu0 %8258
      %8260 = vrot.lane.b32.xlu0 %v8111, 124
      %v8261 = vpop.permute.xlu0 %8260
      %8262 = vrot.lane.b32.xlu0 %v8116, 124
      %v8263 = vpop.permute.xlu0 %8262
      %8264 = vrot.lane.b32.xlu0 %v8119, 124
      %v8265 = vpop.permute.xlu0 %8264
      %8266 = vrot.lane.b32.xlu0 %v8124, 124
      %v8267 = vpop.permute.xlu0 %8266
      %8268 = vrot.lane.b32.xlu0 %v8127, 124
      %v8269 = vpop.permute.xlu0 %8268
      %8270 = vrot.lane.b32.xlu0 %v8132, 124
      %v8271 = vpop.permute.xlu0 %8270
      %8272 = vrot.lane.b32.xlu0 %v8135, 124
      %v8273 = vpop.permute.xlu0 %8272
      %v8306 = vadd.f32 %v8146, %v8211
      %v8307 = vadd.f32 %v8147, %v8213
      %v8308 = vadd.f32 %v8148, %v8215
      %v8309 = vadd.f32 %v8149, %v8217
      %v8310 = vadd.f32 %v8150, %v8219
      %v8311 = vadd.f32 %v8151, %v8221
      %v8312 = vadd.f32 %v8152, %v8223
      %v8313 = vadd.f32 %v8153, %v8225
      %v8314 = vadd.f32 %v8154, %v8227
      %v8315 = vadd.f32 %v8155, %v8229
      %v8316 = vadd.f32 %v8156, %v8231
      %v8317 = vadd.f32 %v8157, %v8233
      %v8318 = vadd.f32 %v8158, %v8235
      %v8319 = vadd.f32 %v8159, %v8237
      %v8320 = vadd.f32 %v8160, %v8239
      %v8321 = vadd.f32 %v8161, %v8241
      %v8322 = vadd.f32 %v8162, %v8243
      %v8323 = vadd.f32 %v8163, %v8245
      %v8324 = vadd.f32 %v8164, %v8247
      %v8325 = vadd.f32 %v8165, %v8249
      %v8326 = vadd.f32 %v8166, %v8251
      %v8327 = vadd.f32 %v8167, %v8253
      %v8328 = vadd.f32 %v8168, %v8255
      %v8329 = vadd.f32 %v8169, %v8257
      %v8330 = vadd.f32 %v8170, %v8259
      %v8331 = vadd.f32 %v8171, %v8261
      %v8332 = vadd.f32 %v8172, %v8263
      %v8333 = vadd.f32 %v8173, %v8265
      %v8334 = vadd.f32 %v8174, %v8267
      %v8335 = vadd.f32 %v8175, %v8269
      %v8336 = vadd.f32 %v8176, %v8271
      %v8337 = vadd.f32 %v8177, %v8273
      %8340 = vrot.lane.b32.xlu0 %v8020, 120
      %v8341 = vpop.permute.xlu0 %8340
      %8342 = vrot.lane.b32.xlu0 %v8023, 120
      %v8343 = vpop.permute.xlu0 %8342
      %8344 = vrot.lane.b32.xlu0 %v8028, 120
      %v8345 = vpop.permute.xlu0 %8344
      %8346 = vrot.lane.b32.xlu0 %v8031, 120
      %v8347 = vpop.permute.xlu0 %8346
      %8348 = vrot.lane.b32.xlu0 %v8036, 120
      %v8349 = vpop.permute.xlu0 %8348
      %8350 = vrot.lane.b32.xlu0 %v8039, 120
      %v8351 = vpop.permute.xlu0 %8350
      %8352 = vrot.lane.b32.xlu0 %v8044, 120
      %v8353 = vpop.permute.xlu0 %8352
      %8354 = vrot.lane.b32.xlu0 %v8047, 120
      %v8355 = vpop.permute.xlu0 %8354
      %8356 = vrot.lane.b32.xlu0 %v8052, 120
      %v8357 = vpop.permute.xlu0 %8356
      %8358 = vrot.lane.b32.xlu0 %v8055, 120
      %v8359 = vpop.permute.xlu0 %8358
      %8360 = vrot.lane.b32.xlu0 %v8060, 120
      %v8361 = vpop.permute.xlu0 %8360
      %8362 = vrot.lane.b32.xlu0 %v8063, 120
      %v8363 = vpop.permute.xlu0 %8362
      %8364 = vrot.lane.b32.xlu0 %v8068, 120
      %v8365 = vpop.permute.xlu0 %8364
      %8366 = vrot.lane.b32.xlu0 %v8071, 120
      %v8367 = vpop.permute.xlu0 %8366
      %8368 = vrot.lane.b32.xlu0 %v8076, 120
      %v8369 = vpop.permute.xlu0 %8368
      %8370 = vrot.lane.b32.xlu0 %v8079, 120
      %v8371 = vpop.permute.xlu0 %8370
      %8372 = vrot.lane.b32.xlu0 %v8084, 120
      %v8373 = vpop.permute.xlu0 %8372
      %8374 = vrot.lane.b32.xlu0 %v8087, 120
      %v8375 = vpop.permute.xlu0 %8374
      %8376 = vrot.lane.b32.xlu0 %v8092, 120
      %v8377 = vpop.permute.xlu0 %8376
      %8378 = vrot.lane.b32.xlu0 %v8095, 120
      %v8379 = vpop.permute.xlu0 %8378
      %8380 = vrot.lane.b32.xlu0 %v8100, 120
      %v8381 = vpop.permute.xlu0 %8380
      %8382 = vrot.lane.b32.xlu0 %v8103, 120
      %v8383 = vpop.permute.xlu0 %8382
      %8384 = vrot.lane.b32.xlu0 %v8108, 120
      %v8385 = vpop.permute.xlu0 %8384
      %8386 = vrot.lane.b32.xlu0 %v8111, 120
      %v8387 = vpop.permute.xlu0 %8386
      %8388 = vrot.lane.b32.xlu0 %v8116, 120
      %v8389 = vpop.permute.xlu0 %8388
      %8390 = vrot.lane.b32.xlu0 %v8119, 120
      %v8391 = vpop.permute.xlu0 %8390
      %8392 = vrot.lane.b32.xlu0 %v8124, 120
      %v8393 = vpop.permute.xlu0 %8392
      %8394 = vrot.lane.b32.xlu0 %v8127, 120
      %v8395 = vpop.permute.xlu0 %8394
      %8396 = vrot.lane.b32.xlu0 %v8132, 120
      %v8397 = vpop.permute.xlu0 %8396
      %8398 = vrot.lane.b32.xlu0 %v8135, 120
      %v8399 = vpop.permute.xlu0 %8398
      %8400 = vrot.lane.b32.xlu0 %v8140, 120
      %v8401 = vpop.permute.xlu0 %8400
      %8402 = vrot.lane.b32.xlu0 %v8143, 120
      %v8403 = vpop.permute.xlu0 %8402
      %v8436 = vadd.f32 %v8306, %v8341
      %v8437 = vadd.f32 %v8307, %v8343
      %v8438 = vadd.f32 %v8308, %v8345
      %v8439 = vadd.f32 %v8309, %v8347
      %v8440 = vadd.f32 %v8310, %v8349
      %v8441 = vadd.f32 %v8311, %v8351
      %v8442 = vadd.f32 %v8312, %v8353
      %v8443 = vadd.f32 %v8313, %v8355
      %v8444 = vadd.f32 %v8314, %v8357
      %v8445 = vadd.f32 %v8315, %v8359
      %v8446 = vadd.f32 %v8316, %v8361
      %v8447 = vadd.f32 %v8317, %v8363
      %v8448 = vadd.f32 %v8318, %v8365
      %v8449 = vadd.f32 %v8319, %v8367
      %v8450 = vadd.f32 %v8320, %v8369
      %v8451 = vadd.f32 %v8321, %v8371
      %v8452 = vadd.f32 %v8322, %v8373
      %v8453 = vadd.f32 %v8323, %v8375
      %v8454 = vadd.f32 %v8324, %v8377
      %v8455 = vadd.f32 %v8325, %v8379
      %v8456 = vadd.f32 %v8326, %v8381
      %v8457 = vadd.f32 %v8327, %v8383
      %v8458 = vadd.f32 %v8328, %v8385
      %v8459 = vadd.f32 %v8329, %v8387
      %v8460 = vadd.f32 %v8330, %v8389
      %v8461 = vadd.f32 %v8331, %v8391
      %v8462 = vadd.f32 %v8332, %v8393
      %v8463 = vadd.f32 %v8333, %v8395
      %v8464 = vadd.f32 %v8334, %v8397
      %v8465 = vadd.f32 %v8335, %v8399
      %v8466 = vadd.f32 %v8336, %v8401
      %v8467 = vadd.f32 %v8337, %v8403
      %v8468 = vld [vmem:[%s6] sm:$0x1]
      %v8470 = vlaneseq
      %v8471 = vshrl.u32 %v8470, 7
      %v8472 = vsub.s32 0, %v8471
      %v8473 = vrot.slane %v8468, %v8472
      %v8475 = vadd.f32 %v8436, %v8473
      %v8476 = vadd.f32 %v8437, %v8473
      %v8477 = vadd.f32 %v8438, %v8473
      %v8478 = vadd.f32 %v8439, %v8473
      %v8479 = vadd.f32 %v8440, %v8473
      %v8480 = vadd.f32 %v8441, %v8473
      %v8481 = vadd.f32 %v8442, %v8473
      %v8482 = vadd.f32 %v8443, %v8473
      %v8483 = vadd.f32 %v8444, %v8473
      %v8484 = vadd.f32 %v8445, %v8473
      %v8485 = vadd.f32 %v8446, %v8473
      %v8486 = vadd.f32 %v8447, %v8473
      %v8487 = vadd.f32 %v8448, %v8473
      %v8488 = vadd.f32 %v8449, %v8473
      %v8489 = vadd.f32 %v8450, %v8473
      %v8490 = vadd.f32 %v8451, %v8473
      %v8491 = vadd.f32 %v8452, %v8473
      %v8492 = vadd.f32 %v8453, %v8473
      %v8493 = vadd.f32 %v8454, %v8473
      %v8494 = vadd.f32 %v8455, %v8473
      %v8495 = vadd.f32 %v8456, %v8473
      %v8496 = vadd.f32 %v8457, %v8473
      %v8497 = vadd.f32 %v8458, %v8473
      %v8498 = vadd.f32 %v8459, %v8473
      %v8499 = vadd.f32 %v8460, %v8473
      %v8500 = vadd.f32 %v8461, %v8473
      %v8501 = vadd.f32 %v8462, %v8473
      %v8502 = vadd.f32 %v8463, %v8473
      %v8503 = vadd.f32 %v8464, %v8473
      %v8504 = vadd.f32 %v8465, %v8473
      %v8505 = vadd.f32 %v8466, %v8473
      %v8506 = vadd.f32 %v8467, %v8473
      %vm8507 = vcmp.gt.f32.partialorder %v8475, 0.0
      %vm8508 = vcmp.gt.f32.partialorder %v8476, 0.0
      %vm8509 = vcmp.gt.f32.partialorder %v8477, 0.0
      %vm8510 = vcmp.gt.f32.partialorder %v8478, 0.0
      %vm8511 = vcmp.gt.f32.partialorder %v8479, 0.0
      %vm8512 = vcmp.gt.f32.partialorder %v8480, 0.0
      %vm8513 = vcmp.gt.f32.partialorder %v8481, 0.0
      %vm8514 = vcmp.gt.f32.partialorder %v8482, 0.0
      %vm8515 = vcmp.gt.f32.partialorder %v8483, 0.0
      %vm8516 = vcmp.gt.f32.partialorder %v8484, 0.0
      %vm8517 = vcmp.gt.f32.partialorder %v8485, 0.0
      %vm8518 = vcmp.gt.f32.partialorder %v8486, 0.0
      %vm8519 = vcmp.gt.f32.partialorder %v8487, 0.0
      %vm8520 = vcmp.gt.f32.partialorder %v8488, 0.0
      %vm8521 = vcmp.gt.f32.partialorder %v8489, 0.0
      %vm8522 = vcmp.gt.f32.partialorder %v8490, 0.0
      %vm8523 = vcmp.gt.f32.partialorder %v8491, 0.0
      %vm8524 = vcmp.gt.f32.partialorder %v8492, 0.0
      %vm8525 = vcmp.gt.f32.partialorder %v8493, 0.0
      %vm8526 = vcmp.gt.f32.partialorder %v8494, 0.0
      %vm8527 = vcmp.gt.f32.partialorder %v8495, 0.0
      %vm8528 = vcmp.gt.f32.partialorder %v8496, 0.0
      %vm8529 = vcmp.gt.f32.partialorder %v8497, 0.0
      %vm8530 = vcmp.gt.f32.partialorder %v8498, 0.0
      %vm8531 = vcmp.gt.f32.partialorder %v8499, 0.0
      %vm8532 = vcmp.gt.f32.partialorder %v8500, 0.0
      %vm8533 = vcmp.gt.f32.partialorder %v8501, 0.0
      %vm8534 = vcmp.gt.f32.partialorder %v8502, 0.0
      %vm8535 = vcmp.gt.f32.partialorder %v8503, 0.0
      %vm8536 = vcmp.gt.f32.partialorder %v8504, 0.0
      %vm8537 = vcmp.gt.f32.partialorder %v8505, 0.0
      %vm8538 = vcmp.gt.f32.partialorder %v8506, 0.0
      %v8539 = vmul.f32 %v8475, 0.2
      %v8540 = vmul.f32 %v8476, 0.2
      %v8541 = vmul.f32 %v8477, 0.2
      %v8542 = vmul.f32 %v8478, 0.2
      %v8543 = vmul.f32 %v8479, 0.2
      %v8544 = vmul.f32 %v8480, 0.2
      %v8545 = vmul.f32 %v8481, 0.2
      %v8546 = vmul.f32 %v8482, 0.2
      %v8547 = vmul.f32 %v8483, 0.2
      %v8548 = vmul.f32 %v8484, 0.2
      %v8549 = vmul.f32 %v8485, 0.2
      %v8550 = vmul.f32 %v8486, 0.2
      %v8551 = vmul.f32 %v8487, 0.2
      %v8552 = vmul.f32 %v8488, 0.2
      %v8553 = vmul.f32 %v8489, 0.2
      %v8554 = vmul.f32 %v8490, 0.2
      %v8555 = vmul.f32 %v8491, 0.2
      %v8556 = vmul.f32 %v8492, 0.2
      %v8557 = vmul.f32 %v8493, 0.2
      %v8558 = vmul.f32 %v8494, 0.2
      %v8559 = vmul.f32 %v8495, 0.2
      %v8560 = vmul.f32 %v8496, 0.2
      %v8561 = vmul.f32 %v8497, 0.2
      %v8562 = vmul.f32 %v8498, 0.2
      %v8563 = vmul.f32 %v8499, 0.2
      %v8564 = vmul.f32 %v8500, 0.2
      %v8565 = vmul.f32 %v8501, 0.2
      %v8566 = vmul.f32 %v8502, 0.2
      %v8567 = vmul.f32 %v8503, 0.2
      %v8568 = vmul.f32 %v8504, 0.2
      %v8569 = vmul.f32 %v8505, 0.2
      %v8570 = vmul.f32 %v8506, 0.2
      %v8571 = vsel %vm8507, %v8475, %v8539
      %v8572 = vsel %vm8508, %v8476, %v8540
      %v8573 = vsel %vm8509, %v8477, %v8541
      %v8574 = vsel %vm8510, %v8478, %v8542
      %v8575 = vsel %vm8511, %v8479, %v8543
      %v8576 = vsel %vm8512, %v8480, %v8544
      %v8577 = vsel %vm8513, %v8481, %v8545
      %v8578 = vsel %vm8514, %v8482, %v8546
      %v8579 = vsel %vm8515, %v8483, %v8547
      %v8580 = vsel %vm8516, %v8484, %v8548
      %v8581 = vsel %vm8517, %v8485, %v8549
      %v8582 = vsel %vm8518, %v8486, %v8550
      %v8583 = vsel %vm8519, %v8487, %v8551
      %v8584 = vsel %vm8520, %v8488, %v8552
      %v8585 = vsel %vm8521, %v8489, %v8553
      %v8586 = vsel %vm8522, %v8490, %v8554
      %v8587 = vsel %vm8523, %v8491, %v8555
      %v8588 = vsel %vm8524, %v8492, %v8556
      %v8589 = vsel %vm8525, %v8493, %v8557
      %v8590 = vsel %vm8526, %v8494, %v8558
      %v8591 = vsel %vm8527, %v8495, %v8559
      %v8592 = vsel %vm8528, %v8496, %v8560
      %v8593 = vsel %vm8529, %v8497, %v8561
      %v8594 = vsel %vm8530, %v8498, %v8562
      %v8595 = vsel %vm8531, %v8499, %v8563
      %v8596 = vsel %vm8532, %v8500, %v8564
      %v8597 = vsel %vm8533, %v8501, %v8565
      %v8598 = vsel %vm8534, %v8502, %v8566
      %v8599 = vsel %vm8535, %v8503, %v8567
      %v8600 = vsel %vm8536, %v8504, %v8568
      %v8601 = vsel %vm8537, %v8505, %v8569
      %v8602 = vsel %vm8538, %v8506, %v8570
      %v8603 = vpack.c.bf16 %v8572, %v8571
      %v8604 = vpack.c.bf16 %v8574, %v8573
      %v8605 = vpack.c.bf16 %v8576, %v8575
      %v8606 = vpack.c.bf16 %v8578, %v8577
      %v8607 = vpack.c.bf16 %v8580, %v8579
      %v8608 = vpack.c.bf16 %v8582, %v8581
      %v8609 = vpack.c.bf16 %v8584, %v8583
      %v8610 = vpack.c.bf16 %v8586, %v8585
      %v8611 = vpack.c.bf16 %v8588, %v8587
      %v8612 = vpack.c.bf16 %v8590, %v8589
      %v8613 = vpack.c.bf16 %v8592, %v8591
      %v8614 = vpack.c.bf16 %v8594, %v8593
      %v8615 = vpack.c.bf16 %v8596, %v8595
      %v8616 = vpack.c.bf16 %v8598, %v8597
      %v8617 = vpack.c.bf16 %v8600, %v8599
      %v8618 = vpack.c.bf16 %v8602, %v8601
      %v8635 = vrot.slane %v8603, 4
      %v8636 = vrot.slane %v8604, 4
      %v8637 = vrot.slane %v8605, 4
      %v8638 = vrot.slane %v8606, 4
      %v8639 = vrot.slane %v8607, 4
      %v8640 = vrot.slane %v8608, 4
      %v8641 = vrot.slane %v8609, 4
      %v8642 = vrot.slane %v8610, 4
      %v8643 = vrot.slane %v8611, 4
      %v8644 = vrot.slane %v8612, 4
      %v8645 = vrot.slane %v8613, 4
      %v8646 = vrot.slane %v8614, 4
      %v8647 = vrot.slane %v8615, 4
      %v8648 = vrot.slane %v8616, 4
      %v8649 = vrot.slane %v8617, 4
      %v8650 = vrot.slane %v8618, 4
      %8651 = vrot.lane.b32.xlu0 %v8635, 16
      %v8652 = vpop.permute.xlu0 %8651
      %8653 = vrot.lane.b32.xlu0 %v8636, 16
      %v8654 = vpop.permute.xlu0 %8653
      %8655 = vrot.lane.b32.xlu0 %v8637, 16
      %v8656 = vpop.permute.xlu0 %8655
      %8657 = vrot.lane.b32.xlu0 %v8638, 16
      %v8658 = vpop.permute.xlu0 %8657
      %8659 = vrot.lane.b32.xlu0 %v8639, 16
      %v8660 = vpop.permute.xlu0 %8659
      %8661 = vrot.lane.b32.xlu0 %v8640, 16
      %v8662 = vpop.permute.xlu0 %8661
      %8663 = vrot.lane.b32.xlu0 %v8641, 16
      %v8664 = vpop.permute.xlu0 %8663
      %8665 = vrot.lane.b32.xlu0 %v8642, 16
      %v8666 = vpop.permute.xlu0 %8665
      %8667 = vrot.lane.b32.xlu0 %v8643, 16
      %v8668 = vpop.permute.xlu0 %8667
      %8669 = vrot.lane.b32.xlu0 %v8644, 16
      %v8670 = vpop.permute.xlu0 %8669
      %8671 = vrot.lane.b32.xlu0 %v8645, 16
      %v8672 = vpop.permute.xlu0 %8671
      %8673 = vrot.lane.b32.xlu0 %v8646, 16
      %v8674 = vpop.permute.xlu0 %8673
      %8675 = vrot.lane.b32.xlu0 %v8647, 16
      %v8676 = vpop.permute.xlu0 %8675
      %8677 = vrot.lane.b32.xlu0 %v8648, 16
      %v8678 = vpop.permute.xlu0 %8677
      %8679 = vrot.lane.b32.xlu0 %v8649, 16
      %v8680 = vpop.permute.xlu0 %8679
      %8681 = vrot.lane.b32.xlu0 %v8650, 16
      %v8682 = vpop.permute.xlu0 %8681
      %vm8699 = vcmask 162948
      %8700 = vst.msk [vmem:[%s394] sm:$0xf0] %vm8699, %v8652
      %vm8701 = vcmask 158848
      %8702 = vst.msk [vmem:[%s394 + $0x8] sm:$0xf] %vm8701, %v8652
      %8703 = vst.msk [vmem:[%s394 + $0x10] sm:$0xf0] %vm8699, %v8654
      %8704 = vst.msk [vmem:[%s394 + $0x18] sm:$0xf] %vm8701, %v8654
      %8705 = vst.msk [vmem:[%s394 + $0x20] sm:$0xf0] %vm8699, %v8656
      %8706 = vst.msk [vmem:[%s394 + $0x28] sm:$0xf] %vm8701, %v8656
      %8707 = vst.msk [vmem:[%s394 + $0x30] sm:$0xf0] %vm8699, %v8658
      %8708 = vst.msk [vmem:[%s394 + $0x38] sm:$0xf] %vm8701, %v8658
      %8709 = vst.msk [vmem:[%s394 + $0x40] sm:$0xf0] %vm8699, %v8660
      %8710 = vst.msk [vmem:[%s394 + $0x48] sm:$0xf] %vm8701, %v8660
      %8711 = vst.msk [vmem:[%s394 + $0x50] sm:$0xf0] %vm8699, %v8662
      %8712 = vst.msk [vmem:[%s394 + $0x58] sm:$0xf] %vm8701, %v8662
      %8713 = vst.msk [vmem:[%s394 + $0x60] sm:$0xf0] %vm8699, %v8664
      %8714 = vst.msk [vmem:[%s394 + $0x68] sm:$0xf] %vm8701, %v8664
      %8715 = vst.msk [vmem:[%s394 + $0x70] sm:$0xf0] %vm8699, %v8666
      %8716 = vst.msk [vmem:[%s394 + $0x78] sm:$0xf] %vm8701, %v8666
      %8717 = vst.msk [vmem:[%s394 + $0x80] sm:$0xf0] %vm8699, %v8668
      %8718 = vst.msk [vmem:[%s394 + $0x88] sm:$0xf] %vm8701, %v8668
      %8719 = vst.msk [vmem:[%s394 + $0x90] sm:$0xf0] %vm8699, %v8670
      %8720 = vst.msk [vmem:[%s394 + $0x98] sm:$0xf] %vm8701, %v8670
      %8721 = vst.msk [vmem:[%s394 + $0xa0] sm:$0xf0] %vm8699, %v8672
      %8722 = vst.msk [vmem:[%s394 + $0xa8] sm:$0xf] %vm8701, %v8672
      %8723 = vst.msk [vmem:[%s394 + $0xb0] sm:$0xf0] %vm8699, %v8674
      %8724 = vst.msk [vmem:[%s394 + $0xb8] sm:$0xf] %vm8701, %v8674
      %8725 = vst.msk [vmem:[%s394 + $0xc0] sm:$0xf0] %vm8699, %v8676
      %8726 = vst.msk [vmem:[%s394 + $0xc8] sm:$0xf] %vm8701, %v8676
      %8727 = vst.msk [vmem:[%s394 + $0xd0] sm:$0xf0] %vm8699, %v8678
      %8728 = vst.msk [vmem:[%s394 + $0xd8] sm:$0xf] %vm8701, %v8678
      %8729 = vst.msk [vmem:[%s394 + $0xe0] sm:$0xf0] %vm8699, %v8680
      %8730 = vst.msk [vmem:[%s394 + $0xe8] sm:$0xf] %vm8701, %v8680
      %8731 = vst.msk [vmem:[%s394 + $0xf0] sm:$0xf0] %vm8699, %v8682
      %8732 = vst.msk [vmem:[%s394 + $0xf8] sm:$0xf] %vm8701, %v8682
      %v8733 = vld [vmem:[#allocation2] sm:$0xf8]
      %v8734 = vld [vmem:[#allocation2 + $0x8] sm:$0xf]
      %v8735 = vld [vmem:[#allocation2 + $0x10] sm:$0xf8]
      %v8736 = vld [vmem:[#allocation2 + $0x18] sm:$0xf]
      %v8737 = vld [vmem:[#allocation2 + $0x20] sm:$0xf8]
      %v8738 = vld [vmem:[#allocation2 + $0x28] sm:$0xf]
      %v8739 = vld [vmem:[#allocation2 + $0x30] sm:$0xf8]
      %v8740 = vld [vmem:[#allocation2 + $0x38] sm:$0xf]
      %v8741 = vld [vmem:[#allocation2 + $0x40] sm:$0xf8]
      %v8742 = vld [vmem:[#allocation2 + $0x48] sm:$0xf]
      %v8743 = vld [vmem:[#allocation2 + $0x50] sm:$0xf8]
      %v8744 = vld [vmem:[#allocation2 + $0x58] sm:$0xf]
      %v8745 = vld [vmem:[#allocation2 + $0x60] sm:$0xf8]
      %v8746 = vld [vmem:[#allocation2 + $0x68] sm:$0xf]
      %v8747 = vld [vmem:[#allocation2 + $0x70] sm:$0xf8]
      %v8748 = vld [vmem:[#allocation2 + $0x78] sm:$0xf]
      %v8749 = vld [vmem:[#allocation2 + $0x80] sm:$0xf8]
      %v8750 = vld [vmem:[#allocation2 + $0x88] sm:$0xf]
      %v8751 = vld [vmem:[#allocation2 + $0x90] sm:$0xf8]
      %v8752 = vld [vmem:[#allocation2 + $0x98] sm:$0xf]
      %v8753 = vld [vmem:[#allocation2 + $0xa0] sm:$0xf8]
      %v8754 = vld [vmem:[#allocation2 + $0xa8] sm:$0xf]
      %v8755 = vld [vmem:[#allocation2 + $0xb0] sm:$0xf8]
      %v8756 = vld [vmem:[#allocation2 + $0xb8] sm:$0xf]
      %v8757 = vld [vmem:[#allocation2 + $0xc0] sm:$0xf8]
      %v8758 = vld [vmem:[#allocation2 + $0xc8] sm:$0xf]
      %v8759 = vld [vmem:[#allocation2 + $0xd0] sm:$0xf8]
      %v8760 = vld [vmem:[#allocation2 + $0xd8] sm:$0xf]
      %v8761 = vld [vmem:[#allocation2 + $0xe0] sm:$0xf8]
      %v8762 = vld [vmem:[#allocation2 + $0xe8] sm:$0xf]
      %v8763 = vld [vmem:[#allocation2 + $0xf0] sm:$0xf8]
      %v8764 = vld [vmem:[#allocation2 + $0xf8] sm:$0xf]
      %v8765 = vld [vmem:[#allocation2 + $0x100] sm:$0xf8]
      %v8766 = vld [vmem:[#allocation2 + $0x108] sm:$0xf]
      %v8767 = vld [vmem:[#allocation2 + $0x110] sm:$0xf8]
      %v8768 = vld [vmem:[#allocation2 + $0x118] sm:$0xf]
      %v8769 = vld [vmem:[%s7] sm:$0xf]
      %v8770 = vld [vmem:[%s7 + $0x4] sm:$0xf]
      %v8771 = vld [vmem:[%s7 + $0x8] sm:$0x3]
      %v8773 = vshrl.u32 %v8733, 16
      %v8775 = vrot.slane %v8773, 3
      %v8776 = vshll.u32 %v8733, 16
      %v8778 = vrot.slane %v8776, 4
      %v8779 = vor.u32 %v8775, %v8778
      %v8781 = vshrl.u32 %v8734, 16
      %v8783 = vrot.slane %v8781, 3
      %v8784 = vshll.u32 %v8734, 16
      %v8786 = vrot.slane %v8784, 4
      %v8787 = vor.u32 %v8783, %v8786
      %v8788 = vsel %vm596, %v8779, %v8787
      %v8790 = vshrl.u32 %v8735, 16
      %v8792 = vrot.slane %v8790, 3
      %v8793 = vshll.u32 %v8735, 16
      %v8795 = vrot.slane %v8793, 4
      %v8796 = vor.u32 %v8792, %v8795
      %v8798 = vshrl.u32 %v8736, 16
      %v8800 = vrot.slane %v8798, 3
      %v8801 = vshll.u32 %v8736, 16
      %v8803 = vrot.slane %v8801, 4
      %v8804 = vor.u32 %v8800, %v8803
      %v8805 = vsel %vm596, %v8796, %v8804
      %v8807 = vshrl.u32 %v8737, 16
      %v8809 = vrot.slane %v8807, 3
      %v8810 = vshll.u32 %v8737, 16
      %v8812 = vrot.slane %v8810, 4
      %v8813 = vor.u32 %v8809, %v8812
      %v8815 = vshrl.u32 %v8738, 16
      %v8817 = vrot.slane %v8815, 3
      %v8818 = vshll.u32 %v8738, 16
      %v8820 = vrot.slane %v8818, 4
      %v8821 = vor.u32 %v8817, %v8820
      %v8822 = vsel %vm596, %v8813, %v8821
      %v8824 = vshrl.u32 %v8739, 16
      %v8826 = vrot.slane %v8824, 3
      %v8827 = vshll.u32 %v8739, 16
      %v8829 = vrot.slane %v8827, 4
      %v8830 = vor.u32 %v8826, %v8829
      %v8832 = vshrl.u32 %v8740, 16
      %v8834 = vrot.slane %v8832, 3
      %v8835 = vshll.u32 %v8740, 16
      %v8837 = vrot.slane %v8835, 4
      %v8838 = vor.u32 %v8834, %v8837
      %v8839 = vsel %vm596, %v8830, %v8838
      %v8841 = vshrl.u32 %v8741, 16
      %v8843 = vrot.slane %v8841, 3
      %v8844 = vshll.u32 %v8741, 16
      %v8846 = vrot.slane %v8844, 4
      %v8847 = vor.u32 %v8843, %v8846
      %v8849 = vshrl.u32 %v8742, 16
      %v8851 = vrot.slane %v8849, 3
      %v8852 = vshll.u32 %v8742, 16
      %v8854 = vrot.slane %v8852, 4
      %v8855 = vor.u32 %v8851, %v8854
      %v8856 = vsel %vm596, %v8847, %v8855
      %v8858 = vshrl.u32 %v8743, 16
      %v8860 = vrot.slane %v8858, 3
      %v8861 = vshll.u32 %v8743, 16
      %v8863 = vrot.slane %v8861, 4
      %v8864 = vor.u32 %v8860, %v8863
      %v8866 = vshrl.u32 %v8744, 16
      %v8868 = vrot.slane %v8866, 3
      %v8869 = vshll.u32 %v8744, 16
      %v8871 = vrot.slane %v8869, 4
      %v8872 = vor.u32 %v8868, %v8871
      %v8873 = vsel %vm596, %v8864, %v8872
      %v8875 = vshrl.u32 %v8745, 16
      %v8877 = vrot.slane %v8875, 3
      %v8878 = vshll.u32 %v8745, 16
      %v8880 = vrot.slane %v8878, 4
      %v8881 = vor.u32 %v8877, %v8880
      %v8883 = vshrl.u32 %v8746, 16
      %v8885 = vrot.slane %v8883, 3
      %v8886 = vshll.u32 %v8746, 16
      %v8888 = vrot.slane %v8886, 4
      %v8889 = vor.u32 %v8885, %v8888
      %v8890 = vsel %vm596, %v8881, %v8889
      %v8892 = vshrl.u32 %v8747, 16
      %v8894 = vrot.slane %v8892, 3
      %v8895 = vshll.u32 %v8747, 16
      %v8897 = vrot.slane %v8895, 4
      %v8898 = vor.u32 %v8894, %v8897
      %v8900 = vshrl.u32 %v8748, 16
      %v8902 = vrot.slane %v8900, 3
      %v8903 = vshll.u32 %v8748, 16
      %v8905 = vrot.slane %v8903, 4
      %v8906 = vor.u32 %v8902, %v8905
      %v8907 = vsel %vm596, %v8898, %v8906
      %v8909 = vshrl.u32 %v8749, 16
      %v8911 = vrot.slane %v8909, 3
      %v8912 = vshll.u32 %v8749, 16
      %v8914 = vrot.slane %v8912, 4
      %v8915 = vor.u32 %v8911, %v8914
      %v8917 = vshrl.u32 %v8750, 16
      %v8919 = vrot.slane %v8917, 3
      %v8920 = vshll.u32 %v8750, 16
      %v8922 = vrot.slane %v8920, 4
      %v8923 = vor.u32 %v8919, %v8922
      %v8924 = vsel %vm596, %v8915, %v8923
      %v8926 = vshrl.u32 %v8751, 16
      %v8928 = vrot.slane %v8926, 3
      %v8929 = vshll.u32 %v8751, 16
      %v8931 = vrot.slane %v8929, 4
      %v8932 = vor.u32 %v8928, %v8931
      %v8934 = vshrl.u32 %v8752, 16
      %v8936 = vrot.slane %v8934, 3
      %v8937 = vshll.u32 %v8752, 16
      %v8939 = vrot.slane %v8937, 4
      %v8940 = vor.u32 %v8936, %v8939
      %v8941 = vsel %vm596, %v8932, %v8940
      %v8943 = vshrl.u32 %v8753, 16
      %v8945 = vrot.slane %v8943, 3
      %v8946 = vshll.u32 %v8753, 16
      %v8948 = vrot.slane %v8946, 4
      %v8949 = vor.u32 %v8945, %v8948
      %v8951 = vshrl.u32 %v8754, 16
      %v8953 = vrot.slane %v8951, 3
      %v8954 = vshll.u32 %v8754, 16
      %v8956 = vrot.slane %v8954, 4
      %v8957 = vor.u32 %v8953, %v8956
      %v8958 = vsel %vm596, %v8949, %v8957
      %v8960 = vshrl.u32 %v8755, 16
      %v8962 = vrot.slane %v8960, 3
      %v8963 = vshll.u32 %v8755, 16
      %v8965 = vrot.slane %v8963, 4
      %v8966 = vor.u32 %v8962, %v8965
      %v8968 = vshrl.u32 %v8756, 16
      %v8970 = vrot.slane %v8968, 3
      %v8971 = vshll.u32 %v8756, 16
      %v8973 = vrot.slane %v8971, 4
      %v8974 = vor.u32 %v8970, %v8973
      %v8975 = vsel %vm596, %v8966, %v8974
      %v8977 = vshrl.u32 %v8757, 16
      %v8979 = vrot.slane %v8977, 3
      %v8980 = vshll.u32 %v8757, 16
      %v8982 = vrot.slane %v8980, 4
      %v8983 = vor.u32 %v8979, %v8982
      %v8985 = vshrl.u32 %v8758, 16
      %v8987 = vrot.slane %v8985, 3
      %v8988 = vshll.u32 %v8758, 16
      %v8990 = vrot.slane %v8988, 4
      %v8991 = vor.u32 %v8987, %v8990
      %v8992 = vsel %vm596, %v8983, %v8991
      %v8994 = vshrl.u32 %v8759, 16
      %v8996 = vrot.slane %v8994, 3
      %v8997 = vshll.u32 %v8759, 16
      %v8999 = vrot.slane %v8997, 4
      %v9000 = vor.u32 %v8996, %v8999
      %v9002 = vshrl.u32 %v8760, 16
      %v9004 = vrot.slane %v9002, 3
      %v9005 = vshll.u32 %v8760, 16
      %v9007 = vrot.slane %v9005, 4
      %v9008 = vor.u32 %v9004, %v9007
      %v9009 = vsel %vm596, %v9000, %v9008
      %v9011 = vshrl.u32 %v8761, 16
      %v9013 = vrot.slane %v9011, 3
      %v9014 = vshll.u32 %v8761, 16
      %v9016 = vrot.slane %v9014, 4
      %v9017 = vor.u32 %v9013, %v9016
      %v9019 = vshrl.u32 %v8762, 16
      %v9021 = vrot.slane %v9019, 3
      %v9022 = vshll.u32 %v8762, 16
      %v9024 = vrot.slane %v9022, 4
      %v9025 = vor.u32 %v9021, %v9024
      %v9026 = vsel %vm596, %v9017, %v9025
      %v9028 = vshrl.u32 %v8763, 16
      %v9030 = vrot.slane %v9028, 3
      %v9031 = vshll.u32 %v8763, 16
      %v9033 = vrot.slane %v9031, 4
      %v9034 = vor.u32 %v9030, %v9033
      %v9036 = vshrl.u32 %v8764, 16
      %v9038 = vrot.slane %v9036, 3
      %v9039 = vshll.u32 %v8764, 16
      %v9041 = vrot.slane %v9039, 4
      %v9042 = vor.u32 %v9038, %v9041
      %v9043 = vsel %vm596, %v9034, %v9042
      %v9045 = vshrl.u32 %v8765, 16
      %v9047 = vrot.slane %v9045, 3
      %v9048 = vshll.u32 %v8765, 16
      %v9050 = vrot.slane %v9048, 4
      %v9051 = vor.u32 %v9047, %v9050
      %v9053 = vshrl.u32 %v8766, 16
      %v9055 = vrot.slane %v9053, 3
      %v9056 = vshll.u32 %v8766, 16
      %v9058 = vrot.slane %v9056, 4
      %v9059 = vor.u32 %v9055, %v9058
      %v9060 = vsel %vm596, %v9051, %v9059
      %v9062 = vshrl.u32 %v8767, 16
      %v9064 = vrot.slane %v9062, 3
      %v9065 = vshll.u32 %v8767, 16
      %v9067 = vrot.slane %v9065, 4
      %v9068 = vor.u32 %v9064, %v9067
      %v9070 = vshrl.u32 %v8768, 16
      %v9072 = vrot.slane %v9070, 3
      %v9073 = vshll.u32 %v8768, 16
      %v9075 = vrot.slane %v9073, 4
      %v9076 = vor.u32 %v9072, %v9075
      %v9077 = vsel %vm596, %v9068, %v9076
      %v9081 = vunpack.c.l.b16 %v8769
      %v9082 = vunpack.c.l.b16 %v8770
      %v9083 = vunpack.c.l.b16 %v8771
      %v9084 = vpack.c.b16 %v9082, %v9081
      %v9085 = vpack.c.b16 %v9083, %v9083
      %vm9087 = vcmask 162816
      %v9089 = vsel %vm9087, %v8788, 0
      %v9092 = vsel %vm9087, %v8805, 0
      %v9095 = vsel %vm9087, %v8822, 0
      %v9098 = vsel %vm9087, %v8839, 0
      %v9101 = vsel %vm9087, %v8856, 0
      %v9104 = vsel %vm9087, %v8873, 0
      %v9107 = vsel %vm9087, %v8890, 0
      %v9110 = vsel %vm9087, %v8907, 0
      %v9113 = vsel %vm9087, %v8924, 0
      %v9116 = vsel %vm9087, %v8941, 0
      %v9119 = vsel %vm9087, %v8958, 0
      %v9122 = vsel %vm9087, %v8975, 0
      %v9125 = vsel %vm9087, %v8992, 0
      %v9128 = vsel %vm9087, %v9009, 0
      %v9131 = vsel %vm9087, %v9026, 0
      %v9134 = vsel %vm9087, %v9043, 0
      %v9137 = vsel %vm9087, %v9060, 0
      %v9140 = vsel %vm9087, %v9077, 0
      %vm9142 = vcmask 1041408
      %v9144 = vsel %vm9142, %v9085, 0
      %9146 = vmatprep.subr.bf16.mxu0 0
      %9147 = vmatpush1.bf16.msra.mxu0 %v9084
      %9148 = vmatprep.subr.bf16.mxu0 0
      %9149 = vmatpush1.bf16.msra.mxu0 %v9144
      %9150 = vmatprep.subr.bf16.mxu0 0
      %9151 = vmatpush1.bf16.msra.mxu0 0
      %9152 = vmatprep.subr.bf16.mxu0 0
      %9153 = vmatpush1.bf16.msra.mxu0 0
      %9154 = vmatprep.subr.bf16.mxu0 0
      %9155 = vmatpush1.bf16.msra.mxu0 0
      %9156 = vmatprep.subr.bf16.mxu0 0
      %9157 = vmatpush1.bf16.msra.mxu0 0
      %9158 = vmatprep.subr.bf16.mxu0 0
      %9159 = vmatpush1.bf16.msra.mxu0 0
      %9160 = vmatprep.subr.bf16.mxu0 0
      %9161 = vmatpush1.bf16.msra.mxu0 0
      %9162 = vmatprep.subr.bf16.mxu0 0
      %9163 = vmatpush1.bf16.msra.mxu0 0
      %9164 = vmatprep.subr.bf16.mxu0 0
      %9165 = vmatpush1.bf16.msra.mxu0 0
      %9166 = vmatprep.subr.bf16.mxu0 0
      %9167 = vmatpush1.bf16.msra.mxu0 0
      %9168 = vmatprep.subr.bf16.mxu0 0
      %9169 = vmatpush1.bf16.msra.mxu0 0
      %9170 = vmatprep.subr.bf16.mxu0 0
      %9171 = vmatpush1.bf16.msra.mxu0 0
      %9172 = vmatprep.subr.bf16.mxu0 0
      %9173 = vmatpush1.bf16.msra.mxu0 0
      %9174 = vmatprep.subr.bf16.mxu0 0
      %9175 = vmatpush1.bf16.msra.mxu0 0
      %9176 = vmatprep.subr.bf16.mxu0 0
      %9177 = vmatpush1.bf16.msra.mxu0 0
      %9178 = vmatprep.mubr.bf16.mxu0 0
      %9179 = vmatmul.mubr.bf16.gmra.mrb[0].mxu0 %v9089
      %v9180 = vpop.f32.mrb[0].mxu0
      %v9181 = vadd.f32 0.0, %v9180
      %v9182 = vpop.f32.mrb[0].mxu0
      %v9183 = vpop.f32.mrb[0].mxu0
      %v9184 = vadd.f32 0.0, %v9183
      %v9185 = vpop.f32.mrb[0].mxu0
      %9186 = vmatprep.mubr.bf16.mxu0 0
      %9187 = vmatmul.mubr.bf16.gmra.mrb[0].mxu0 %v9092
      %v9188 = vpop.f32.mrb[0].mxu0
      %v9189 = vadd.f32 0.0, %v9188
      %v9190 = vpop.f32.mrb[0].mxu0
      %v9191 = vpop.f32.mrb[0].mxu0
      %v9192 = vadd.f32 0.0, %v9191
      %v9193 = vpop.f32.mrb[0].mxu0
      %9194 = vmatprep.mubr.bf16.mxu0 0
      %9195 = vmatmul.mubr.bf16.gmra.mrb[0].mxu0 %v9095
      %v9196 = vpop.f32.mrb[0].mxu0
      %v9197 = vadd.f32 0.0, %v9196
      %v9198 = vpop.f32.mrb[0].mxu0
      %v9199 = vpop.f32.mrb[0].mxu0
      %v9200 = vadd.f32 0.0, %v9199
      %v9201 = vpop.f32.mrb[0].mxu0
      %9202 = vmatprep.mubr.bf16.mxu0 0
      %9203 = vmatmul.mubr.bf16.gmra.mrb[0].mxu0 %v9098
      %v9204 = vpop.f32.mrb[0].mxu0
      %v9205 = vadd.f32 0.0, %v9204
      %v9206 = vpop.f32.mrb[0].mxu0
      %v9207 = vpop.f32.mrb[0].mxu0
      %v9208 = vadd.f32 0.0, %v9207
      %v9209 = vpop.f32.mrb[0].mxu0
      %9210 = vmatprep.mubr.bf16.mxu0 0
      %9211 = vmatmul.mubr.bf16.gmra.mrb[0].mxu0 %v9101
      %v9212 = vpop.f32.mrb[0].mxu0
      %v9213 = vadd.f32 0.0, %v9212
      %v9214 = vpop.f32.mrb[0].mxu0
      %v9215 = vpop.f32.mrb[0].mxu0
      %v9216 = vadd.f32 0.0, %v9215
      %v9217 = vpop.f32.mrb[0].mxu0
      %9218 = vmatprep.mubr.bf16.mxu0 0
      %9219 = vmatmul.mubr.bf16.gmra.mrb[0].mxu0 %v9104
      %v9220 = vpop.f32.mrb[0].mxu0
      %v9221 = vadd.f32 0.0, %v9220
      %v9222 = vpop.f32.mrb[0].mxu0
      %v9223 = vpop.f32.mrb[0].mxu0
      %v9224 = vadd.f32 0.0, %v9223
      %v9225 = vpop.f32.mrb[0].mxu0
      %9226 = vmatprep.mubr.bf16.mxu0 0
      %9227 = vmatmul.mubr.bf16.gmra.mrb[0].mxu0 %v9107
      %v9228 = vpop.f32.mrb[0].mxu0
      %v9229 = vadd.f32 0.0, %v9228
      %v9230 = vpop.f32.mrb[0].mxu0
      %v9231 = vpop.f32.mrb[0].mxu0
      %v9232 = vadd.f32 0.0, %v9231
      %v9233 = vpop.f32.mrb[0].mxu0
      %9234 = vmatprep.mubr.bf16.mxu0 0
      %9235 = vmatmul.mubr.bf16.gmra.mrb[0].mxu0 %v9110
      %v9236 = vpop.f32.mrb[0].mxu0
      %v9237 = vadd.f32 0.0, %v9236
      %v9238 = vpop.f32.mrb[0].mxu0
      %v9239 = vpop.f32.mrb[0].mxu0
      %v9240 = vadd.f32 0.0, %v9239
      %v9241 = vpop.f32.mrb[0].mxu0
      %9242 = vmatprep.mubr.bf16.mxu0 0
      %9243 = vmatmul.mubr.bf16.gmra.mrb[0].mxu0 %v9113
      %v9244 = vpop.f32.mrb[0].mxu0
      %v9245 = vadd.f32 0.0, %v9244
      %v9246 = vpop.f32.mrb[0].mxu0
      %v9247 = vpop.f32.mrb[0].mxu0
      %v9248 = vadd.f32 0.0, %v9247
      %v9249 = vpop.f32.mrb[0].mxu0
      %9250 = vmatprep.mubr.bf16.mxu0 0
      %9251 = vmatmul.mubr.bf16.gmra.mrb[0].mxu0 %v9116
      %v9252 = vpop.f32.mrb[0].mxu0
      %v9253 = vadd.f32 0.0, %v9252
      %v9254 = vpop.f32.mrb[0].mxu0
      %v9255 = vpop.f32.mrb[0].mxu0
      %v9256 = vadd.f32 0.0, %v9255
      %v9257 = vpop.f32.mrb[0].mxu0
      %9258 = vmatprep.mubr.bf16.mxu0 0
      %9259 = vmatmul.mubr.bf16.gmra.mrb[0].mxu0 %v9119
      %v9260 = vpop.f32.mrb[0].mxu0
      %v9261 = vadd.f32 0.0, %v9260
      %v9262 = vpop.f32.mrb[0].mxu0
      %v9263 = vpop.f32.mrb[0].mxu0
      %v9264 = vadd.f32 0.0, %v9263
      %v9265 = vpop.f32.mrb[0].mxu0
      %9266 = vmatprep.mubr.bf16.mxu0 0
      %9267 = vmatmul.mubr.bf16.gmra.mrb[0].mxu0 %v9122
      %v9268 = vpop.f32.mrb[0].mxu0
      %v9269 = vadd.f32 0.0, %v9268
      %v9270 = vpop.f32.mrb[0].mxu0
      %v9271 = vpop.f32.mrb[0].mxu0
      %v9272 = vadd.f32 0.0, %v9271
      %v9273 = vpop.f32.mrb[0].mxu0
      %9274 = vmatprep.mubr.bf16.mxu0 0
      %9275 = vmatmul.mubr.bf16.gmra.mrb[0].mxu0 %v9125
      %v9276 = vpop.f32.mrb[0].mxu0
      %v9277 = vadd.f32 0.0, %v9276
      %v9278 = vpop.f32.mrb[0].mxu0
      %v9279 = vpop.f32.mrb[0].mxu0
      %v9280 = vadd.f32 0.0, %v9279
      %v9281 = vpop.f32.mrb[0].mxu0
      %9282 = vmatprep.mubr.bf16.mxu0 0
      %9283 = vmatmul.mubr.bf16.gmra.mrb[0].mxu0 %v9128
      %v9284 = vpop.f32.mrb[0].mxu0
      %v9285 = vadd.f32 0.0, %v9284
      %v9286 = vpop.f32.mrb[0].mxu0
      %v9287 = vpop.f32.mrb[0].mxu0
      %v9288 = vadd.f32 0.0, %v9287
      %v9289 = vpop.f32.mrb[0].mxu0
      %9290 = vmatprep.mubr.bf16.mxu0 0
      %9291 = vmatmul.mubr.bf16.gmra.mrb[0].mxu0 %v9131
      %v9292 = vpop.f32.mrb[0].mxu0
      %v9293 = vadd.f32 0.0, %v9292
      %v9294 = vpop.f32.mrb[0].mxu0
      %v9295 = vpop.f32.mrb[0].mxu0
      %v9296 = vadd.f32 0.0, %v9295
      %v9297 = vpop.f32.mrb[0].mxu0
      %9298 = vmatprep.mubr.bf16.mxu0 0
      %9299 = vmatmul.mubr.bf16.gmra.mrb[0].mxu0 %v9134
      %v9300 = vpop.f32.mrb[0].mxu0
      %v9301 = vadd.f32 0.0, %v9300
      %v9302 = vpop.f32.mrb[0].mxu0
      %v9303 = vpop.f32.mrb[0].mxu0
      %v9304 = vadd.f32 0.0, %v9303
      %v9305 = vpop.f32.mrb[0].mxu0
      %9306 = vmatprep.mubr.bf16.mxu0 0
      %9307 = vmatmul.mubr.bf16.gmra.mrb[0].mxu0 %v9137
      %v9308 = vpop.f32.mrb[0].mxu0
      %v9309 = vadd.f32 0.0, %v9308
      %v9310 = vpop.f32.mrb[0].mxu0
      %v9311 = vpop.f32.mrb[0].mxu0
      %v9312 = vadd.f32 0.0, %v9311
      %v9313 = vpop.f32.mrb[0].mxu0
      %9314 = vmatprep.mubr.bf16.mxu0 0
      %9315 = vmatmul.mubr.bf16.gmra.mrb[0].mxu0 %v9140
      %v9316 = vpop.f32.mrb[0].mxu0
      %v9317 = vadd.f32 0.0, %v9316
      %v9318 = vpop.f32.mrb[0].mxu0
      %v9319 = vpop.f32.mrb[0].mxu0
      %v9320 = vadd.f32 0.0, %v9319
      %v9321 = vpop.f32.mrb[0].mxu0
      %9322 = vdwg.mxu0
      %v9323 = vadd.f32 %v9181, 0.0
      %v9324 = vadd.f32 %v9184, 0.0
      %v9325 = vadd.f32 %v9189, 0.0
      %v9326 = vadd.f32 %v9192, 0.0
      %v9327 = vadd.f32 %v9197, 0.0
      %v9328 = vadd.f32 %v9200, 0.0
      %v9329 = vadd.f32 %v9205, 0.0
      %v9330 = vadd.f32 %v9208, 0.0
      %v9331 = vadd.f32 %v9213, 0.0
      %v9332 = vadd.f32 %v9216, 0.0
      %v9333 = vadd.f32 %v9221, 0.0
      %v9334 = vadd.f32 %v9224, 0.0
      %v9335 = vadd.f32 %v9229, 0.0
      %v9336 = vadd.f32 %v9232, 0.0
      %v9337 = vadd.f32 %v9237, 0.0
      %v9338 = vadd.f32 %v9240, 0.0
      %v9339 = vadd.f32 %v9245, 0.0
      %v9340 = vadd.f32 %v9248, 0.0
      %v9341 = vadd.f32 %v9253, 0.0
      %v9342 = vadd.f32 %v9256, 0.0
      %v9343 = vadd.f32 %v9261, 0.0
      %v9344 = vadd.f32 %v9264, 0.0
      %v9345 = vadd.f32 %v9269, 0.0
      %v9346 = vadd.f32 %v9272, 0.0
      %v9347 = vadd.f32 %v9277, 0.0
      %v9348 = vadd.f32 %v9280, 0.0
      %v9349 = vadd.f32 %v9285, 0.0
      %v9350 = vadd.f32 %v9288, 0.0
      %v9351 = vadd.f32 %v9293, 0.0
      %v9352 = vadd.f32 %v9296, 0.0
      %v9353 = vadd.f32 %v9301, 0.0
      %v9354 = vadd.f32 %v9304, 0.0
      %9387 = vrot.lane.b32.xlu0 %v9189, 124
      %v9388 = vpop.permute.xlu0 %9387
      %9389 = vrot.lane.b32.xlu0 %v9192, 124
      %v9390 = vpop.permute.xlu0 %9389
      %9391 = vrot.lane.b32.xlu0 %v9197, 124
      %v9392 = vpop.permute.xlu0 %9391
      %9393 = vrot.lane.b32.xlu0 %v9200, 124
      %v9394 = vpop.permute.xlu0 %9393
      %9395 = vrot.lane.b32.xlu0 %v9205, 124
      %v9396 = vpop.permute.xlu0 %9395
      %9397 = vrot.lane.b32.xlu0 %v9208, 124
      %v9398 = vpop.permute.xlu0 %9397
      %9399 = vrot.lane.b32.xlu0 %v9213, 124
      %v9400 = vpop.permute.xlu0 %9399
      %9401 = vrot.lane.b32.xlu0 %v9216, 124
      %v9402 = vpop.permute.xlu0 %9401
      %9403 = vrot.lane.b32.xlu0 %v9221, 124
      %v9404 = vpop.permute.xlu0 %9403
      %9405 = vrot.lane.b32.xlu0 %v9224, 124
      %v9406 = vpop.permute.xlu0 %9405
      %9407 = vrot.lane.b32.xlu0 %v9229, 124
      %v9408 = vpop.permute.xlu0 %9407
      %9409 = vrot.lane.b32.xlu0 %v9232, 124
      %v9410 = vpop.permute.xlu0 %9409
      %9411 = vrot.lane.b32.xlu0 %v9237, 124
      %v9412 = vpop.permute.xlu0 %9411
      %9413 = vrot.lane.b32.xlu0 %v9240, 124
      %v9414 = vpop.permute.xlu0 %9413
      %9415 = vrot.lane.b32.xlu0 %v9245, 124
      %v9416 = vpop.permute.xlu0 %9415
      %9417 = vrot.lane.b32.xlu0 %v9248, 124
      %v9418 = vpop.permute.xlu0 %9417
      %9419 = vrot.lane.b32.xlu0 %v9253, 124
      %v9420 = vpop.permute.xlu0 %9419
      %9421 = vrot.lane.b32.xlu0 %v9256, 124
      %v9422 = vpop.permute.xlu0 %9421
      %9423 = vrot.lane.b32.xlu0 %v9261, 124
      %v9424 = vpop.permute.xlu0 %9423
      %9425 = vrot.lane.b32.xlu0 %v9264, 124
      %v9426 = vpop.permute.xlu0 %9425
      %9427 = vrot.lane.b32.xlu0 %v9269, 124
      %v9428 = vpop.permute.xlu0 %9427
      %9429 = vrot.lane.b32.xlu0 %v9272, 124
      %v9430 = vpop.permute.xlu0 %9429
      %9431 = vrot.lane.b32.xlu0 %v9277, 124
      %v9432 = vpop.permute.xlu0 %9431
      %9433 = vrot.lane.b32.xlu0 %v9280, 124
      %v9434 = vpop.permute.xlu0 %9433
      %9435 = vrot.lane.b32.xlu0 %v9285, 124
      %v9436 = vpop.permute.xlu0 %9435
      %9437 = vrot.lane.b32.xlu0 %v9288, 124
      %v9438 = vpop.permute.xlu0 %9437
      %9439 = vrot.lane.b32.xlu0 %v9293, 124
      %v9440 = vpop.permute.xlu0 %9439
      %9441 = vrot.lane.b32.xlu0 %v9296, 124
      %v9442 = vpop.permute.xlu0 %9441
      %9443 = vrot.lane.b32.xlu0 %v9301, 124
      %v9444 = vpop.permute.xlu0 %9443
      %9445 = vrot.lane.b32.xlu0 %v9304, 124
      %v9446 = vpop.permute.xlu0 %9445
      %9447 = vrot.lane.b32.xlu0 %v9309, 124
      %v9448 = vpop.permute.xlu0 %9447
      %9449 = vrot.lane.b32.xlu0 %v9312, 124
      %v9450 = vpop.permute.xlu0 %9449
      %v9483 = vadd.f32 %v9323, %v9388
      %v9484 = vadd.f32 %v9324, %v9390
      %v9485 = vadd.f32 %v9325, %v9392
      %v9486 = vadd.f32 %v9326, %v9394
      %v9487 = vadd.f32 %v9327, %v9396
      %v9488 = vadd.f32 %v9328, %v9398
      %v9489 = vadd.f32 %v9329, %v9400
      %v9490 = vadd.f32 %v9330, %v9402
      %v9491 = vadd.f32 %v9331, %v9404
      %v9492 = vadd.f32 %v9332, %v9406
      %v9493 = vadd.f32 %v9333, %v9408
      %v9494 = vadd.f32 %v9334, %v9410
      %v9495 = vadd.f32 %v9335, %v9412
      %v9496 = vadd.f32 %v9336, %v9414
      %v9497 = vadd.f32 %v9337, %v9416
      %v9498 = vadd.f32 %v9338, %v9418
      %v9499 = vadd.f32 %v9339, %v9420
      %v9500 = vadd.f32 %v9340, %v9422
      %v9501 = vadd.f32 %v9341, %v9424
      %v9502 = vadd.f32 %v9342, %v9426
      %v9503 = vadd.f32 %v9343, %v9428
      %v9504 = vadd.f32 %v9344, %v9430
      %v9505 = vadd.f32 %v9345, %v9432
      %v9506 = vadd.f32 %v9346, %v9434
      %v9507 = vadd.f32 %v9347, %v9436
      %v9508 = vadd.f32 %v9348, %v9438
      %v9509 = vadd.f32 %v9349, %v9440
      %v9510 = vadd.f32 %v9350, %v9442
      %v9511 = vadd.f32 %v9351, %v9444
      %v9512 = vadd.f32 %v9352, %v9446
      %v9513 = vadd.f32 %v9353, %v9448
      %v9514 = vadd.f32 %v9354, %v9450
      %9517 = vrot.lane.b32.xlu0 %v9197, 120
      %v9518 = vpop.permute.xlu0 %9517
      %9519 = vrot.lane.b32.xlu0 %v9200, 120
      %v9520 = vpop.permute.xlu0 %9519
      %9521 = vrot.lane.b32.xlu0 %v9205, 120
      %v9522 = vpop.permute.xlu0 %9521
      %9523 = vrot.lane.b32.xlu0 %v9208, 120
      %v9524 = vpop.permute.xlu0 %9523
      %9525 = vrot.lane.b32.xlu0 %v9213, 120
      %v9526 = vpop.permute.xlu0 %9525
      %9527 = vrot.lane.b32.xlu0 %v9216, 120
      %v9528 = vpop.permute.xlu0 %9527
      %9529 = vrot.lane.b32.xlu0 %v9221, 120
      %v9530 = vpop.permute.xlu0 %9529
      %9531 = vrot.lane.b32.xlu0 %v9224, 120
      %v9532 = vpop.permute.xlu0 %9531
      %9533 = vrot.lane.b32.xlu0 %v9229, 120
      %v9534 = vpop.permute.xlu0 %9533
      %9535 = vrot.lane.b32.xlu0 %v9232, 120
      %v9536 = vpop.permute.xlu0 %9535
      %9537 = vrot.lane.b32.xlu0 %v9237, 120
      %v9538 = vpop.permute.xlu0 %9537
      %9539 = vrot.lane.b32.xlu0 %v9240, 120
      %v9540 = vpop.permute.xlu0 %9539
      %9541 = vrot.lane.b32.xlu0 %v9245, 120
      %v9542 = vpop.permute.xlu0 %9541
      %9543 = vrot.lane.b32.xlu0 %v9248, 120
      %v9544 = vpop.permute.xlu0 %9543
      %9545 = vrot.lane.b32.xlu0 %v9253, 120
      %v9546 = vpop.permute.xlu0 %9545
      %9547 = vrot.lane.b32.xlu0 %v9256, 120
      %v9548 = vpop.permute.xlu0 %9547
      %9549 = vrot.lane.b32.xlu0 %v9261, 120
      %v9550 = vpop.permute.xlu0 %9549
      %9551 = vrot.lane.b32.xlu0 %v9264, 120
      %v9552 = vpop.permute.xlu0 %9551
      %9553 = vrot.lane.b32.xlu0 %v9269, 120
      %v9554 = vpop.permute.xlu0 %9553
      %9555 = vrot.lane.b32.xlu0 %v9272, 120
      %v9556 = vpop.permute.xlu0 %9555
      %9557 = vrot.lane.b32.xlu0 %v9277, 120
      %v9558 = vpop.permute.xlu0 %9557
      %9559 = vrot.lane.b32.xlu0 %v9280, 120
      %v9560 = vpop.permute.xlu0 %9559
      %9561 = vrot.lane.b32.xlu0 %v9285, 120
      %v9562 = vpop.permute.xlu0 %9561
      %9563 = vrot.lane.b32.xlu0 %v9288, 120
      %v9564 = vpop.permute.xlu0 %9563
      %9565 = vrot.lane.b32.xlu0 %v9293, 120
      %v9566 = vpop.permute.xlu0 %9565
      %9567 = vrot.lane.b32.xlu0 %v9296, 120
      %v9568 = vpop.permute.xlu0 %9567
      %9569 = vrot.lane.b32.xlu0 %v9301, 120
      %v9570 = vpop.permute.xlu0 %9569
      %9571 = vrot.lane.b32.xlu0 %v9304, 120
      %v9572 = vpop.permute.xlu0 %9571
      %9573 = vrot.lane.b32.xlu0 %v9309, 120
      %v9574 = vpop.permute.xlu0 %9573
      %9575 = vrot.lane.b32.xlu0 %v9312, 120
      %v9576 = vpop.permute.xlu0 %9575
      %9577 = vrot.lane.b32.xlu0 %v9317, 120
      %v9578 = vpop.permute.xlu0 %9577
      %9579 = vrot.lane.b32.xlu0 %v9320, 120
      %v9580 = vpop.permute.xlu0 %9579
      %v9613 = vadd.f32 %v9483, %v9518
      %v9614 = vadd.f32 %v9484, %v9520
      %v9615 = vadd.f32 %v9485, %v9522
      %v9616 = vadd.f32 %v9486, %v9524
      %v9617 = vadd.f32 %v9487, %v9526
      %v9618 = vadd.f32 %v9488, %v9528
      %v9619 = vadd.f32 %v9489, %v9530
      %v9620 = vadd.f32 %v9490, %v9532
      %v9621 = vadd.f32 %v9491, %v9534
      %v9622 = vadd.f32 %v9492, %v9536
      %v9623 = vadd.f32 %v9493, %v9538
      %v9624 = vadd.f32 %v9494, %v9540
      %v9625 = vadd.f32 %v9495, %v9542
      %v9626 = vadd.f32 %v9496, %v9544
      %v9627 = vadd.f32 %v9497, %v9546
      %v9628 = vadd.f32 %v9498, %v9548
      %v9629 = vadd.f32 %v9499, %v9550
      %v9630 = vadd.f32 %v9500, %v9552
      %v9631 = vadd.f32 %v9501, %v9554
      %v9632 = vadd.f32 %v9502, %v9556
      %v9633 = vadd.f32 %v9503, %v9558
      %v9634 = vadd.f32 %v9504, %v9560
      %v9635 = vadd.f32 %v9505, %v9562
      %v9636 = vadd.f32 %v9506, %v9564
      %v9637 = vadd.f32 %v9507, %v9566
      %v9638 = vadd.f32 %v9508, %v9568
      %v9639 = vadd.f32 %v9509, %v9570
      %v9640 = vadd.f32 %v9510, %v9572
      %v9641 = vadd.f32 %v9511, %v9574
      %v9642 = vadd.f32 %v9512, %v9576
      %v9643 = vadd.f32 %v9513, %v9578
      %v9644 = vadd.f32 %v9514, %v9580
      %v9645 = vld [vmem:[#allocation2] sm:$0xf0]
      %v9646 = vld [vmem:[#allocation2 + $0x10] sm:$0xf0]
      %v9647 = vld [vmem:[#allocation2 + $0x20] sm:$0xf0]
      %v9648 = vld [vmem:[#allocation2 + $0x30] sm:$0xf0]
      %v9649 = vld [vmem:[#allocation2 + $0x40] sm:$0xf0]
      %v9650 = vld [vmem:[#allocation2 + $0x50] sm:$0xf0]
      %v9651 = vld [vmem:[#allocation2 + $0x60] sm:$0xf0]
      %v9652 = vld [vmem:[#allocation2 + $0x70] sm:$0xf0]
      %v9653 = vld [vmem:[#allocation2 + $0x80] sm:$0xf0]
      %v9654 = vld [vmem:[#allocation2 + $0x90] sm:$0xf0]
      %v9655 = vld [vmem:[#allocation2 + $0xa0] sm:$0xf0]
      %v9656 = vld [vmem:[#allocation2 + $0xb0] sm:$0xf0]
      %v9657 = vld [vmem:[#allocation2 + $0xc0] sm:$0xf0]
      %v9658 = vld [vmem:[#allocation2 + $0xd0] sm:$0xf0]
      %v9659 = vld [vmem:[#allocation2 + $0xe0] sm:$0xf0]
      %v9660 = vld [vmem:[#allocation2 + $0xf0] sm:$0xf0]
      %v9661 = vld [vmem:[#allocation2 + $0x100] sm:$0xf0]
      %v9662 = vld [vmem:[#allocation2 + $0x110] sm:$0xf0]
      %s9663 = scalar_lea.vmem %s7, 12
      %v9664 = vld [vmem:[%s9663] sm:$0xf]
      %v9665 = vld [vmem:[%s9663 + $0x4] sm:$0xf]
      %v9666 = vld [vmem:[%s9663 + $0x8] sm:$0x3]
      %v9703 = vrot.slane %v9645, 4
      %v9704 = vrot.slane %v8734, 4
      %v9705 = vsel %vm1517, %v9703, %v9704
      %v9706 = vrot.slane %v9646, 4
      %v9707 = vrot.slane %v8736, 4
      %v9708 = vsel %vm1517, %v9706, %v9707
      %v9709 = vrot.slane %v9647, 4
      %v9710 = vrot.slane %v8738, 4
      %v9711 = vsel %vm1517, %v9709, %v9710
      %v9712 = vrot.slane %v9648, 4
      %v9713 = vrot.slane %v8740, 4
      %v9714 = vsel %vm1517, %v9712, %v9713
      %v9715 = vrot.slane %v9649, 4
      %v9716 = vrot.slane %v8742, 4
      %v9717 = vsel %vm1517, %v9715, %v9716
      %v9718 = vrot.slane %v9650, 4
      %v9719 = vrot.slane %v8744, 4
      %v9720 = vsel %vm1517, %v9718, %v9719
      %v9721 = vrot.slane %v9651, 4
      %v9722 = vrot.slane %v8746, 4
      %v9723 = vsel %vm1517, %v9721, %v9722
      %v9724 = vrot.slane %v9652, 4
      %v9725 = vrot.slane %v8748, 4
      %v9726 = vsel %vm1517, %v9724, %v9725
      %v9727 = vrot.slane %v9653, 4
      %v9728 = vrot.slane %v8750, 4
      %v9729 = vsel %vm1517, %v9727, %v9728
      %v9730 = vrot.slane %v9654, 4
      %v9731 = vrot.slane %v8752, 4
      %v9732 = vsel %vm1517, %v9730, %v9731
      %v9733 = vrot.slane %v9655, 4
      %v9734 = vrot.slane %v8754, 4
      %v9735 = vsel %vm1517, %v9733, %v9734
      %v9736 = vrot.slane %v9656, 4
      %v9737 = vrot.slane %v8756, 4
      %v9738 = vsel %vm1517, %v9736, %v9737
      %v9739 = vrot.slane %v9657, 4
      %v9740 = vrot.slane %v8758, 4
      %v9741 = vsel %vm1517, %v9739, %v9740
      %v9742 = vrot.slane %v9658, 4
      %v9743 = vrot.slane %v8760, 4
      %v9744 = vsel %vm1517, %v9742, %v9743
      %v9745 = vrot.slane %v9659, 4
      %v9746 = vrot.slane %v8762, 4
      %v9747 = vsel %vm1517, %v9745, %v9746
      %v9748 = vrot.slane %v9660, 4
      %v9749 = vrot.slane %v8764, 4
      %v9750 = vsel %vm1517, %v9748, %v9749
      %v9751 = vrot.slane %v9661, 4
      %v9752 = vrot.slane %v8766, 4
      %v9753 = vsel %vm1517, %v9751, %v9752
      %v9754 = vrot.slane %v9662, 4
      %v9755 = vrot.slane %v8768, 4
      %v9756 = vsel %vm1517, %v9754, %v9755
      %v9760 = vunpack.c.l.b16 %v9664
      %v9761 = vunpack.c.l.b16 %v9665
      %v9762 = vunpack.c.l.b16 %v9666
      %v9763 = vpack.c.b16 %v9761, %v9760
      %v9764 = vpack.c.b16 %v9762, %v9762
      %v9767 = vsel %vm9087, %v9705, 0
      %v9770 = vsel %vm9087, %v9708, 0
      %v9773 = vsel %vm9087, %v9711, 0
      %v9776 = vsel %vm9087, %v9714, 0
      %v9779 = vsel %vm9087, %v9717, 0
      %v9782 = vsel %vm9087, %v9720, 0
      %v9785 = vsel %vm9087, %v9723, 0
      %v9788 = vsel %vm9087, %v9726, 0
      %v9791 = vsel %vm9087, %v9729, 0
      %v9794 = vsel %vm9087, %v9732, 0
      %v9797 = vsel %vm9087, %v9735, 0
      %v9800 = vsel %vm9087, %v9738, 0
      %v9803 = vsel %vm9087, %v9741, 0
      %v9806 = vsel %vm9087, %v9744, 0
      %v9809 = vsel %vm9087, %v9747, 0
      %v9812 = vsel %vm9087, %v9750, 0
      %v9815 = vsel %vm9087, %v9753, 0
      %v9818 = vsel %vm9087, %v9756, 0
      %v9821 = vsel %vm9142, %v9764, 0
      %9823 = vmatprep.subr.bf16.mxu0 0
      %9824 = vmatpush1.bf16.msra.mxu0 %v9763
      %9825 = vmatprep.subr.bf16.mxu0 0
      %9826 = vmatpush1.bf16.msra.mxu0 %v9821
      %9827 = vmatprep.subr.bf16.mxu0 0
      %9828 = vmatpush1.bf16.msra.mxu0 0
      %9829 = vmatprep.subr.bf16.mxu0 0
      %9830 = vmatpush1.bf16.msra.mxu0 0
      %9831 = vmatprep.subr.bf16.mxu0 0
      %9832 = vmatpush1.bf16.msra.mxu0 0
      %9833 = vmatprep.subr.bf16.mxu0 0
      %9834 = vmatpush1.bf16.msra.mxu0 0
      %9835 = vmatprep.subr.bf16.mxu0 0
      %9836 = vmatpush1.bf16.msra.mxu0 0
      %9837 = vmatprep.subr.bf16.mxu0 0
      %9838 = vmatpush1.bf16.msra.mxu0 0
      %9839 = vmatprep.subr.bf16.mxu0 0
      %9840 = vmatpush1.bf16.msra.mxu0 0
      %9841 = vmatprep.subr.bf16.mxu0 0
      %9842 = vmatpush1.bf16.msra.mxu0 0
      %9843 = vmatprep.subr.bf16.mxu0 0
      %9844 = vmatpush1.bf16.msra.mxu0 0
      %9845 = vmatprep.subr.bf16.mxu0 0
      %9846 = vmatpush1.bf16.msra.mxu0 0
      %9847 = vmatprep.subr.bf16.mxu0 0
      %9848 = vmatpush1.bf16.msra.mxu0 0
      %9849 = vmatprep.subr.bf16.mxu0 0
      %9850 = vmatpush1.bf16.msra.mxu0 0
      %9851 = vmatprep.subr.bf16.mxu0 0
      %9852 = vmatpush1.bf16.msra.mxu0 0
      %9853 = vmatprep.subr.bf16.mxu0 0
      %9854 = vmatpush1.bf16.msra.mxu0 0
      %9855 = vmatprep.mubr.bf16.mxu0 0
      %9856 = vmatmul.mubr.bf16.gmra.mrb[0].mxu0 %v9767
      %v9857 = vpop.f32.mrb[0].mxu0
      %v9858 = vadd.f32 0.0, %v9857
      %v9859 = vpop.f32.mrb[0].mxu0
      %v9860 = vpop.f32.mrb[0].mxu0
      %v9861 = vadd.f32 0.0, %v9860
      %v9862 = vpop.f32.mrb[0].mxu0
      %9863 = vmatprep.mubr.bf16.mxu0 0
      %9864 = vmatmul.mubr.bf16.gmra.mrb[0].mxu0 %v9770
      %v9865 = vpop.f32.mrb[0].mxu0
      %v9866 = vadd.f32 0.0, %v9865
      %v9867 = vpop.f32.mrb[0].mxu0
      %v9868 = vpop.f32.mrb[0].mxu0
      %v9869 = vadd.f32 0.0, %v9868
      %v9870 = vpop.f32.mrb[0].mxu0
      %9871 = vmatprep.mubr.bf16.mxu0 0
      %9872 = vmatmul.mubr.bf16.gmra.mrb[0].mxu0 %v9773
      %v9873 = vpop.f32.mrb[0].mxu0
      %v9874 = vadd.f32 0.0, %v9873
      %v9875 = vpop.f32.mrb[0].mxu0
      %v9876 = vpop.f32.mrb[0].mxu0
      %v9877 = vadd.f32 0.0, %v9876
      %v9878 = vpop.f32.mrb[0].mxu0
      %9879 = vmatprep.mubr.bf16.mxu0 0
      %9880 = vmatmul.mubr.bf16.gmra.mrb[0].mxu0 %v9776
      %v9881 = vpop.f32.mrb[0].mxu0
      %v9882 = vadd.f32 0.0, %v9881
      %v9883 = vpop.f32.mrb[0].mxu0
      %v9884 = vpop.f32.mrb[0].mxu0
      %v9885 = vadd.f32 0.0, %v9884
      %v9886 = vpop.f32.mrb[0].mxu0
      %9887 = vmatprep.mubr.bf16.mxu0 0
      %9888 = vmatmul.mubr.bf16.gmra.mrb[0].mxu0 %v9779
      %v9889 = vpop.f32.mrb[0].mxu0
      %v9890 = vadd.f32 0.0, %v9889
      %v9891 = vpop.f32.mrb[0].mxu0
      %v9892 = vpop.f32.mrb[0].mxu0
      %v9893 = vadd.f32 0.0, %v9892
      %v9894 = vpop.f32.mrb[0].mxu0
      %9895 = vmatprep.mubr.bf16.mxu0 0
      %9896 = vmatmul.mubr.bf16.gmra.mrb[0].mxu0 %v9782
      %v9897 = vpop.f32.mrb[0].mxu0
      %v9898 = vadd.f32 0.0, %v9897
      %v9899 = vpop.f32.mrb[0].mxu0
      %v9900 = vpop.f32.mrb[0].mxu0
      %v9901 = vadd.f32 0.0, %v9900
      %v9902 = vpop.f32.mrb[0].mxu0
      %9903 = vmatprep.mubr.bf16.mxu0 0
      %9904 = vmatmul.mubr.bf16.gmra.mrb[0].mxu0 %v9785
      %v9905 = vpop.f32.mrb[0].mxu0
      %v9906 = vadd.f32 0.0, %v9905
      %v9907 = vpop.f32.mrb[0].mxu0
      %v9908 = vpop.f32.mrb[0].mxu0
      %v9909 = vadd.f32 0.0, %v9908
      %v9910 = vpop.f32.mrb[0].mxu0
      %9911 = vmatprep.mubr.bf16.mxu0 0
      %9912 = vmatmul.mubr.bf16.gmra.mrb[0].mxu0 %v9788
      %v9913 = vpop.f32.mrb[0].mxu0
      %v9914 = vadd.f32 0.0, %v9913
      %v9915 = vpop.f32.mrb[0].mxu0
      %v9916 = vpop.f32.mrb[0].mxu0
      %v9917 = vadd.f32 0.0, %v9916
      %v9918 = vpop.f32.mrb[0].mxu0
      %9919 = vmatprep.mubr.bf16.mxu0 0
      %9920 = vmatmul.mubr.bf16.gmra.mrb[0].mxu0 %v9791
      %v9921 = vpop.f32.mrb[0].mxu0
      %v9922 = vadd.f32 0.0, %v9921
      %v9923 = vpop.f32.mrb[0].mxu0
      %v9924 = vpop.f32.mrb[0].mxu0
      %v9925 = vadd.f32 0.0, %v9924
      %v9926 = vpop.f32.mrb[0].mxu0
      %9927 = vmatprep.mubr.bf16.mxu0 0
      %9928 = vmatmul.mubr.bf16.gmra.mrb[0].mxu0 %v9794
      %v9929 = vpop.f32.mrb[0].mxu0
      %v9930 = vadd.f32 0.0, %v9929
      %v9931 = vpop.f32.mrb[0].mxu0
      %v9932 = vpop.f32.mrb[0].mxu0
      %v9933 = vadd.f32 0.0, %v9932
      %v9934 = vpop.f32.mrb[0].mxu0
      %9935 = vmatprep.mubr.bf16.mxu0 0
      %9936 = vmatmul.mubr.bf16.gmra.mrb[0].mxu0 %v9797
      %v9937 = vpop.f32.mrb[0].mxu0
      %v9938 = vadd.f32 0.0, %v9937
      %v9939 = vpop.f32.mrb[0].mxu0
      %v9940 = vpop.f32.mrb[0].mxu0
      %v9941 = vadd.f32 0.0, %v9940
      %v9942 = vpop.f32.mrb[0].mxu0
      %9943 = vmatprep.mubr.bf16.mxu0 0
      %9944 = vmatmul.mubr.bf16.gmra.mrb[0].mxu0 %v9800
      %v9945 = vpop.f32.mrb[0].mxu0
      %v9946 = vadd.f32 0.0, %v9945
      %v9947 = vpop.f32.mrb[0].mxu0
      %v9948 = vpop.f32.mrb[0].mxu0
      %v9949 = vadd.f32 0.0, %v9948
      %v9950 = vpop.f32.mrb[0].mxu0
      %9951 = vmatprep.mubr.bf16.mxu0 0
      %9952 = vmatmul.mubr.bf16.gmra.mrb[0].mxu0 %v9803
      %v9953 = vpop.f32.mrb[0].mxu0
      %v9954 = vadd.f32 0.0, %v9953
      %v9955 = vpop.f32.mrb[0].mxu0
      %v9956 = vpop.f32.mrb[0].mxu0
      %v9957 = vadd.f32 0.0, %v9956
      %v9958 = vpop.f32.mrb[0].mxu0
      %9959 = vmatprep.mubr.bf16.mxu0 0
      %9960 = vmatmul.mubr.bf16.gmra.mrb[0].mxu0 %v9806
      %v9961 = vpop.f32.mrb[0].mxu0
      %v9962 = vadd.f32 0.0, %v9961
      %v9963 = vpop.f32.mrb[0].mxu0
      %v9964 = vpop.f32.mrb[0].mxu0
      %v9965 = vadd.f32 0.0, %v9964
      %v9966 = vpop.f32.mrb[0].mxu0
      %9967 = vmatprep.mubr.bf16.mxu0 0
      %9968 = vmatmul.mubr.bf16.gmra.mrb[0].mxu0 %v9809
      %v9969 = vpop.f32.mrb[0].mxu0
      %v9970 = vadd.f32 0.0, %v9969
      %v9971 = vpop.f32.mrb[0].mxu0
      %v9972 = vpop.f32.mrb[0].mxu0
      %v9973 = vadd.f32 0.0, %v9972
      %v9974 = vpop.f32.mrb[0].mxu0
      %9975 = vmatprep.mubr.bf16.mxu0 0
      %9976 = vmatmul.mubr.bf16.gmra.mrb[0].mxu0 %v9812
      %v9977 = vpop.f32.mrb[0].mxu0
      %v9978 = vadd.f32 0.0, %v9977
      %v9979 = vpop.f32.mrb[0].mxu0
      %v9980 = vpop.f32.mrb[0].mxu0
      %v9981 = vadd.f32 0.0, %v9980
      %v9982 = vpop.f32.mrb[0].mxu0
      %9983 = vmatprep.mubr.bf16.mxu0 0
      %9984 = vmatmul.mubr.bf16.gmra.mrb[0].mxu0 %v9815
      %v9985 = vpop.f32.mrb[0].mxu0
      %v9986 = vadd.f32 0.0, %v9985
      %v9987 = vpop.f32.mrb[0].mxu0
      %v9988 = vpop.f32.mrb[0].mxu0
      %v9989 = vadd.f32 0.0, %v9988
      %v9990 = vpop.f32.mrb[0].mxu0
      %9991 = vmatprep.mubr.bf16.mxu0 0
      %9992 = vmatmul.mubr.bf16.gmra.mrb[0].mxu0 %v9818
      %v9993 = vpop.f32.mrb[0].mxu0
      %v9994 = vadd.f32 0.0, %v9993
      %v9995 = vpop.f32.mrb[0].mxu0
      %v9996 = vpop.f32.mrb[0].mxu0
      %v9997 = vadd.f32 0.0, %v9996
      %v9998 = vpop.f32.mrb[0].mxu0
      %9999 = vdwg.mxu0
      %v10000 = vadd.f32 %v9613, %v9858
      %v10001 = vadd.f32 %v9614, %v9861
      %v10002 = vadd.f32 %v9615, %v9866
      %v10003 = vadd.f32 %v9616, %v9869
      %v10004 = vadd.f32 %v9617, %v9874
      %v10005 = vadd.f32 %v9618, %v9877
      %v10006 = vadd.f32 %v9619, %v9882
      %v10007 = vadd.f32 %v9620, %v9885
      %v10008 = vadd.f32 %v9621, %v9890
      %v10009 = vadd.f32 %v9622, %v9893
      %v10010 = vadd.f32 %v9623, %v9898
      %v10011 = vadd.f32 %v9624, %v9901
      %v10012 = vadd.f32 %v9625, %v9906
      %v10013 = vadd.f32 %v9626, %v9909
      %v10014 = vadd.f32 %v9627, %v9914
      %v10015 = vadd.f32 %v9628, %v9917
      %v10016 = vadd.f32 %v9629, %v9922
      %v10017 = vadd.f32 %v9630, %v9925
      %v10018 = vadd.f32 %v9631, %v9930
      %v10019 = vadd.f32 %v9632, %v9933
      %v10020 = vadd.f32 %v9633, %v9938
      %v10021 = vadd.f32 %v9634, %v9941
      %v10022 = vadd.f32 %v9635, %v9946
      %v10023 = vadd.f32 %v9636, %v9949
      %v10024 = vadd.f32 %v9637, %v9954
      %v10025 = vadd.f32 %v9638, %v9957
      %v10026 = vadd.f32 %v9639, %v9962
      %v10027 = vadd.f32 %v9640, %v9965
      %v10028 = vadd.f32 %v9641, %v9970
      %v10029 = vadd.f32 %v9642, %v9973
      %v10030 = vadd.f32 %v9643, %v9978
      %v10031 = vadd.f32 %v9644, %v9981
      %10064 = vrot.lane.b32.xlu0 %v9866, 124
      %v10065 = vpop.permute.xlu0 %10064
      %10066 = vrot.lane.b32.xlu0 %v9869, 124
      %v10067 = vpop.permute.xlu0 %10066
      %10068 = vrot.lane.b32.xlu0 %v9874, 124
      %v10069 = vpop.permute.xlu0 %10068
      %10070 = vrot.lane.b32.xlu0 %v9877, 124
      %v10071 = vpop.permute.xlu0 %10070
      %10072 = vrot.lane.b32.xlu0 %v9882, 124
      %v10073 = vpop.permute.xlu0 %10072
      %10074 = vrot.lane.b32.xlu0 %v9885, 124
      %v10075 = vpop.permute.xlu0 %10074
      %10076 = vrot.lane.b32.xlu0 %v9890, 124
      %v10077 = vpop.permute.xlu0 %10076
      %10078 = vrot.lane.b32.xlu0 %v9893, 124
      %v10079 = vpop.permute.xlu0 %10078
      %10080 = vrot.lane.b32.xlu0 %v9898, 124
      %v10081 = vpop.permute.xlu0 %10080
      %10082 = vrot.lane.b32.xlu0 %v9901, 124
      %v10083 = vpop.permute.xlu0 %10082
      %10084 = vrot.lane.b32.xlu0 %v9906, 124
      %v10085 = vpop.permute.xlu0 %10084
      %10086 = vrot.lane.b32.xlu0 %v9909, 124
      %v10087 = vpop.permute.xlu0 %10086
      %10088 = vrot.lane.b32.xlu0 %v9914, 124
      %v10089 = vpop.permute.xlu0 %10088
      %10090 = vrot.lane.b32.xlu0 %v9917, 124
      %v10091 = vpop.permute.xlu0 %10090
      %10092 = vrot.lane.b32.xlu0 %v9922, 124
      %v10093 = vpop.permute.xlu0 %10092
      %10094 = vrot.lane.b32.xlu0 %v9925, 124
      %v10095 = vpop.permute.xlu0 %10094
      %10096 = vrot.lane.b32.xlu0 %v9930, 124
      %v10097 = vpop.permute.xlu0 %10096
      %10098 = vrot.lane.b32.xlu0 %v9933, 124
      %v10099 = vpop.permute.xlu0 %10098
      %10100 = vrot.lane.b32.xlu0 %v9938, 124
      %v10101 = vpop.permute.xlu0 %10100
      %10102 = vrot.lane.b32.xlu0 %v9941, 124
      %v10103 = vpop.permute.xlu0 %10102
      %10104 = vrot.lane.b32.xlu0 %v9946, 124
      %v10105 = vpop.permute.xlu0 %10104
      %10106 = vrot.lane.b32.xlu0 %v9949, 124
      %v10107 = vpop.permute.xlu0 %10106
      %10108 = vrot.lane.b32.xlu0 %v9954, 124
      %v10109 = vpop.permute.xlu0 %10108
      %10110 = vrot.lane.b32.xlu0 %v9957, 124
      %v10111 = vpop.permute.xlu0 %10110
      %10112 = vrot.lane.b32.xlu0 %v9962, 124
      %v10113 = vpop.permute.xlu0 %10112
      %10114 = vrot.lane.b32.xlu0 %v9965, 124
      %v10115 = vpop.permute.xlu0 %10114
      %10116 = vrot.lane.b32.xlu0 %v9970, 124
      %v10117 = vpop.permute.xlu0 %10116
      %10118 = vrot.lane.b32.xlu0 %v9973, 124
      %v10119 = vpop.permute.xlu0 %10118
      %10120 = vrot.lane.b32.xlu0 %v9978, 124
      %v10121 = vpop.permute.xlu0 %10120
      %10122 = vrot.lane.b32.xlu0 %v9981, 124
      %v10123 = vpop.permute.xlu0 %10122
      %10124 = vrot.lane.b32.xlu0 %v9986, 124
      %v10125 = vpop.permute.xlu0 %10124
      %10126 = vrot.lane.b32.xlu0 %v9989, 124
      %v10127 = vpop.permute.xlu0 %10126
      %v10160 = vadd.f32 %v10000, %v10065
      %v10161 = vadd.f32 %v10001, %v10067
      %v10162 = vadd.f32 %v10002, %v10069
      %v10163 = vadd.f32 %v10003, %v10071
      %v10164 = vadd.f32 %v10004, %v10073
      %v10165 = vadd.f32 %v10005, %v10075
      %v10166 = vadd.f32 %v10006, %v10077
      %v10167 = vadd.f32 %v10007, %v10079
      %v10168 = vadd.f32 %v10008, %v10081
      %v10169 = vadd.f32 %v10009, %v10083
      %v10170 = vadd.f32 %v10010, %v10085
      %v10171 = vadd.f32 %v10011, %v10087
      %v10172 = vadd.f32 %v10012, %v10089
      %v10173 = vadd.f32 %v10013, %v10091
      %v10174 = vadd.f32 %v10014, %v10093
      %v10175 = vadd.f32 %v10015, %v10095
      %v10176 = vadd.f32 %v10016, %v10097
      %v10177 = vadd.f32 %v10017, %v10099
      %v10178 = vadd.f32 %v10018, %v10101
      %v10179 = vadd.f32 %v10019, %v10103
      %v10180 = vadd.f32 %v10020, %v10105
      %v10181 = vadd.f32 %v10021, %v10107
      %v10182 = vadd.f32 %v10022, %v10109
      %v10183 = vadd.f32 %v10023, %v10111
      %v10184 = vadd.f32 %v10024, %v10113
      %v10185 = vadd.f32 %v10025, %v10115
      %v10186 = vadd.f32 %v10026, %v10117
      %v10187 = vadd.f32 %v10027, %v10119
      %v10188 = vadd.f32 %v10028, %v10121
      %v10189 = vadd.f32 %v10029, %v10123
      %v10190 = vadd.f32 %v10030, %v10125
      %v10191 = vadd.f32 %v10031, %v10127
      %10194 = vrot.lane.b32.xlu0 %v9874, 120
      %v10195 = vpop.permute.xlu0 %10194
      %10196 = vrot.lane.b32.xlu0 %v9877, 120
      %v10197 = vpop.permute.xlu0 %10196
      %10198 = vrot.lane.b32.xlu0 %v9882, 120
      %v10199 = vpop.permute.xlu0 %10198
      %10200 = vrot.lane.b32.xlu0 %v9885, 120
      %v10201 = vpop.permute.xlu0 %10200
      %10202 = vrot.lane.b32.xlu0 %v9890, 120
      %v10203 = vpop.permute.xlu0 %10202
      %10204 = vrot.lane.b32.xlu0 %v9893, 120
      %v10205 = vpop.permute.xlu0 %10204
      %10206 = vrot.lane.b32.xlu0 %v9898, 120
      %v10207 = vpop.permute.xlu0 %10206
      %10208 = vrot.lane.b32.xlu0 %v9901, 120
      %v10209 = vpop.permute.xlu0 %10208
      %10210 = vrot.lane.b32.xlu0 %v9906, 120
      %v10211 = vpop.permute.xlu0 %10210
      %10212 = vrot.lane.b32.xlu0 %v9909, 120
      %v10213 = vpop.permute.xlu0 %10212
      %10214 = vrot.lane.b32.xlu0 %v9914, 120
      %v10215 = vpop.permute.xlu0 %10214
      %10216 = vrot.lane.b32.xlu0 %v9917, 120
      %v10217 = vpop.permute.xlu0 %10216
      %10218 = vrot.lane.b32.xlu0 %v9922, 120
      %v10219 = vpop.permute.xlu0 %10218
      %10220 = vrot.lane.b32.xlu0 %v9925, 120
      %v10221 = vpop.permute.xlu0 %10220
      %10222 = vrot.lane.b32.xlu0 %v9930, 120
      %v10223 = vpop.permute.xlu0 %10222
      %10224 = vrot.lane.b32.xlu0 %v9933, 120
      %v10225 = vpop.permute.xlu0 %10224
      %10226 = vrot.lane.b32.xlu0 %v9938, 120
      %v10227 = vpop.permute.xlu0 %10226
      %10228 = vrot.lane.b32.xlu0 %v9941, 120
      %v10229 = vpop.permute.xlu0 %10228
      %10230 = vrot.lane.b32.xlu0 %v9946, 120
      %v10231 = vpop.permute.xlu0 %10230
      %10232 = vrot.lane.b32.xlu0 %v9949, 120
      %v10233 = vpop.permute.xlu0 %10232
      %10234 = vrot.lane.b32.xlu0 %v9954, 120
      %v10235 = vpop.permute.xlu0 %10234
      %10236 = vrot.lane.b32.xlu0 %v9957, 120
      %v10237 = vpop.permute.xlu0 %10236
      %10238 = vrot.lane.b32.xlu0 %v9962, 120
      %v10239 = vpop.permute.xlu0 %10238
      %10240 = vrot.lane.b32.xlu0 %v9965, 120
      %v10241 = vpop.permute.xlu0 %10240
      %10242 = vrot.lane.b32.xlu0 %v9970, 120
      %v10243 = vpop.permute.xlu0 %10242
      %10244 = vrot.lane.b32.xlu0 %v9973, 120
      %v10245 = vpop.permute.xlu0 %10244
      %10246 = vrot.lane.b32.xlu0 %v9978, 120
      %v10247 = vpop.permute.xlu0 %10246
      %10248 = vrot.lane.b32.xlu0 %v9981, 120
      %v10249 = vpop.permute.xlu0 %10248
      %10250 = vrot.lane.b32.xlu0 %v9986, 120
      %v10251 = vpop.permute.xlu0 %10250
      %10252 = vrot.lane.b32.xlu0 %v9989, 120
      %v10253 = vpop.permute.xlu0 %10252
      %10254 = vrot.lane.b32.xlu0 %v9994, 120
      %v10255 = vpop.permute.xlu0 %10254
      %10256 = vrot.lane.b32.xlu0 %v9997, 120
      %v10257 = vpop.permute.xlu0 %10256
      %v10290 = vadd.f32 %v10160, %v10195
      %v10291 = vadd.f32 %v10161, %v10197
      %v10292 = vadd.f32 %v10162, %v10199
      %v10293 = vadd.f32 %v10163, %v10201
      %v10294 = vadd.f32 %v10164, %v10203
      %v10295 = vadd.f32 %v10165, %v10205
      %v10296 = vadd.f32 %v10166, %v10207
      %v10297 = vadd.f32 %v10167, %v10209
      %v10298 = vadd.f32 %v10168, %v10211
      %v10299 = vadd.f32 %v10169, %v10213
      %v10300 = vadd.f32 %v10170, %v10215
      %v10301 = vadd.f32 %v10171, %v10217
      %v10302 = vadd.f32 %v10172, %v10219
      %v10303 = vadd.f32 %v10173, %v10221
      %v10304 = vadd.f32 %v10174, %v10223
      %v10305 = vadd.f32 %v10175, %v10225
      %v10306 = vadd.f32 %v10176, %v10227
      %v10307 = vadd.f32 %v10177, %v10229
      %v10308 = vadd.f32 %v10178, %v10231
      %v10309 = vadd.f32 %v10179, %v10233
      %v10310 = vadd.f32 %v10180, %v10235
      %v10311 = vadd.f32 %v10181, %v10237
      %v10312 = vadd.f32 %v10182, %v10239
      %v10313 = vadd.f32 %v10183, %v10241
      %v10314 = vadd.f32 %v10184, %v10243
      %v10315 = vadd.f32 %v10185, %v10245
      %v10316 = vadd.f32 %v10186, %v10247
      %v10317 = vadd.f32 %v10187, %v10249
      %v10318 = vadd.f32 %v10188, %v10251
      %v10319 = vadd.f32 %v10189, %v10253
      %v10320 = vadd.f32 %v10190, %v10255
      %v10321 = vadd.f32 %v10191, %v10257
      %v10322 = vld [vmem:[#allocation2 + $0x8] sm:$0x1f]
      %v10323 = vld [vmem:[#allocation2 + $0x18] sm:$0x1f]
      %v10324 = vld [vmem:[#allocation2 + $0x28] sm:$0x1f]
      %v10325 = vld [vmem:[#allocation2 + $0x38] sm:$0x1f]
      %v10326 = vld [vmem:[#allocation2 + $0x48] sm:$0x1f]
      %v10327 = vld [vmem:[#allocation2 + $0x58] sm:$0x1f]
      %v10328 = vld [vmem:[#allocation2 + $0x68] sm:$0x1f]
      %v10329 = vld [vmem:[#allocation2 + $0x78] sm:$0x1f]
      %v10330 = vld [vmem:[#allocation2 + $0x88] sm:$0x1f]
      %v10331 = vld [vmem:[#allocation2 + $0x98] sm:$0x1f]
      %v10332 = vld [vmem:[#allocation2 + $0xa8] sm:$0x1f]
      %v10333 = vld [vmem:[#allocation2 + $0xb8] sm:$0x1f]
      %v10334 = vld [vmem:[#allocation2 + $0xc8] sm:$0x1f]
      %v10335 = vld [vmem:[#allocation2 + $0xd8] sm:$0x1f]
      %v10336 = vld [vmem:[#allocation2 + $0xe8] sm:$0x1f]
      %v10337 = vld [vmem:[#allocation2 + $0xf8] sm:$0x1f]
      %v10338 = vld [vmem:[#allocation2 + $0x108] sm:$0x1f]
      %v10339 = vld [vmem:[#allocation2 + $0x118] sm:$0x1f]
      %s10340 = scalar_lea.vmem %s7, 24
      %v10341 = vld [vmem:[%s10340] sm:$0xf]
      %v10342 = vld [vmem:[%s10340 + $0x4] sm:$0xf]
      %v10343 = vld [vmem:[%s10340 + $0x8] sm:$0x3]
      %v10345 = vshrl.u32 %v9645, 16
      %v10347 = vrot.slane %v10345, 4
      %v10348 = vshll.u32 %v9645, 16
      %v10350 = vrot.slane %v10348, 5
      %v10351 = vor.u32 %v10347, %v10350
      %v10353 = vshrl.u32 %v10322, 16
      %v10355 = vrot.slane %v10353, 4
      %v10356 = vshll.u32 %v10322, 16
      %v10358 = vrot.slane %v10356, 5
      %v10359 = vor.u32 %v10355, %v10358
      %v10360 = vsel %vm2148, %v10351, %v10359
      %v10362 = vshrl.u32 %v9646, 16
      %v10364 = vrot.slane %v10362, 4
      %v10365 = vshll.u32 %v9646, 16
      %v10367 = vrot.slane %v10365, 5
      %v10368 = vor.u32 %v10364, %v10367
      %v10370 = vshrl.u32 %v10323, 16
      %v10372 = vrot.slane %v10370, 4
      %v10373 = vshll.u32 %v10323, 16
      %v10375 = vrot.slane %v10373, 5
      %v10376 = vor.u32 %v10372, %v10375
      %v10377 = vsel %vm2148, %v10368, %v10376
      %v10379 = vshrl.u32 %v9647, 16
      %v10381 = vrot.slane %v10379, 4
      %v10382 = vshll.u32 %v9647, 16
      %v10384 = vrot.slane %v10382, 5
      %v10385 = vor.u32 %v10381, %v10384
      %v10387 = vshrl.u32 %v10324, 16
      %v10389 = vrot.slane %v10387, 4
      %v10390 = vshll.u32 %v10324, 16
      %v10392 = vrot.slane %v10390, 5
      %v10393 = vor.u32 %v10389, %v10392
      %v10394 = vsel %vm2148, %v10385, %v10393
      %v10396 = vshrl.u32 %v9648, 16
      %v10398 = vrot.slane %v10396, 4
      %v10399 = vshll.u32 %v9648, 16
      %v10401 = vrot.slane %v10399, 5
      %v10402 = vor.u32 %v10398, %v10401
      %v10404 = vshrl.u32 %v10325, 16
      %v10406 = vrot.slane %v10404, 4
      %v10407 = vshll.u32 %v10325, 16
      %v10409 = vrot.slane %v10407, 5
      %v10410 = vor.u32 %v10406, %v10409
      %v10411 = vsel %vm2148, %v10402, %v10410
      %v10413 = vshrl.u32 %v9649, 16
      %v10415 = vrot.slane %v10413, 4
      %v10416 = vshll.u32 %v9649, 16
      %v10418 = vrot.slane %v10416, 5
      %v10419 = vor.u32 %v10415, %v10418
      %v10421 = vshrl.u32 %v10326, 16
      %v10423 = vrot.slane %v10421, 4
      %v10424 = vshll.u32 %v10326, 16
      %v10426 = vrot.slane %v10424, 5
      %v10427 = vor.u32 %v10423, %v10426
      %v10428 = vsel %vm2148, %v10419, %v10427
      %v10430 = vshrl.u32 %v9650, 16
      %v10432 = vrot.slane %v10430, 4
      %v10433 = vshll.u32 %v9650, 16
      %v10435 = vrot.slane %v10433, 5
      %v10436 = vor.u32 %v10432, %v10435
      %v10438 = vshrl.u32 %v10327, 16
      %v10440 = vrot.slane %v10438, 4
      %v10441 = vshll.u32 %v10327, 16
      %v10443 = vrot.slane %v10441, 5
      %v10444 = vor.u32 %v10440, %v10443
      %v10445 = vsel %vm2148, %v10436, %v10444
      %v10447 = vshrl.u32 %v9651, 16
      %v10449 = vrot.slane %v10447, 4
      %v10450 = vshll.u32 %v9651, 16
      %v10452 = vrot.slane %v10450, 5
      %v10453 = vor.u32 %v10449, %v10452
      %v10455 = vshrl.u32 %v10328, 16
      %v10457 = vrot.slane %v10455, 4
      %v10458 = vshll.u32 %v10328, 16
      %v10460 = vrot.slane %v10458, 5
      %v10461 = vor.u32 %v10457, %v10460
      %v10462 = vsel %vm2148, %v10453, %v10461
      %v10464 = vshrl.u32 %v9652, 16
      %v10466 = vrot.slane %v10464, 4
      %v10467 = vshll.u32 %v9652, 16
      %v10469 = vrot.slane %v10467, 5
      %v10470 = vor.u32 %v10466, %v10469
      %v10472 = vshrl.u32 %v10329, 16
      %v10474 = vrot.slane %v10472, 4
      %v10475 = vshll.u32 %v10329, 16
      %v10477 = vrot.slane %v10475, 5
      %v10478 = vor.u32 %v10474, %v10477
      %v10479 = vsel %vm2148, %v10470, %v10478
      %v10481 = vshrl.u32 %v9653, 16
      %v10483 = vrot.slane %v10481, 4
      %v10484 = vshll.u32 %v9653, 16
      %v10486 = vrot.slane %v10484, 5
      %v10487 = vor.u32 %v10483, %v10486
      %v10489 = vshrl.u32 %v10330, 16
      %v10491 = vrot.slane %v10489, 4
      %v10492 = vshll.u32 %v10330, 16
      %v10494 = vrot.slane %v10492, 5
      %v10495 = vor.u32 %v10491, %v10494
      %v10496 = vsel %vm2148, %v10487, %v10495
      %v10498 = vshrl.u32 %v9654, 16
      %v10500 = vrot.slane %v10498, 4
      %v10501 = vshll.u32 %v9654, 16
      %v10503 = vrot.slane %v10501, 5
      %v10504 = vor.u32 %v10500, %v10503
      %v10506 = vshrl.u32 %v10331, 16
      %v10508 = vrot.slane %v10506, 4
      %v10509 = vshll.u32 %v10331, 16
      %v10511 = vrot.slane %v10509, 5
      %v10512 = vor.u32 %v10508, %v10511
      %v10513 = vsel %vm2148, %v10504, %v10512
      %v10515 = vshrl.u32 %v9655, 16
      %v10517 = vrot.slane %v10515, 4
      %v10518 = vshll.u32 %v9655, 16
      %v10520 = vrot.slane %v10518, 5
      %v10521 = vor.u32 %v10517, %v10520
      %v10523 = vshrl.u32 %v10332, 16
      %v10525 = vrot.slane %v10523, 4
      %v10526 = vshll.u32 %v10332, 16
      %v10528 = vrot.slane %v10526, 5
      %v10529 = vor.u32 %v10525, %v10528
      %v10530 = vsel %vm2148, %v10521, %v10529
      %v10532 = vshrl.u32 %v9656, 16
      %v10534 = vrot.slane %v10532, 4
      %v10535 = vshll.u32 %v9656, 16
      %v10537 = vrot.slane %v10535, 5
      %v10538 = vor.u32 %v10534, %v10537
      %v10540 = vshrl.u32 %v10333, 16
      %v10542 = vrot.slane %v10540, 4
      %v10543 = vshll.u32 %v10333, 16
      %v10545 = vrot.slane %v10543, 5
      %v10546 = vor.u32 %v10542, %v10545
      %v10547 = vsel %vm2148, %v10538, %v10546
      %v10549 = vshrl.u32 %v9657, 16
      %v10551 = vrot.slane %v10549, 4
      %v10552 = vshll.u32 %v9657, 16
      %v10554 = vrot.slane %v10552, 5
      %v10555 = vor.u32 %v10551, %v10554
      %v10557 = vshrl.u32 %v10334, 16
      %v10559 = vrot.slane %v10557, 4
      %v10560 = vshll.u32 %v10334, 16
      %v10562 = vrot.slane %v10560, 5
      %v10563 = vor.u32 %v10559, %v10562
      %v10564 = vsel %vm2148, %v10555, %v10563
      %v10566 = vshrl.u32 %v9658, 16
      %v10568 = vrot.slane %v10566, 4
      %v10569 = vshll.u32 %v9658, 16
      %v10571 = vrot.slane %v10569, 5
      %v10572 = vor.u32 %v10568, %v10571
      %v10574 = vshrl.u32 %v10335, 16
      %v10576 = vrot.slane %v10574, 4
      %v10577 = vshll.u32 %v10335, 16
      %v10579 = vrot.slane %v10577, 5
      %v10580 = vor.u32 %v10576, %v10579
      %v10581 = vsel %vm2148, %v10572, %v10580
      %v10583 = vshrl.u32 %v9659, 16
      %v10585 = vrot.slane %v10583, 4
      %v10586 = vshll.u32 %v9659, 16
      %v10588 = vrot.slane %v10586, 5
      %v10589 = vor.u32 %v10585, %v10588
      %v10591 = vshrl.u32 %v10336, 16
      %v10593 = vrot.slane %v10591, 4
      %v10594 = vshll.u32 %v10336, 16
      %v10596 = vrot.slane %v10594, 5
      %v10597 = vor.u32 %v10593, %v10596
      %v10598 = vsel %vm2148, %v10589, %v10597
      %v10600 = vshrl.u32 %v9660, 16
      %v10602 = vrot.slane %v10600, 4
      %v10603 = vshll.u32 %v9660, 16
      %v10605 = vrot.slane %v10603, 5
      %v10606 = vor.u32 %v10602, %v10605
      %v10608 = vshrl.u32 %v10337, 16
      %v10610 = vrot.slane %v10608, 4
      %v10611 = vshll.u32 %v10337, 16
      %v10613 = vrot.slane %v10611, 5
      %v10614 = vor.u32 %v10610, %v10613
      %v10615 = vsel %vm2148, %v10606, %v10614
      %v10617 = vshrl.u32 %v9661, 16
      %v10619 = vrot.slane %v10617, 4
      %v10620 = vshll.u32 %v9661, 16
      %v10622 = vrot.slane %v10620, 5
      %v10623 = vor.u32 %v10619, %v10622
      %v10625 = vshrl.u32 %v10338, 16
      %v10627 = vrot.slane %v10625, 4
      %v10628 = vshll.u32 %v10338, 16
      %v10630 = vrot.slane %v10628, 5
      %v10631 = vor.u32 %v10627, %v10630
      %v10632 = vsel %vm2148, %v10623, %v10631
      %v10634 = vshrl.u32 %v9662, 16
      %v10636 = vrot.slane %v10634, 4
      %v10637 = vshll.u32 %v9662, 16
      %v10639 = vrot.slane %v10637, 5
      %v10640 = vor.u32 %v10636, %v10639
      %v10642 = vshrl.u32 %v10339, 16
      %v10644 = vrot.slane %v10642, 4
      %v10645 = vshll.u32 %v10339, 16
      %v10647 = vrot.slane %v10645, 5
      %v10648 = vor.u32 %v10644, %v10647
      %v10649 = vsel %vm2148, %v10640, %v10648
      %v10653 = vunpack.c.l.b16 %v10341
      %v10654 = vunpack.c.l.b16 %v10342
      %v10655 = vunpack.c.l.b16 %v10343
      %v10656 = vpack.c.b16 %v10654, %v10653
      %v10657 = vpack.c.b16 %v10655, %v10655
      %v10660 = vsel %vm9087, %v10360, 0
      %v10663 = vsel %vm9087, %v10377, 0
      %v10666 = vsel %vm9087, %v10394, 0
      %v10669 = vsel %vm9087, %v10411, 0
      %v10672 = vsel %vm9087, %v10428, 0
      %v10675 = vsel %vm9087, %v10445, 0
      %v10678 = vsel %vm9087, %v10462, 0
      %v10681 = vsel %vm9087, %v10479, 0
      %v10684 = vsel %vm9087, %v10496, 0
      %v10687 = vsel %vm9087, %v10513, 0
      %v10690 = vsel %vm9087, %v10530, 0
      %v10693 = vsel %vm9087, %v10547, 0
      %v10696 = vsel %vm9087, %v10564, 0
      %v10699 = vsel %vm9087, %v10581, 0
      %v10702 = vsel %vm9087, %v10598, 0
      %v10705 = vsel %vm9087, %v10615, 0
      %v10708 = vsel %vm9087, %v10632, 0
      %v10711 = vsel %vm9087, %v10649, 0
      %v10714 = vsel %vm9142, %v10657, 0
      %10716 = vmatprep.subr.bf16.mxu0 0
      %10717 = vmatpush1.bf16.msra.mxu0 %v10656
      %10718 = vmatprep.subr.bf16.mxu0 0
      %10719 = vmatpush1.bf16.msra.mxu0 %v10714
      %10720 = vmatprep.subr.bf16.mxu0 0
      %10721 = vmatpush1.bf16.msra.mxu0 0
      %10722 = vmatprep.subr.bf16.mxu0 0
      %10723 = vmatpush1.bf16.msra.mxu0 0
      %10724 = vmatprep.subr.bf16.mxu0 0
      %10725 = vmatpush1.bf16.msra.mxu0 0
      %10726 = vmatprep.subr.bf16.mxu0 0
      %10727 = vmatpush1.bf16.msra.mxu0 0
      %10728 = vmatprep.subr.bf16.mxu0 0
      %10729 = vmatpush1.bf16.msra.mxu0 0
      %10730 = vmatprep.subr.bf16.mxu0 0
      %10731 = vmatpush1.bf16.msra.mxu0 0
      %10732 = vmatprep.subr.bf16.mxu0 0
      %10733 = vmatpush1.bf16.msra.mxu0 0
      %10734 = vmatprep.subr.bf16.mxu0 0
      %10735 = vmatpush1.bf16.msra.mxu0 0
      %10736 = vmatprep.subr.bf16.mxu0 0
      %10737 = vmatpush1.bf16.msra.mxu0 0
      %10738 = vmatprep.subr.bf16.mxu0 0
      %10739 = vmatpush1.bf16.msra.mxu0 0
      %10740 = vmatprep.subr.bf16.mxu0 0
      %10741 = vmatpush1.bf16.msra.mxu0 0
      %10742 = vmatprep.subr.bf16.mxu0 0
      %10743 = vmatpush1.bf16.msra.mxu0 0
      %10744 = vmatprep.subr.bf16.mxu0 0
      %10745 = vmatpush1.bf16.msra.mxu0 0
      %10746 = vmatprep.subr.bf16.mxu0 0
      %10747 = vmatpush1.bf16.msra.mxu0 0
      %10748 = vmatprep.mubr.bf16.mxu0 0
      %10749 = vmatmul.mubr.bf16.gmra.mrb[0].mxu0 %v10660
      %v10750 = vpop.f32.mrb[0].mxu0
      %v10751 = vadd.f32 0.0, %v10750
      %v10752 = vpop.f32.mrb[0].mxu0
      %v10753 = vpop.f32.mrb[0].mxu0
      %v10754 = vadd.f32 0.0, %v10753
      %v10755 = vpop.f32.mrb[0].mxu0
      %10756 = vmatprep.mubr.bf16.mxu0 0
      %10757 = vmatmul.mubr.bf16.gmra.mrb[0].mxu0 %v10663
      %v10758 = vpop.f32.mrb[0].mxu0
      %v10759 = vadd.f32 0.0, %v10758
      %v10760 = vpop.f32.mrb[0].mxu0
      %v10761 = vpop.f32.mrb[0].mxu0
      %v10762 = vadd.f32 0.0, %v10761
      %v10763 = vpop.f32.mrb[0].mxu0
      %10764 = vmatprep.mubr.bf16.mxu0 0
      %10765 = vmatmul.mubr.bf16.gmra.mrb[0].mxu0 %v10666
      %v10766 = vpop.f32.mrb[0].mxu0
      %v10767 = vadd.f32 0.0, %v10766
      %v10768 = vpop.f32.mrb[0].mxu0
      %v10769 = vpop.f32.mrb[0].mxu0
      %v10770 = vadd.f32 0.0, %v10769
      %v10771 = vpop.f32.mrb[0].mxu0
      %10772 = vmatprep.mubr.bf16.mxu0 0
      %10773 = vmatmul.mubr.bf16.gmra.mrb[0].mxu0 %v10669
      %v10774 = vpop.f32.mrb[0].mxu0
      %v10775 = vadd.f32 0.0, %v10774
      %v10776 = vpop.f32.mrb[0].mxu0
      %v10777 = vpop.f32.mrb[0].mxu0
      %v10778 = vadd.f32 0.0, %v10777
      %v10779 = vpop.f32.mrb[0].mxu0
      %10780 = vmatprep.mubr.bf16.mxu0 0
      %10781 = vmatmul.mubr.bf16.gmra.mrb[0].mxu0 %v10672
      %v10782 = vpop.f32.mrb[0].mxu0
      %v10783 = vadd.f32 0.0, %v10782
      %v10784 = vpop.f32.mrb[0].mxu0
      %v10785 = vpop.f32.mrb[0].mxu0
      %v10786 = vadd.f32 0.0, %v10785
      %v10787 = vpop.f32.mrb[0].mxu0
      %10788 = vmatprep.mubr.bf16.mxu0 0
      %10789 = vmatmul.mubr.bf16.gmra.mrb[0].mxu0 %v10675
      %v10790 = vpop.f32.mrb[0].mxu0
      %v10791 = vadd.f32 0.0, %v10790
      %v10792 = vpop.f32.mrb[0].mxu0
      %v10793 = vpop.f32.mrb[0].mxu0
      %v10794 = vadd.f32 0.0, %v10793
      %v10795 = vpop.f32.mrb[0].mxu0
      %10796 = vmatprep.mubr.bf16.mxu0 0
      %10797 = vmatmul.mubr.bf16.gmra.mrb[0].mxu0 %v10678
      %v10798 = vpop.f32.mrb[0].mxu0
      %v10799 = vadd.f32 0.0, %v10798
      %v10800 = vpop.f32.mrb[0].mxu0
      %v10801 = vpop.f32.mrb[0].mxu0
      %v10802 = vadd.f32 0.0, %v10801
      %v10803 = vpop.f32.mrb[0].mxu0
      %10804 = vmatprep.mubr.bf16.mxu0 0
      %10805 = vmatmul.mubr.bf16.gmra.mrb[0].mxu0 %v10681
      %v10806 = vpop.f32.mrb[0].mxu0
      %v10807 = vadd.f32 0.0, %v10806
      %v10808 = vpop.f32.mrb[0].mxu0
      %v10809 = vpop.f32.mrb[0].mxu0
      %v10810 = vadd.f32 0.0, %v10809
      %v10811 = vpop.f32.mrb[0].mxu0
      %10812 = vmatprep.mubr.bf16.mxu0 0
      %10813 = vmatmul.mubr.bf16.gmra.mrb[0].mxu0 %v10684
      %v10814 = vpop.f32.mrb[0].mxu0
      %v10815 = vadd.f32 0.0, %v10814
      %v10816 = vpop.f32.mrb[0].mxu0
      %v10817 = vpop.f32.mrb[0].mxu0
      %v10818 = vadd.f32 0.0, %v10817
      %v10819 = vpop.f32.mrb[0].mxu0
      %10820 = vmatprep.mubr.bf16.mxu0 0
      %10821 = vmatmul.mubr.bf16.gmra.mrb[0].mxu0 %v10687
      %v10822 = vpop.f32.mrb[0].mxu0
      %v10823 = vadd.f32 0.0, %v10822
      %v10824 = vpop.f32.mrb[0].mxu0
      %v10825 = vpop.f32.mrb[0].mxu0
      %v10826 = vadd.f32 0.0, %v10825
      %v10827 = vpop.f32.mrb[0].mxu0
      %10828 = vmatprep.mubr.bf16.mxu0 0
      %10829 = vmatmul.mubr.bf16.gmra.mrb[0].mxu0 %v10690
      %v10830 = vpop.f32.mrb[0].mxu0
      %v10831 = vadd.f32 0.0, %v10830
      %v10832 = vpop.f32.mrb[0].mxu0
      %v10833 = vpop.f32.mrb[0].mxu0
      %v10834 = vadd.f32 0.0, %v10833
      %v10835 = vpop.f32.mrb[0].mxu0
      %10836 = vmatprep.mubr.bf16.mxu0 0
      %10837 = vmatmul.mubr.bf16.gmra.mrb[0].mxu0 %v10693
      %v10838 = vpop.f32.mrb[0].mxu0
      %v10839 = vadd.f32 0.0, %v10838
      %v10840 = vpop.f32.mrb[0].mxu0
      %v10841 = vpop.f32.mrb[0].mxu0
      %v10842 = vadd.f32 0.0, %v10841
      %v10843 = vpop.f32.mrb[0].mxu0
      %10844 = vmatprep.mubr.bf16.mxu0 0
      %10845 = vmatmul.mubr.bf16.gmra.mrb[0].mxu0 %v10696
      %v10846 = vpop.f32.mrb[0].mxu0
      %v10847 = vadd.f32 0.0, %v10846
      %v10848 = vpop.f32.mrb[0].mxu0
      %v10849 = vpop.f32.mrb[0].mxu0
      %v10850 = vadd.f32 0.0, %v10849
      %v10851 = vpop.f32.mrb[0].mxu0
      %10852 = vmatprep.mubr.bf16.mxu0 0
      %10853 = vmatmul.mubr.bf16.gmra.mrb[0].mxu0 %v10699
      %v10854 = vpop.f32.mrb[0].mxu0
      %v10855 = vadd.f32 0.0, %v10854
      %v10856 = vpop.f32.mrb[0].mxu0
      %v10857 = vpop.f32.mrb[0].mxu0
      %v10858 = vadd.f32 0.0, %v10857
      %v10859 = vpop.f32.mrb[0].mxu0
      %10860 = vmatprep.mubr.bf16.mxu0 0
      %10861 = vmatmul.mubr.bf16.gmra.mrb[0].mxu0 %v10702
      %v10862 = vpop.f32.mrb[0].mxu0
      %v10863 = vadd.f32 0.0, %v10862
      %v10864 = vpop.f32.mrb[0].mxu0
      %v10865 = vpop.f32.mrb[0].mxu0
      %v10866 = vadd.f32 0.0, %v10865
      %v10867 = vpop.f32.mrb[0].mxu0
      %10868 = vmatprep.mubr.bf16.mxu0 0
      %10869 = vmatmul.mubr.bf16.gmra.mrb[0].mxu0 %v10705
      %v10870 = vpop.f32.mrb[0].mxu0
      %v10871 = vadd.f32 0.0, %v10870
      %v10872 = vpop.f32.mrb[0].mxu0
      %v10873 = vpop.f32.mrb[0].mxu0
      %v10874 = vadd.f32 0.0, %v10873
      %v10875 = vpop.f32.mrb[0].mxu0
      %10876 = vmatprep.mubr.bf16.mxu0 0
      %10877 = vmatmul.mubr.bf16.gmra.mrb[0].mxu0 %v10708
      %v10878 = vpop.f32.mrb[0].mxu0
      %v10879 = vadd.f32 0.0, %v10878
      %v10880 = vpop.f32.mrb[0].mxu0
      %v10881 = vpop.f32.mrb[0].mxu0
      %v10882 = vadd.f32 0.0, %v10881
      %v10883 = vpop.f32.mrb[0].mxu0
      %10884 = vmatprep.mubr.bf16.mxu0 0
      %10885 = vmatmul.mubr.bf16.gmra.mrb[0].mxu0 %v10711
      %v10886 = vpop.f32.mrb[0].mxu0
      %v10887 = vadd.f32 0.0, %v10886
      %v10888 = vpop.f32.mrb[0].mxu0
      %v10889 = vpop.f32.mrb[0].mxu0
      %v10890 = vadd.f32 0.0, %v10889
      %v10891 = vpop.f32.mrb[0].mxu0
      %10892 = vdwg.mxu0
      %v10893 = vadd.f32 %v10290, %v10751
      %v10894 = vadd.f32 %v10291, %v10754
      %v10895 = vadd.f32 %v10292, %v10759
      %v10896 = vadd.f32 %v10293, %v10762
      %v10897 = vadd.f32 %v10294, %v10767
      %v10898 = vadd.f32 %v10295, %v10770
      %v10899 = vadd.f32 %v10296, %v10775
      %v10900 = vadd.f32 %v10297, %v10778
      %v10901 = vadd.f32 %v10298, %v10783
      %v10902 = vadd.f32 %v10299, %v10786
      %v10903 = vadd.f32 %v10300, %v10791
      %v10904 = vadd.f32 %v10301, %v10794
      %v10905 = vadd.f32 %v10302, %v10799
      %v10906 = vadd.f32 %v10303, %v10802
      %v10907 = vadd.f32 %v10304, %v10807
      %v10908 = vadd.f32 %v10305, %v10810
      %v10909 = vadd.f32 %v10306, %v10815
      %v10910 = vadd.f32 %v10307, %v10818
      %v10911 = vadd.f32 %v10308, %v10823
      %v10912 = vadd.f32 %v10309, %v10826
      %v10913 = vadd.f32 %v10310, %v10831
      %v10914 = vadd.f32 %v10311, %v10834
      %v10915 = vadd.f32 %v10312, %v10839
      %v10916 = vadd.f32 %v10313, %v10842
      %v10917 = vadd.f32 %v10314, %v10847
      %v10918 = vadd.f32 %v10315, %v10850
      %v10919 = vadd.f32 %v10316, %v10855
      %v10920 = vadd.f32 %v10317, %v10858
      %v10921 = vadd.f32 %v10318, %v10863
      %v10922 = vadd.f32 %v10319, %v10866
      %v10923 = vadd.f32 %v10320, %v10871
      %v10924 = vadd.f32 %v10321, %v10874
      %10957 = vrot.lane.b32.xlu0 %v10759, 124
      %v10958 = vpop.permute.xlu0 %10957
      %10959 = vrot.lane.b32.xlu0 %v10762, 124
      %v10960 = vpop.permute.xlu0 %10959
      %10961 = vrot.lane.b32.xlu0 %v10767, 124
      %v10962 = vpop.permute.xlu0 %10961
      %10963 = vrot.lane.b32.xlu0 %v10770, 124
      %v10964 = vpop.permute.xlu0 %10963
      %10965 = vrot.lane.b32.xlu0 %v10775, 124
      %v10966 = vpop.permute.xlu0 %10965
      %10967 = vrot.lane.b32.xlu0 %v10778, 124
      %v10968 = vpop.permute.xlu0 %10967
      %10969 = vrot.lane.b32.xlu0 %v10783, 124
      %v10970 = vpop.permute.xlu0 %10969
      %10971 = vrot.lane.b32.xlu0 %v10786, 124
      %v10972 = vpop.permute.xlu0 %10971
      %10973 = vrot.lane.b32.xlu0 %v10791, 124
      %v10974 = vpop.permute.xlu0 %10973
      %10975 = vrot.lane.b32.xlu0 %v10794, 124
      %v10976 = vpop.permute.xlu0 %10975
      %10977 = vrot.lane.b32.xlu0 %v10799, 124
      %v10978 = vpop.permute.xlu0 %10977
      %10979 = vrot.lane.b32.xlu0 %v10802, 124
      %v10980 = vpop.permute.xlu0 %10979
      %10981 = vrot.lane.b32.xlu0 %v10807, 124
      %v10982 = vpop.permute.xlu0 %10981
      %10983 = vrot.lane.b32.xlu0 %v10810, 124
      %v10984 = vpop.permute.xlu0 %10983
      %10985 = vrot.lane.b32.xlu0 %v10815, 124
      %v10986 = vpop.permute.xlu0 %10985
      %10987 = vrot.lane.b32.xlu0 %v10818, 124
      %v10988 = vpop.permute.xlu0 %10987
      %10989 = vrot.lane.b32.xlu0 %v10823, 124
      %v10990 = vpop.permute.xlu0 %10989
      %10991 = vrot.lane.b32.xlu0 %v10826, 124
      %v10992 = vpop.permute.xlu0 %10991
      %10993 = vrot.lane.b32.xlu0 %v10831, 124
      %v10994 = vpop.permute.xlu0 %10993
      %10995 = vrot.lane.b32.xlu0 %v10834, 124
      %v10996 = vpop.permute.xlu0 %10995
      %10997 = vrot.lane.b32.xlu0 %v10839, 124
      %v10998 = vpop.permute.xlu0 %10997
      %10999 = vrot.lane.b32.xlu0 %v10842, 124
      %v11000 = vpop.permute.xlu0 %10999
      %11001 = vrot.lane.b32.xlu0 %v10847, 124
      %v11002 = vpop.permute.xlu0 %11001
      %11003 = vrot.lane.b32.xlu0 %v10850, 124
      %v11004 = vpop.permute.xlu0 %11003
      %11005 = vrot.lane.b32.xlu0 %v10855, 124
      %v11006 = vpop.permute.xlu0 %11005
      %11007 = vrot.lane.b32.xlu0 %v10858, 124
      %v11008 = vpop.permute.xlu0 %11007
      %11009 = vrot.lane.b32.xlu0 %v10863, 124
      %v11010 = vpop.permute.xlu0 %11009
      %11011 = vrot.lane.b32.xlu0 %v10866, 124
      %v11012 = vpop.permute.xlu0 %11011
      %11013 = vrot.lane.b32.xlu0 %v10871, 124
      %v11014 = vpop.permute.xlu0 %11013
      %11015 = vrot.lane.b32.xlu0 %v10874, 124
      %v11016 = vpop.permute.xlu0 %11015
      %11017 = vrot.lane.b32.xlu0 %v10879, 124
      %v11018 = vpop.permute.xlu0 %11017
      %11019 = vrot.lane.b32.xlu0 %v10882, 124
      %v11020 = vpop.permute.xlu0 %11019
      %v11053 = vadd.f32 %v10893, %v10958
      %v11054 = vadd.f32 %v10894, %v10960
      %v11055 = vadd.f32 %v10895, %v10962
      %v11056 = vadd.f32 %v10896, %v10964
      %v11057 = vadd.f32 %v10897, %v10966
      %v11058 = vadd.f32 %v10898, %v10968
      %v11059 = vadd.f32 %v10899, %v10970
      %v11060 = vadd.f32 %v10900, %v10972
      %v11061 = vadd.f32 %v10901, %v10974
      %v11062 = vadd.f32 %v10902, %v10976
      %v11063 = vadd.f32 %v10903, %v10978
      %v11064 = vadd.f32 %v10904, %v10980
      %v11065 = vadd.f32 %v10905, %v10982
      %v11066 = vadd.f32 %v10906, %v10984
      %v11067 = vadd.f32 %v10907, %v10986
      %v11068 = vadd.f32 %v10908, %v10988
      %v11069 = vadd.f32 %v10909, %v10990
      %v11070 = vadd.f32 %v10910, %v10992
      %v11071 = vadd.f32 %v10911, %v10994
      %v11072 = vadd.f32 %v10912, %v10996
      %v11073 = vadd.f32 %v10913, %v10998
      %v11074 = vadd.f32 %v10914, %v11000
      %v11075 = vadd.f32 %v10915, %v11002
      %v11076 = vadd.f32 %v10916, %v11004
      %v11077 = vadd.f32 %v10917, %v11006
      %v11078 = vadd.f32 %v10918, %v11008
      %v11079 = vadd.f32 %v10919, %v11010
      %v11080 = vadd.f32 %v10920, %v11012
      %v11081 = vadd.f32 %v10921, %v11014
      %v11082 = vadd.f32 %v10922, %v11016
      %v11083 = vadd.f32 %v10923, %v11018
      %v11084 = vadd.f32 %v10924, %v11020
      %11087 = vrot.lane.b32.xlu0 %v10767, 120
      %v11088 = vpop.permute.xlu0 %11087
      %11089 = vrot.lane.b32.xlu0 %v10770, 120
      %v11090 = vpop.permute.xlu0 %11089
      %11091 = vrot.lane.b32.xlu0 %v10775, 120
      %v11092 = vpop.permute.xlu0 %11091
      %11093 = vrot.lane.b32.xlu0 %v10778, 120
      %v11094 = vpop.permute.xlu0 %11093
      %11095 = vrot.lane.b32.xlu0 %v10783, 120
      %v11096 = vpop.permute.xlu0 %11095
      %11097 = vrot.lane.b32.xlu0 %v10786, 120
      %v11098 = vpop.permute.xlu0 %11097
      %11099 = vrot.lane.b32.xlu0 %v10791, 120
      %v11100 = vpop.permute.xlu0 %11099
      %11101 = vrot.lane.b32.xlu0 %v10794, 120
      %v11102 = vpop.permute.xlu0 %11101
      %11103 = vrot.lane.b32.xlu0 %v10799, 120
      %v11104 = vpop.permute.xlu0 %11103
      %11105 = vrot.lane.b32.xlu0 %v10802, 120
      %v11106 = vpop.permute.xlu0 %11105
      %11107 = vrot.lane.b32.xlu0 %v10807, 120
      %v11108 = vpop.permute.xlu0 %11107
      %11109 = vrot.lane.b32.xlu0 %v10810, 120
      %v11110 = vpop.permute.xlu0 %11109
      %11111 = vrot.lane.b32.xlu0 %v10815, 120
      %v11112 = vpop.permute.xlu0 %11111
      %11113 = vrot.lane.b32.xlu0 %v10818, 120
      %v11114 = vpop.permute.xlu0 %11113
      %11115 = vrot.lane.b32.xlu0 %v10823, 120
      %v11116 = vpop.permute.xlu0 %11115
      %11117 = vrot.lane.b32.xlu0 %v10826, 120
      %v11118 = vpop.permute.xlu0 %11117
      %11119 = vrot.lane.b32.xlu0 %v10831, 120
      %v11120 = vpop.permute.xlu0 %11119
      %11121 = vrot.lane.b32.xlu0 %v10834, 120
      %v11122 = vpop.permute.xlu0 %11121
      %11123 = vrot.lane.b32.xlu0 %v10839, 120
      %v11124 = vpop.permute.xlu0 %11123
      %11125 = vrot.lane.b32.xlu0 %v10842, 120
      %v11126 = vpop.permute.xlu0 %11125
      %11127 = vrot.lane.b32.xlu0 %v10847, 120
      %v11128 = vpop.permute.xlu0 %11127
      %11129 = vrot.lane.b32.xlu0 %v10850, 120
      %v11130 = vpop.permute.xlu0 %11129
      %11131 = vrot.lane.b32.xlu0 %v10855, 120
      %v11132 = vpop.permute.xlu0 %11131
      %11133 = vrot.lane.b32.xlu0 %v10858, 120
      %v11134 = vpop.permute.xlu0 %11133
      %11135 = vrot.lane.b32.xlu0 %v10863, 120
      %v11136 = vpop.permute.xlu0 %11135
      %11137 = vrot.lane.b32.xlu0 %v10866, 120
      %v11138 = vpop.permute.xlu0 %11137
      %11139 = vrot.lane.b32.xlu0 %v10871, 120
      %v11140 = vpop.permute.xlu0 %11139
      %11141 = vrot.lane.b32.xlu0 %v10874, 120
      %v11142 = vpop.permute.xlu0 %11141
      %11143 = vrot.lane.b32.xlu0 %v10879, 120
      %v11144 = vpop.permute.xlu0 %11143
      %11145 = vrot.lane.b32.xlu0 %v10882, 120
      %v11146 = vpop.permute.xlu0 %11145
      %11147 = vrot.lane.b32.xlu0 %v10887, 120
      %v11148 = vpop.permute.xlu0 %11147
      %11149 = vrot.lane.b32.xlu0 %v10890, 120
      %v11150 = vpop.permute.xlu0 %11149
      %v11183 = vadd.f32 %v11053, %v11088
      %v11184 = vadd.f32 %v11054, %v11090
      %v11185 = vadd.f32 %v11055, %v11092
      %v11186 = vadd.f32 %v11056, %v11094
      %v11187 = vadd.f32 %v11057, %v11096
      %v11188 = vadd.f32 %v11058, %v11098
      %v11189 = vadd.f32 %v11059, %v11100
      %v11190 = vadd.f32 %v11060, %v11102
      %v11191 = vadd.f32 %v11061, %v11104
      %v11192 = vadd.f32 %v11062, %v11106
      %v11193 = vadd.f32 %v11063, %v11108
      %v11194 = vadd.f32 %v11064, %v11110
      %v11195 = vadd.f32 %v11065, %v11112
      %v11196 = vadd.f32 %v11066, %v11114
      %v11197 = vadd.f32 %v11067, %v11116
      %v11198 = vadd.f32 %v11068, %v11118
      %v11199 = vadd.f32 %v11069, %v11120
      %v11200 = vadd.f32 %v11070, %v11122
      %v11201 = vadd.f32 %v11071, %v11124
      %v11202 = vadd.f32 %v11072, %v11126
      %v11203 = vadd.f32 %v11073, %v11128
      %v11204 = vadd.f32 %v11074, %v11130
      %v11205 = vadd.f32 %v11075, %v11132
      %v11206 = vadd.f32 %v11076, %v11134
      %v11207 = vadd.f32 %v11077, %v11136
      %v11208 = vadd.f32 %v11078, %v11138
      %v11209 = vadd.f32 %v11079, %v11140
      %v11210 = vadd.f32 %v11080, %v11142
      %v11211 = vadd.f32 %v11081, %v11144
      %v11212 = vadd.f32 %v11082, %v11146
      %v11213 = vadd.f32 %v11083, %v11148
      %v11214 = vadd.f32 %v11084, %v11150
      %v11215 = vld [vmem:[%s8] sm:$0x1]
      %v11217 = vlaneseq
      %v11218 = vshrl.u32 %v11217, 7
      %v11219 = vsub.s32 0, %v11218
      %v11220 = vrot.slane %v11215, %v11219
      %v11222 = vadd.f32 %v11183, %v11220
      %v11223 = vadd.f32 %v11184, %v11220
      %v11224 = vadd.f32 %v11185, %v11220
      %v11225 = vadd.f32 %v11186, %v11220
      %v11226 = vadd.f32 %v11187, %v11220
      %v11227 = vadd.f32 %v11188, %v11220
      %v11228 = vadd.f32 %v11189, %v11220
      %v11229 = vadd.f32 %v11190, %v11220
      %v11230 = vadd.f32 %v11191, %v11220
      %v11231 = vadd.f32 %v11192, %v11220
      %v11232 = vadd.f32 %v11193, %v11220
      %v11233 = vadd.f32 %v11194, %v11220
      %v11234 = vadd.f32 %v11195, %v11220
      %v11235 = vadd.f32 %v11196, %v11220
      %v11236 = vadd.f32 %v11197, %v11220
      %v11237 = vadd.f32 %v11198, %v11220
      %v11238 = vadd.f32 %v11199, %v11220
      %v11239 = vadd.f32 %v11200, %v11220
      %v11240 = vadd.f32 %v11201, %v11220
      %v11241 = vadd.f32 %v11202, %v11220
      %v11242 = vadd.f32 %v11203, %v11220
      %v11243 = vadd.f32 %v11204, %v11220
      %v11244 = vadd.f32 %v11205, %v11220
      %v11245 = vadd.f32 %v11206, %v11220
      %v11246 = vadd.f32 %v11207, %v11220
      %v11247 = vadd.f32 %v11208, %v11220
      %v11248 = vadd.f32 %v11209, %v11220
      %v11249 = vadd.f32 %v11210, %v11220
      %v11250 = vadd.f32 %v11211, %v11220
      %v11251 = vadd.f32 %v11212, %v11220
      %v11252 = vadd.f32 %v11213, %v11220
      %v11253 = vadd.f32 %v11214, %v11220
      %vm11254 = vcmp.gt.f32.partialorder %v11222, 0.0
      %vm11255 = vcmp.gt.f32.partialorder %v11223, 0.0
      %vm11256 = vcmp.gt.f32.partialorder %v11224, 0.0
      %vm11257 = vcmp.gt.f32.partialorder %v11225, 0.0
      %vm11258 = vcmp.gt.f32.partialorder %v11226, 0.0
      %vm11259 = vcmp.gt.f32.partialorder %v11227, 0.0
      %vm11260 = vcmp.gt.f32.partialorder %v11228, 0.0
      %vm11261 = vcmp.gt.f32.partialorder %v11229, 0.0
      %vm11262 = vcmp.gt.f32.partialorder %v11230, 0.0
      %vm11263 = vcmp.gt.f32.partialorder %v11231, 0.0
      %vm11264 = vcmp.gt.f32.partialorder %v11232, 0.0
      %vm11265 = vcmp.gt.f32.partialorder %v11233, 0.0
      %vm11266 = vcmp.gt.f32.partialorder %v11234, 0.0
      %vm11267 = vcmp.gt.f32.partialorder %v11235, 0.0
      %vm11268 = vcmp.gt.f32.partialorder %v11236, 0.0
      %vm11269 = vcmp.gt.f32.partialorder %v11237, 0.0
      %vm11270 = vcmp.gt.f32.partialorder %v11238, 0.0
      %vm11271 = vcmp.gt.f32.partialorder %v11239, 0.0
      %vm11272 = vcmp.gt.f32.partialorder %v11240, 0.0
      %vm11273 = vcmp.gt.f32.partialorder %v11241, 0.0
      %vm11274 = vcmp.gt.f32.partialorder %v11242, 0.0
      %vm11275 = vcmp.gt.f32.partialorder %v11243, 0.0
      %vm11276 = vcmp.gt.f32.partialorder %v11244, 0.0
      %vm11277 = vcmp.gt.f32.partialorder %v11245, 0.0
      %vm11278 = vcmp.gt.f32.partialorder %v11246, 0.0
      %vm11279 = vcmp.gt.f32.partialorder %v11247, 0.0
      %vm11280 = vcmp.gt.f32.partialorder %v11248, 0.0
      %vm11281 = vcmp.gt.f32.partialorder %v11249, 0.0
      %vm11282 = vcmp.gt.f32.partialorder %v11250, 0.0
      %vm11283 = vcmp.gt.f32.partialorder %v11251, 0.0
      %vm11284 = vcmp.gt.f32.partialorder %v11252, 0.0
      %vm11285 = vcmp.gt.f32.partialorder %v11253, 0.0
      %v11286 = vmul.f32 %v11222, 0.2
      %v11287 = vmul.f32 %v11223, 0.2
      %v11288 = vmul.f32 %v11224, 0.2
      %v11289 = vmul.f32 %v11225, 0.2
      %v11290 = vmul.f32 %v11226, 0.2
      %v11291 = vmul.f32 %v11227, 0.2
      %v11292 = vmul.f32 %v11228, 0.2
      %v11293 = vmul.f32 %v11229, 0.2
      %v11294 = vmul.f32 %v11230, 0.2
      %v11295 = vmul.f32 %v11231, 0.2
      %v11296 = vmul.f32 %v11232, 0.2
      %v11297 = vmul.f32 %v11233, 0.2
      %v11298 = vmul.f32 %v11234, 0.2
      %v11299 = vmul.f32 %v11235, 0.2
      %v11300 = vmul.f32 %v11236, 0.2
      %v11301 = vmul.f32 %v11237, 0.2
      %v11302 = vmul.f32 %v11238, 0.2
      %v11303 = vmul.f32 %v11239, 0.2
      %v11304 = vmul.f32 %v11240, 0.2
      %v11305 = vmul.f32 %v11241, 0.2
      %v11306 = vmul.f32 %v11242, 0.2
      %v11307 = vmul.f32 %v11243, 0.2
      %v11308 = vmul.f32 %v11244, 0.2
      %v11309 = vmul.f32 %v11245, 0.2
      %v11310 = vmul.f32 %v11246, 0.2
      %v11311 = vmul.f32 %v11247, 0.2
      %v11312 = vmul.f32 %v11248, 0.2
      %v11313 = vmul.f32 %v11249, 0.2
      %v11314 = vmul.f32 %v11250, 0.2
      %v11315 = vmul.f32 %v11251, 0.2
      %v11316 = vmul.f32 %v11252, 0.2
      %v11317 = vmul.f32 %v11253, 0.2
      %v11318 = vsel %vm11254, %v11222, %v11286
      %v11319 = vsel %vm11255, %v11223, %v11287
      %v11320 = vsel %vm11256, %v11224, %v11288
      %v11321 = vsel %vm11257, %v11225, %v11289
      %v11322 = vsel %vm11258, %v11226, %v11290
      %v11323 = vsel %vm11259, %v11227, %v11291
      %v11324 = vsel %vm11260, %v11228, %v11292
      %v11325 = vsel %vm11261, %v11229, %v11293
      %v11326 = vsel %vm11262, %v11230, %v11294
      %v11327 = vsel %vm11263, %v11231, %v11295
      %v11328 = vsel %vm11264, %v11232, %v11296
      %v11329 = vsel %vm11265, %v11233, %v11297
      %v11330 = vsel %vm11266, %v11234, %v11298
      %v11331 = vsel %vm11267, %v11235, %v11299
      %v11332 = vsel %vm11268, %v11236, %v11300
      %v11333 = vsel %vm11269, %v11237, %v11301
      %v11334 = vsel %vm11270, %v11238, %v11302
      %v11335 = vsel %vm11271, %v11239, %v11303
      %v11336 = vsel %vm11272, %v11240, %v11304
      %v11337 = vsel %vm11273, %v11241, %v11305
      %v11338 = vsel %vm11274, %v11242, %v11306
      %v11339 = vsel %vm11275, %v11243, %v11307
      %v11340 = vsel %vm11276, %v11244, %v11308
      %v11341 = vsel %vm11277, %v11245, %v11309
      %v11342 = vsel %vm11278, %v11246, %v11310
      %v11343 = vsel %vm11279, %v11247, %v11311
      %v11344 = vsel %vm11280, %v11248, %v11312
      %v11345 = vsel %vm11281, %v11249, %v11313
      %v11346 = vsel %vm11282, %v11250, %v11314
      %v11347 = vsel %vm11283, %v11251, %v11315
      %v11348 = vsel %vm11284, %v11252, %v11316
      %v11349 = vsel %vm11285, %v11253, %v11317
      %v11350 = vpack.c.bf16 %v11319, %v11318
      %v11351 = vpack.c.bf16 %v11321, %v11320
      %v11352 = vpack.c.bf16 %v11323, %v11322
      %v11353 = vpack.c.bf16 %v11325, %v11324
      %v11354 = vpack.c.bf16 %v11327, %v11326
      %v11355 = vpack.c.bf16 %v11329, %v11328
      %v11356 = vpack.c.bf16 %v11331, %v11330
      %v11357 = vpack.c.bf16 %v11333, %v11332
      %v11358 = vpack.c.bf16 %v11335, %v11334
      %v11359 = vpack.c.bf16 %v11337, %v11336
      %v11360 = vpack.c.bf16 %v11339, %v11338
      %v11361 = vpack.c.bf16 %v11341, %v11340
      %v11362 = vpack.c.bf16 %v11343, %v11342
      %v11363 = vpack.c.bf16 %v11345, %v11344
      %v11364 = vpack.c.bf16 %v11347, %v11346
      %v11365 = vpack.c.bf16 %v11349, %v11348
      %v11382 = vrot.slane %v11350, 4
      %v11383 = vrot.slane %v11351, 4
      %v11384 = vrot.slane %v11352, 4
      %v11385 = vrot.slane %v11353, 4
      %v11386 = vrot.slane %v11354, 4
      %v11387 = vrot.slane %v11355, 4
      %v11388 = vrot.slane %v11356, 4
      %v11389 = vrot.slane %v11357, 4
      %v11390 = vrot.slane %v11358, 4
      %v11391 = vrot.slane %v11359, 4
      %v11392 = vrot.slane %v11360, 4
      %v11393 = vrot.slane %v11361, 4
      %v11394 = vrot.slane %v11362, 4
      %v11395 = vrot.slane %v11363, 4
      %v11396 = vrot.slane %v11364, 4
      %v11397 = vrot.slane %v11365, 4
      %11398 = vrot.lane.b32.xlu0 %v11382, 20
      %v11399 = vpop.permute.xlu0 %11398
      %11400 = vrot.lane.b32.xlu0 %v11383, 20
      %v11401 = vpop.permute.xlu0 %11400
      %11402 = vrot.lane.b32.xlu0 %v11384, 20
      %v11403 = vpop.permute.xlu0 %11402
      %11404 = vrot.lane.b32.xlu0 %v11385, 20
      %v11405 = vpop.permute.xlu0 %11404
      %11406 = vrot.lane.b32.xlu0 %v11386, 20
      %v11407 = vpop.permute.xlu0 %11406
      %11408 = vrot.lane.b32.xlu0 %v11387, 20
      %v11409 = vpop.permute.xlu0 %11408
      %11410 = vrot.lane.b32.xlu0 %v11388, 20
      %v11411 = vpop.permute.xlu0 %11410
      %11412 = vrot.lane.b32.xlu0 %v11389, 20
      %v11413 = vpop.permute.xlu0 %11412
      %11414 = vrot.lane.b32.xlu0 %v11390, 20
      %v11415 = vpop.permute.xlu0 %11414
      %11416 = vrot.lane.b32.xlu0 %v11391, 20
      %v11417 = vpop.permute.xlu0 %11416
      %11418 = vrot.lane.b32.xlu0 %v11392, 20
      %v11419 = vpop.permute.xlu0 %11418
      %11420 = vrot.lane.b32.xlu0 %v11393, 20
      %v11421 = vpop.permute.xlu0 %11420
      %11422 = vrot.lane.b32.xlu0 %v11394, 20
      %v11423 = vpop.permute.xlu0 %11422
      %11424 = vrot.lane.b32.xlu0 %v11395, 20
      %v11425 = vpop.permute.xlu0 %11424
      %11426 = vrot.lane.b32.xlu0 %v11396, 20
      %v11427 = vpop.permute.xlu0 %11426
      %11428 = vrot.lane.b32.xlu0 %v11397, 20
      %v11429 = vpop.permute.xlu0 %11428
      %vm11446 = vcmask 195748
      %11447 = vst.msk [vmem:[%s394] sm:$0xf0] %vm11446, %v11399
      %vm11448 = vcmask 191648
      %11449 = vst.msk [vmem:[%s394 + $0x8] sm:$0xf] %vm11448, %v11399
      %11450 = vst.msk [vmem:[%s394 + $0x10] sm:$0xf0] %vm11446, %v11401
      %11451 = vst.msk [vmem:[%s394 + $0x18] sm:$0xf] %vm11448, %v11401
      %11452 = vst.msk [vmem:[%s394 + $0x20] sm:$0xf0] %vm11446, %v11403
      %11453 = vst.msk [vmem:[%s394 + $0x28] sm:$0xf] %vm11448, %v11403
      %11454 = vst.msk [vmem:[%s394 + $0x30] sm:$0xf0] %vm11446, %v11405
      %11455 = vst.msk [vmem:[%s394 + $0x38] sm:$0xf] %vm11448, %v11405
      %11456 = vst.msk [vmem:[%s394 + $0x40] sm:$0xf0] %vm11446, %v11407
      %11457 = vst.msk [vmem:[%s394 + $0x48] sm:$0xf] %vm11448, %v11407
      %11458 = vst.msk [vmem:[%s394 + $0x50] sm:$0xf0] %vm11446, %v11409
      %11459 = vst.msk [vmem:[%s394 + $0x58] sm:$0xf] %vm11448, %v11409
      %11460 = vst.msk [vmem:[%s394 + $0x60] sm:$0xf0] %vm11446, %v11411
      %11461 = vst.msk [vmem:[%s394 + $0x68] sm:$0xf] %vm11448, %v11411
      %11462 = vst.msk [vmem:[%s394 + $0x70] sm:$0xf0] %vm11446, %v11413
      %11463 = vst.msk [vmem:[%s394 + $0x78] sm:$0xf] %vm11448, %v11413
      %11464 = vst.msk [vmem:[%s394 + $0x80] sm:$0xf0] %vm11446, %v11415
      %11465 = vst.msk [vmem:[%s394 + $0x88] sm:$0xf] %vm11448, %v11415
      %11466 = vst.msk [vmem:[%s394 + $0x90] sm:$0xf0] %vm11446, %v11417
      %11467 = vst.msk [vmem:[%s394 + $0x98] sm:$0xf] %vm11448, %v11417
      %11468 = vst.msk [vmem:[%s394 + $0xa0] sm:$0xf0] %vm11446, %v11419
      %11469 = vst.msk [vmem:[%s394 + $0xa8] sm:$0xf] %vm11448, %v11419
      %11470 = vst.msk [vmem:[%s394 + $0xb0] sm:$0xf0] %vm11446, %v11421
      %11471 = vst.msk [vmem:[%s394 + $0xb8] sm:$0xf] %vm11448, %v11421
      %11472 = vst.msk [vmem:[%s394 + $0xc0] sm:$0xf0] %vm11446, %v11423
      %11473 = vst.msk [vmem:[%s394 + $0xc8] sm:$0xf] %vm11448, %v11423
      %11474 = vst.msk [vmem:[%s394 + $0xd0] sm:$0xf0] %vm11446, %v11425
      %11475 = vst.msk [vmem:[%s394 + $0xd8] sm:$0xf] %vm11448, %v11425
      %11476 = vst.msk [vmem:[%s394 + $0xe0] sm:$0xf0] %vm11446, %v11427
      %11477 = vst.msk [vmem:[%s394 + $0xe8] sm:$0xf] %vm11448, %v11427
      %11478 = vst.msk [vmem:[%s394 + $0xf0] sm:$0xf0] %vm11446, %v11429
      %11479 = vst.msk [vmem:[%s394 + $0xf8] sm:$0xf] %vm11448, %v11429
      %v11480 = vld [vmem:[#allocation2] sm:$0xf8]
      %v11481 = vld [vmem:[#allocation2 + $0x8] sm:$0xf]
      %v11482 = vld [vmem:[#allocation2 + $0x10] sm:$0xf8]
      %v11483 = vld [vmem:[#allocation2 + $0x18] sm:$0xf]
      %v11484 = vld [vmem:[#allocation2 + $0x20] sm:$0xf8]
      %v11485 = vld [vmem:[#allocation2 + $0x28] sm:$0xf]
      %v11486 = vld [vmem:[#allocation2 + $0x30] sm:$0xf8]
      %v11487 = vld [vmem:[#allocation2 + $0x38] sm:$0xf]
      %v11488 = vld [vmem:[#allocation2 + $0x40] sm:$0xf8]
      %v11489 = vld [vmem:[#allocation2 + $0x48] sm:$0xf]
      %v11490 = vld [vmem:[#allocation2 + $0x50] sm:$0xf8]
      %v11491 = vld [vmem:[#allocation2 + $0x58] sm:$0xf]
      %v11492 = vld [vmem:[#allocation2 + $0x60] sm:$0xf8]
      %v11493 = vld [vmem:[#allocation2 + $0x68] sm:$0xf]
      %v11494 = vld [vmem:[#allocation2 + $0x70] sm:$0xf8]
      %v11495 = vld [vmem:[#allocation2 + $0x78] sm:$0xf]
      %v11496 = vld [vmem:[#allocation2 + $0x80] sm:$0xf8]
      %v11497 = vld [vmem:[#allocation2 + $0x88] sm:$0xf]
      %v11498 = vld [vmem:[#allocation2 + $0x90] sm:$0xf8]
      %v11499 = vld [vmem:[#allocation2 + $0x98] sm:$0xf]
      %v11500 = vld [vmem:[#allocation2 + $0xa0] sm:$0xf8]
      %v11501 = vld [vmem:[#allocation2 + $0xa8] sm:$0xf]
      %v11502 = vld [vmem:[#allocation2 + $0xb0] sm:$0xf8]
      %v11503 = vld [vmem:[#allocation2 + $0xb8] sm:$0xf]
      %v11504 = vld [vmem:[#allocation2 + $0xc0] sm:$0xf8]
      %v11505 = vld [vmem:[#allocation2 + $0xc8] sm:$0xf]
      %v11506 = vld [vmem:[#allocation2 + $0xd0] sm:$0xf8]
      %v11507 = vld [vmem:[#allocation2 + $0xd8] sm:$0xf]
      %v11508 = vld [vmem:[#allocation2 + $0xe0] sm:$0xf8]
      %v11509 = vld [vmem:[#allocation2 + $0xe8] sm:$0xf]
      %v11510 = vld [vmem:[#allocation2 + $0xf0] sm:$0xf8]
      %v11511 = vld [vmem:[#allocation2 + $0xf8] sm:$0xf]
      %v11512 = vld [vmem:[#allocation2 + $0x100] sm:$0xf8]
      %v11513 = vld [vmem:[#allocation2 + $0x108] sm:$0xf]
      %v11514 = vld [vmem:[#allocation2 + $0x110] sm:$0xf8]
      %v11515 = vld [vmem:[#allocation2 + $0x118] sm:$0xf]
      %v11516 = vld [vmem:[%s9] sm:$0xf]
      %v11517 = vld [vmem:[%s9 + $0x4] sm:$0xf]
      %v11518 = vld [vmem:[%s9 + $0x8] sm:$0xf]
      %v11520 = vshrl.u32 %v11480, 16
      %v11522 = vrot.slane %v11520, 3
      %v11523 = vshll.u32 %v11480, 16
      %v11525 = vrot.slane %v11523, 4
      %v11526 = vor.u32 %v11522, %v11525
      %v11528 = vshrl.u32 %v11481, 16
      %v11530 = vrot.slane %v11528, 3
      %v11531 = vshll.u32 %v11481, 16
      %v11533 = vrot.slane %v11531, 4
      %v11534 = vor.u32 %v11530, %v11533
      %v11535 = vsel %vm596, %v11526, %v11534
      %v11537 = vshrl.u32 %v11482, 16
      %v11539 = vrot.slane %v11537, 3
      %v11540 = vshll.u32 %v11482, 16
      %v11542 = vrot.slane %v11540, 4
      %v11543 = vor.u32 %v11539, %v11542
      %v11545 = vshrl.u32 %v11483, 16
      %v11547 = vrot.slane %v11545, 3
      %v11548 = vshll.u32 %v11483, 16
      %v11550 = vrot.slane %v11548, 4
      %v11551 = vor.u32 %v11547, %v11550
      %v11552 = vsel %vm596, %v11543, %v11551
      %v11554 = vshrl.u32 %v11484, 16
      %v11556 = vrot.slane %v11554, 3
      %v11557 = vshll.u32 %v11484, 16
      %v11559 = vrot.slane %v11557, 4
      %v11560 = vor.u32 %v11556, %v11559
      %v11562 = vshrl.u32 %v11485, 16
      %v11564 = vrot.slane %v11562, 3
      %v11565 = vshll.u32 %v11485, 16
      %v11567 = vrot.slane %v11565, 4
      %v11568 = vor.u32 %v11564, %v11567
      %v11569 = vsel %vm596, %v11560, %v11568
      %v11571 = vshrl.u32 %v11486, 16
      %v11573 = vrot.slane %v11571, 3
      %v11574 = vshll.u32 %v11486, 16
      %v11576 = vrot.slane %v11574, 4
      %v11577 = vor.u32 %v11573, %v11576
      %v11579 = vshrl.u32 %v11487, 16
      %v11581 = vrot.slane %v11579, 3
      %v11582 = vshll.u32 %v11487, 16
      %v11584 = vrot.slane %v11582, 4
      %v11585 = vor.u32 %v11581, %v11584
      %v11586 = vsel %vm596, %v11577, %v11585
      %v11588 = vshrl.u32 %v11488, 16
      %v11590 = vrot.slane %v11588, 3
      %v11591 = vshll.u32 %v11488, 16
      %v11593 = vrot.slane %v11591, 4
      %v11594 = vor.u32 %v11590, %v11593
      %v11596 = vshrl.u32 %v11489, 16
      %v11598 = vrot.slane %v11596, 3
      %v11599 = vshll.u32 %v11489, 16
      %v11601 = vrot.slane %v11599, 4
      %v11602 = vor.u32 %v11598, %v11601
      %v11603 = vsel %vm596, %v11594, %v11602
      %v11605 = vshrl.u32 %v11490, 16
      %v11607 = vrot.slane %v11605, 3
      %v11608 = vshll.u32 %v11490, 16
      %v11610 = vrot.slane %v11608, 4
      %v11611 = vor.u32 %v11607, %v11610
      %v11613 = vshrl.u32 %v11491, 16
      %v11615 = vrot.slane %v11613, 3
      %v11616 = vshll.u32 %v11491, 16
      %v11618 = vrot.slane %v11616, 4
      %v11619 = vor.u32 %v11615, %v11618
      %v11620 = vsel %vm596, %v11611, %v11619
      %v11622 = vshrl.u32 %v11492, 16
      %v11624 = vrot.slane %v11622, 3
      %v11625 = vshll.u32 %v11492, 16
      %v11627 = vrot.slane %v11625, 4
      %v11628 = vor.u32 %v11624, %v11627
      %v11630 = vshrl.u32 %v11493, 16
      %v11632 = vrot.slane %v11630, 3
      %v11633 = vshll.u32 %v11493, 16
      %v11635 = vrot.slane %v11633, 4
      %v11636 = vor.u32 %v11632, %v11635
      %v11637 = vsel %vm596, %v11628, %v11636
      %v11639 = vshrl.u32 %v11494, 16
      %v11641 = vrot.slane %v11639, 3
      %v11642 = vshll.u32 %v11494, 16
      %v11644 = vrot.slane %v11642, 4
      %v11645 = vor.u32 %v11641, %v11644
      %v11647 = vshrl.u32 %v11495, 16
      %v11649 = vrot.slane %v11647, 3
      %v11650 = vshll.u32 %v11495, 16
      %v11652 = vrot.slane %v11650, 4
      %v11653 = vor.u32 %v11649, %v11652
      %v11654 = vsel %vm596, %v11645, %v11653
      %v11656 = vshrl.u32 %v11496, 16
      %v11658 = vrot.slane %v11656, 3
      %v11659 = vshll.u32 %v11496, 16
      %v11661 = vrot.slane %v11659, 4
      %v11662 = vor.u32 %v11658, %v11661
      %v11664 = vshrl.u32 %v11497, 16
      %v11666 = vrot.slane %v11664, 3
      %v11667 = vshll.u32 %v11497, 16
      %v11669 = vrot.slane %v11667, 4
      %v11670 = vor.u32 %v11666, %v11669
      %v11671 = vsel %vm596, %v11662, %v11670
      %v11673 = vshrl.u32 %v11498, 16
      %v11675 = vrot.slane %v11673, 3
      %v11676 = vshll.u32 %v11498, 16
      %v11678 = vrot.slane %v11676, 4
      %v11679 = vor.u32 %v11675, %v11678
      %v11681 = vshrl.u32 %v11499, 16
      %v11683 = vrot.slane %v11681, 3
      %v11684 = vshll.u32 %v11499, 16
      %v11686 = vrot.slane %v11684, 4
      %v11687 = vor.u32 %v11683, %v11686
      %v11688 = vsel %vm596, %v11679, %v11687
      %v11690 = vshrl.u32 %v11500, 16
      %v11692 = vrot.slane %v11690, 3
      %v11693 = vshll.u32 %v11500, 16
      %v11695 = vrot.slane %v11693, 4
      %v11696 = vor.u32 %v11692, %v11695
      %v11698 = vshrl.u32 %v11501, 16
      %v11700 = vrot.slane %v11698, 3
      %v11701 = vshll.u32 %v11501, 16
      %v11703 = vrot.slane %v11701, 4
      %v11704 = vor.u32 %v11700, %v11703
      %v11705 = vsel %vm596, %v11696, %v11704
      %v11707 = vshrl.u32 %v11502, 16
      %v11709 = vrot.slane %v11707, 3
      %v11710 = vshll.u32 %v11502, 16
      %v11712 = vrot.slane %v11710, 4
      %v11713 = vor.u32 %v11709, %v11712
      %v11715 = vshrl.u32 %v11503, 16
      %v11717 = vrot.slane %v11715, 3
      %v11718 = vshll.u32 %v11503, 16
      %v11720 = vrot.slane %v11718, 4
      %v11721 = vor.u32 %v11717, %v11720
      %v11722 = vsel %vm596, %v11713, %v11721
      %v11724 = vshrl.u32 %v11504, 16
      %v11726 = vrot.slane %v11724, 3
      %v11727 = vshll.u32 %v11504, 16
      %v11729 = vrot.slane %v11727, 4
      %v11730 = vor.u32 %v11726, %v11729
      %v11732 = vshrl.u32 %v11505, 16
      %v11734 = vrot.slane %v11732, 3
      %v11735 = vshll.u32 %v11505, 16
      %v11737 = vrot.slane %v11735, 4
      %v11738 = vor.u32 %v11734, %v11737
      %v11739 = vsel %vm596, %v11730, %v11738
      %v11741 = vshrl.u32 %v11506, 16
      %v11743 = vrot.slane %v11741, 3
      %v11744 = vshll.u32 %v11506, 16
      %v11746 = vrot.slane %v11744, 4
      %v11747 = vor.u32 %v11743, %v11746
      %v11749 = vshrl.u32 %v11507, 16
      %v11751 = vrot.slane %v11749, 3
      %v11752 = vshll.u32 %v11507, 16
      %v11754 = vrot.slane %v11752, 4
      %v11755 = vor.u32 %v11751, %v11754
      %v11756 = vsel %vm596, %v11747, %v11755
      %v11758 = vshrl.u32 %v11508, 16
      %v11760 = vrot.slane %v11758, 3
      %v11761 = vshll.u32 %v11508, 16
      %v11763 = vrot.slane %v11761, 4
      %v11764 = vor.u32 %v11760, %v11763
      %v11766 = vshrl.u32 %v11509, 16
      %v11768 = vrot.slane %v11766, 3
      %v11769 = vshll.u32 %v11509, 16
      %v11771 = vrot.slane %v11769, 4
      %v11772 = vor.u32 %v11768, %v11771
      %v11773 = vsel %vm596, %v11764, %v11772
      %v11775 = vshrl.u32 %v11510, 16
      %v11777 = vrot.slane %v11775, 3
      %v11778 = vshll.u32 %v11510, 16
      %v11780 = vrot.slane %v11778, 4
      %v11781 = vor.u32 %v11777, %v11780
      %v11783 = vshrl.u32 %v11511, 16
      %v11785 = vrot.slane %v11783, 3
      %v11786 = vshll.u32 %v11511, 16
      %v11788 = vrot.slane %v11786, 4
      %v11789 = vor.u32 %v11785, %v11788
      %v11790 = vsel %vm596, %v11781, %v11789
      %v11792 = vshrl.u32 %v11512, 16
      %v11794 = vrot.slane %v11792, 3
      %v11795 = vshll.u32 %v11512, 16
      %v11797 = vrot.slane %v11795, 4
      %v11798 = vor.u32 %v11794, %v11797
      %v11800 = vshrl.u32 %v11513, 16
      %v11802 = vrot.slane %v11800, 3
      %v11803 = vshll.u32 %v11513, 16
      %v11805 = vrot.slane %v11803, 4
      %v11806 = vor.u32 %v11802, %v11805
      %v11807 = vsel %vm596, %v11798, %v11806
      %v11809 = vshrl.u32 %v11514, 16
      %v11811 = vrot.slane %v11809, 3
      %v11812 = vshll.u32 %v11514, 16
      %v11814 = vrot.slane %v11812, 4
      %v11815 = vor.u32 %v11811, %v11814
      %v11817 = vshrl.u32 %v11515, 16
      %v11819 = vrot.slane %v11817, 3
      %v11820 = vshll.u32 %v11515, 16
      %v11822 = vrot.slane %v11820, 4
      %v11823 = vor.u32 %v11819, %v11822
      %v11824 = vsel %vm596, %v11815, %v11823
      %v11828 = vunpack.c.l.b16 %v11516
      %v11829 = vunpack.c.l.b16 %v11517
      %v11830 = vunpack.c.l.b16 %v11518
      %v11831 = vpack.c.b16 %v11829, %v11828
      %v11832 = vpack.c.b16 %v11830, %v11830
      %v11835 = vsel %vm388, %v11535, 0
      %v11838 = vsel %vm388, %v11552, 0
      %v11841 = vsel %vm388, %v11569, 0
      %v11844 = vsel %vm388, %v11586, 0
      %v11847 = vsel %vm388, %v11603, 0
      %v11850 = vsel %vm388, %v11620, 0
      %v11853 = vsel %vm388, %v11637, 0
      %v11856 = vsel %vm388, %v11654, 0
      %v11859 = vsel %vm388, %v11671, 0
      %v11862 = vsel %vm388, %v11688, 0
      %v11865 = vsel %vm388, %v11705, 0
      %v11868 = vsel %vm388, %v11722, 0
      %v11871 = vsel %vm388, %v11739, 0
      %v11874 = vsel %vm388, %v11756, 0
      %v11877 = vsel %vm388, %v11773, 0
      %v11880 = vsel %vm388, %v11790, 0
      %v11883 = vsel %vm388, %v11807, 0
      %v11886 = vsel %vm388, %v11824, 0
      %v11889 = vsel %vm958, %v11832, 0
      %11891 = vmatprep.subr.bf16.mxu0 0
      %11892 = vmatpush1.bf16.msra.mxu0 %v11831
      %11893 = vmatprep.subr.bf16.mxu0 0
      %11894 = vmatpush1.bf16.msra.mxu0 %v11889
      %11895 = vmatprep.subr.bf16.mxu0 0
      %11896 = vmatpush1.bf16.msra.mxu0 0
      %11897 = vmatprep.subr.bf16.mxu0 0
      %11898 = vmatpush1.bf16.msra.mxu0 0
      %11899 = vmatprep.subr.bf16.mxu0 0
      %11900 = vmatpush1.bf16.msra.mxu0 0
      %11901 = vmatprep.subr.bf16.mxu0 0
      %11902 = vmatpush1.bf16.msra.mxu0 0
      %11903 = vmatprep.subr.bf16.mxu0 0
      %11904 = vmatpush1.bf16.msra.mxu0 0
      %11905 = vmatprep.subr.bf16.mxu0 0
      %11906 = vmatpush1.bf16.msra.mxu0 0
      %11907 = vmatprep.subr.bf16.mxu0 0
      %11908 = vmatpush1.bf16.msra.mxu0 0
      %11909 = vmatprep.subr.bf16.mxu0 0
      %11910 = vmatpush1.bf16.msra.mxu0 0
      %11911 = vmatprep.subr.bf16.mxu0 0
      %11912 = vmatpush1.bf16.msra.mxu0 0
      %11913 = vmatprep.subr.bf16.mxu0 0
      %11914 = vmatpush1.bf16.msra.mxu0 0
      %11915 = vmatprep.subr.bf16.mxu0 0
      %11916 = vmatpush1.bf16.msra.mxu0 0
      %11917 = vmatprep.subr.bf16.mxu0 0
      %11918 = vmatpush1.bf16.msra.mxu0 0
      %11919 = vmatprep.subr.bf16.mxu0 0
      %11920 = vmatpush1.bf16.msra.mxu0 0
      %11921 = vmatprep.subr.bf16.mxu0 0
      %11922 = vmatpush1.bf16.msra.mxu0 0
      %11923 = vmatprep.mubr.bf16.mxu0 0
      %11924 = vmatmul.mubr.bf16.gmra.mrb[0].mxu0 %v11835
      %v11925 = vpop.f32.mrb[0].mxu0
      %v11926 = vadd.f32 0.0, %v11925
      %v11927 = vpop.f32.mrb[0].mxu0
      %v11928 = vpop.f32.mrb[0].mxu0
      %v11929 = vadd.f32 0.0, %v11928
      %v11930 = vpop.f32.mrb[0].mxu0
      %11931 = vmatprep.mubr.bf16.mxu0 0
      %11932 = vmatmul.mubr.bf16.gmra.mrb[0].mxu0 %v11838
      %v11933 = vpop.f32.mrb[0].mxu0
      %v11934 = vadd.f32 0.0, %v11933
      %v11935 = vpop.f32.mrb[0].mxu0
      %v11936 = vpop.f32.mrb[0].mxu0
      %v11937 = vadd.f32 0.0, %v11936
      %v11938 = vpop.f32.mrb[0].mxu0
      %11939 = vmatprep.mubr.bf16.mxu0 0
      %11940 = vmatmul.mubr.bf16.gmra.mrb[0].mxu0 %v11841
      %v11941 = vpop.f32.mrb[0].mxu0
      %v11942 = vadd.f32 0.0, %v11941
      %v11943 = vpop.f32.mrb[0].mxu0
      %v11944 = vpop.f32.mrb[0].mxu0
      %v11945 = vadd.f32 0.0, %v11944
      %v11946 = vpop.f32.mrb[0].mxu0
      %11947 = vmatprep.mubr.bf16.mxu0 0
      %11948 = vmatmul.mubr.bf16.gmra.mrb[0].mxu0 %v11844
      %v11949 = vpop.f32.mrb[0].mxu0
      %v11950 = vadd.f32 0.0, %v11949
      %v11951 = vpop.f32.mrb[0].mxu0
      %v11952 = vpop.f32.mrb[0].mxu0
      %v11953 = vadd.f32 0.0, %v11952
      %v11954 = vpop.f32.mrb[0].mxu0
      %11955 = vmatprep.mubr.bf16.mxu0 0
      %11956 = vmatmul.mubr.bf16.gmra.mrb[0].mxu0 %v11847
      %v11957 = vpop.f32.mrb[0].mxu0
      %v11958 = vadd.f32 0.0, %v11957
      %v11959 = vpop.f32.mrb[0].mxu0
      %v11960 = vpop.f32.mrb[0].mxu0
      %v11961 = vadd.f32 0.0, %v11960
      %v11962 = vpop.f32.mrb[0].mxu0
      %11963 = vmatprep.mubr.bf16.mxu0 0
      %11964 = vmatmul.mubr.bf16.gmra.mrb[0].mxu0 %v11850
      %v11965 = vpop.f32.mrb[0].mxu0
      %v11966 = vadd.f32 0.0, %v11965
      %v11967 = vpop.f32.mrb[0].mxu0
      %v11968 = vpop.f32.mrb[0].mxu0
      %v11969 = vadd.f32 0.0, %v11968
      %v11970 = vpop.f32.mrb[0].mxu0
      %11971 = vmatprep.mubr.bf16.mxu0 0
      %11972 = vmatmul.mubr.bf16.gmra.mrb[0].mxu0 %v11853
      %v11973 = vpop.f32.mrb[0].mxu0
      %v11974 = vadd.f32 0.0, %v11973
      %v11975 = vpop.f32.mrb[0].mxu0
      %v11976 = vpop.f32.mrb[0].mxu0
      %v11977 = vadd.f32 0.0, %v11976
      %v11978 = vpop.f32.mrb[0].mxu0
      %11979 = vmatprep.mubr.bf16.mxu0 0
      %11980 = vmatmul.mubr.bf16.gmra.mrb[0].mxu0 %v11856
      %v11981 = vpop.f32.mrb[0].mxu0
      %v11982 = vadd.f32 0.0, %v11981
      %v11983 = vpop.f32.mrb[0].mxu0
      %v11984 = vpop.f32.mrb[0].mxu0
      %v11985 = vadd.f32 0.0, %v11984
      %v11986 = vpop.f32.mrb[0].mxu0
      %11987 = vmatprep.mubr.bf16.mxu0 0
      %11988 = vmatmul.mubr.bf16.gmra.mrb[0].mxu0 %v11859
      %v11989 = vpop.f32.mrb[0].mxu0
      %v11990 = vadd.f32 0.0, %v11989
      %v11991 = vpop.f32.mrb[0].mxu0
      %v11992 = vpop.f32.mrb[0].mxu0
      %v11993 = vadd.f32 0.0, %v11992
      %v11994 = vpop.f32.mrb[0].mxu0
      %11995 = vmatprep.mubr.bf16.mxu0 0
      %11996 = vmatmul.mubr.bf16.gmra.mrb[0].mxu0 %v11862
      %v11997 = vpop.f32.mrb[0].mxu0
      %v11998 = vadd.f32 0.0, %v11997
      %v11999 = vpop.f32.mrb[0].mxu0
      %v12000 = vpop.f32.mrb[0].mxu0
      %v12001 = vadd.f32 0.0, %v12000
      %v12002 = vpop.f32.mrb[0].mxu0
      %12003 = vmatprep.mubr.bf16.mxu0 0
      %12004 = vmatmul.mubr.bf16.gmra.mrb[0].mxu0 %v11865
      %v12005 = vpop.f32.mrb[0].mxu0
      %v12006 = vadd.f32 0.0, %v12005
      %v12007 = vpop.f32.mrb[0].mxu0
      %v12008 = vpop.f32.mrb[0].mxu0
      %v12009 = vadd.f32 0.0, %v12008
      %v12010 = vpop.f32.mrb[0].mxu0
      %12011 = vmatprep.mubr.bf16.mxu0 0
      %12012 = vmatmul.mubr.bf16.gmra.mrb[0].mxu0 %v11868
      %v12013 = vpop.f32.mrb[0].mxu0
      %v12014 = vadd.f32 0.0, %v12013
      %v12015 = vpop.f32.mrb[0].mxu0
      %v12016 = vpop.f32.mrb[0].mxu0
      %v12017 = vadd.f32 0.0, %v12016
      %v12018 = vpop.f32.mrb[0].mxu0
      %12019 = vmatprep.mubr.bf16.mxu0 0
      %12020 = vmatmul.mubr.bf16.gmra.mrb[0].mxu0 %v11871
      %v12021 = vpop.f32.mrb[0].mxu0
      %v12022 = vadd.f32 0.0, %v12021
      %v12023 = vpop.f32.mrb[0].mxu0
      %v12024 = vpop.f32.mrb[0].mxu0
      %v12025 = vadd.f32 0.0, %v12024
      %v12026 = vpop.f32.mrb[0].mxu0
      %12027 = vmatprep.mubr.bf16.mxu0 0
      %12028 = vmatmul.mubr.bf16.gmra.mrb[0].mxu0 %v11874
      %v12029 = vpop.f32.mrb[0].mxu0
      %v12030 = vadd.f32 0.0, %v12029
      %v12031 = vpop.f32.mrb[0].mxu0
      %v12032 = vpop.f32.mrb[0].mxu0
      %v12033 = vadd.f32 0.0, %v12032
      %v12034 = vpop.f32.mrb[0].mxu0
      %12035 = vmatprep.mubr.bf16.mxu0 0
      %12036 = vmatmul.mubr.bf16.gmra.mrb[0].mxu0 %v11877
      %v12037 = vpop.f32.mrb[0].mxu0
      %v12038 = vadd.f32 0.0, %v12037
      %v12039 = vpop.f32.mrb[0].mxu0
      %v12040 = vpop.f32.mrb[0].mxu0
      %v12041 = vadd.f32 0.0, %v12040
      %v12042 = vpop.f32.mrb[0].mxu0
      %12043 = vmatprep.mubr.bf16.mxu0 0
      %12044 = vmatmul.mubr.bf16.gmra.mrb[0].mxu0 %v11880
      %v12045 = vpop.f32.mrb[0].mxu0
      %v12046 = vadd.f32 0.0, %v12045
      %v12047 = vpop.f32.mrb[0].mxu0
      %v12048 = vpop.f32.mrb[0].mxu0
      %v12049 = vadd.f32 0.0, %v12048
      %v12050 = vpop.f32.mrb[0].mxu0
      %12051 = vmatprep.mubr.bf16.mxu0 0
      %12052 = vmatmul.mubr.bf16.gmra.mrb[0].mxu0 %v11883
      %v12053 = vpop.f32.mrb[0].mxu0
      %v12054 = vadd.f32 0.0, %v12053
      %v12055 = vpop.f32.mrb[0].mxu0
      %v12056 = vpop.f32.mrb[0].mxu0
      %v12057 = vadd.f32 0.0, %v12056
      %v12058 = vpop.f32.mrb[0].mxu0
      %12059 = vmatprep.mubr.bf16.mxu0 0
      %12060 = vmatmul.mubr.bf16.gmra.mrb[0].mxu0 %v11886
      %v12061 = vpop.f32.mrb[0].mxu0
      %v12062 = vadd.f32 0.0, %v12061
      %v12063 = vpop.f32.mrb[0].mxu0
      %v12064 = vpop.f32.mrb[0].mxu0
      %v12065 = vadd.f32 0.0, %v12064
      %v12066 = vpop.f32.mrb[0].mxu0
      %12067 = vdwg.mxu0
      %v12068 = vadd.f32 %v11926, 0.0
      %v12069 = vadd.f32 %v11929, 0.0
      %v12070 = vadd.f32 %v11934, 0.0
      %v12071 = vadd.f32 %v11937, 0.0
      %v12072 = vadd.f32 %v11942, 0.0
      %v12073 = vadd.f32 %v11945, 0.0
      %v12074 = vadd.f32 %v11950, 0.0
      %v12075 = vadd.f32 %v11953, 0.0
      %v12076 = vadd.f32 %v11958, 0.0
      %v12077 = vadd.f32 %v11961, 0.0
      %v12078 = vadd.f32 %v11966, 0.0
      %v12079 = vadd.f32 %v11969, 0.0
      %v12080 = vadd.f32 %v11974, 0.0
      %v12081 = vadd.f32 %v11977, 0.0
      %v12082 = vadd.f32 %v11982, 0.0
      %v12083 = vadd.f32 %v11985, 0.0
      %v12084 = vadd.f32 %v11990, 0.0
      %v12085 = vadd.f32 %v11993, 0.0
      %v12086 = vadd.f32 %v11998, 0.0
      %v12087 = vadd.f32 %v12001, 0.0
      %v12088 = vadd.f32 %v12006, 0.0
      %v12089 = vadd.f32 %v12009, 0.0
      %v12090 = vadd.f32 %v12014, 0.0
      %v12091 = vadd.f32 %v12017, 0.0
      %v12092 = vadd.f32 %v12022, 0.0
      %v12093 = vadd.f32 %v12025, 0.0
      %v12094 = vadd.f32 %v12030, 0.0
      %v12095 = vadd.f32 %v12033, 0.0
      %v12096 = vadd.f32 %v12038, 0.0
      %v12097 = vadd.f32 %v12041, 0.0
      %v12098 = vadd.f32 %v12046, 0.0
      %v12099 = vadd.f32 %v12049, 0.0
      %12132 = vrot.lane.b32.xlu0 %v11934, 120
      %v12133 = vpop.permute.xlu0 %12132
      %12134 = vrot.lane.b32.xlu0 %v11937, 120
      %v12135 = vpop.permute.xlu0 %12134
      %12136 = vrot.lane.b32.xlu0 %v11942, 120
      %v12137 = vpop.permute.xlu0 %12136
      %12138 = vrot.lane.b32.xlu0 %v11945, 120
      %v12139 = vpop.permute.xlu0 %12138
      %12140 = vrot.lane.b32.xlu0 %v11950, 120
      %v12141 = vpop.permute.xlu0 %12140
      %12142 = vrot.lane.b32.xlu0 %v11953, 120
      %v12143 = vpop.permute.xlu0 %12142
      %12144 = vrot.lane.b32.xlu0 %v11958, 120
      %v12145 = vpop.permute.xlu0 %12144
      %12146 = vrot.lane.b32.xlu0 %v11961, 120
      %v12147 = vpop.permute.xlu0 %12146
      %12148 = vrot.lane.b32.xlu0 %v11966, 120
      %v12149 = vpop.permute.xlu0 %12148
      %12150 = vrot.lane.b32.xlu0 %v11969, 120
      %v12151 = vpop.permute.xlu0 %12150
      %12152 = vrot.lane.b32.xlu0 %v11974, 120
      %v12153 = vpop.permute.xlu0 %12152
      %12154 = vrot.lane.b32.xlu0 %v11977, 120
      %v12155 = vpop.permute.xlu0 %12154
      %12156 = vrot.lane.b32.xlu0 %v11982, 120
      %v12157 = vpop.permute.xlu0 %12156
      %12158 = vrot.lane.b32.xlu0 %v11985, 120
      %v12159 = vpop.permute.xlu0 %12158
      %12160 = vrot.lane.b32.xlu0 %v11990, 120
      %v12161 = vpop.permute.xlu0 %12160
      %12162 = vrot.lane.b32.xlu0 %v11993, 120
      %v12163 = vpop.permute.xlu0 %12162
      %12164 = vrot.lane.b32.xlu0 %v11998, 120
      %v12165 = vpop.permute.xlu0 %12164
      %12166 = vrot.lane.b32.xlu0 %v12001, 120
      %v12167 = vpop.permute.xlu0 %12166
      %12168 = vrot.lane.b32.xlu0 %v12006, 120
      %v12169 = vpop.permute.xlu0 %12168
      %12170 = vrot.lane.b32.xlu0 %v12009, 120
      %v12171 = vpop.permute.xlu0 %12170
      %12172 = vrot.lane.b32.xlu0 %v12014, 120
      %v12173 = vpop.permute.xlu0 %12172
      %12174 = vrot.lane.b32.xlu0 %v12017, 120
      %v12175 = vpop.permute.xlu0 %12174
      %12176 = vrot.lane.b32.xlu0 %v12022, 120
      %v12177 = vpop.permute.xlu0 %12176
      %12178 = vrot.lane.b32.xlu0 %v12025, 120
      %v12179 = vpop.permute.xlu0 %12178
      %12180 = vrot.lane.b32.xlu0 %v12030, 120
      %v12181 = vpop.permute.xlu0 %12180
      %12182 = vrot.lane.b32.xlu0 %v12033, 120
      %v12183 = vpop.permute.xlu0 %12182
      %12184 = vrot.lane.b32.xlu0 %v12038, 120
      %v12185 = vpop.permute.xlu0 %12184
      %12186 = vrot.lane.b32.xlu0 %v12041, 120
      %v12187 = vpop.permute.xlu0 %12186
      %12188 = vrot.lane.b32.xlu0 %v12046, 120
      %v12189 = vpop.permute.xlu0 %12188
      %12190 = vrot.lane.b32.xlu0 %v12049, 120
      %v12191 = vpop.permute.xlu0 %12190
      %12192 = vrot.lane.b32.xlu0 %v12054, 120
      %v12193 = vpop.permute.xlu0 %12192
      %12194 = vrot.lane.b32.xlu0 %v12057, 120
      %v12195 = vpop.permute.xlu0 %12194
      %v12228 = vadd.f32 %v12068, %v12133
      %v12229 = vadd.f32 %v12069, %v12135
      %v12230 = vadd.f32 %v12070, %v12137
      %v12231 = vadd.f32 %v12071, %v12139
      %v12232 = vadd.f32 %v12072, %v12141
      %v12233 = vadd.f32 %v12073, %v12143
      %v12234 = vadd.f32 %v12074, %v12145
      %v12235 = vadd.f32 %v12075, %v12147
      %v12236 = vadd.f32 %v12076, %v12149
      %v12237 = vadd.f32 %v12077, %v12151
      %v12238 = vadd.f32 %v12078, %v12153
      %v12239 = vadd.f32 %v12079, %v12155
      %v12240 = vadd.f32 %v12080, %v12157
      %v12241 = vadd.f32 %v12081, %v12159
      %v12242 = vadd.f32 %v12082, %v12161
      %v12243 = vadd.f32 %v12083, %v12163
      %v12244 = vadd.f32 %v12084, %v12165
      %v12245 = vadd.f32 %v12085, %v12167
      %v12246 = vadd.f32 %v12086, %v12169
      %v12247 = vadd.f32 %v12087, %v12171
      %v12248 = vadd.f32 %v12088, %v12173
      %v12249 = vadd.f32 %v12089, %v12175
      %v12250 = vadd.f32 %v12090, %v12177
      %v12251 = vadd.f32 %v12091, %v12179
      %v12252 = vadd.f32 %v12092, %v12181
      %v12253 = vadd.f32 %v12093, %v12183
      %v12254 = vadd.f32 %v12094, %v12185
      %v12255 = vadd.f32 %v12095, %v12187
      %v12256 = vadd.f32 %v12096, %v12189
      %v12257 = vadd.f32 %v12097, %v12191
      %v12258 = vadd.f32 %v12098, %v12193
      %v12259 = vadd.f32 %v12099, %v12195
      %12262 = vrot.lane.b32.xlu0 %v11942, 112
      %v12263 = vpop.permute.xlu0 %12262
      %12264 = vrot.lane.b32.xlu0 %v11945, 112
      %v12265 = vpop.permute.xlu0 %12264
      %12266 = vrot.lane.b32.xlu0 %v11950, 112
      %v12267 = vpop.permute.xlu0 %12266
      %12268 = vrot.lane.b32.xlu0 %v11953, 112
      %v12269 = vpop.permute.xlu0 %12268
      %12270 = vrot.lane.b32.xlu0 %v11958, 112
      %v12271 = vpop.permute.xlu0 %12270
      %12272 = vrot.lane.b32.xlu0 %v11961, 112
      %v12273 = vpop.permute.xlu0 %12272
      %12274 = vrot.lane.b32.xlu0 %v11966, 112
      %v12275 = vpop.permute.xlu0 %12274
      %12276 = vrot.lane.b32.xlu0 %v11969, 112
      %v12277 = vpop.permute.xlu0 %12276
      %12278 = vrot.lane.b32.xlu0 %v11974, 112
      %v12279 = vpop.permute.xlu0 %12278
      %12280 = vrot.lane.b32.xlu0 %v11977, 112
      %v12281 = vpop.permute.xlu0 %12280
      %12282 = vrot.lane.b32.xlu0 %v11982, 112
      %v12283 = vpop.permute.xlu0 %12282
      %12284 = vrot.lane.b32.xlu0 %v11985, 112
      %v12285 = vpop.permute.xlu0 %12284
      %12286 = vrot.lane.b32.xlu0 %v11990, 112
      %v12287 = vpop.permute.xlu0 %12286
      %12288 = vrot.lane.b32.xlu0 %v11993, 112
      %v12289 = vpop.permute.xlu0 %12288
      %12290 = vrot.lane.b32.xlu0 %v11998, 112
      %v12291 = vpop.permute.xlu0 %12290
      %12292 = vrot.lane.b32.xlu0 %v12001, 112
      %v12293 = vpop.permute.xlu0 %12292
      %12294 = vrot.lane.b32.xlu0 %v12006, 112
      %v12295 = vpop.permute.xlu0 %12294
      %12296 = vrot.lane.b32.xlu0 %v12009, 112
      %v12297 = vpop.permute.xlu0 %12296
      %12298 = vrot.lane.b32.xlu0 %v12014, 112
      %v12299 = vpop.permute.xlu0 %12298
      %12300 = vrot.lane.b32.xlu0 %v12017, 112
      %v12301 = vpop.permute.xlu0 %12300
      %12302 = vrot.lane.b32.xlu0 %v12022, 112
      %v12303 = vpop.permute.xlu0 %12302
      %12304 = vrot.lane.b32.xlu0 %v12025, 112
      %v12305 = vpop.permute.xlu0 %12304
      %12306 = vrot.lane.b32.xlu0 %v12030, 112
      %v12307 = vpop.permute.xlu0 %12306
      %12308 = vrot.lane.b32.xlu0 %v12033, 112
      %v12309 = vpop.permute.xlu0 %12308
      %12310 = vrot.lane.b32.xlu0 %v12038, 112
      %v12311 = vpop.permute.xlu0 %12310
      %12312 = vrot.lane.b32.xlu0 %v12041, 112
      %v12313 = vpop.permute.xlu0 %12312
      %12314 = vrot.lane.b32.xlu0 %v12046, 112
      %v12315 = vpop.permute.xlu0 %12314
      %12316 = vrot.lane.b32.xlu0 %v12049, 112
      %v12317 = vpop.permute.xlu0 %12316
      %12318 = vrot.lane.b32.xlu0 %v12054, 112
      %v12319 = vpop.permute.xlu0 %12318
      %12320 = vrot.lane.b32.xlu0 %v12057, 112
      %v12321 = vpop.permute.xlu0 %12320
      %12322 = vrot.lane.b32.xlu0 %v12062, 112
      %v12323 = vpop.permute.xlu0 %12322
      %12324 = vrot.lane.b32.xlu0 %v12065, 112
      %v12325 = vpop.permute.xlu0 %12324
      %v12358 = vadd.f32 %v12228, %v12263
      %v12359 = vadd.f32 %v12229, %v12265
      %v12360 = vadd.f32 %v12230, %v12267
      %v12361 = vadd.f32 %v12231, %v12269
      %v12362 = vadd.f32 %v12232, %v12271
      %v12363 = vadd.f32 %v12233, %v12273
      %v12364 = vadd.f32 %v12234, %v12275
      %v12365 = vadd.f32 %v12235, %v12277
      %v12366 = vadd.f32 %v12236, %v12279
      %v12367 = vadd.f32 %v12237, %v12281
      %v12368 = vadd.f32 %v12238, %v12283
      %v12369 = vadd.f32 %v12239, %v12285
      %v12370 = vadd.f32 %v12240, %v12287
      %v12371 = vadd.f32 %v12241, %v12289
      %v12372 = vadd.f32 %v12242, %v12291
      %v12373 = vadd.f32 %v12243, %v12293
      %v12374 = vadd.f32 %v12244, %v12295
      %v12375 = vadd.f32 %v12245, %v12297
      %v12376 = vadd.f32 %v12246, %v12299
      %v12377 = vadd.f32 %v12247, %v12301
      %v12378 = vadd.f32 %v12248, %v12303
      %v12379 = vadd.f32 %v12249, %v12305
      %v12380 = vadd.f32 %v12250, %v12307
      %v12381 = vadd.f32 %v12251, %v12309
      %v12382 = vadd.f32 %v12252, %v12311
      %v12383 = vadd.f32 %v12253, %v12313
      %v12384 = vadd.f32 %v12254, %v12315
      %v12385 = vadd.f32 %v12255, %v12317
      %v12386 = vadd.f32 %v12256, %v12319
      %v12387 = vadd.f32 %v12257, %v12321
      %v12388 = vadd.f32 %v12258, %v12323
      %v12389 = vadd.f32 %v12259, %v12325
      %v12390 = vld [vmem:[#allocation2] sm:$0xf0]
      %v12391 = vld [vmem:[#allocation2 + $0x10] sm:$0xf0]
      %v12392 = vld [vmem:[#allocation2 + $0x20] sm:$0xf0]
      %v12393 = vld [vmem:[#allocation2 + $0x30] sm:$0xf0]
      %v12394 = vld [vmem:[#allocation2 + $0x40] sm:$0xf0]
      %v12395 = vld [vmem:[#allocation2 + $0x50] sm:$0xf0]
      %v12396 = vld [vmem:[#allocation2 + $0x60] sm:$0xf0]
      %v12397 = vld [vmem:[#allocation2 + $0x70] sm:$0xf0]
      %v12398 = vld [vmem:[#allocation2 + $0x80] sm:$0xf0]
      %v12399 = vld [vmem:[#allocation2 + $0x90] sm:$0xf0]
      %v12400 = vld [vmem:[#allocation2 + $0xa0] sm:$0xf0]
      %v12401 = vld [vmem:[#allocation2 + $0xb0] sm:$0xf0]
      %v12402 = vld [vmem:[#allocation2 + $0xc0] sm:$0xf0]
      %v12403 = vld [vmem:[#allocation2 + $0xd0] sm:$0xf0]
      %v12404 = vld [vmem:[#allocation2 + $0xe0] sm:$0xf0]
      %v12405 = vld [vmem:[#allocation2 + $0xf0] sm:$0xf0]
      %v12406 = vld [vmem:[#allocation2 + $0x100] sm:$0xf0]
      %v12407 = vld [vmem:[#allocation2 + $0x110] sm:$0xf0]
      %s12408 = scalar_lea.vmem %s9, 12
      %v12409 = vld [vmem:[%s12408] sm:$0xf]
      %v12410 = vld [vmem:[%s12408 + $0x4] sm:$0xf]
      %v12411 = vld [vmem:[%s12408 + $0x8] sm:$0xf]
      %v12448 = vrot.slane %v12390, 4
      %v12449 = vrot.slane %v11481, 4
      %v12450 = vsel %vm1517, %v12448, %v12449
      %v12451 = vrot.slane %v12391, 4
      %v12452 = vrot.slane %v11483, 4
      %v12453 = vsel %vm1517, %v12451, %v12452
      %v12454 = vrot.slane %v12392, 4
      %v12455 = vrot.slane %v11485, 4
      %v12456 = vsel %vm1517, %v12454, %v12455
      %v12457 = vrot.slane %v12393, 4
      %v12458 = vrot.slane %v11487, 4
      %v12459 = vsel %vm1517, %v12457, %v12458
      %v12460 = vrot.slane %v12394, 4
      %v12461 = vrot.slane %v11489, 4
      %v12462 = vsel %vm1517, %v12460, %v12461
      %v12463 = vrot.slane %v12395, 4
      %v12464 = vrot.slane %v11491, 4
      %v12465 = vsel %vm1517, %v12463, %v12464
      %v12466 = vrot.slane %v12396, 4
      %v12467 = vrot.slane %v11493, 4
      %v12468 = vsel %vm1517, %v12466, %v12467
      %v12469 = vrot.slane %v12397, 4
      %v12470 = vrot.slane %v11495, 4
      %v12471 = vsel %vm1517, %v12469, %v12470
      %v12472 = vrot.slane %v12398, 4
      %v12473 = vrot.slane %v11497, 4
      %v12474 = vsel %vm1517, %v12472, %v12473
      %v12475 = vrot.slane %v12399, 4
      %v12476 = vrot.slane %v11499, 4
      %v12477 = vsel %vm1517, %v12475, %v12476
      %v12478 = vrot.slane %v12400, 4
      %v12479 = vrot.slane %v11501, 4
      %v12480 = vsel %vm1517, %v12478, %v12479
      %v12481 = vrot.slane %v12401, 4
      %v12482 = vrot.slane %v11503, 4
      %v12483 = vsel %vm1517, %v12481, %v12482
      %v12484 = vrot.slane %v12402, 4
      %v12485 = vrot.slane %v11505, 4
      %v12486 = vsel %vm1517, %v12484, %v12485
      %v12487 = vrot.slane %v12403, 4
      %v12488 = vrot.slane %v11507, 4
      %v12489 = vsel %vm1517, %v12487, %v12488
      %v12490 = vrot.slane %v12404, 4
      %v12491 = vrot.slane %v11509, 4
      %v12492 = vsel %vm1517, %v12490, %v12491
      %v12493 = vrot.slane %v12405, 4
      %v12494 = vrot.slane %v11511, 4
      %v12495 = vsel %vm1517, %v12493, %v12494
      %v12496 = vrot.slane %v12406, 4
      %v12497 = vrot.slane %v11513, 4
      %v12498 = vsel %vm1517, %v12496, %v12497
      %v12499 = vrot.slane %v12407, 4
      %v12500 = vrot.slane %v11515, 4
      %v12501 = vsel %vm1517, %v12499, %v12500
      %v12505 = vunpack.c.l.b16 %v12409
      %v12506 = vunpack.c.l.b16 %v12410
      %v12507 = vunpack.c.l.b16 %v12411
      %v12508 = vpack.c.b16 %v12506, %v12505
      %v12509 = vpack.c.b16 %v12507, %v12507
      %v12512 = vsel %vm388, %v12450, 0
      %v12515 = vsel %vm388, %v12453, 0
      %v12518 = vsel %vm388, %v12456, 0
      %v12521 = vsel %vm388, %v12459, 0
      %v12524 = vsel %vm388, %v12462, 0
      %v12527 = vsel %vm388, %v12465, 0
      %v12530 = vsel %vm388, %v12468, 0
      %v12533 = vsel %vm388, %v12471, 0
      %v12536 = vsel %vm388, %v12474, 0
      %v12539 = vsel %vm388, %v12477, 0
      %v12542 = vsel %vm388, %v12480, 0
      %v12545 = vsel %vm388, %v12483, 0
      %v12548 = vsel %vm388, %v12486, 0
      %v12551 = vsel %vm388, %v12489, 0
      %v12554 = vsel %vm388, %v12492, 0
      %v12557 = vsel %vm388, %v12495, 0
      %v12560 = vsel %vm388, %v12498, 0
      %v12563 = vsel %vm388, %v12501, 0
      %v12566 = vsel %vm958, %v12509, 0
      %12568 = vmatprep.subr.bf16.mxu0 0
      %12569 = vmatpush1.bf16.msra.mxu0 %v12508
      %12570 = vmatprep.subr.bf16.mxu0 0
      %12571 = vmatpush1.bf16.msra.mxu0 %v12566
      %12572 = vmatprep.subr.bf16.mxu0 0
      %12573 = vmatpush1.bf16.msra.mxu0 0
      %12574 = vmatprep.subr.bf16.mxu0 0
      %12575 = vmatpush1.bf16.msra.mxu0 0
      %12576 = vmatprep.subr.bf16.mxu0 0
      %12577 = vmatpush1.bf16.msra.mxu0 0
      %12578 = vmatprep.subr.bf16.mxu0 0
      %12579 = vmatpush1.bf16.msra.mxu0 0
      %12580 = vmatprep.subr.bf16.mxu0 0
      %12581 = vmatpush1.bf16.msra.mxu0 0
      %12582 = vmatprep.subr.bf16.mxu0 0
      %12583 = vmatpush1.bf16.msra.mxu0 0
      %12584 = vmatprep.subr.bf16.mxu0 0
      %12585 = vmatpush1.bf16.msra.mxu0 0
      %12586 = vmatprep.subr.bf16.mxu0 0
      %12587 = vmatpush1.bf16.msra.mxu0 0
      %12588 = vmatprep.subr.bf16.mxu0 0
      %12589 = vmatpush1.bf16.msra.mxu0 0
      %12590 = vmatprep.subr.bf16.mxu0 0
      %12591 = vmatpush1.bf16.msra.mxu0 0
      %12592 = vmatprep.subr.bf16.mxu0 0
      %12593 = vmatpush1.bf16.msra.mxu0 0
      %12594 = vmatprep.subr.bf16.mxu0 0
      %12595 = vmatpush1.bf16.msra.mxu0 0
      %12596 = vmatprep.subr.bf16.mxu0 0
      %12597 = vmatpush1.bf16.msra.mxu0 0
      %12598 = vmatprep.subr.bf16.mxu0 0
      %12599 = vmatpush1.bf16.msra.mxu0 0
      %12600 = vmatprep.mubr.bf16.mxu0 0
      %12601 = vmatmul.mubr.bf16.gmra.mrb[0].mxu0 %v12512
      %v12602 = vpop.f32.mrb[0].mxu0
      %v12603 = vadd.f32 0.0, %v12602
      %v12604 = vpop.f32.mrb[0].mxu0
      %v12605 = vpop.f32.mrb[0].mxu0
      %v12606 = vadd.f32 0.0, %v12605
      %v12607 = vpop.f32.mrb[0].mxu0
      %12608 = vmatprep.mubr.bf16.mxu0 0
      %12609 = vmatmul.mubr.bf16.gmra.mrb[0].mxu0 %v12515
      %v12610 = vpop.f32.mrb[0].mxu0
      %v12611 = vadd.f32 0.0, %v12610
      %v12612 = vpop.f32.mrb[0].mxu0
      %v12613 = vpop.f32.mrb[0].mxu0
      %v12614 = vadd.f32 0.0, %v12613
      %v12615 = vpop.f32.mrb[0].mxu0
      %12616 = vmatprep.mubr.bf16.mxu0 0
      %12617 = vmatmul.mubr.bf16.gmra.mrb[0].mxu0 %v12518
      %v12618 = vpop.f32.mrb[0].mxu0
      %v12619 = vadd.f32 0.0, %v12618
      %v12620 = vpop.f32.mrb[0].mxu0
      %v12621 = vpop.f32.mrb[0].mxu0
      %v12622 = vadd.f32 0.0, %v12621
      %v12623 = vpop.f32.mrb[0].mxu0
      %12624 = vmatprep.mubr.bf16.mxu0 0
      %12625 = vmatmul.mubr.bf16.gmra.mrb[0].mxu0 %v12521
      %v12626 = vpop.f32.mrb[0].mxu0
      %v12627 = vadd.f32 0.0, %v12626
      %v12628 = vpop.f32.mrb[0].mxu0
      %v12629 = vpop.f32.mrb[0].mxu0
      %v12630 = vadd.f32 0.0, %v12629
      %v12631 = vpop.f32.mrb[0].mxu0
      %12632 = vmatprep.mubr.bf16.mxu0 0
      %12633 = vmatmul.mubr.bf16.gmra.mrb[0].mxu0 %v12524
      %v12634 = vpop.f32.mrb[0].mxu0
      %v12635 = vadd.f32 0.0, %v12634
      %v12636 = vpop.f32.mrb[0].mxu0
      %v12637 = vpop.f32.mrb[0].mxu0
      %v12638 = vadd.f32 0.0, %v12637
      %v12639 = vpop.f32.mrb[0].mxu0
      %12640 = vmatprep.mubr.bf16.mxu0 0
      %12641 = vmatmul.mubr.bf16.gmra.mrb[0].mxu0 %v12527
      %v12642 = vpop.f32.mrb[0].mxu0
      %v12643 = vadd.f32 0.0, %v12642
      %v12644 = vpop.f32.mrb[0].mxu0
      %v12645 = vpop.f32.mrb[0].mxu0
      %v12646 = vadd.f32 0.0, %v12645
      %v12647 = vpop.f32.mrb[0].mxu0
      %12648 = vmatprep.mubr.bf16.mxu0 0
      %12649 = vmatmul.mubr.bf16.gmra.mrb[0].mxu0 %v12530
      %v12650 = vpop.f32.mrb[0].mxu0
      %v12651 = vadd.f32 0.0, %v12650
      %v12652 = vpop.f32.mrb[0].mxu0
      %v12653 = vpop.f32.mrb[0].mxu0
      %v12654 = vadd.f32 0.0, %v12653
      %v12655 = vpop.f32.mrb[0].mxu0
      %12656 = vmatprep.mubr.bf16.mxu0 0
      %12657 = vmatmul.mubr.bf16.gmra.mrb[0].mxu0 %v12533
      %v12658 = vpop.f32.mrb[0].mxu0
      %v12659 = vadd.f32 0.0, %v12658
      %v12660 = vpop.f32.mrb[0].mxu0
      %v12661 = vpop.f32.mrb[0].mxu0
      %v12662 = vadd.f32 0.0, %v12661
      %v12663 = vpop.f32.mrb[0].mxu0
      %12664 = vmatprep.mubr.bf16.mxu0 0
      %12665 = vmatmul.mubr.bf16.gmra.mrb[0].mxu0 %v12536
      %v12666 = vpop.f32.mrb[0].mxu0
      %v12667 = vadd.f32 0.0, %v12666
      %v12668 = vpop.f32.mrb[0].mxu0
      %v12669 = vpop.f32.mrb[0].mxu0
      %v12670 = vadd.f32 0.0, %v12669
      %v12671 = vpop.f32.mrb[0].mxu0
      %12672 = vmatprep.mubr.bf16.mxu0 0
      %12673 = vmatmul.mubr.bf16.gmra.mrb[0].mxu0 %v12539
      %v12674 = vpop.f32.mrb[0].mxu0
      %v12675 = vadd.f32 0.0, %v12674
      %v12676 = vpop.f32.mrb[0].mxu0
      %v12677 = vpop.f32.mrb[0].mxu0
      %v12678 = vadd.f32 0.0, %v12677
      %v12679 = vpop.f32.mrb[0].mxu0
      %12680 = vmatprep.mubr.bf16.mxu0 0
      %12681 = vmatmul.mubr.bf16.gmra.mrb[0].mxu0 %v12542
      %v12682 = vpop.f32.mrb[0].mxu0
      %v12683 = vadd.f32 0.0, %v12682
      %v12684 = vpop.f32.mrb[0].mxu0
      %v12685 = vpop.f32.mrb[0].mxu0
      %v12686 = vadd.f32 0.0, %v12685
      %v12687 = vpop.f32.mrb[0].mxu0
      %12688 = vmatprep.mubr.bf16.mxu0 0
      %12689 = vmatmul.mubr.bf16.gmra.mrb[0].mxu0 %v12545
      %v12690 = vpop.f32.mrb[0].mxu0
      %v12691 = vadd.f32 0.0, %v12690
      %v12692 = vpop.f32.mrb[0].mxu0
      %v12693 = vpop.f32.mrb[0].mxu0
      %v12694 = vadd.f32 0.0, %v12693
      %v12695 = vpop.f32.mrb[0].mxu0
      %12696 = vmatprep.mubr.bf16.mxu0 0
      %12697 = vmatmul.mubr.bf16.gmra.mrb[0].mxu0 %v12548
      %v12698 = vpop.f32.mrb[0].mxu0
      %v12699 = vadd.f32 0.0, %v12698
      %v12700 = vpop.f32.mrb[0].mxu0
      %v12701 = vpop.f32.mrb[0].mxu0
      %v12702 = vadd.f32 0.0, %v12701
      %v12703 = vpop.f32.mrb[0].mxu0
      %12704 = vmatprep.mubr.bf16.mxu0 0
      %12705 = vmatmul.mubr.bf16.gmra.mrb[0].mxu0 %v12551
      %v12706 = vpop.f32.mrb[0].mxu0
      %v12707 = vadd.f32 0.0, %v12706
      %v12708 = vpop.f32.mrb[0].mxu0
      %v12709 = vpop.f32.mrb[0].mxu0
      %v12710 = vadd.f32 0.0, %v12709
      %v12711 = vpop.f32.mrb[0].mxu0
      %12712 = vmatprep.mubr.bf16.mxu0 0
      %12713 = vmatmul.mubr.bf16.gmra.mrb[0].mxu0 %v12554
      %v12714 = vpop.f32.mrb[0].mxu0
      %v12715 = vadd.f32 0.0, %v12714
      %v12716 = vpop.f32.mrb[0].mxu0
      %v12717 = vpop.f32.mrb[0].mxu0
      %v12718 = vadd.f32 0.0, %v12717
      %v12719 = vpop.f32.mrb[0].mxu0
      %12720 = vmatprep.mubr.bf16.mxu0 0
      %12721 = vmatmul.mubr.bf16.gmra.mrb[0].mxu0 %v12557
      %v12722 = vpop.f32.mrb[0].mxu0
      %v12723 = vadd.f32 0.0, %v12722
      %v12724 = vpop.f32.mrb[0].mxu0
      %v12725 = vpop.f32.mrb[0].mxu0
      %v12726 = vadd.f32 0.0, %v12725
      %v12727 = vpop.f32.mrb[0].mxu0
      %12728 = vmatprep.mubr.bf16.mxu0 0
      %12729 = vmatmul.mubr.bf16.gmra.mrb[0].mxu0 %v12560
      %v12730 = vpop.f32.mrb[0].mxu0
      %v12731 = vadd.f32 0.0, %v12730
      %v12732 = vpop.f32.mrb[0].mxu0
      %v12733 = vpop.f32.mrb[0].mxu0
      %v12734 = vadd.f32 0.0, %v12733
      %v12735 = vpop.f32.mrb[0].mxu0
      %12736 = vmatprep.mubr.bf16.mxu0 0
      %12737 = vmatmul.mubr.bf16.gmra.mrb[0].mxu0 %v12563
      %v12738 = vpop.f32.mrb[0].mxu0
      %v12739 = vadd.f32 0.0, %v12738
      %v12740 = vpop.f32.mrb[0].mxu0
      %v12741 = vpop.f32.mrb[0].mxu0
      %v12742 = vadd.f32 0.0, %v12741
      %v12743 = vpop.f32.mrb[0].mxu0
      %12744 = vdwg.mxu0
      %v12745 = vadd.f32 %v12358, %v12603
      %v12746 = vadd.f32 %v12359, %v12606
      %v12747 = vadd.f32 %v12360, %v12611
      %v12748 = vadd.f32 %v12361, %v12614
      %v12749 = vadd.f32 %v12362, %v12619
      %v12750 = vadd.f32 %v12363, %v12622
      %v12751 = vadd.f32 %v12364, %v12627
      %v12752 = vadd.f32 %v12365, %v12630
      %v12753 = vadd.f32 %v12366, %v12635
      %v12754 = vadd.f32 %v12367, %v12638
      %v12755 = vadd.f32 %v12368, %v12643
      %v12756 = vadd.f32 %v12369, %v12646
      %v12757 = vadd.f32 %v12370, %v12651
      %v12758 = vadd.f32 %v12371, %v12654
      %v12759 = vadd.f32 %v12372, %v12659
      %v12760 = vadd.f32 %v12373, %v12662
      %v12761 = vadd.f32 %v12374, %v12667
      %v12762 = vadd.f32 %v12375, %v12670
      %v12763 = vadd.f32 %v12376, %v12675
      %v12764 = vadd.f32 %v12377, %v12678
      %v12765 = vadd.f32 %v12378, %v12683
      %v12766 = vadd.f32 %v12379, %v12686
      %v12767 = vadd.f32 %v12380, %v12691
      %v12768 = vadd.f32 %v12381, %v12694
      %v12769 = vadd.f32 %v12382, %v12699
      %v12770 = vadd.f32 %v12383, %v12702
      %v12771 = vadd.f32 %v12384, %v12707
      %v12772 = vadd.f32 %v12385, %v12710
      %v12773 = vadd.f32 %v12386, %v12715
      %v12774 = vadd.f32 %v12387, %v12718
      %v12775 = vadd.f32 %v12388, %v12723
      %v12776 = vadd.f32 %v12389, %v12726
      %12809 = vrot.lane.b32.xlu0 %v12611, 120
      %v12810 = vpop.permute.xlu0 %12809
      %12811 = vrot.lane.b32.xlu0 %v12614, 120
      %v12812 = vpop.permute.xlu0 %12811
      %12813 = vrot.lane.b32.xlu0 %v12619, 120
      %v12814 = vpop.permute.xlu0 %12813
      %12815 = vrot.lane.b32.xlu0 %v12622, 120
      %v12816 = vpop.permute.xlu0 %12815
      %12817 = vrot.lane.b32.xlu0 %v12627, 120
      %v12818 = vpop.permute.xlu0 %12817
      %12819 = vrot.lane.b32.xlu0 %v12630, 120
      %v12820 = vpop.permute.xlu0 %12819
      %12821 = vrot.lane.b32.xlu0 %v12635, 120
      %v12822 = vpop.permute.xlu0 %12821
      %12823 = vrot.lane.b32.xlu0 %v12638, 120
      %v12824 = vpop.permute.xlu0 %12823
      %12825 = vrot.lane.b32.xlu0 %v12643, 120
      %v12826 = vpop.permute.xlu0 %12825
      %12827 = vrot.lane.b32.xlu0 %v12646, 120
      %v12828 = vpop.permute.xlu0 %12827
      %12829 = vrot.lane.b32.xlu0 %v12651, 120
      %v12830 = vpop.permute.xlu0 %12829
      %12831 = vrot.lane.b32.xlu0 %v12654, 120
      %v12832 = vpop.permute.xlu0 %12831
      %12833 = vrot.lane.b32.xlu0 %v12659, 120
      %v12834 = vpop.permute.xlu0 %12833
      %12835 = vrot.lane.b32.xlu0 %v12662, 120
      %v12836 = vpop.permute.xlu0 %12835
      %12837 = vrot.lane.b32.xlu0 %v12667, 120
      %v12838 = vpop.permute.xlu0 %12837
      %12839 = vrot.lane.b32.xlu0 %v12670, 120
      %v12840 = vpop.permute.xlu0 %12839
      %12841 = vrot.lane.b32.xlu0 %v12675, 120
      %v12842 = vpop.permute.xlu0 %12841
      %12843 = vrot.lane.b32.xlu0 %v12678, 120
      %v12844 = vpop.permute.xlu0 %12843
      %12845 = vrot.lane.b32.xlu0 %v12683, 120
      %v12846 = vpop.permute.xlu0 %12845
      %12847 = vrot.lane.b32.xlu0 %v12686, 120
      %v12848 = vpop.permute.xlu0 %12847
      %12849 = vrot.lane.b32.xlu0 %v12691, 120
      %v12850 = vpop.permute.xlu0 %12849
      %12851 = vrot.lane.b32.xlu0 %v12694, 120
      %v12852 = vpop.permute.xlu0 %12851
      %12853 = vrot.lane.b32.xlu0 %v12699, 120
      %v12854 = vpop.permute.xlu0 %12853
      %12855 = vrot.lane.b32.xlu0 %v12702, 120
      %v12856 = vpop.permute.xlu0 %12855
      %12857 = vrot.lane.b32.xlu0 %v12707, 120
      %v12858 = vpop.permute.xlu0 %12857
      %12859 = vrot.lane.b32.xlu0 %v12710, 120
      %v12860 = vpop.permute.xlu0 %12859
      %12861 = vrot.lane.b32.xlu0 %v12715, 120
      %v12862 = vpop.permute.xlu0 %12861
      %12863 = vrot.lane.b32.xlu0 %v12718, 120
      %v12864 = vpop.permute.xlu0 %12863
      %12865 = vrot.lane.b32.xlu0 %v12723, 120
      %v12866 = vpop.permute.xlu0 %12865
      %12867 = vrot.lane.b32.xlu0 %v12726, 120
      %v12868 = vpop.permute.xlu0 %12867
      %12869 = vrot.lane.b32.xlu0 %v12731, 120
      %v12870 = vpop.permute.xlu0 %12869
      %12871 = vrot.lane.b32.xlu0 %v12734, 120
      %v12872 = vpop.permute.xlu0 %12871
      %v12905 = vadd.f32 %v12745, %v12810
      %v12906 = vadd.f32 %v12746, %v12812
      %v12907 = vadd.f32 %v12747, %v12814
      %v12908 = vadd.f32 %v12748, %v12816
      %v12909 = vadd.f32 %v12749, %v12818
      %v12910 = vadd.f32 %v12750, %v12820
      %v12911 = vadd.f32 %v12751, %v12822
      %v12912 = vadd.f32 %v12752, %v12824
      %v12913 = vadd.f32 %v12753, %v12826
      %v12914 = vadd.f32 %v12754, %v12828
      %v12915 = vadd.f32 %v12755, %v12830
      %v12916 = vadd.f32 %v12756, %v12832
      %v12917 = vadd.f32 %v12757, %v12834
      %v12918 = vadd.f32 %v12758, %v12836
      %v12919 = vadd.f32 %v12759, %v12838
      %v12920 = vadd.f32 %v12760, %v12840
      %v12921 = vadd.f32 %v12761, %v12842
      %v12922 = vadd.f32 %v12762, %v12844
      %v12923 = vadd.f32 %v12763, %v12846
      %v12924 = vadd.f32 %v12764, %v12848
      %v12925 = vadd.f32 %v12765, %v12850
      %v12926 = vadd.f32 %v12766, %v12852
      %v12927 = vadd.f32 %v12767, %v12854
      %v12928 = vadd.f32 %v12768, %v12856
      %v12929 = vadd.f32 %v12769, %v12858
      %v12930 = vadd.f32 %v12770, %v12860
      %v12931 = vadd.f32 %v12771, %v12862
      %v12932 = vadd.f32 %v12772, %v12864
      %v12933 = vadd.f32 %v12773, %v12866
      %v12934 = vadd.f32 %v12774, %v12868
      %v12935 = vadd.f32 %v12775, %v12870
      %v12936 = vadd.f32 %v12776, %v12872
      %12939 = vrot.lane.b32.xlu0 %v12619, 112
      %v12940 = vpop.permute.xlu0 %12939
      %12941 = vrot.lane.b32.xlu0 %v12622, 112
      %v12942 = vpop.permute.xlu0 %12941
      %12943 = vrot.lane.b32.xlu0 %v12627, 112
      %v12944 = vpop.permute.xlu0 %12943
      %12945 = vrot.lane.b32.xlu0 %v12630, 112
      %v12946 = vpop.permute.xlu0 %12945
      %12947 = vrot.lane.b32.xlu0 %v12635, 112
      %v12948 = vpop.permute.xlu0 %12947
      %12949 = vrot.lane.b32.xlu0 %v12638, 112
      %v12950 = vpop.permute.xlu0 %12949
      %12951 = vrot.lane.b32.xlu0 %v12643, 112
      %v12952 = vpop.permute.xlu0 %12951
      %12953 = vrot.lane.b32.xlu0 %v12646, 112
      %v12954 = vpop.permute.xlu0 %12953
      %12955 = vrot.lane.b32.xlu0 %v12651, 112
      %v12956 = vpop.permute.xlu0 %12955
      %12957 = vrot.lane.b32.xlu0 %v12654, 112
      %v12958 = vpop.permute.xlu0 %12957
      %12959 = vrot.lane.b32.xlu0 %v12659, 112
      %v12960 = vpop.permute.xlu0 %12959
      %12961 = vrot.lane.b32.xlu0 %v12662, 112
      %v12962 = vpop.permute.xlu0 %12961
      %12963 = vrot.lane.b32.xlu0 %v12667, 112
      %v12964 = vpop.permute.xlu0 %12963
      %12965 = vrot.lane.b32.xlu0 %v12670, 112
      %v12966 = vpop.permute.xlu0 %12965
      %12967 = vrot.lane.b32.xlu0 %v12675, 112
      %v12968 = vpop.permute.xlu0 %12967
      %12969 = vrot.lane.b32.xlu0 %v12678, 112
      %v12970 = vpop.permute.xlu0 %12969
      %12971 = vrot.lane.b32.xlu0 %v12683, 112
      %v12972 = vpop.permute.xlu0 %12971
      %12973 = vrot.lane.b32.xlu0 %v12686, 112
      %v12974 = vpop.permute.xlu0 %12973
      %12975 = vrot.lane.b32.xlu0 %v12691, 112
      %v12976 = vpop.permute.xlu0 %12975
      %12977 = vrot.lane.b32.xlu0 %v12694, 112
      %v12978 = vpop.permute.xlu0 %12977
      %12979 = vrot.lane.b32.xlu0 %v12699, 112
      %v12980 = vpop.permute.xlu0 %12979
      %12981 = vrot.lane.b32.xlu0 %v12702, 112
      %v12982 = vpop.permute.xlu0 %12981
      %12983 = vrot.lane.b32.xlu0 %v12707, 112
      %v12984 = vpop.permute.xlu0 %12983
      %12985 = vrot.lane.b32.xlu0 %v12710, 112
      %v12986 = vpop.permute.xlu0 %12985
      %12987 = vrot.lane.b32.xlu0 %v12715, 112
      %v12988 = vpop.permute.xlu0 %12987
      %12989 = vrot.lane.b32.xlu0 %v12718, 112
      %v12990 = vpop.permute.xlu0 %12989
      %12991 = vrot.lane.b32.xlu0 %v12723, 112
      %v12992 = vpop.permute.xlu0 %12991
      %12993 = vrot.lane.b32.xlu0 %v12726, 112
      %v12994 = vpop.permute.xlu0 %12993
      %12995 = vrot.lane.b32.xlu0 %v12731, 112
      %v12996 = vpop.permute.xlu0 %12995
      %12997 = vrot.lane.b32.xlu0 %v12734, 112
      %v12998 = vpop.permute.xlu0 %12997
      %12999 = vrot.lane.b32.xlu0 %v12739, 112
      %v13000 = vpop.permute.xlu0 %12999
      %13001 = vrot.lane.b32.xlu0 %v12742, 112
      %v13002 = vpop.permute.xlu0 %13001
      %v13035 = vadd.f32 %v12905, %v12940
      %v13036 = vadd.f32 %v12906, %v12942
      %v13037 = vadd.f32 %v12907, %v12944
      %v13038 = vadd.f32 %v12908, %v12946
      %v13039 = vadd.f32 %v12909, %v12948
      %v13040 = vadd.f32 %v12910, %v12950
      %v13041 = vadd.f32 %v12911, %v12952
      %v13042 = vadd.f32 %v12912, %v12954
      %v13043 = vadd.f32 %v12913, %v12956
      %v13044 = vadd.f32 %v12914, %v12958
      %v13045 = vadd.f32 %v12915, %v12960
      %v13046 = vadd.f32 %v12916, %v12962
      %v13047 = vadd.f32 %v12917, %v12964
      %v13048 = vadd.f32 %v12918, %v12966
      %v13049 = vadd.f32 %v12919, %v12968
      %v13050 = vadd.f32 %v12920, %v12970
      %v13051 = vadd.f32 %v12921, %v12972
      %v13052 = vadd.f32 %v12922, %v12974
      %v13053 = vadd.f32 %v12923, %v12976
      %v13054 = vadd.f32 %v12924, %v12978
      %v13055 = vadd.f32 %v12925, %v12980
      %v13056 = vadd.f32 %v12926, %v12982
      %v13057 = vadd.f32 %v12927, %v12984
      %v13058 = vadd.f32 %v12928, %v12986
      %v13059 = vadd.f32 %v12929, %v12988
      %v13060 = vadd.f32 %v12930, %v12990
      %v13061 = vadd.f32 %v12931, %v12992
      %v13062 = vadd.f32 %v12932, %v12994
      %v13063 = vadd.f32 %v12933, %v12996
      %v13064 = vadd.f32 %v12934, %v12998
      %v13065 = vadd.f32 %v12935, %v13000
      %v13066 = vadd.f32 %v12936, %v13002
      %v13067 = vld [vmem:[#allocation2 + $0x8] sm:$0x1f]
      %v13068 = vld [vmem:[#allocation2 + $0x18] sm:$0x1f]
      %v13069 = vld [vmem:[#allocation2 + $0x28] sm:$0x1f]
      %v13070 = vld [vmem:[#allocation2 + $0x38] sm:$0x1f]
      %v13071 = vld [vmem:[#allocation2 + $0x48] sm:$0x1f]
      %v13072 = vld [vmem:[#allocation2 + $0x58] sm:$0x1f]
      %v13073 = vld [vmem:[#allocation2 + $0x68] sm:$0x1f]
      %v13074 = vld [vmem:[#allocation2 + $0x78] sm:$0x1f]
      %v13075 = vld [vmem:[#allocation2 + $0x88] sm:$0x1f]
      %v13076 = vld [vmem:[#allocation2 + $0x98] sm:$0x1f]
      %v13077 = vld [vmem:[#allocation2 + $0xa8] sm:$0x1f]
      %v13078 = vld [vmem:[#allocation2 + $0xb8] sm:$0x1f]
      %v13079 = vld [vmem:[#allocation2 + $0xc8] sm:$0x1f]
      %v13080 = vld [vmem:[#allocation2 + $0xd8] sm:$0x1f]
      %v13081 = vld [vmem:[#allocation2 + $0xe8] sm:$0x1f]
      %v13082 = vld [vmem:[#allocation2 + $0xf8] sm:$0x1f]
      %v13083 = vld [vmem:[#allocation2 + $0x108] sm:$0x1f]
      %v13084 = vld [vmem:[#allocation2 + $0x118] sm:$0x1f]
      %s13085 = scalar_lea.vmem %s9, 24
      %v13086 = vld [vmem:[%s13085] sm:$0xf]
      %v13087 = vld [vmem:[%s13085 + $0x4] sm:$0xf]
      %v13088 = vld [vmem:[%s13085 + $0x8] sm:$0xf]
      %v13090 = vshrl.u32 %v12390, 16
      %v13092 = vrot.slane %v13090, 4
      %v13093 = vshll.u32 %v12390, 16
      %v13095 = vrot.slane %v13093, 5
      %v13096 = vor.u32 %v13092, %v13095
      %v13098 = vshrl.u32 %v13067, 16
      %v13100 = vrot.slane %v13098, 4
      %v13101 = vshll.u32 %v13067, 16
      %v13103 = vrot.slane %v13101, 5
      %v13104 = vor.u32 %v13100, %v13103
      %v13105 = vsel %vm2148, %v13096, %v13104
      %v13107 = vshrl.u32 %v12391, 16
      %v13109 = vrot.slane %v13107, 4
      %v13110 = vshll.u32 %v12391, 16
      %v13112 = vrot.slane %v13110, 5
      %v13113 = vor.u32 %v13109, %v13112
      %v13115 = vshrl.u32 %v13068, 16
      %v13117 = vrot.slane %v13115, 4
      %v13118 = vshll.u32 %v13068, 16
      %v13120 = vrot.slane %v13118, 5
      %v13121 = vor.u32 %v13117, %v13120
      %v13122 = vsel %vm2148, %v13113, %v13121
      %v13124 = vshrl.u32 %v12392, 16
      %v13126 = vrot.slane %v13124, 4
      %v13127 = vshll.u32 %v12392, 16
      %v13129 = vrot.slane %v13127, 5
      %v13130 = vor.u32 %v13126, %v13129
      %v13132 = vshrl.u32 %v13069, 16
      %v13134 = vrot.slane %v13132, 4
      %v13135 = vshll.u32 %v13069, 16
      %v13137 = vrot.slane %v13135, 5
      %v13138 = vor.u32 %v13134, %v13137
      %v13139 = vsel %vm2148, %v13130, %v13138
      %v13141 = vshrl.u32 %v12393, 16
      %v13143 = vrot.slane %v13141, 4
      %v13144 = vshll.u32 %v12393, 16
      %v13146 = vrot.slane %v13144, 5
      %v13147 = vor.u32 %v13143, %v13146
      %v13149 = vshrl.u32 %v13070, 16
      %v13151 = vrot.slane %v13149, 4
      %v13152 = vshll.u32 %v13070, 16
      %v13154 = vrot.slane %v13152, 5
      %v13155 = vor.u32 %v13151, %v13154
      %v13156 = vsel %vm2148, %v13147, %v13155
      %v13158 = vshrl.u32 %v12394, 16
      %v13160 = vrot.slane %v13158, 4
      %v13161 = vshll.u32 %v12394, 16
      %v13163 = vrot.slane %v13161, 5
      %v13164 = vor.u32 %v13160, %v13163
      %v13166 = vshrl.u32 %v13071, 16
      %v13168 = vrot.slane %v13166, 4
      %v13169 = vshll.u32 %v13071, 16
      %v13171 = vrot.slane %v13169, 5
      %v13172 = vor.u32 %v13168, %v13171
      %v13173 = vsel %vm2148, %v13164, %v13172
      %v13175 = vshrl.u32 %v12395, 16
      %v13177 = vrot.slane %v13175, 4
      %v13178 = vshll.u32 %v12395, 16
      %v13180 = vrot.slane %v13178, 5
      %v13181 = vor.u32 %v13177, %v13180
      %v13183 = vshrl.u32 %v13072, 16
      %v13185 = vrot.slane %v13183, 4
      %v13186 = vshll.u32 %v13072, 16
      %v13188 = vrot.slane %v13186, 5
      %v13189 = vor.u32 %v13185, %v13188
      %v13190 = vsel %vm2148, %v13181, %v13189
      %v13192 = vshrl.u32 %v12396, 16
      %v13194 = vrot.slane %v13192, 4
      %v13195 = vshll.u32 %v12396, 16
      %v13197 = vrot.slane %v13195, 5
      %v13198 = vor.u32 %v13194, %v13197
      %v13200 = vshrl.u32 %v13073, 16
      %v13202 = vrot.slane %v13200, 4
      %v13203 = vshll.u32 %v13073, 16
      %v13205 = vrot.slane %v13203, 5
      %v13206 = vor.u32 %v13202, %v13205
      %v13207 = vsel %vm2148, %v13198, %v13206
      %v13209 = vshrl.u32 %v12397, 16
      %v13211 = vrot.slane %v13209, 4
      %v13212 = vshll.u32 %v12397, 16
      %v13214 = vrot.slane %v13212, 5
      %v13215 = vor.u32 %v13211, %v13214
      %v13217 = vshrl.u32 %v13074, 16
      %v13219 = vrot.slane %v13217, 4
      %v13220 = vshll.u32 %v13074, 16
      %v13222 = vrot.slane %v13220, 5
      %v13223 = vor.u32 %v13219, %v13222
      %v13224 = vsel %vm2148, %v13215, %v13223
      %v13226 = vshrl.u32 %v12398, 16
      %v13228 = vrot.slane %v13226, 4
      %v13229 = vshll.u32 %v12398, 16
      %v13231 = vrot.slane %v13229, 5
      %v13232 = vor.u32 %v13228, %v13231
      %v13234 = vshrl.u32 %v13075, 16
      %v13236 = vrot.slane %v13234, 4
      %v13237 = vshll.u32 %v13075, 16
      %v13239 = vrot.slane %v13237, 5
      %v13240 = vor.u32 %v13236, %v13239
      %v13241 = vsel %vm2148, %v13232, %v13240
      %v13243 = vshrl.u32 %v12399, 16
      %v13245 = vrot.slane %v13243, 4
      %v13246 = vshll.u32 %v12399, 16
      %v13248 = vrot.slane %v13246, 5
      %v13249 = vor.u32 %v13245, %v13248
      %v13251 = vshrl.u32 %v13076, 16
      %v13253 = vrot.slane %v13251, 4
      %v13254 = vshll.u32 %v13076, 16
      %v13256 = vrot.slane %v13254, 5
      %v13257 = vor.u32 %v13253, %v13256
      %v13258 = vsel %vm2148, %v13249, %v13257
      %v13260 = vshrl.u32 %v12400, 16
      %v13262 = vrot.slane %v13260, 4
      %v13263 = vshll.u32 %v12400, 16
      %v13265 = vrot.slane %v13263, 5
      %v13266 = vor.u32 %v13262, %v13265
      %v13268 = vshrl.u32 %v13077, 16
      %v13270 = vrot.slane %v13268, 4
      %v13271 = vshll.u32 %v13077, 16
      %v13273 = vrot.slane %v13271, 5
      %v13274 = vor.u32 %v13270, %v13273
      %v13275 = vsel %vm2148, %v13266, %v13274
      %v13277 = vshrl.u32 %v12401, 16
      %v13279 = vrot.slane %v13277, 4
      %v13280 = vshll.u32 %v12401, 16
      %v13282 = vrot.slane %v13280, 5
      %v13283 = vor.u32 %v13279, %v13282
      %v13285 = vshrl.u32 %v13078, 16
      %v13287 = vrot.slane %v13285, 4
      %v13288 = vshll.u32 %v13078, 16
      %v13290 = vrot.slane %v13288, 5
      %v13291 = vor.u32 %v13287, %v13290
      %v13292 = vsel %vm2148, %v13283, %v13291
      %v13294 = vshrl.u32 %v12402, 16
      %v13296 = vrot.slane %v13294, 4
      %v13297 = vshll.u32 %v12402, 16
      %v13299 = vrot.slane %v13297, 5
      %v13300 = vor.u32 %v13296, %v13299
      %v13302 = vshrl.u32 %v13079, 16
      %v13304 = vrot.slane %v13302, 4
      %v13305 = vshll.u32 %v13079, 16
      %v13307 = vrot.slane %v13305, 5
      %v13308 = vor.u32 %v13304, %v13307
      %v13309 = vsel %vm2148, %v13300, %v13308
      %v13311 = vshrl.u32 %v12403, 16
      %v13313 = vrot.slane %v13311, 4
      %v13314 = vshll.u32 %v12403, 16
      %v13316 = vrot.slane %v13314, 5
      %v13317 = vor.u32 %v13313, %v13316
      %v13319 = vshrl.u32 %v13080, 16
      %v13321 = vrot.slane %v13319, 4
      %v13322 = vshll.u32 %v13080, 16
      %v13324 = vrot.slane %v13322, 5
      %v13325 = vor.u32 %v13321, %v13324
      %v13326 = vsel %vm2148, %v13317, %v13325
      %v13328 = vshrl.u32 %v12404, 16
      %v13330 = vrot.slane %v13328, 4
      %v13331 = vshll.u32 %v12404, 16
      %v13333 = vrot.slane %v13331, 5
      %v13334 = vor.u32 %v13330, %v13333
      %v13336 = vshrl.u32 %v13081, 16
      %v13338 = vrot.slane %v13336, 4
      %v13339 = vshll.u32 %v13081, 16
      %v13341 = vrot.slane %v13339, 5
      %v13342 = vor.u32 %v13338, %v13341
      %v13343 = vsel %vm2148, %v13334, %v13342
      %v13345 = vshrl.u32 %v12405, 16
      %v13347 = vrot.slane %v13345, 4
      %v13348 = vshll.u32 %v12405, 16
      %v13350 = vrot.slane %v13348, 5
      %v13351 = vor.u32 %v13347, %v13350
      %v13353 = vshrl.u32 %v13082, 16
      %v13355 = vrot.slane %v13353, 4
      %v13356 = vshll.u32 %v13082, 16
      %v13358 = vrot.slane %v13356, 5
      %v13359 = vor.u32 %v13355, %v13358
      %v13360 = vsel %vm2148, %v13351, %v13359
      %v13362 = vshrl.u32 %v12406, 16
      %v13364 = vrot.slane %v13362, 4
      %v13365 = vshll.u32 %v12406, 16
      %v13367 = vrot.slane %v13365, 5
      %v13368 = vor.u32 %v13364, %v13367
      %v13370 = vshrl.u32 %v13083, 16
      %v13372 = vrot.slane %v13370, 4
      %v13373 = vshll.u32 %v13083, 16
      %v13375 = vrot.slane %v13373, 5
      %v13376 = vor.u32 %v13372, %v13375
      %v13377 = vsel %vm2148, %v13368, %v13376
      %v13379 = vshrl.u32 %v12407, 16
      %v13381 = vrot.slane %v13379, 4
      %v13382 = vshll.u32 %v12407, 16
      %v13384 = vrot.slane %v13382, 5
      %v13385 = vor.u32 %v13381, %v13384
      %v13387 = vshrl.u32 %v13084, 16
      %v13389 = vrot.slane %v13387, 4
      %v13390 = vshll.u32 %v13084, 16
      %v13392 = vrot.slane %v13390, 5
      %v13393 = vor.u32 %v13389, %v13392
      %v13394 = vsel %vm2148, %v13385, %v13393
      %v13398 = vunpack.c.l.b16 %v13086
      %v13399 = vunpack.c.l.b16 %v13087
      %v13400 = vunpack.c.l.b16 %v13088
      %v13401 = vpack.c.b16 %v13399, %v13398
      %v13402 = vpack.c.b16 %v13400, %v13400
      %v13405 = vsel %vm388, %v13105, 0
      %v13408 = vsel %vm388, %v13122, 0
      %v13411 = vsel %vm388, %v13139, 0
      %v13414 = vsel %vm388, %v13156, 0
      %v13417 = vsel %vm388, %v13173, 0
      %v13420 = vsel %vm388, %v13190, 0
      %v13423 = vsel %vm388, %v13207, 0
      %v13426 = vsel %vm388, %v13224, 0
      %v13429 = vsel %vm388, %v13241, 0
      %v13432 = vsel %vm388, %v13258, 0
      %v13435 = vsel %vm388, %v13275, 0
      %v13438 = vsel %vm388, %v13292, 0
      %v13441 = vsel %vm388, %v13309, 0
      %v13444 = vsel %vm388, %v13326, 0
      %v13447 = vsel %vm388, %v13343, 0
      %v13450 = vsel %vm388, %v13360, 0
      %v13453 = vsel %vm388, %v13377, 0
      %v13456 = vsel %vm388, %v13394, 0
      %v13459 = vsel %vm958, %v13402, 0
      %13461 = vmatprep.subr.bf16.mxu0 0
      %13462 = vmatpush1.bf16.msra.mxu0 %v13401
      %13463 = vmatprep.subr.bf16.mxu0 0
      %13464 = vmatpush1.bf16.msra.mxu0 %v13459
      %13465 = vmatprep.subr.bf16.mxu0 0
      %13466 = vmatpush1.bf16.msra.mxu0 0
      %13467 = vmatprep.subr.bf16.mxu0 0
      %13468 = vmatpush1.bf16.msra.mxu0 0
      %13469 = vmatprep.subr.bf16.mxu0 0
      %13470 = vmatpush1.bf16.msra.mxu0 0
      %13471 = vmatprep.subr.bf16.mxu0 0
      %13472 = vmatpush1.bf16.msra.mxu0 0
      %13473 = vmatprep.subr.bf16.mxu0 0
      %13474 = vmatpush1.bf16.msra.mxu0 0
      %13475 = vmatprep.subr.bf16.mxu0 0
      %13476 = vmatpush1.bf16.msra.mxu0 0
      %13477 = vmatprep.subr.bf16.mxu0 0
      %13478 = vmatpush1.bf16.msra.mxu0 0
      %13479 = vmatprep.subr.bf16.mxu0 0
      %13480 = vmatpush1.bf16.msra.mxu0 0
      %13481 = vmatprep.subr.bf16.mxu0 0
      %13482 = vmatpush1.bf16.msra.mxu0 0
      %13483 = vmatprep.subr.bf16.mxu0 0
      %13484 = vmatpush1.bf16.msra.mxu0 0
      %13485 = vmatprep.subr.bf16.mxu0 0
      %13486 = vmatpush1.bf16.msra.mxu0 0
      %13487 = vmatprep.subr.bf16.mxu0 0
      %13488 = vmatpush1.bf16.msra.mxu0 0
      %13489 = vmatprep.subr.bf16.mxu0 0
      %13490 = vmatpush1.bf16.msra.mxu0 0
      %13491 = vmatprep.subr.bf16.mxu0 0
      %13492 = vmatpush1.bf16.msra.mxu0 0
      %13493 = vmatprep.mubr.bf16.mxu0 0
      %13494 = vmatmul.mubr.bf16.gmra.mrb[0].mxu0 %v13405
      %v13495 = vpop.f32.mrb[0].mxu0
      %v13496 = vadd.f32 0.0, %v13495
      %v13497 = vpop.f32.mrb[0].mxu0
      %v13498 = vpop.f32.mrb[0].mxu0
      %v13499 = vadd.f32 0.0, %v13498
      %v13500 = vpop.f32.mrb[0].mxu0
      %13501 = vmatprep.mubr.bf16.mxu0 0
      %13502 = vmatmul.mubr.bf16.gmra.mrb[0].mxu0 %v13408
      %v13503 = vpop.f32.mrb[0].mxu0
      %v13504 = vadd.f32 0.0, %v13503
      %v13505 = vpop.f32.mrb[0].mxu0
      %v13506 = vpop.f32.mrb[0].mxu0
      %v13507 = vadd.f32 0.0, %v13506
      %v13508 = vpop.f32.mrb[0].mxu0
      %13509 = vmatprep.mubr.bf16.mxu0 0
      %13510 = vmatmul.mubr.bf16.gmra.mrb[0].mxu0 %v13411
      %v13511 = vpop.f32.mrb[0].mxu0
      %v13512 = vadd.f32 0.0, %v13511
      %v13513 = vpop.f32.mrb[0].mxu0
      %v13514 = vpop.f32.mrb[0].mxu0
      %v13515 = vadd.f32 0.0, %v13514
      %v13516 = vpop.f32.mrb[0].mxu0
      %13517 = vmatprep.mubr.bf16.mxu0 0
      %13518 = vmatmul.mubr.bf16.gmra.mrb[0].mxu0 %v13414
      %v13519 = vpop.f32.mrb[0].mxu0
      %v13520 = vadd.f32 0.0, %v13519
      %v13521 = vpop.f32.mrb[0].mxu0
      %v13522 = vpop.f32.mrb[0].mxu0
      %v13523 = vadd.f32 0.0, %v13522
      %v13524 = vpop.f32.mrb[0].mxu0
      %13525 = vmatprep.mubr.bf16.mxu0 0
      %13526 = vmatmul.mubr.bf16.gmra.mrb[0].mxu0 %v13417
      %v13527 = vpop.f32.mrb[0].mxu0
      %v13528 = vadd.f32 0.0, %v13527
      %v13529 = vpop.f32.mrb[0].mxu0
      %v13530 = vpop.f32.mrb[0].mxu0
      %v13531 = vadd.f32 0.0, %v13530
      %v13532 = vpop.f32.mrb[0].mxu0
      %13533 = vmatprep.mubr.bf16.mxu0 0
      %13534 = vmatmul.mubr.bf16.gmra.mrb[0].mxu0 %v13420
      %v13535 = vpop.f32.mrb[0].mxu0
      %v13536 = vadd.f32 0.0, %v13535
      %v13537 = vpop.f32.mrb[0].mxu0
      %v13538 = vpop.f32.mrb[0].mxu0
      %v13539 = vadd.f32 0.0, %v13538
      %v13540 = vpop.f32.mrb[0].mxu0
      %13541 = vmatprep.mubr.bf16.mxu0 0
      %13542 = vmatmul.mubr.bf16.gmra.mrb[0].mxu0 %v13423
      %v13543 = vpop.f32.mrb[0].mxu0
      %v13544 = vadd.f32 0.0, %v13543
      %v13545 = vpop.f32.mrb[0].mxu0
      %v13546 = vpop.f32.mrb[0].mxu0
      %v13547 = vadd.f32 0.0, %v13546
      %v13548 = vpop.f32.mrb[0].mxu0
      %13549 = vmatprep.mubr.bf16.mxu0 0
      %13550 = vmatmul.mubr.bf16.gmra.mrb[0].mxu0 %v13426
      %v13551 = vpop.f32.mrb[0].mxu0
      %v13552 = vadd.f32 0.0, %v13551
      %v13553 = vpop.f32.mrb[0].mxu0
      %v13554 = vpop.f32.mrb[0].mxu0
      %v13555 = vadd.f32 0.0, %v13554
      %v13556 = vpop.f32.mrb[0].mxu0
      %13557 = vmatprep.mubr.bf16.mxu0 0
      %13558 = vmatmul.mubr.bf16.gmra.mrb[0].mxu0 %v13429
      %v13559 = vpop.f32.mrb[0].mxu0
      %v13560 = vadd.f32 0.0, %v13559
      %v13561 = vpop.f32.mrb[0].mxu0
      %v13562 = vpop.f32.mrb[0].mxu0
      %v13563 = vadd.f32 0.0, %v13562
      %v13564 = vpop.f32.mrb[0].mxu0
      %13565 = vmatprep.mubr.bf16.mxu0 0
      %13566 = vmatmul.mubr.bf16.gmra.mrb[0].mxu0 %v13432
      %v13567 = vpop.f32.mrb[0].mxu0
      %v13568 = vadd.f32 0.0, %v13567
      %v13569 = vpop.f32.mrb[0].mxu0
      %v13570 = vpop.f32.mrb[0].mxu0
      %v13571 = vadd.f32 0.0, %v13570
      %v13572 = vpop.f32.mrb[0].mxu0
      %13573 = vmatprep.mubr.bf16.mxu0 0
      %13574 = vmatmul.mubr.bf16.gmra.mrb[0].mxu0 %v13435
      %v13575 = vpop.f32.mrb[0].mxu0
      %v13576 = vadd.f32 0.0, %v13575
      %v13577 = vpop.f32.mrb[0].mxu0
      %v13578 = vpop.f32.mrb[0].mxu0
      %v13579 = vadd.f32 0.0, %v13578
      %v13580 = vpop.f32.mrb[0].mxu0
      %13581 = vmatprep.mubr.bf16.mxu0 0
      %13582 = vmatmul.mubr.bf16.gmra.mrb[0].mxu0 %v13438
      %v13583 = vpop.f32.mrb[0].mxu0
      %v13584 = vadd.f32 0.0, %v13583
      %v13585 = vpop.f32.mrb[0].mxu0
      %v13586 = vpop.f32.mrb[0].mxu0
      %v13587 = vadd.f32 0.0, %v13586
      %v13588 = vpop.f32.mrb[0].mxu0
      %13589 = vmatprep.mubr.bf16.mxu0 0
      %13590 = vmatmul.mubr.bf16.gmra.mrb[0].mxu0 %v13441
      %v13591 = vpop.f32.mrb[0].mxu0
      %v13592 = vadd.f32 0.0, %v13591
      %v13593 = vpop.f32.mrb[0].mxu0
      %v13594 = vpop.f32.mrb[0].mxu0
      %v13595 = vadd.f32 0.0, %v13594
      %v13596 = vpop.f32.mrb[0].mxu0
      %13597 = vmatprep.mubr.bf16.mxu0 0
      %13598 = vmatmul.mubr.bf16.gmra.mrb[0].mxu0 %v13444
      %v13599 = vpop.f32.mrb[0].mxu0
      %v13600 = vadd.f32 0.0, %v13599
      %v13601 = vpop.f32.mrb[0].mxu0
      %v13602 = vpop.f32.mrb[0].mxu0
      %v13603 = vadd.f32 0.0, %v13602
      %v13604 = vpop.f32.mrb[0].mxu0
      %13605 = vmatprep.mubr.bf16.mxu0 0
      %13606 = vmatmul.mubr.bf16.gmra.mrb[0].mxu0 %v13447
      %v13607 = vpop.f32.mrb[0].mxu0
      %v13608 = vadd.f32 0.0, %v13607
      %v13609 = vpop.f32.mrb[0].mxu0
      %v13610 = vpop.f32.mrb[0].mxu0
      %v13611 = vadd.f32 0.0, %v13610
      %v13612 = vpop.f32.mrb[0].mxu0
      %13613 = vmatprep.mubr.bf16.mxu0 0
      %13614 = vmatmul.mubr.bf16.gmra.mrb[0].mxu0 %v13450
      %v13615 = vpop.f32.mrb[0].mxu0
      %v13616 = vadd.f32 0.0, %v13615
      %v13617 = vpop.f32.mrb[0].mxu0
      %v13618 = vpop.f32.mrb[0].mxu0
      %v13619 = vadd.f32 0.0, %v13618
      %v13620 = vpop.f32.mrb[0].mxu0
      %13621 = vmatprep.mubr.bf16.mxu0 0
      %13622 = vmatmul.mubr.bf16.gmra.mrb[0].mxu0 %v13453
      %v13623 = vpop.f32.mrb[0].mxu0
      %v13624 = vadd.f32 0.0, %v13623
      %v13625 = vpop.f32.mrb[0].mxu0
      %v13626 = vpop.f32.mrb[0].mxu0
      %v13627 = vadd.f32 0.0, %v13626
      %v13628 = vpop.f32.mrb[0].mxu0
      %13629 = vmatprep.mubr.bf16.mxu0 0
      %13630 = vmatmul.mubr.bf16.gmra.mrb[0].mxu0 %v13456
      %v13631 = vpop.f32.mrb[0].mxu0
      %v13632 = vadd.f32 0.0, %v13631
      %v13633 = vpop.f32.mrb[0].mxu0
      %v13634 = vpop.f32.mrb[0].mxu0
      %v13635 = vadd.f32 0.0, %v13634
      %v13636 = vpop.f32.mrb[0].mxu0
      %13637 = vdwg.mxu0
      %v13638 = vadd.f32 %v13035, %v13496
      %v13639 = vadd.f32 %v13036, %v13499
      %v13640 = vadd.f32 %v13037, %v13504
      %v13641 = vadd.f32 %v13038, %v13507
      %v13642 = vadd.f32 %v13039, %v13512
      %v13643 = vadd.f32 %v13040, %v13515
      %v13644 = vadd.f32 %v13041, %v13520
      %v13645 = vadd.f32 %v13042, %v13523
      %v13646 = vadd.f32 %v13043, %v13528
      %v13647 = vadd.f32 %v13044, %v13531
      %v13648 = vadd.f32 %v13045, %v13536
      %v13649 = vadd.f32 %v13046, %v13539
      %v13650 = vadd.f32 %v13047, %v13544
      %v13651 = vadd.f32 %v13048, %v13547
      %v13652 = vadd.f32 %v13049, %v13552
      %v13653 = vadd.f32 %v13050, %v13555
      %v13654 = vadd.f32 %v13051, %v13560
      %v13655 = vadd.f32 %v13052, %v13563
      %v13656 = vadd.f32 %v13053, %v13568
      %v13657 = vadd.f32 %v13054, %v13571
      %v13658 = vadd.f32 %v13055, %v13576
      %v13659 = vadd.f32 %v13056, %v13579
      %v13660 = vadd.f32 %v13057, %v13584
      %v13661 = vadd.f32 %v13058, %v13587
      %v13662 = vadd.f32 %v13059, %v13592
      %v13663 = vadd.f32 %v13060, %v13595
      %v13664 = vadd.f32 %v13061, %v13600
      %v13665 = vadd.f32 %v13062, %v13603
      %v13666 = vadd.f32 %v13063, %v13608
      %v13667 = vadd.f32 %v13064, %v13611
      %v13668 = vadd.f32 %v13065, %v13616
      %v13669 = vadd.f32 %v13066, %v13619
      %13702 = vrot.lane.b32.xlu0 %v13504, 120
      %v13703 = vpop.permute.xlu0 %13702
      %13704 = vrot.lane.b32.xlu0 %v13507, 120
      %v13705 = vpop.permute.xlu0 %13704
      %13706 = vrot.lane.b32.xlu0 %v13512, 120
      %v13707 = vpop.permute.xlu0 %13706
      %13708 = vrot.lane.b32.xlu0 %v13515, 120
      %v13709 = vpop.permute.xlu0 %13708
      %13710 = vrot.lane.b32.xlu0 %v13520, 120
      %v13711 = vpop.permute.xlu0 %13710
      %13712 = vrot.lane.b32.xlu0 %v13523, 120
      %v13713 = vpop.permute.xlu0 %13712
      %13714 = vrot.lane.b32.xlu0 %v13528, 120
      %v13715 = vpop.permute.xlu0 %13714
      %13716 = vrot.lane.b32.xlu0 %v13531, 120
      %v13717 = vpop.permute.xlu0 %13716
      %13718 = vrot.lane.b32.xlu0 %v13536, 120
      %v13719 = vpop.permute.xlu0 %13718
      %13720 = vrot.lane.b32.xlu0 %v13539, 120
      %v13721 = vpop.permute.xlu0 %13720
      %13722 = vrot.lane.b32.xlu0 %v13544, 120
      %v13723 = vpop.permute.xlu0 %13722
      %13724 = vrot.lane.b32.xlu0 %v13547, 120
      %v13725 = vpop.permute.xlu0 %13724
      %13726 = vrot.lane.b32.xlu0 %v13552, 120
      %v13727 = vpop.permute.xlu0 %13726
      %13728 = vrot.lane.b32.xlu0 %v13555, 120
      %v13729 = vpop.permute.xlu0 %13728
      %13730 = vrot.lane.b32.xlu0 %v13560, 120
      %v13731 = vpop.permute.xlu0 %13730
      %13732 = vrot.lane.b32.xlu0 %v13563, 120
      %v13733 = vpop.permute.xlu0 %13732
      %13734 = vrot.lane.b32.xlu0 %v13568, 120
      %v13735 = vpop.permute.xlu0 %13734
      %13736 = vrot.lane.b32.xlu0 %v13571, 120
      %v13737 = vpop.permute.xlu0 %13736
      %13738 = vrot.lane.b32.xlu0 %v13576, 120
      %v13739 = vpop.permute.xlu0 %13738
      %13740 = vrot.lane.b32.xlu0 %v13579, 120
      %v13741 = vpop.permute.xlu0 %13740
      %13742 = vrot.lane.b32.xlu0 %v13584, 120
      %v13743 = vpop.permute.xlu0 %13742
      %13744 = vrot.lane.b32.xlu0 %v13587, 120
      %v13745 = vpop.permute.xlu0 %13744
      %13746 = vrot.lane.b32.xlu0 %v13592, 120
      %v13747 = vpop.permute.xlu0 %13746
      %13748 = vrot.lane.b32.xlu0 %v13595, 120
      %v13749 = vpop.permute.xlu0 %13748
      %13750 = vrot.lane.b32.xlu0 %v13600, 120
      %v13751 = vpop.permute.xlu0 %13750
      %13752 = vrot.lane.b32.xlu0 %v13603, 120
      %v13753 = vpop.permute.xlu0 %13752
      %13754 = vrot.lane.b32.xlu0 %v13608, 120
      %v13755 = vpop.permute.xlu0 %13754
      %13756 = vrot.lane.b32.xlu0 %v13611, 120
      %v13757 = vpop.permute.xlu0 %13756
      %13758 = vrot.lane.b32.xlu0 %v13616, 120
      %v13759 = vpop.permute.xlu0 %13758
      %13760 = vrot.lane.b32.xlu0 %v13619, 120
      %v13761 = vpop.permute.xlu0 %13760
      %13762 = vrot.lane.b32.xlu0 %v13624, 120
      %v13763 = vpop.permute.xlu0 %13762
      %13764 = vrot.lane.b32.xlu0 %v13627, 120
      %v13765 = vpop.permute.xlu0 %13764
      %v13798 = vadd.f32 %v13638, %v13703
      %v13799 = vadd.f32 %v13639, %v13705
      %v13800 = vadd.f32 %v13640, %v13707
      %v13801 = vadd.f32 %v13641, %v13709
      %v13802 = vadd.f32 %v13642, %v13711
      %v13803 = vadd.f32 %v13643, %v13713
      %v13804 = vadd.f32 %v13644, %v13715
      %v13805 = vadd.f32 %v13645, %v13717
      %v13806 = vadd.f32 %v13646, %v13719
      %v13807 = vadd.f32 %v13647, %v13721
      %v13808 = vadd.f32 %v13648, %v13723
      %v13809 = vadd.f32 %v13649, %v13725
      %v13810 = vadd.f32 %v13650, %v13727
      %v13811 = vadd.f32 %v13651, %v13729
      %v13812 = vadd.f32 %v13652, %v13731
      %v13813 = vadd.f32 %v13653, %v13733
      %v13814 = vadd.f32 %v13654, %v13735
      %v13815 = vadd.f32 %v13655, %v13737
      %v13816 = vadd.f32 %v13656, %v13739
      %v13817 = vadd.f32 %v13657, %v13741
      %v13818 = vadd.f32 %v13658, %v13743
      %v13819 = vadd.f32 %v13659, %v13745
      %v13820 = vadd.f32 %v13660, %v13747
      %v13821 = vadd.f32 %v13661, %v13749
      %v13822 = vadd.f32 %v13662, %v13751
      %v13823 = vadd.f32 %v13663, %v13753
      %v13824 = vadd.f32 %v13664, %v13755
      %v13825 = vadd.f32 %v13665, %v13757
      %v13826 = vadd.f32 %v13666, %v13759
      %v13827 = vadd.f32 %v13667, %v13761
      %v13828 = vadd.f32 %v13668, %v13763
      %v13829 = vadd.f32 %v13669, %v13765
      %13832 = vrot.lane.b32.xlu0 %v13512, 112
      %v13833 = vpop.permute.xlu0 %13832
      %13834 = vrot.lane.b32.xlu0 %v13515, 112
      %v13835 = vpop.permute.xlu0 %13834
      %13836 = vrot.lane.b32.xlu0 %v13520, 112
      %v13837 = vpop.permute.xlu0 %13836
      %13838 = vrot.lane.b32.xlu0 %v13523, 112
      %v13839 = vpop.permute.xlu0 %13838
      %13840 = vrot.lane.b32.xlu0 %v13528, 112
      %v13841 = vpop.permute.xlu0 %13840
      %13842 = vrot.lane.b32.xlu0 %v13531, 112
      %v13843 = vpop.permute.xlu0 %13842
      %13844 = vrot.lane.b32.xlu0 %v13536, 112
      %v13845 = vpop.permute.xlu0 %13844
      %13846 = vrot.lane.b32.xlu0 %v13539, 112
      %v13847 = vpop.permute.xlu0 %13846
      %13848 = vrot.lane.b32.xlu0 %v13544, 112
      %v13849 = vpop.permute.xlu0 %13848
      %13850 = vrot.lane.b32.xlu0 %v13547, 112
      %v13851 = vpop.permute.xlu0 %13850
      %13852 = vrot.lane.b32.xlu0 %v13552, 112
      %v13853 = vpop.permute.xlu0 %13852
      %13854 = vrot.lane.b32.xlu0 %v13555, 112
      %v13855 = vpop.permute.xlu0 %13854
      %13856 = vrot.lane.b32.xlu0 %v13560, 112
      %v13857 = vpop.permute.xlu0 %13856
      %13858 = vrot.lane.b32.xlu0 %v13563, 112
      %v13859 = vpop.permute.xlu0 %13858
      %13860 = vrot.lane.b32.xlu0 %v13568, 112
      %v13861 = vpop.permute.xlu0 %13860
      %13862 = vrot.lane.b32.xlu0 %v13571, 112
      %v13863 = vpop.permute.xlu0 %13862
      %13864 = vrot.lane.b32.xlu0 %v13576, 112
      %v13865 = vpop.permute.xlu0 %13864
      %13866 = vrot.lane.b32.xlu0 %v13579, 112
      %v13867 = vpop.permute.xlu0 %13866
      %13868 = vrot.lane.b32.xlu0 %v13584, 112
      %v13869 = vpop.permute.xlu0 %13868
      %13870 = vrot.lane.b32.xlu0 %v13587, 112
      %v13871 = vpop.permute.xlu0 %13870
      %13872 = vrot.lane.b32.xlu0 %v13592, 112
      %v13873 = vpop.permute.xlu0 %13872
      %13874 = vrot.lane.b32.xlu0 %v13595, 112
      %v13875 = vpop.permute.xlu0 %13874
      %13876 = vrot.lane.b32.xlu0 %v13600, 112
      %v13877 = vpop.permute.xlu0 %13876
      %13878 = vrot.lane.b32.xlu0 %v13603, 112
      %v13879 = vpop.permute.xlu0 %13878
      %13880 = vrot.lane.b32.xlu0 %v13608, 112
      %v13881 = vpop.permute.xlu0 %13880
      %13882 = vrot.lane.b32.xlu0 %v13611, 112
      %v13883 = vpop.permute.xlu0 %13882
      %13884 = vrot.lane.b32.xlu0 %v13616, 112
      %v13885 = vpop.permute.xlu0 %13884
      %13886 = vrot.lane.b32.xlu0 %v13619, 112
      %v13887 = vpop.permute.xlu0 %13886
      %13888 = vrot.lane.b32.xlu0 %v13624, 112
      %v13889 = vpop.permute.xlu0 %13888
      %13890 = vrot.lane.b32.xlu0 %v13627, 112
      %v13891 = vpop.permute.xlu0 %13890
      %13892 = vrot.lane.b32.xlu0 %v13632, 112
      %v13893 = vpop.permute.xlu0 %13892
      %13894 = vrot.lane.b32.xlu0 %v13635, 112
      %v13895 = vpop.permute.xlu0 %13894
      %v13928 = vadd.f32 %v13798, %v13833
      %v13929 = vadd.f32 %v13799, %v13835
      %v13930 = vadd.f32 %v13800, %v13837
      %v13931 = vadd.f32 %v13801, %v13839
      %v13932 = vadd.f32 %v13802, %v13841
      %v13933 = vadd.f32 %v13803, %v13843
      %v13934 = vadd.f32 %v13804, %v13845
      %v13935 = vadd.f32 %v13805, %v13847
      %v13936 = vadd.f32 %v13806, %v13849
      %v13937 = vadd.f32 %v13807, %v13851
      %v13938 = vadd.f32 %v13808, %v13853
      %v13939 = vadd.f32 %v13809, %v13855
      %v13940 = vadd.f32 %v13810, %v13857
      %v13941 = vadd.f32 %v13811, %v13859
      %v13942 = vadd.f32 %v13812, %v13861
      %v13943 = vadd.f32 %v13813, %v13863
      %v13944 = vadd.f32 %v13814, %v13865
      %v13945 = vadd.f32 %v13815, %v13867
      %v13946 = vadd.f32 %v13816, %v13869
      %v13947 = vadd.f32 %v13817, %v13871
      %v13948 = vadd.f32 %v13818, %v13873
      %v13949 = vadd.f32 %v13819, %v13875
      %v13950 = vadd.f32 %v13820, %v13877
      %v13951 = vadd.f32 %v13821, %v13879
      %v13952 = vadd.f32 %v13822, %v13881
      %v13953 = vadd.f32 %v13823, %v13883
      %v13954 = vadd.f32 %v13824, %v13885
      %v13955 = vadd.f32 %v13825, %v13887
      %v13956 = vadd.f32 %v13826, %v13889
      %v13957 = vadd.f32 %v13827, %v13891
      %v13958 = vadd.f32 %v13828, %v13893
      %v13959 = vadd.f32 %v13829, %v13895
      %v13960 = vld [vmem:[%s10] sm:$0x1]
      %v13962 = vlaneseq
      %v13963 = vshrl.u32 %v13962, 7
      %v13964 = vsub.s32 0, %v13963
      %v13965 = vrot.slane %v13960, %v13964
      %v13967 = vadd.f32 %v13928, %v13965
      %v13968 = vadd.f32 %v13929, %v13965
      %v13969 = vadd.f32 %v13930, %v13965
      %v13970 = vadd.f32 %v13931, %v13965
      %v13971 = vadd.f32 %v13932, %v13965
      %v13972 = vadd.f32 %v13933, %v13965
      %v13973 = vadd.f32 %v13934, %v13965
      %v13974 = vadd.f32 %v13935, %v13965
      %v13975 = vadd.f32 %v13936, %v13965
      %v13976 = vadd.f32 %v13937, %v13965
      %v13977 = vadd.f32 %v13938, %v13965
      %v13978 = vadd.f32 %v13939, %v13965
      %v13979 = vadd.f32 %v13940, %v13965
      %v13980 = vadd.f32 %v13941, %v13965
      %v13981 = vadd.f32 %v13942, %v13965
      %v13982 = vadd.f32 %v13943, %v13965
      %v13983 = vadd.f32 %v13944, %v13965
      %v13984 = vadd.f32 %v13945, %v13965
      %v13985 = vadd.f32 %v13946, %v13965
      %v13986 = vadd.f32 %v13947, %v13965
      %v13987 = vadd.f32 %v13948, %v13965
      %v13988 = vadd.f32 %v13949, %v13965
      %v13989 = vadd.f32 %v13950, %v13965
      %v13990 = vadd.f32 %v13951, %v13965
      %v13991 = vadd.f32 %v13952, %v13965
      %v13992 = vadd.f32 %v13953, %v13965
      %v13993 = vadd.f32 %v13954, %v13965
      %v13994 = vadd.f32 %v13955, %v13965
      %v13995 = vadd.f32 %v13956, %v13965
      %v13996 = vadd.f32 %v13957, %v13965
      %v13997 = vadd.f32 %v13958, %v13965
      %v13998 = vadd.f32 %v13959, %v13965
      %v13999 = vld [vmem:[%s394] sm:$0xf0]
      %v14000 = vld [vmem:[%s394 + $0x8] sm:$0xf]
      %v14001 = vld [vmem:[%s394 + $0x10] sm:$0xf0]
      %v14002 = vld [vmem:[%s394 + $0x18] sm:$0xf]
      %v14003 = vld [vmem:[%s394 + $0x20] sm:$0xf0]
      %v14004 = vld [vmem:[%s394 + $0x28] sm:$0xf]
      %v14005 = vld [vmem:[%s394 + $0x30] sm:$0xf0]
      %v14006 = vld [vmem:[%s394 + $0x38] sm:$0xf]
      %v14007 = vld [vmem:[%s394 + $0x40] sm:$0xf0]
      %v14008 = vld [vmem:[%s394 + $0x48] sm:$0xf]
      %v14009 = vld [vmem:[%s394 + $0x50] sm:$0xf0]
      %v14010 = vld [vmem:[%s394 + $0x58] sm:$0xf]
      %v14011 = vld [vmem:[%s394 + $0x60] sm:$0xf0]
      %v14012 = vld [vmem:[%s394 + $0x68] sm:$0xf]
      %v14013 = vld [vmem:[%s394 + $0x70] sm:$0xf0]
      %v14014 = vld [vmem:[%s394 + $0x78] sm:$0xf]
      %v14015 = vld [vmem:[%s394 + $0x80] sm:$0xf0]
      %v14016 = vld [vmem:[%s394 + $0x88] sm:$0xf]
      %v14017 = vld [vmem:[%s394 + $0x90] sm:$0xf0]
      %v14018 = vld [vmem:[%s394 + $0x98] sm:$0xf]
      %v14019 = vld [vmem:[%s394 + $0xa0] sm:$0xf0]
      %v14020 = vld [vmem:[%s394 + $0xa8] sm:$0xf]
      %v14021 = vld [vmem:[%s394 + $0xb0] sm:$0xf0]
      %v14022 = vld [vmem:[%s394 + $0xb8] sm:$0xf]
      %v14023 = vld [vmem:[%s394 + $0xc0] sm:$0xf0]
      %v14024 = vld [vmem:[%s394 + $0xc8] sm:$0xf]
      %v14025 = vld [vmem:[%s394 + $0xd0] sm:$0xf0]
      %v14026 = vld [vmem:[%s394 + $0xd8] sm:$0xf]
      %v14027 = vld [vmem:[%s394 + $0xe0] sm:$0xf0]
      %v14028 = vld [vmem:[%s394 + $0xe8] sm:$0xf]
      %v14029 = vld [vmem:[%s394 + $0xf0] sm:$0xf0]
      %v14030 = vld [vmem:[%s394 + $0xf8] sm:$0xf]
      %v14063 = vrot.slane %v13999, 4
      %v14064 = vrot.slane %v14000, 4
      %v14065 = vsel %vm1517, %v14063, %v14064
      %v14066 = vrot.slane %v14001, 4
      %v14067 = vrot.slane %v14002, 4
      %v14068 = vsel %vm1517, %v14066, %v14067
      %v14069 = vrot.slane %v14003, 4
      %v14070 = vrot.slane %v14004, 4
      %v14071 = vsel %vm1517, %v14069, %v14070
      %v14072 = vrot.slane %v14005, 4
      %v14073 = vrot.slane %v14006, 4
      %v14074 = vsel %vm1517, %v14072, %v14073
      %v14075 = vrot.slane %v14007, 4
      %v14076 = vrot.slane %v14008, 4
      %v14077 = vsel %vm1517, %v14075, %v14076
      %v14078 = vrot.slane %v14009, 4
      %v14079 = vrot.slane %v14010, 4
      %v14080 = vsel %vm1517, %v14078, %v14079
      %v14081 = vrot.slane %v14011, 4
      %v14082 = vrot.slane %v14012, 4
      %v14083 = vsel %vm1517, %v14081, %v14082
      %v14084 = vrot.slane %v14013, 4
      %v14085 = vrot.slane %v14014, 4
      %v14086 = vsel %vm1517, %v14084, %v14085
      %v14087 = vrot.slane %v14015, 4
      %v14088 = vrot.slane %v14016, 4
      %v14089 = vsel %vm1517, %v14087, %v14088
      %v14090 = vrot.slane %v14017, 4
      %v14091 = vrot.slane %v14018, 4
      %v14092 = vsel %vm1517, %v14090, %v14091
      %v14093 = vrot.slane %v14019, 4
      %v14094 = vrot.slane %v14020, 4
      %v14095 = vsel %vm1517, %v14093, %v14094
      %v14096 = vrot.slane %v14021, 4
      %v14097 = vrot.slane %v14022, 4
      %v14098 = vsel %vm1517, %v14096, %v14097
      %v14099 = vrot.slane %v14023, 4
      %v14100 = vrot.slane %v14024, 4
      %v14101 = vsel %vm1517, %v14099, %v14100
      %v14102 = vrot.slane %v14025, 4
      %v14103 = vrot.slane %v14026, 4
      %v14104 = vsel %vm1517, %v14102, %v14103
      %v14105 = vrot.slane %v14027, 4
      %v14106 = vrot.slane %v14028, 4
      %v14107 = vsel %vm1517, %v14105, %v14106
      %v14108 = vrot.slane %v14029, 4
      %v14109 = vrot.slane %v14030, 4
      %v14110 = vsel %vm1517, %v14108, %v14109
      %v14127 = vunpack.c.l.bf16 %v14065
      %v14128 = vunpack.c.h.bf16 %v14065
      %v14129 = vunpack.c.l.bf16 %v14068
      %v14130 = vunpack.c.h.bf16 %v14068
      %v14131 = vunpack.c.l.bf16 %v14071
      %v14132 = vunpack.c.h.bf16 %v14071
      %v14133 = vunpack.c.l.bf16 %v14074
      %v14134 = vunpack.c.h.bf16 %v14074
      %v14135 = vunpack.c.l.bf16 %v14077
      %v14136 = vunpack.c.h.bf16 %v14077
      %v14137 = vunpack.c.l.bf16 %v14080
      %v14138 = vunpack.c.h.bf16 %v14080
      %v14139 = vunpack.c.l.bf16 %v14083
      %v14140 = vunpack.c.h.bf16 %v14083
      %v14141 = vunpack.c.l.bf16 %v14086
      %v14142 = vunpack.c.h.bf16 %v14086
      %v14143 = vunpack.c.l.bf16 %v14089
      %v14144 = vunpack.c.h.bf16 %v14089
      %v14145 = vunpack.c.l.bf16 %v14092
      %v14146 = vunpack.c.h.bf16 %v14092
      %v14147 = vunpack.c.l.bf16 %v14095
      %v14148 = vunpack.c.h.bf16 %v14095
      %v14149 = vunpack.c.l.bf16 %v14098
      %v14150 = vunpack.c.h.bf16 %v14098
      %v14151 = vunpack.c.l.bf16 %v14101
      %v14152 = vunpack.c.h.bf16 %v14101
      %v14153 = vunpack.c.l.bf16 %v14104
      %v14154 = vunpack.c.h.bf16 %v14104
      %v14155 = vunpack.c.l.bf16 %v14107
      %v14156 = vunpack.c.h.bf16 %v14107
      %v14157 = vunpack.c.l.bf16 %v14110
      %v14158 = vunpack.c.h.bf16 %v14110
      %v14159 = vmul.f32 %v13967, 0.2
      %v14160 = vmul.f32 %v13968, 0.2
      %v14161 = vmul.f32 %v13969, 0.2
      %v14162 = vmul.f32 %v13970, 0.2
      %v14163 = vmul.f32 %v13971, 0.2
      %v14164 = vmul.f32 %v13972, 0.2
      %v14165 = vmul.f32 %v13973, 0.2
      %v14166 = vmul.f32 %v13974, 0.2
      %v14167 = vmul.f32 %v13975, 0.2
      %v14168 = vmul.f32 %v13976, 0.2
      %v14169 = vmul.f32 %v13977, 0.2
      %v14170 = vmul.f32 %v13978, 0.2
      %v14171 = vmul.f32 %v13979, 0.2
      %v14172 = vmul.f32 %v13980, 0.2
      %v14173 = vmul.f32 %v13981, 0.2
      %v14174 = vmul.f32 %v13982, 0.2
      %v14175 = vmul.f32 %v13983, 0.2
      %v14176 = vmul.f32 %v13984, 0.2
      %v14177 = vmul.f32 %v13985, 0.2
      %v14178 = vmul.f32 %v13986, 0.2
      %v14179 = vmul.f32 %v13987, 0.2
      %v14180 = vmul.f32 %v13988, 0.2
      %v14181 = vmul.f32 %v13989, 0.2
      %v14182 = vmul.f32 %v13990, 0.2
      %v14183 = vmul.f32 %v13991, 0.2
      %v14184 = vmul.f32 %v13992, 0.2
      %v14185 = vmul.f32 %v13993, 0.2
      %v14186 = vmul.f32 %v13994, 0.2
      %v14187 = vmul.f32 %v13995, 0.2
      %v14188 = vmul.f32 %v13996, 0.2
      %v14189 = vmul.f32 %v13997, 0.2
      %v14190 = vmul.f32 %v13998, 0.2
      %v14191 = vadd.f32 %v14159, %v14127
      %v14192 = vadd.f32 %v14160, %v14128
      %v14193 = vadd.f32 %v14161, %v14129
      %v14194 = vadd.f32 %v14162, %v14130
      %v14195 = vadd.f32 %v14163, %v14131
      %v14196 = vadd.f32 %v14164, %v14132
      %v14197 = vadd.f32 %v14165, %v14133
      %v14198 = vadd.f32 %v14166, %v14134
      %v14199 = vadd.f32 %v14167, %v14135
      %v14200 = vadd.f32 %v14168, %v14136
      %v14201 = vadd.f32 %v14169, %v14137
      %v14202 = vadd.f32 %v14170, %v14138
      %v14203 = vadd.f32 %v14171, %v14139
      %v14204 = vadd.f32 %v14172, %v14140
      %v14205 = vadd.f32 %v14173, %v14141
      %v14206 = vadd.f32 %v14174, %v14142
      %v14207 = vadd.f32 %v14175, %v14143
      %v14208 = vadd.f32 %v14176, %v14144
      %v14209 = vadd.f32 %v14177, %v14145
      %v14210 = vadd.f32 %v14178, %v14146
      %v14211 = vadd.f32 %v14179, %v14147
      %v14212 = vadd.f32 %v14180, %v14148
      %v14213 = vadd.f32 %v14181, %v14149
      %v14214 = vadd.f32 %v14182, %v14150
      %v14215 = vadd.f32 %v14183, %v14151
      %v14216 = vadd.f32 %v14184, %v14152
      %v14217 = vadd.f32 %v14185, %v14153
      %v14218 = vadd.f32 %v14186, %v14154
      %v14219 = vadd.f32 %v14187, %v14155
      %v14220 = vadd.f32 %v14188, %v14156
      %v14221 = vadd.f32 %v14189, %v14157
      %v14222 = vadd.f32 %v14190, %v14158
      %14223 = vst.msk [vmem:[%s386] sm:$0xff] %vm903, %v14191
      %14224 = vst.msk [vmem:[%s386 + $0x8] sm:$0xff] %vm903, %v14192
      %14225 = vst.msk [vmem:[%s386 + $0x10] sm:$0xff] %vm903, %v14193
      %14226 = vst.msk [vmem:[%s386 + $0x18] sm:$0xff] %vm903, %v14194
      %14227 = vst.msk [vmem:[%s386 + $0x20] sm:$0xff] %vm903, %v14195
      %14228 = vst.msk [vmem:[%s386 + $0x28] sm:$0xff] %vm903, %v14196
      %14229 = vst.msk [vmem:[%s386 + $0x30] sm:$0xff] %vm903, %v14197
      %14230 = vst.msk [vmem:[%s386 + $0x38] sm:$0xff] %vm903, %v14198
      %14231 = vst.msk [vmem:[%s386 + $0x40] sm:$0xff] %vm903, %v14199
      %14232 = vst.msk [vmem:[%s386 + $0x48] sm:$0xff] %vm903, %v14200
      %14233 = vst.msk [vmem:[%s386 + $0x50] sm:$0xff] %vm903, %v14201
      %14234 = vst.msk [vmem:[%s386 + $0x58] sm:$0xff] %vm903, %v14202
      %14235 = vst.msk [vmem:[%s386 + $0x60] sm:$0xff] %vm903, %v14203
      %14236 = vst.msk [vmem:[%s386 + $0x68] sm:$0xff] %vm903, %v14204
      %14237 = vst.msk [vmem:[%s386 + $0x70] sm:$0xff] %vm903, %v14205
      %14238 = vst.msk [vmem:[%s386 + $0x78] sm:$0xff] %vm903, %v14206
      %14239 = vst.msk [vmem:[%s386 + $0x80] sm:$0xff] %vm903, %v14207
      %14240 = vst.msk [vmem:[%s386 + $0x88] sm:$0xff] %vm903, %v14208
      %14241 = vst.msk [vmem:[%s386 + $0x90] sm:$0xff] %vm903, %v14209
      %14242 = vst.msk [vmem:[%s386 + $0x98] sm:$0xff] %vm903, %v14210
      %14243 = vst.msk [vmem:[%s386 + $0xa0] sm:$0xff] %vm903, %v14211
      %14244 = vst.msk [vmem:[%s386 + $0xa8] sm:$0xff] %vm903, %v14212
      %14245 = vst.msk [vmem:[%s386 + $0xb0] sm:$0xff] %vm903, %v14213
      %14246 = vst.msk [vmem:[%s386 + $0xb8] sm:$0xff] %vm903, %v14214
      %14247 = vst.msk [vmem:[%s386 + $0xc0] sm:$0xff] %vm903, %v14215
      %14248 = vst.msk [vmem:[%s386 + $0xc8] sm:$0xff] %vm903, %v14216
      %14249 = vst.msk [vmem:[%s386 + $0xd0] sm:$0xff] %vm903, %v14217
      %14250 = vst.msk [vmem:[%s386 + $0xd8] sm:$0xff] %vm903, %v14218
      %14251 = vst.msk [vmem:[%s386 + $0xe0] sm:$0xff] %vm903, %v14219
      %14252 = vst.msk [vmem:[%s386 + $0xe8] sm:$0xff] %vm903, %v14220
      %14253 = vst.msk [vmem:[%s386 + $0xf0] sm:$0xff] %vm903, %v14221
      %14254 = vst.msk [vmem:[%s386 + $0xf8] sm:$0xff] %vm903, %v14222
      %p14255 = scmp.lt.s32.totalorder %s22, 1
      %s14256 = scalar_select %p14255, %s22, 1
      %s14257 = smul.addr %s14256, 32
      %s14258 = smul.addr %s14257, 8
      %s14259 = scalar_lea.vmem %s11, %s14258
      // Predicated region
      $region65: #{tpu_custom_call.1} parent=63 // pred_check
        %p14260 = pneg %p276
      $region66: #{tpu_custom_call.1} parent=63 // pred_check_branch
        %14262 = sbr.rel (%p14260) target = $region68
      $region67: #{tpu_custom_call.1} parent=63 // pred_region
        _
      $region68: #{tpu_custom_call.1} parent=63 // pred_fallthru
        _
    $region64: #{tpu_custom_call.1} parent=5 // pred_fallthru
      _
    %p14263 = scmp.le.s32.totalorder 2, %s17
    // Predicated region
    $region69: #{tpu_custom_call.1} parent=5 // pred_check
      %p14264 = pneg %p14263
    $region70: #{tpu_custom_call.1} parent=5 // pred_check_branch
      %14266 = sbr.rel (%p14264) target = $region72
    $region71: #{tpu_custom_call.1} parent=5 // pred_region
      %s14267 = ssub.s32 %s17, 2
      // Predicated region
      $region73: #{tpu_custom_call.1} parent=71 // pred_check
        %p14268 = pneg %p282
      $region74: #{tpu_custom_call.1} parent=71 // pred_check_branch
        %14270 = sbr.rel (%p14268) target = $region76
      $region75: #{tpu_custom_call.1} parent=71 // pred_region
        %p14271 = scmp.lt.s32.totalorder %s23, 1
        %s14272 = scalar_select %p14271, %s23, 1
        %s14273 = smul.addr %s14272, 32
        %s14274 = smul.addr %s14273, 8
        %s14275 = scalar_lea.vmem %s11, %s14274
      $region76: #{tpu_custom_call.1} parent=71 // pred_fallthru
        _
    $region72: #{tpu_custom_call.1} parent=5 // pred_fallthru
      _
  $region6: #{tpu_custom_call.1} parent=0 // loop_footer
    %s21 = sadd.s32 1, %s17
  $region7: #{tpu_custom_call.1} parent=0 // loop_footer_branch
    %16 = sbr.rel target = $region3
  $region8: #{tpu_custom_call.1} parent=0 // loop_exit
    _

</llo_original>
